<compile_context>
chip_gen: v7x
topology: tpu7x:2x2x1
jax: 0.10.0
libtpu: 0.0.40
codegen_flags: <defaults>
</compile_context>

<pallas_src>
import functools
import math

import jax
import jax.numpy as jnp
from jax.experimental import pallas as pl
from jax.experimental.pallas import tpu as pltpu

# Layer widths, matching the PyTorch module:
#   encoder: 784 -> 128 -> 64 -> 12 -> 3
#   decoder:   3 ->  12 -> 64 -> 128 -> 784
DIMS = [28 * 28, 128, 64, 12, 3, 12, 64, 128, 28 * 28]
N_LAYERS = len(DIMS) - 1  # 8 linear layers
# ReLU after every linear except encoder-last (idx 3, no activation) and
# decoder-last (idx 7, tanh).
NO_RELU_LAYERS = (3, 7)

LANE = 128
IN_DIM = DIMS[0]    # 784 — kept unpadded (HBM-facing input width)
OUT_DIM = DIMS[-1]  # 784 — kept unpadded (HBM-facing output width)


def _round_up(v, m):
    return (v + m - 1) // m * m


# Only the INTERNAL widths are padded to 128 lanes; the 784-wide input/output
# stay at 784 so no wrapper pad/slice and no inflated DMA bytes.
PAD_DIMS = [IN_DIM] + [_round_up(d, LANE) for d in DIMS[1:-1]] + [OUT_DIM]
# -> [784, 128, 128, 128, 128, 128, 128, 128, 784]


def autoencoder_kernel(x_ref, *refs):
    """refs = (w1, b1, w2, b2, ..., w8, b8, out_ref).

    x_ref:  (tb, 784) f32
    w_i:    (in_pad, out_pad) bf16   (pre-transposed, zero-padded internally)
    b_i:    (1, out_pad) f32         (zero-padded)
    out:    (tb, 784) f32 (or bf16)
    """
    out_ref = refs[-1]
    param_refs = refs[:-1]

    h = x_ref[...]  # (tb, 784) f32
    for layer in range(N_LAYERS):
        w = param_refs[2 * layer][...]       # (in_pad, out_pad) bf16
        b = param_refs[2 * layer + 1][...]   # (1, out_pad) f32
        # bf16 MXU matmul with f32 accumulation; bias add / activation in f32.
        h = jnp.dot(h.astype(jnp.bfloat16), w,
                    preferred_element_type=jnp.float32) + b
        if layer not in NO_RELU_LAYERS:
            h = jnp.maximum(h, 0.0)
    out_ref[...] = jnp.tanh(h).astype(out_ref.dtype)


def init_params(key):
    """PyTorch-style Linear init: U(-1/sqrt(fan_in), +1/sqrt(fan_in)).

    Returns [(W, b), ...] with W in PyTorch (out, in) convention, f32."""
    params = []
    for layer in range(N_LAYERS):
        fan_in, fan_out = DIMS[layer], DIMS[layer + 1]
        key, kw, kb = jax.random.split(key, 3)
        bound = 1.0 / jnp.sqrt(jnp.float32(fan_in))
        w = jax.random.uniform(kw, (fan_out, fan_in), jnp.float32, -bound, bound)
        b = jax.random.uniform(kb, (fan_out,), jnp.float32, -bound, bound)
        params.append((w, b))
    return params


def prepare_kernel_params(params):
    """Transpose to (in, out), zero-pad INTERNAL dims to 128, cast W to bf16."""
    flat = []
    for layer, (w, b) in enumerate(params):
        in_d, out_d = DIMS[layer], DIMS[layer + 1]
        in_p, out_p = PAD_DIMS[layer], PAD_DIMS[layer + 1]
        w_t = jnp.asarray(w.T)                                    # (in, out) f32
        w_pad = jnp.zeros((in_p, out_p), jnp.float32).at[:in_d, :out_d].set(w_t)
        b_pad = jnp.zeros((1, out_p), jnp.float32).at[0, :out_d].set(b)
        flat.append(w_pad.astype(jnp.bfloat16))
        flat.append(b_pad)  # bias stays f32
    return flat


def _cost_estimate(batch, flat_params, out_dtype):
    # Reflects the padded shapes actually executed and the real 784-wide I/O.
    flops = 2 * batch * sum(PAD_DIMS[l] * PAD_DIMS[l + 1] for l in range(N_LAYERS))
    transcendentals = batch * OUT_DIM  # tanh on the output
    param_bytes = sum(math.prod(p.shape) * p.dtype.itemsize for p in flat_params)
    io_bytes = batch * IN_DIM * 4 + batch * OUT_DIM * jnp.dtype(out_dtype).itemsize
    return pl.CostEstimate(flops=flops,
                           transcendentals=transcendentals,
                           bytes_accessed=io_bytes + param_bytes)


@functools.partial(jax.jit, static_argnames=("tb", "out_dtype"))
def autoencoder_forward(x, flat_params, *, tb=512, out_dtype=jnp.float32):
    """x: (B, 784) f32.  flat_params: output of prepare_kernel_params.

    tb: batch tile.  512 is a good default everywhere (fits v5e's raised VMEM
    limit, amortizes per-step overhead).  On v6e a 1024 sweep point is also
    fine; on v7x pick tb so the grid length stays even and >= 2 so both
    TensorCores are used ("parallel" batch axis).
    """
    B, D = x.shape
    assert D == IN_DIM

    # Shrink the tile for small batches (shapes are static under jit), keeping
    # the second-to-last block dim a multiple of 8 (sublane requirement).
    etb = min(_round_up(tb, 8), _round_up(B, 8))
    Bp = _round_up(B, etb)

    # Pad ONLY the batch dim, and ONLY when the batch is ragged w.r.t. the tile.
    x_p = x if Bp == B else jnp.pad(x, ((0, Bp - B), (0, 0)))

    # Input: (etb, 784) block — last dim equals the full array dim, so the
    # non-multiple-of-128 width is legal and stays lane-unpadded end to end.
    in_specs = [pl.BlockSpec((etb, IN_DIM), lambda i: (i, 0))]
    for p in flat_params:
        # Full-array block with a constant index map: DMA'd once, VMEM-resident
        # across all grid steps (block index never changes).
        in_specs.append(pl.BlockSpec(p.shape, lambda i: (0, 0)))

    # VMEM budget: double-buffered f32 in/out blocks + (double-buffered) params
    # + headroom for f32 intermediates.  Clamp to [32 MiB, 56 MiB] so we always
    # raise v5e's 16 MiB scoped default and never approach v7x's 64 MiB physical.
    io_block_bytes = etb * max(IN_DIM, OUT_DIM) * 4
    param_bytes = sum(math.prod(p.shape) * p.dtype.itemsize for p in flat_params)
    vmem_limit = int(min(56 << 20,
                         max(32 << 20,
                             4 * io_block_bytes + 2 * param_bytes + (16 << 20))))

    out_p = pl.pallas_call(
        autoencoder_kernel,
        out_shape=jax.ShapeDtypeStruct((Bp, OUT_DIM), out_dtype),
        grid=(Bp // etb,),
        in_specs=in_specs,
        out_specs=pl.BlockSpec((etb, OUT_DIM), lambda i: (i, 0)),
        compiler_params=pltpu.CompilerParams(
            dimension_semantics=("parallel",),
            vmem_limit_bytes=vmem_limit,
        ),
        cost_estimate=_cost_estimate(Bp, flat_params, out_dtype),
    )(x_p, *flat_params)

    return out_p if Bp == B else out_p[:B]


def autoencoder_ref_bf16(x, params):
    """Pure-JAX reference with the SAME bf16 matmul quantization as the kernel."""
    h = x
    for layer, (w, b) in enumerate(params):
        h = jnp.dot(h.astype(jnp.bfloat16), w.T.astype(jnp.bfloat16),
                    preferred_element_type=jnp.float32) + b
        if layer not in NO_RELU_LAYERS:
            h = jnp.maximum(h, 0.0)
    return jnp.tanh(h)


def autoencoder_ref_f32(x, params):
    """Full-precision reference mirroring the PyTorch forward."""
    h = x
    for layer, (w, b) in enumerate(params):
        h = h @ w.T + b
        if layer not in NO_RELU_LAYERS:
            h = jnp.maximum(h, 0.0)
    return jnp.tanh(h)


if __name__ == "__main__":
    key = jax.random.PRNGKey(0)
    key, kx = jax.random.split(key)

    params = init_params(key)
    flat_params = prepare_kernel_params(params)

    # Main path: B divisible by tb -> no batch padding, grid of 2 "parallel"
    # steps (keeps both v7x TensorCores busy; still fine on v5e/v6e).
    B, TB = 1024, 512
    x = jax.random.uniform(kx, (B, 28 * 28), jnp.float32, -1.0, 1.0)

    out = jax.block_until_ready(autoencoder_forward(x, flat_params, tb=TB))
    assert out.shape == (B, 28 * 28)

    # Exactness vs a reference using identical bf16 matmul quantization.
    ref_bf16 = autoencoder_ref_bf16(x, params)
    assert jnp.allclose(out, ref_bf16, atol=2e-3, rtol=2e-3), \
        "mismatch vs bf16 JAX reference"

    # Sanity vs the full-f32 PyTorch-equivalent forward (loose tol: bf16 weights).
    ref_f32 = autoencoder_ref_f32(x, params)
    assert jnp.allclose(out, ref_f32, atol=5e-2, rtol=5e-2), \
        "mismatch vs f32 JAX reference"

    # Ragged-batch path: B % tb != 0 -> batch-only pad + row slice in wrapper.
    B2 = 100
    x2 = jax.random.uniform(jax.random.PRNGKey(1), (B2, 28 * 28),
                            jnp.float32, -1.0, 1.0)
    out2 = jax.block_until_ready(autoencoder_forward(x2, flat_params, tb=TB))
    assert out2.shape == (B2, 28 * 28)
    assert jnp.allclose(out2, autoencoder_ref_bf16(x2, params),
                        atol=2e-3, rtol=2e-3), "ragged-batch mismatch"

    print("KERNEL_OK")
</pallas_src>

<mosaic_0001>
module attributes {stable_mosaic.version = 11 : i64} {
  func.func @autoencoder_kernel(%arg0: i32, %arg1: memref<512x784xf32, #tpu.memory_space<vmem>>, %arg2: memref<784x128xbf16, #tpu.memory_space<vmem>>, %arg3: memref<1x128xf32, #tpu.memory_space<vmem>>, %arg4: memref<128x128xbf16, #tpu.memory_space<vmem>>, %arg5: memref<1x128xf32, #tpu.memory_space<vmem>>, %arg6: memref<128x128xbf16, #tpu.memory_space<vmem>>, %arg7: memref<1x128xf32, #tpu.memory_space<vmem>>, %arg8: memref<128x128xbf16, #tpu.memory_space<vmem>>, %arg9: memref<1x128xf32, #tpu.memory_space<vmem>>, %arg10: memref<128x128xbf16, #tpu.memory_space<vmem>>, %arg11: memref<1x128xf32, #tpu.memory_space<vmem>>, %arg12: memref<128x128xbf16, #tpu.memory_space<vmem>>, %arg13: memref<1x128xf32, #tpu.memory_space<vmem>>, %arg14: memref<128x128xbf16, #tpu.memory_space<vmem>>, %arg15: memref<1x128xf32, #tpu.memory_space<vmem>>, %arg16: memref<128x784xbf16, #tpu.memory_space<vmem>>, %arg17: memref<1x784xf32, #tpu.memory_space<vmem>>, %arg18: memref<512x784xf32, #tpu.memory_space<vmem>>) attributes {dimension_semantics = [#tpu.dimension_semantics<parallel>], iteration_bounds = array<i64: 2>, scalar_prefetch = 0 : i64, scratch_operands = 0 : i64, tpu.core_type = #tpu.core_type<tc>, window_params = [{transform_indices = @transform_0, window_bounds = array<i64: 512, 784>}, {pipeline_mode = #tpu.pipeline_mode<synchronous>, transform_indices = @transform_1, window_bounds = array<i64: 784, 128>}, {pipeline_mode = #tpu.pipeline_mode<synchronous>, transform_indices = @transform_2, window_bounds = array<i64: 1, 128>}, {pipeline_mode = #tpu.pipeline_mode<synchronous>, transform_indices = @transform_3, window_bounds = array<i64: 128, 128>}, {pipeline_mode = #tpu.pipeline_mode<synchronous>, transform_indices = @transform_4, window_bounds = array<i64: 1, 128>}, {pipeline_mode = #tpu.pipeline_mode<synchronous>, transform_indices = @transform_5, window_bounds = array<i64: 128, 128>}, {pipeline_mode = #tpu.pipeline_mode<synchronous>, transform_indices = @transform_6, window_bounds = array<i64: 1, 128>}, {pipeline_mode = #tpu.pipeline_mode<synchronous>, transform_indices = @transform_7, window_bounds = array<i64: 128, 128>}, {pipeline_mode = #tpu.pipeline_mode<synchronous>, transform_indices = @transform_8, window_bounds = array<i64: 1, 128>}, {pipeline_mode = #tpu.pipeline_mode<synchronous>, transform_indices = @transform_9, window_bounds = array<i64: 128, 128>}, {pipeline_mode = #tpu.pipeline_mode<synchronous>, transform_indices = @transform_10, window_bounds = array<i64: 1, 128>}, {pipeline_mode = #tpu.pipeline_mode<synchronous>, transform_indices = @transform_11, window_bounds = array<i64: 128, 128>}, {pipeline_mode = #tpu.pipeline_mode<synchronous>, transform_indices = @transform_12, window_bounds = array<i64: 1, 128>}, {pipeline_mode = #tpu.pipeline_mode<synchronous>, transform_indices = @transform_13, window_bounds = array<i64: 128, 128>}, {pipeline_mode = #tpu.pipeline_mode<synchronous>, transform_indices = @transform_14, window_bounds = array<i64: 1, 128>}, {pipeline_mode = #tpu.pipeline_mode<synchronous>, transform_indices = @transform_15, window_bounds = array<i64: 128, 784>}, {pipeline_mode = #tpu.pipeline_mode<synchronous>, transform_indices = @transform_16, window_bounds = array<i64: 1, 784>}, {transform_indices = @transform_17, window_bounds = array<i64: 512, 784>}]} {
    %c0 = arith.constant 0 : index
    %c0_0 = arith.constant 0 : index
    %0 = vector.load %arg1[%c0, %c0_0] : memref<512x784xf32, #tpu.memory_space<vmem>>, vector<512x784xf32>
    %c0_1 = arith.constant 0 : index
    %c0_2 = arith.constant 0 : index
    %1 = vector.load %arg2[%c0_1, %c0_2] : memref<784x128xbf16, #tpu.memory_space<vmem>>, vector<784x128xbf16>
    %c0_3 = arith.constant 0 : index
    %c0_4 = arith.constant 0 : index
    %2 = vector.load %arg3[%c0_3, %c0_4] : memref<1x128xf32, #tpu.memory_space<vmem>>, vector<1x128xf32>
    %3 = arith.truncf %0 : vector<512x784xf32> to vector<512x784xbf16>
    %cst = arith.constant dense<0.000000e+00> : vector<512x128xf32>
    %4 = tpu.matmul %3, %1, %cst {dimension_numbers = #tpu.dot_dimension_numbers<[1], [0], [0], [1], [0, 0, 1, 1], [], []>} : vector<512x784xbf16>, vector<784x128xbf16>, vector<512x128xf32> -> vector<512x128xf32>
    %5 = vector.broadcast %2 : vector<1x128xf32> to vector<512x128xf32>
    %6 = arith.addf %4, %5 : vector<512x128xf32>
    %cst_5 = arith.constant 0.000000e+00 : f32
    %7 = vector.broadcast %cst_5 : f32 to vector<512x128xf32>
    %8 = arith.maximumf %6, %7 : vector<512x128xf32>
    %c0_6 = arith.constant 0 : index
    %c0_7 = arith.constant 0 : index
    %9 = vector.load %arg4[%c0_6, %c0_7] : memref<128x128xbf16, #tpu.memory_space<vmem>>, vector<128x128xbf16>
    %c0_8 = arith.constant 0 : index
    %c0_9 = arith.constant 0 : index
    %10 = vector.load %arg5[%c0_8, %c0_9] : memref<1x128xf32, #tpu.memory_space<vmem>>, vector<1x128xf32>
    %11 = arith.truncf %8 : vector<512x128xf32> to vector<512x128xbf16>
    %cst_10 = arith.constant dense<0.000000e+00> : vector<512x128xf32>
    %12 = tpu.matmul %11, %9, %cst_10 {dimension_numbers = #tpu.dot_dimension_numbers<[1], [0], [0], [1], [0, 0, 1, 1], [], []>} : vector<512x128xbf16>, vector<128x128xbf16>, vector<512x128xf32> -> vector<512x128xf32>
    %13 = vector.broadcast %10 : vector<1x128xf32> to vector<512x128xf32>
    %14 = arith.addf %12, %13 : vector<512x128xf32>
    %cst_11 = arith.constant 0.000000e+00 : f32
    %15 = vector.broadcast %cst_11 : f32 to vector<512x128xf32>
    %16 = arith.maximumf %14, %15 : vector<512x128xf32>
    %c0_12 = arith.constant 0 : index
    %c0_13 = arith.constant 0 : index
    %17 = vector.load %arg6[%c0_12, %c0_13] : memref<128x128xbf16, #tpu.memory_space<vmem>>, vector<128x128xbf16>
    %c0_14 = arith.constant 0 : index
    %c0_15 = arith.constant 0 : index
    %18 = vector.load %arg7[%c0_14, %c0_15] : memref<1x128xf32, #tpu.memory_space<vmem>>, vector<1x128xf32>
    %19 = arith.truncf %16 : vector<512x128xf32> to vector<512x128xbf16>
    %cst_16 = arith.constant dense<0.000000e+00> : vector<512x128xf32>
    %20 = tpu.matmul %19, %17, %cst_16 {dimension_numbers = #tpu.dot_dimension_numbers<[1], [0], [0], [1], [0, 0, 1, 1], [], []>} : vector<512x128xbf16>, vector<128x128xbf16>, vector<512x128xf32> -> vector<512x128xf32>
    %21 = vector.broadcast %18 : vector<1x128xf32> to vector<512x128xf32>
    %22 = arith.addf %20, %21 : vector<512x128xf32>
    %cst_17 = arith.constant 0.000000e+00 : f32
    %23 = vector.broadcast %cst_17 : f32 to vector<512x128xf32>
    %24 = arith.maximumf %22, %23 : vector<512x128xf32>
    %c0_18 = arith.constant 0 : index
    %c0_19 = arith.constant 0 : index
    %25 = vector.load %arg8[%c0_18, %c0_19] : memref<128x128xbf16, #tpu.memory_space<vmem>>, vector<128x128xbf16>
    %c0_20 = arith.constant 0 : index
    %c0_21 = arith.constant 0 : index
    %26 = vector.load %arg9[%c0_20, %c0_21] : memref<1x128xf32, #tpu.memory_space<vmem>>, vector<1x128xf32>
    %27 = arith.truncf %24 : vector<512x128xf32> to vector<512x128xbf16>
    %cst_22 = arith.constant dense<0.000000e+00> : vector<512x128xf32>
    %28 = tpu.matmul %27, %25, %cst_22 {dimension_numbers = #tpu.dot_dimension_numbers<[1], [0], [0], [1], [0, 0, 1, 1], [], []>} : vector<512x128xbf16>, vector<128x128xbf16>, vector<512x128xf32> -> vector<512x128xf32>
    %29 = vector.broadcast %26 : vector<1x128xf32> to vector<512x128xf32>
    %30 = arith.addf %28, %29 : vector<512x128xf32>
    %c0_23 = arith.constant 0 : index
    %c0_24 = arith.constant 0 : index
    %31 = vector.load %arg10[%c0_23, %c0_24] : memref<128x128xbf16, #tpu.memory_space<vmem>>, vector<128x128xbf16>
    %c0_25 = arith.constant 0 : index
    %c0_26 = arith.constant 0 : index
    %32 = vector.load %arg11[%c0_25, %c0_26] : memref<1x128xf32, #tpu.memory_space<vmem>>, vector<1x128xf32>
    %33 = arith.truncf %30 : vector<512x128xf32> to vector<512x128xbf16>
    %cst_27 = arith.constant dense<0.000000e+00> : vector<512x128xf32>
    %34 = tpu.matmul %33, %31, %cst_27 {dimension_numbers = #tpu.dot_dimension_numbers<[1], [0], [0], [1], [0, 0, 1, 1], [], []>} : vector<512x128xbf16>, vector<128x128xbf16>, vector<512x128xf32> -> vector<512x128xf32>
    %35 = vector.broadcast %32 : vector<1x128xf32> to vector<512x128xf32>
    %36 = arith.addf %34, %35 : vector<512x128xf32>
    %cst_28 = arith.constant 0.000000e+00 : f32
    %37 = vector.broadcast %cst_28 : f32 to vector<512x128xf32>
    %38 = arith.maximumf %36, %37 : vector<512x128xf32>
    %c0_29 = arith.constant 0 : index
    %c0_30 = arith.constant 0 : index
    %39 = vector.load %arg12[%c0_29, %c0_30] : memref<128x128xbf16, #tpu.memory_space<vmem>>, vector<128x128xbf16>
    %c0_31 = arith.constant 0 : index
    %c0_32 = arith.constant 0 : index
    %40 = vector.load %arg13[%c0_31, %c0_32] : memref<1x128xf32, #tpu.memory_space<vmem>>, vector<1x128xf32>
    %41 = arith.truncf %38 : vector<512x128xf32> to vector<512x128xbf16>
    %cst_33 = arith.constant dense<0.000000e+00> : vector<512x128xf32>
    %42 = tpu.matmul %41, %39, %cst_33 {dimension_numbers = #tpu.dot_dimension_numbers<[1], [0], [0], [1], [0, 0, 1, 1], [], []>} : vector<512x128xbf16>, vector<128x128xbf16>, vector<512x128xf32> -> vector<512x128xf32>
    %43 = vector.broadcast %40 : vector<1x128xf32> to vector<512x128xf32>
    %44 = arith.addf %42, %43 : vector<512x128xf32>
    %cst_34 = arith.constant 0.000000e+00 : f32
    %45 = vector.broadcast %cst_34 : f32 to vector<512x128xf32>
    %46 = arith.maximumf %44, %45 : vector<512x128xf32>
    %c0_35 = arith.constant 0 : index
    %c0_36 = arith.constant 0 : index
    %47 = vector.load %arg14[%c0_35, %c0_36] : memref<128x128xbf16, #tpu.memory_space<vmem>>, vector<128x128xbf16>
    %c0_37 = arith.constant 0 : index
    %c0_38 = arith.constant 0 : index
    %48 = vector.load %arg15[%c0_37, %c0_38] : memref<1x128xf32, #tpu.memory_space<vmem>>, vector<1x128xf32>
    %49 = arith.truncf %46 : vector<512x128xf32> to vector<512x128xbf16>
    %cst_39 = arith.constant dense<0.000000e+00> : vector<512x128xf32>
    %50 = tpu.matmul %49, %47, %cst_39 {dimension_numbers = #tpu.dot_dimension_numbers<[1], [0], [0], [1], [0, 0, 1, 1], [], []>} : vector<512x128xbf16>, vector<128x128xbf16>, vector<512x128xf32> -> vector<512x128xf32>
    %51 = vector.broadcast %48 : vector<1x128xf32> to vector<512x128xf32>
    %52 = arith.addf %50, %51 : vector<512x128xf32>
    %cst_40 = arith.constant 0.000000e+00 : f32
    %53 = vector.broadcast %cst_40 : f32 to vector<512x128xf32>
    %54 = arith.maximumf %52, %53 : vector<512x128xf32>
    %c0_41 = arith.constant 0 : index
    %c0_42 = arith.constant 0 : index
    %55 = vector.load %arg16[%c0_41, %c0_42] : memref<128x784xbf16, #tpu.memory_space<vmem>>, vector<128x784xbf16>
    %c0_43 = arith.constant 0 : index
    %c0_44 = arith.constant 0 : index
    %56 = vector.load %arg17[%c0_43, %c0_44] : memref<1x784xf32, #tpu.memory_space<vmem>>, vector<1x784xf32>
    %57 = arith.truncf %54 : vector<512x128xf32> to vector<512x128xbf16>
    %cst_45 = arith.constant dense<0.000000e+00> : vector<512x784xf32>
    %58 = tpu.matmul %57, %55, %cst_45 {dimension_numbers = #tpu.dot_dimension_numbers<[1], [0], [0], [1], [0, 0, 1, 1], [], []>} : vector<512x128xbf16>, vector<128x784xbf16>, vector<512x784xf32> -> vector<512x784xf32>
    %59 = vector.broadcast %56 : vector<1x784xf32> to vector<512x784xf32>
    %60 = arith.addf %58, %59 : vector<512x784xf32>
    %61 = math.tanh %60 : vector<512x784xf32>
    %c0_46 = arith.constant 0 : index
    %c0_47 = arith.constant 0 : index
    %62 = vector.load %arg18[%c0_46, %c0_47] : memref<512x784xf32, #tpu.memory_space<vmem>>, vector<512x784xf32>
    tpu.vector_store %arg18[%c0_46, %c0_47], %61 {strides = array<i32>} : memref<512x784xf32, #tpu.memory_space<vmem>>, vector<512x784xf32>,
    return
  }
  func.func @transform_0(%arg0: i32) -> (i32, i32) {
    %c0_i32 = arith.constant 0 : i32
    %c0_i32_0 = arith.constant 0 : i32
    return %arg0, %c0_i32 : i32, i32
  }
  func.func @transform_1(%arg0: i32) -> (i32, i32) {
    %c0_i32 = arith.constant 0 : i32
    %c0_i32_0 = arith.constant 0 : i32
    %c0_i32_1 = arith.constant 0 : i32
    return %c0_i32, %c0_i32_0 : i32, i32
  }
  func.func @transform_2(%arg0: i32) -> (i32, i32) {
    %c0_i32 = arith.constant 0 : i32
    %c0_i32_0 = arith.constant 0 : i32
    %c0_i32_1 = arith.constant 0 : i32
    return %c0_i32, %c0_i32_0 : i32, i32
  }
  func.func @transform_3(%arg0: i32) -> (i32, i32) {
    %c0_i32 = arith.constant 0 : i32
    %c0_i32_0 = arith.constant 0 : i32
    %c0_i32_1 = arith.constant 0 : i32
    return %c0_i32, %c0_i32_0 : i32, i32
  }
  func.func @transform_4(%arg0: i32) -> (i32, i32) {
    %c0_i32 = arith.constant 0 : i32
    %c0_i32_0 = arith.constant 0 : i32
    %c0_i32_1 = arith.constant 0 : i32
    return %c0_i32, %c0_i32_0 : i32, i32
  }
  func.func @transform_5(%arg0: i32) -> (i32, i32) {
    %c0_i32 = arith.constant 0 : i32
    %c0_i32_0 = arith.constant 0 : i32
    %c0_i32_1 = arith.constant 0 : i32
    return %c0_i32, %c0_i32_0 : i32, i32
  }
  func.func @transform_6(%arg0: i32) -> (i32, i32) {
    %c0_i32 = arith.constant 0 : i32
    %c0_i32_0 = arith.constant 0 : i32
    %c0_i32_1 = arith.constant 0 : i32
    return %c0_i32, %c0_i32_0 : i32, i32
  }
  func.func @transform_7(%arg0: i32) -> (i32, i32) {
    %c0_i32 = arith.constant 0 : i32
    %c0_i32_0 = arith.constant 0 : i32
    %c0_i32_1 = arith.constant 0 : i32
    return %c0_i32, %c0_i32_0 : i32, i32
  }
  func.func @transform_8(%arg0: i32) -> (i32, i32) {
    %c0_i32 = arith.constant 0 : i32
    %c0_i32_0 = arith.constant 0 : i32
    %c0_i32_1 = arith.constant 0 : i32
    return %c0_i32, %c0_i32_0 : i32, i32
  }
  func.func @transform_9(%arg0: i32) -> (i32, i32) {
    %c0_i32 = arith.constant 0 : i32
    %c0_i32_0 = arith.constant 0 : i32
    %c0_i32_1 = arith.constant 0 : i32
    return %c0_i32, %c0_i32_0 : i32, i32
  }
  func.func @transform_10(%arg0: i32) -> (i32, i32) {
    %c0_i32 = arith.constant 0 : i32
    %c0_i32_0 = arith.constant 0 : i32
    %c0_i32_1 = arith.constant 0 : i32
    return %c0_i32, %c0_i32_0 : i32, i32
  }
  func.func @transform_11(%arg0: i32) -> (i32, i32) {
    %c0_i32 = arith.constant 0 : i32
    %c0_i32_0 = arith.constant 0 : i32
    %c0_i32_1 = arith.constant 0 : i32
    return %c0_i32, %c0_i32_0 : i32, i32
  }
  func.func @transform_12(%arg0: i32) -> (i32, i32) {
    %c0_i32 = arith.constant 0 : i32
    %c0_i32_0 = arith.constant 0 : i32
    %c0_i32_1 = arith.constant 0 : i32
    return %c0_i32, %c0_i32_0 : i32, i32
  }
  func.func @transform_13(%arg0: i32) -> (i32, i32) {
    %c0_i32 = arith.constant 0 : i32
    %c0_i32_0 = arith.constant 0 : i32
    %c0_i32_1 = arith.constant 0 : i32
    return %c0_i32, %c0_i32_0 : i32, i32
  }
  func.func @transform_14(%arg0: i32) -> (i32, i32) {
    %c0_i32 = arith.constant 0 : i32
    %c0_i32_0 = arith.constant 0 : i32
    %c0_i32_1 = arith.constant 0 : i32
    return %c0_i32, %c0_i32_0 : i32, i32
  }
  func.func @transform_15(%arg0: i32) -> (i32, i32) {
    %c0_i32 = arith.constant 0 : i32
    %c0_i32_0 = arith.constant 0 : i32
    %c0_i32_1 = arith.constant 0 : i32
    return %c0_i32, %c0_i32_0 : i32, i32
  }
  func.func @transform_16(%arg0: i32) -> (i32, i32) {
    %c0_i32 = arith.constant 0 : i32
    %c0_i32_0 = arith.constant 0 : i32
    %c0_i32_1 = arith.constant 0 : i32
    return %c0_i32, %c0_i32_0 : i32, i32
  }
  func.func @transform_17(%arg0: i32) -> (i32, i32) {
    %c0_i32 = arith.constant 0 : i32
    %c0_i32_0 = arith.constant 0 : i32
    return %arg0, %c0_i32 : i32, i32
  }
}

</mosaic_0001>

<llo_original>
// kernel: autoencoder_forward.1
$region0: #{autoencoder_forward.1}
  #allocation0 [shape = 'u32[]', space=smem, size = 0x4, offset = 0x4, fixed_abs, tag = 'smem constant byte address 0x4 - core index']
  #allocation1 [shape = 'u32[144,128]{1,0:T(1,128)}', space=vmem, size = 0x12000, scoped, tag = 'internal scratch']
  %s0 = inlined_call_operand.vmem [shape: f32[1024,784], index: 0, kind: input, shape index: {}]
  %s1 = inlined_call_operand.vmem [shape: bf16[784,128], index: 1, kind: input, shape index: {}]
  %s2 = inlined_call_operand.vmem [shape: f32[1,128], index: 2, kind: input, shape index: {}]
  %s3 = inlined_call_operand.vmem [shape: bf16[128,128], index: 3, kind: input, shape index: {}]
  %s4 = inlined_call_operand.vmem [shape: f32[1,128], index: 4, kind: input, shape index: {}]
  %s5 = inlined_call_operand.vmem [shape: bf16[128,128], index: 5, kind: input, shape index: {}]
  %s6 = inlined_call_operand.vmem [shape: f32[1,128], index: 6, kind: input, shape index: {}]
  %s7 = inlined_call_operand.vmem [shape: bf16[128,128], index: 7, kind: input, shape index: {}]
  %s8 = inlined_call_operand.vmem [shape: f32[1,128], index: 8, kind: input, shape index: {}]
  %s9 = inlined_call_operand.vmem [shape: bf16[128,128], index: 9, kind: input, shape index: {}]
  %s10 = inlined_call_operand.vmem [shape: f32[1,128], index: 10, kind: input, shape index: {}]
  %s11 = inlined_call_operand.vmem [shape: bf16[128,128], index: 11, kind: input, shape index: {}]
  %s12 = inlined_call_operand.vmem [shape: f32[1,128], index: 12, kind: input, shape index: {}]
  %s13 = inlined_call_operand.vmem [shape: bf16[128,128], index: 13, kind: input, shape index: {}]
  %s14 = inlined_call_operand.vmem [shape: f32[1,128], index: 14, kind: input, shape index: {}]
  %s15 = inlined_call_operand.vmem [shape: bf16[128,784], index: 15, kind: input, shape index: {}]
  %s16 = inlined_call_operand.vmem [shape: f32[1,784], index: 16, kind: input, shape index: {}]
  %s17 = inlined_call_operand.vmem [shape: f32[1024,784], index: 17, kind: output, shape index: {}]
  %s18 = sld [smem:[#allocation0]]
  $region101: #{autoencoder_forward.1} parent=0
    _
  %s20 = ssub.s32 1, %s18
  %s21 = scalar_select 0, %s20, %s18
  loop: start=0, step=1, limit=4
  $region2: #{autoencoder_forward.1} parent=0 // loop_pre_header
    _
  $region3: #{autoencoder_forward.1} parent=0 // loop_header
    %s23 = sphi 0, %s27
    %p24 = scmp.ge.s32.totalorder %s23, 4
    %s33 = sphi 0, %s35
    %s36 = sphi 0, %s33
    %s37 = sphi 0, %s36
    %s53 = sphi 0, %s37
    %s57 = sphi 0, %s57
    %s59 = sphi 0, %s57
    %s60 = sphi 0, %s59
    %s74 = sphi 0, %s60
    %s78 = sphi 0, %s78
    %s80 = sphi 0, %s78
    %s81 = sphi 0, %s80
    %s95 = sphi 0, %s81
    %s99 = sphi 0, %s99
    %s101 = sphi 0, %s99
    %s102 = sphi 0, %s101
    %s116 = sphi 0, %s102
    %s120 = sphi 0, %s120
    %s122 = sphi 0, %s120
    %s123 = sphi 0, %s122
    %s137 = sphi 0, %s123
    %s141 = sphi 0, %s141
    %s143 = sphi 0, %s141
    %s144 = sphi 0, %s143
    %s158 = sphi 0, %s144
    %s162 = sphi 0, %s162
    %s164 = sphi 0, %s162
    %s165 = sphi 0, %s164
    %s179 = sphi 0, %s165
    %s183 = sphi 0, %s183
    %s185 = sphi 0, %s183
    %s186 = sphi 0, %s185
    %s200 = sphi 0, %s186
    %s204 = sphi 0, %s204
    %s206 = sphi 0, %s204
    %s207 = sphi 0, %s206
    %s221 = sphi 0, %s207
    %s225 = sphi 0, %s225
    %s227 = sphi 0, %s225
    %s228 = sphi 0, %s227
    %s242 = sphi 0, %s228
    %s246 = sphi 0, %s246
    %s248 = sphi 0, %s246
    %s249 = sphi 0, %s248
    %s263 = sphi 0, %s249
    %s267 = sphi 0, %s267
    %s269 = sphi 0, %s267
    %s270 = sphi 0, %s269
    %s284 = sphi 0, %s270
    %s288 = sphi 0, %s288
    %s290 = sphi 0, %s288
    %s291 = sphi 0, %s290
    %s305 = sphi 0, %s291
    %s309 = sphi 0, %s309
    %s311 = sphi 0, %s309
    %s312 = sphi 0, %s311
    %s326 = sphi 0, %s312
    %s330 = sphi 0, %s330
    %s332 = sphi 0, %s330
    %s333 = sphi 0, %s332
    %s347 = sphi 0, %s333
    %s351 = sphi 0, %s351
    %s353 = sphi 0, %s351
    %s354 = sphi 0, %s353
    %s368 = sphi 0, %s354
    %s372 = sphi 0, %s372
    %s374 = sphi 0, %s372
    %s375 = sphi 0, %s374
    %s389 = sphi 0, %s375
    %s395 = sphi 0, %s397
    %s398 = sphi 0, %s395
    %s399 = sphi 0, %s398
    %s415 = sphi 0, %s399
  $region4: #{autoencoder_forward.1} parent=0 // loop_header_branch
    %26 = sbr.rel (%p24) target = $region8
  $region5: #{autoencoder_forward.1} parent=0 // loop_body
    %s28 = ssub.s32 %s23, 1
    %s29 = ssub.s32 %s23, 2
    %s30 = sadd.s32 %s23, 1
    %s31 = ssub.s32 %s23, %s30
    %p32 = scmp.eq.s32.totalorder %s31, 0
    %s34 = sadd.s32 %s33, 1
    %s35 = scalar_select %p32, %s33, %s34
    %p38 = pneg %p32
    %p39 = scmp.eq.s32.totalorder %s23, 1
    %p40 = por %p38, %p39
    %p41 = scmp.ne.s32.totalorder %s33, %s36
    %p42 = scmp.eq.s32.totalorder %s23, 0
    %p43 = por %p41, %p42
    %p44 = scmp.ne.s32.totalorder %s33, %s36
    %p45 = scmp.eq.s32.totalorder %s28, 1
    %p46 = por %p44, %p45
    %p47 = scmp.ne.s32.totalorder %s36, %s37
    %p48 = scmp.eq.s32.totalorder %s28, 0
    %p49 = por %p47, %p48
    %p50 = scmp.ne.s32.totalorder %s36, %s37
    %p51 = scmp.eq.s32.totalorder %s29, 1
    %p52 = por %p50, %p51
    %p54 = scmp.ne.s32.totalorder %s37, %s53
    %p55 = scmp.eq.s32.totalorder %s29, 0
    %p56 = por %p54, %p55
    %s58 = sadd.s32 %s57, 1
    %p61 = scmp.eq.s32.totalorder %s23, 1
    %p62 = scmp.ne.s32.totalorder %s57, %s59
    %p63 = scmp.eq.s32.totalorder %s23, 0
    %p64 = por %p62, %p63
    %p65 = scmp.ne.s32.totalorder %s57, %s59
    %p66 = scmp.eq.s32.totalorder %s28, 1
    %p67 = por %p65, %p66
    %p68 = scmp.ne.s32.totalorder %s59, %s60
    %p69 = scmp.eq.s32.totalorder %s28, 0
    %p70 = por %p68, %p69
    %p71 = scmp.ne.s32.totalorder %s59, %s60
    %p72 = scmp.eq.s32.totalorder %s29, 1
    %p73 = por %p71, %p72
    %p75 = scmp.ne.s32.totalorder %s60, %s74
    %p76 = scmp.eq.s32.totalorder %s29, 0
    %p77 = por %p75, %p76
    %s79 = sadd.s32 %s78, 1
    %p82 = scmp.eq.s32.totalorder %s23, 1
    %p83 = scmp.ne.s32.totalorder %s78, %s80
    %p84 = scmp.eq.s32.totalorder %s23, 0
    %p85 = por %p83, %p84
    %p86 = scmp.ne.s32.totalorder %s78, %s80
    %p87 = scmp.eq.s32.totalorder %s28, 1
    %p88 = por %p86, %p87
    %p89 = scmp.ne.s32.totalorder %s80, %s81
    %p90 = scmp.eq.s32.totalorder %s28, 0
    %p91 = por %p89, %p90
    %p92 = scmp.ne.s32.totalorder %s80, %s81
    %p93 = scmp.eq.s32.totalorder %s29, 1
    %p94 = por %p92, %p93
    %p96 = scmp.ne.s32.totalorder %s81, %s95
    %p97 = scmp.eq.s32.totalorder %s29, 0
    %p98 = por %p96, %p97
    %s100 = sadd.s32 %s99, 1
    %p103 = scmp.eq.s32.totalorder %s23, 1
    %p104 = scmp.ne.s32.totalorder %s99, %s101
    %p105 = scmp.eq.s32.totalorder %s23, 0
    %p106 = por %p104, %p105
    %p107 = scmp.ne.s32.totalorder %s99, %s101
    %p108 = scmp.eq.s32.totalorder %s28, 1
    %p109 = por %p107, %p108
    %p110 = scmp.ne.s32.totalorder %s101, %s102
    %p111 = scmp.eq.s32.totalorder %s28, 0
    %p112 = por %p110, %p111
    %p113 = scmp.ne.s32.totalorder %s101, %s102
    %p114 = scmp.eq.s32.totalorder %s29, 1
    %p115 = por %p113, %p114
    %p117 = scmp.ne.s32.totalorder %s102, %s116
    %p118 = scmp.eq.s32.totalorder %s29, 0
    %p119 = por %p117, %p118
    %s121 = sadd.s32 %s120, 1
    %p124 = scmp.eq.s32.totalorder %s23, 1
    %p125 = scmp.ne.s32.totalorder %s120, %s122
    %p126 = scmp.eq.s32.totalorder %s23, 0
    %p127 = por %p125, %p126
    %p128 = scmp.ne.s32.totalorder %s120, %s122
    %p129 = scmp.eq.s32.totalorder %s28, 1
    %p130 = por %p128, %p129
    %p131 = scmp.ne.s32.totalorder %s122, %s123
    %p132 = scmp.eq.s32.totalorder %s28, 0
    %p133 = por %p131, %p132
    %p134 = scmp.ne.s32.totalorder %s122, %s123
    %p135 = scmp.eq.s32.totalorder %s29, 1
    %p136 = por %p134, %p135
    %p138 = scmp.ne.s32.totalorder %s123, %s137
    %p139 = scmp.eq.s32.totalorder %s29, 0
    %p140 = por %p138, %p139
    %s142 = sadd.s32 %s141, 1
    %p145 = scmp.eq.s32.totalorder %s23, 1
    %p146 = scmp.ne.s32.totalorder %s141, %s143
    %p147 = scmp.eq.s32.totalorder %s23, 0
    %p148 = por %p146, %p147
    %p149 = scmp.ne.s32.totalorder %s141, %s143
    %p150 = scmp.eq.s32.totalorder %s28, 1
    %p151 = por %p149, %p150
    %p152 = scmp.ne.s32.totalorder %s143, %s144
    %p153 = scmp.eq.s32.totalorder %s28, 0
    %p154 = por %p152, %p153
    %p155 = scmp.ne.s32.totalorder %s143, %s144
    %p156 = scmp.eq.s32.totalorder %s29, 1
    %p157 = por %p155, %p156
    %p159 = scmp.ne.s32.totalorder %s144, %s158
    %p160 = scmp.eq.s32.totalorder %s29, 0
    %p161 = por %p159, %p160
    %s163 = sadd.s32 %s162, 1
    %p166 = scmp.eq.s32.totalorder %s23, 1
    %p167 = scmp.ne.s32.totalorder %s162, %s164
    %p168 = scmp.eq.s32.totalorder %s23, 0
    %p169 = por %p167, %p168
    %p170 = scmp.ne.s32.totalorder %s162, %s164
    %p171 = scmp.eq.s32.totalorder %s28, 1
    %p172 = por %p170, %p171
    %p173 = scmp.ne.s32.totalorder %s164, %s165
    %p174 = scmp.eq.s32.totalorder %s28, 0
    %p175 = por %p173, %p174
    %p176 = scmp.ne.s32.totalorder %s164, %s165
    %p177 = scmp.eq.s32.totalorder %s29, 1
    %p178 = por %p176, %p177
    %p180 = scmp.ne.s32.totalorder %s165, %s179
    %p181 = scmp.eq.s32.totalorder %s29, 0
    %p182 = por %p180, %p181
    %s184 = sadd.s32 %s183, 1
    %p187 = scmp.eq.s32.totalorder %s23, 1
    %p188 = scmp.ne.s32.totalorder %s183, %s185
    %p189 = scmp.eq.s32.totalorder %s23, 0
    %p190 = por %p188, %p189
    %p191 = scmp.ne.s32.totalorder %s183, %s185
    %p192 = scmp.eq.s32.totalorder %s28, 1
    %p193 = por %p191, %p192
    %p194 = scmp.ne.s32.totalorder %s185, %s186
    %p195 = scmp.eq.s32.totalorder %s28, 0
    %p196 = por %p194, %p195
    %p197 = scmp.ne.s32.totalorder %s185, %s186
    %p198 = scmp.eq.s32.totalorder %s29, 1
    %p199 = por %p197, %p198
    %p201 = scmp.ne.s32.totalorder %s186, %s200
    %p202 = scmp.eq.s32.totalorder %s29, 0
    %p203 = por %p201, %p202
    %s205 = sadd.s32 %s204, 1
    %p208 = scmp.eq.s32.totalorder %s23, 1
    %p209 = scmp.ne.s32.totalorder %s204, %s206
    %p210 = scmp.eq.s32.totalorder %s23, 0
    %p211 = por %p209, %p210
    %p212 = scmp.ne.s32.totalorder %s204, %s206
    %p213 = scmp.eq.s32.totalorder %s28, 1
    %p214 = por %p212, %p213
    %p215 = scmp.ne.s32.totalorder %s206, %s207
    %p216 = scmp.eq.s32.totalorder %s28, 0
    %p217 = por %p215, %p216
    %p218 = scmp.ne.s32.totalorder %s206, %s207
    %p219 = scmp.eq.s32.totalorder %s29, 1
    %p220 = por %p218, %p219
    %p222 = scmp.ne.s32.totalorder %s207, %s221
    %p223 = scmp.eq.s32.totalorder %s29, 0
    %p224 = por %p222, %p223
    %s226 = sadd.s32 %s225, 1
    %p229 = scmp.eq.s32.totalorder %s23, 1
    %p230 = scmp.ne.s32.totalorder %s225, %s227
    %p231 = scmp.eq.s32.totalorder %s23, 0
    %p232 = por %p230, %p231
    %p233 = scmp.ne.s32.totalorder %s225, %s227
    %p234 = scmp.eq.s32.totalorder %s28, 1
    %p235 = por %p233, %p234
    %p236 = scmp.ne.s32.totalorder %s227, %s228
    %p237 = scmp.eq.s32.totalorder %s28, 0
    %p238 = por %p236, %p237
    %p239 = scmp.ne.s32.totalorder %s227, %s228
    %p240 = scmp.eq.s32.totalorder %s29, 1
    %p241 = por %p239, %p240
    %p243 = scmp.ne.s32.totalorder %s228, %s242
    %p244 = scmp.eq.s32.totalorder %s29, 0
    %p245 = por %p243, %p244
    %s247 = sadd.s32 %s246, 1
    %p250 = scmp.eq.s32.totalorder %s23, 1
    %p251 = scmp.ne.s32.totalorder %s246, %s248
    %p252 = scmp.eq.s32.totalorder %s23, 0
    %p253 = por %p251, %p252
    %p254 = scmp.ne.s32.totalorder %s246, %s248
    %p255 = scmp.eq.s32.totalorder %s28, 1
    %p256 = por %p254, %p255
    %p257 = scmp.ne.s32.totalorder %s248, %s249
    %p258 = scmp.eq.s32.totalorder %s28, 0
    %p259 = por %p257, %p258
    %p260 = scmp.ne.s32.totalorder %s248, %s249
    %p261 = scmp.eq.s32.totalorder %s29, 1
    %p262 = por %p260, %p261
    %p264 = scmp.ne.s32.totalorder %s249, %s263
    %p265 = scmp.eq.s32.totalorder %s29, 0
    %p266 = por %p264, %p265
    %s268 = sadd.s32 %s267, 1
    %p271 = scmp.eq.s32.totalorder %s23, 1
    %p272 = scmp.ne.s32.totalorder %s267, %s269
    %p273 = scmp.eq.s32.totalorder %s23, 0
    %p274 = por %p272, %p273
    %p275 = scmp.ne.s32.totalorder %s267, %s269
    %p276 = scmp.eq.s32.totalorder %s28, 1
    %p277 = por %p275, %p276
    %p278 = scmp.ne.s32.totalorder %s269, %s270
    %p279 = scmp.eq.s32.totalorder %s28, 0
    %p280 = por %p278, %p279
    %p281 = scmp.ne.s32.totalorder %s269, %s270
    %p282 = scmp.eq.s32.totalorder %s29, 1
    %p283 = por %p281, %p282
    %p285 = scmp.ne.s32.totalorder %s270, %s284
    %p286 = scmp.eq.s32.totalorder %s29, 0
    %p287 = por %p285, %p286
    %s289 = sadd.s32 %s288, 1
    %p292 = scmp.eq.s32.totalorder %s23, 1
    %p293 = scmp.ne.s32.totalorder %s288, %s290
    %p294 = scmp.eq.s32.totalorder %s23, 0
    %p295 = por %p293, %p294
    %p296 = scmp.ne.s32.totalorder %s288, %s290
    %p297 = scmp.eq.s32.totalorder %s28, 1
    %p298 = por %p296, %p297
    %p299 = scmp.ne.s32.totalorder %s290, %s291
    %p300 = scmp.eq.s32.totalorder %s28, 0
    %p301 = por %p299, %p300
    %p302 = scmp.ne.s32.totalorder %s290, %s291
    %p303 = scmp.eq.s32.totalorder %s29, 1
    %p304 = por %p302, %p303
    %p306 = scmp.ne.s32.totalorder %s291, %s305
    %p307 = scmp.eq.s32.totalorder %s29, 0
    %p308 = por %p306, %p307
    %s310 = sadd.s32 %s309, 1
    %p313 = scmp.eq.s32.totalorder %s23, 1
    %p314 = scmp.ne.s32.totalorder %s309, %s311
    %p315 = scmp.eq.s32.totalorder %s23, 0
    %p316 = por %p314, %p315
    %p317 = scmp.ne.s32.totalorder %s309, %s311
    %p318 = scmp.eq.s32.totalorder %s28, 1
    %p319 = por %p317, %p318
    %p320 = scmp.ne.s32.totalorder %s311, %s312
    %p321 = scmp.eq.s32.totalorder %s28, 0
    %p322 = por %p320, %p321
    %p323 = scmp.ne.s32.totalorder %s311, %s312
    %p324 = scmp.eq.s32.totalorder %s29, 1
    %p325 = por %p323, %p324
    %p327 = scmp.ne.s32.totalorder %s312, %s326
    %p328 = scmp.eq.s32.totalorder %s29, 0
    %p329 = por %p327, %p328
    %s331 = sadd.s32 %s330, 1
    %p334 = scmp.eq.s32.totalorder %s23, 1
    %p335 = scmp.ne.s32.totalorder %s330, %s332
    %p336 = scmp.eq.s32.totalorder %s23, 0
    %p337 = por %p335, %p336
    %p338 = scmp.ne.s32.totalorder %s330, %s332
    %p339 = scmp.eq.s32.totalorder %s28, 1
    %p340 = por %p338, %p339
    %p341 = scmp.ne.s32.totalorder %s332, %s333
    %p342 = scmp.eq.s32.totalorder %s28, 0
    %p343 = por %p341, %p342
    %p344 = scmp.ne.s32.totalorder %s332, %s333
    %p345 = scmp.eq.s32.totalorder %s29, 1
    %p346 = por %p344, %p345
    %p348 = scmp.ne.s32.totalorder %s333, %s347
    %p349 = scmp.eq.s32.totalorder %s29, 0
    %p350 = por %p348, %p349
    %s352 = sadd.s32 %s351, 1
    %p355 = scmp.eq.s32.totalorder %s23, 1
    %p356 = scmp.ne.s32.totalorder %s351, %s353
    %p357 = scmp.eq.s32.totalorder %s23, 0
    %p358 = por %p356, %p357
    %p359 = scmp.ne.s32.totalorder %s351, %s353
    %p360 = scmp.eq.s32.totalorder %s28, 1
    %p361 = por %p359, %p360
    %p362 = scmp.ne.s32.totalorder %s353, %s354
    %p363 = scmp.eq.s32.totalorder %s28, 0
    %p364 = por %p362, %p363
    %p365 = scmp.ne.s32.totalorder %s353, %s354
    %p366 = scmp.eq.s32.totalorder %s29, 1
    %p367 = por %p365, %p366
    %p369 = scmp.ne.s32.totalorder %s354, %s368
    %p370 = scmp.eq.s32.totalorder %s29, 0
    %p371 = por %p369, %p370
    %s373 = sadd.s32 %s372, 1
    %p376 = scmp.eq.s32.totalorder %s23, 1
    %p377 = scmp.ne.s32.totalorder %s372, %s374
    %p378 = scmp.eq.s32.totalorder %s23, 0
    %p379 = por %p377, %p378
    %p380 = scmp.ne.s32.totalorder %s372, %s374
    %p381 = scmp.eq.s32.totalorder %s28, 1
    %p382 = por %p380, %p381
    %p383 = scmp.ne.s32.totalorder %s374, %s375
    %p384 = scmp.eq.s32.totalorder %s28, 0
    %p385 = por %p383, %p384
    %p386 = scmp.ne.s32.totalorder %s374, %s375
    %p387 = scmp.eq.s32.totalorder %s29, 1
    %p388 = por %p386, %p387
    %p390 = scmp.ne.s32.totalorder %s375, %s389
    %p391 = scmp.eq.s32.totalorder %s29, 0
    %p392 = por %p390, %p391
    %s393 = ssub.s32 %s23, %s30
    %p394 = scmp.eq.s32.totalorder %s393, 0
    %s396 = sadd.s32 %s395, 1
    %s397 = scalar_select %p394, %s395, %s396
    %p400 = pneg %p394
    %p401 = scmp.eq.s32.totalorder %s23, 1
    %p402 = por %p400, %p401
    %p403 = scmp.ne.s32.totalorder %s395, %s398
    %p404 = scmp.eq.s32.totalorder %s23, 0
    %p405 = por %p403, %p404
    %p406 = scmp.ne.s32.totalorder %s395, %s398
    %p407 = scmp.eq.s32.totalorder %s28, 1
    %p408 = por %p406, %p407
    %p409 = scmp.ne.s32.totalorder %s398, %s399
    %p410 = scmp.eq.s32.totalorder %s28, 0
    %p411 = por %p409, %p410
    %p412 = scmp.ne.s32.totalorder %s398, %s399
    %p413 = scmp.eq.s32.totalorder %s29, 1
    %p414 = por %p412, %p413
    %p416 = scmp.ne.s32.totalorder %s399, %s415
    %p417 = scmp.eq.s32.totalorder %s29, 0
    %p418 = por %p416, %p417
    %p419 = scmp.le.s32.totalorder 1, %s23
    %p420 = scmp.lt.s32.totalorder %s23, 3
    %p421 = pnand %p419, %p420
    %p422 = pneg %p421
    // Predicated region
    $region9: #{autoencoder_forward.1} parent=5 // pred_check
      _
    $region10: #{autoencoder_forward.1} parent=5 // pred_check_branch
      %424 = sbr.rel (%p421) target = $region12
    $region11: #{autoencoder_forward.1} parent=5 // pred_region
      %s425 = ssub.s32 %s23, 1
      // Predicated region
      $region13: #{autoencoder_forward.1} parent=11 // pred_check
        %p426 = pneg %p70
      $region14: #{autoencoder_forward.1} parent=11 // pred_check_branch
        %428 = sbr.rel (%p426) target = $region16
      $region15: #{autoencoder_forward.1} parent=11 // pred_region
        _
      $region16: #{autoencoder_forward.1} parent=11 // pred_fallthru
        _
      // Predicated region
      $region17: #{autoencoder_forward.1} parent=11 // pred_check
        %p429 = pneg %p91
      $region18: #{autoencoder_forward.1} parent=11 // pred_check_branch
        %431 = sbr.rel (%p429) target = $region20
      $region19: #{autoencoder_forward.1} parent=11 // pred_region
        _
      $region20: #{autoencoder_forward.1} parent=11 // pred_fallthru
        _
      // Predicated region
      $region21: #{autoencoder_forward.1} parent=11 // pred_check
        %p432 = pneg %p112
      $region22: #{autoencoder_forward.1} parent=11 // pred_check_branch
        %434 = sbr.rel (%p432) target = $region24
      $region23: #{autoencoder_forward.1} parent=11 // pred_region
        _
      $region24: #{autoencoder_forward.1} parent=11 // pred_fallthru
        _
      // Predicated region
      $region25: #{autoencoder_forward.1} parent=11 // pred_check
        %p435 = pneg %p133
      $region26: #{autoencoder_forward.1} parent=11 // pred_check_branch
        %437 = sbr.rel (%p435) target = $region28
      $region27: #{autoencoder_forward.1} parent=11 // pred_region
        _
      $region28: #{autoencoder_forward.1} parent=11 // pred_fallthru
        _
      // Predicated region
      $region29: #{autoencoder_forward.1} parent=11 // pred_check
        %p438 = pneg %p154
      $region30: #{autoencoder_forward.1} parent=11 // pred_check_branch
        %440 = sbr.rel (%p438) target = $region32
      $region31: #{autoencoder_forward.1} parent=11 // pred_region
        _
      $region32: #{autoencoder_forward.1} parent=11 // pred_fallthru
        _
      // Predicated region
      $region33: #{autoencoder_forward.1} parent=11 // pred_check
        %p441 = pneg %p175
      $region34: #{autoencoder_forward.1} parent=11 // pred_check_branch
        %443 = sbr.rel (%p441) target = $region36
      $region35: #{autoencoder_forward.1} parent=11 // pred_region
        _
      $region36: #{autoencoder_forward.1} parent=11 // pred_fallthru
        _
      // Predicated region
      $region37: #{autoencoder_forward.1} parent=11 // pred_check
        %p444 = pneg %p196
      $region38: #{autoencoder_forward.1} parent=11 // pred_check_branch
        %446 = sbr.rel (%p444) target = $region40
      $region39: #{autoencoder_forward.1} parent=11 // pred_region
        _
      $region40: #{autoencoder_forward.1} parent=11 // pred_fallthru
        _
      // Predicated region
      $region41: #{autoencoder_forward.1} parent=11 // pred_check
        %p447 = pneg %p217
      $region42: #{autoencoder_forward.1} parent=11 // pred_check_branch
        %449 = sbr.rel (%p447) target = $region44
      $region43: #{autoencoder_forward.1} parent=11 // pred_region
        _
      $region44: #{autoencoder_forward.1} parent=11 // pred_fallthru
        _
      // Predicated region
      $region45: #{autoencoder_forward.1} parent=11 // pred_check
        %p450 = pneg %p238
      $region46: #{autoencoder_forward.1} parent=11 // pred_check_branch
        %452 = sbr.rel (%p450) target = $region48
      $region47: #{autoencoder_forward.1} parent=11 // pred_region
        _
      $region48: #{autoencoder_forward.1} parent=11 // pred_fallthru
        _
      // Predicated region
      $region49: #{autoencoder_forward.1} parent=11 // pred_check
        %p453 = pneg %p259
      $region50: #{autoencoder_forward.1} parent=11 // pred_check_branch
        %455 = sbr.rel (%p453) target = $region52
      $region51: #{autoencoder_forward.1} parent=11 // pred_region
        _
      $region52: #{autoencoder_forward.1} parent=11 // pred_fallthru
        _
      // Predicated region
      $region53: #{autoencoder_forward.1} parent=11 // pred_check
        %p456 = pneg %p280
      $region54: #{autoencoder_forward.1} parent=11 // pred_check_branch
        %458 = sbr.rel (%p456) target = $region56
      $region55: #{autoencoder_forward.1} parent=11 // pred_region
        _
      $region56: #{autoencoder_forward.1} parent=11 // pred_fallthru
        _
      // Predicated region
      $region57: #{autoencoder_forward.1} parent=11 // pred_check
        %p459 = pneg %p301
      $region58: #{autoencoder_forward.1} parent=11 // pred_check_branch
        %461 = sbr.rel (%p459) target = $region60
      $region59: #{autoencoder_forward.1} parent=11 // pred_region
        _
      $region60: #{autoencoder_forward.1} parent=11 // pred_fallthru
        _
      // Predicated region
      $region61: #{autoencoder_forward.1} parent=11 // pred_check
        %p462 = pneg %p322
      $region62: #{autoencoder_forward.1} parent=11 // pred_check_branch
        %464 = sbr.rel (%p462) target = $region64
      $region63: #{autoencoder_forward.1} parent=11 // pred_region
        _
      $region64: #{autoencoder_forward.1} parent=11 // pred_fallthru
        _
      // Predicated region
      $region65: #{autoencoder_forward.1} parent=11 // pred_check
        %p465 = pneg %p343
      $region66: #{autoencoder_forward.1} parent=11 // pred_check_branch
        %467 = sbr.rel (%p465) target = $region68
      $region67: #{autoencoder_forward.1} parent=11 // pred_region
        _
      $region68: #{autoencoder_forward.1} parent=11 // pred_fallthru
        _
      // Predicated region
      $region69: #{autoencoder_forward.1} parent=11 // pred_check
        %p468 = pneg %p364
      $region70: #{autoencoder_forward.1} parent=11 // pred_check_branch
        %470 = sbr.rel (%p468) target = $region72
      $region71: #{autoencoder_forward.1} parent=11 // pred_region
        _
      $region72: #{autoencoder_forward.1} parent=11 // pred_fallthru
        _
      // Predicated region
      $region73: #{autoencoder_forward.1} parent=11 // pred_check
        %p471 = pneg %p385
      $region74: #{autoencoder_forward.1} parent=11 // pred_check_branch
        %473 = sbr.rel (%p471) target = $region76
      $region75: #{autoencoder_forward.1} parent=11 // pred_region
        _
      $region76: #{autoencoder_forward.1} parent=11 // pred_fallthru
        _
    $region12: #{autoencoder_forward.1} parent=5 // pred_fallthru
      _
    %p474 = scmp.lt.s32.totalorder %s23, 2
    // Predicated region
    $region77: #{autoencoder_forward.1} parent=5 // pred_check
      %p475 = pneg %p474
    $region78: #{autoencoder_forward.1} parent=5 // pred_check_branch
      %477 = sbr.rel (%p475) target = $region80
    $region79: #{autoencoder_forward.1} parent=5 // pred_region
      // Predicated region
      $region81: #{autoencoder_forward.1} parent=79 // pred_check
        %p478 = pneg %p43
      $region82: #{autoencoder_forward.1} parent=79 // pred_check_branch
        %480 = sbr.rel (%p478) target = $region84
      $region83: #{autoencoder_forward.1} parent=79 // pred_region
        %s481 = smul.u32 64, %s23
        %p482 = scmp.lt.s32.totalorder %s481, 127
        %s483 = scalar_select %p482, %s481, 127
        %s484 = smul.addr %s483, 7
        %s485 = smul.addr %s484, 8
        %s486 = scalar_lea.vmem %s0, %s485
        %s487 = smul.u32 64, %s23
      $region84: #{autoencoder_forward.1} parent=79 // pred_fallthru
        _
    $region80: #{autoencoder_forward.1} parent=5 // pred_fallthru
      _
    %p488 = scmp.le.s32.totalorder 1, %s23
    %p489 = scmp.lt.s32.totalorder %s23, 3
    %p490 = pnand %p488, %p489
    %p491 = pneg %p490
    // Predicated region
    $region85: #{autoencoder_forward.1} parent=5 // pred_check
      _
    $region86: #{autoencoder_forward.1} parent=5 // pred_check_branch
      %493 = sbr.rel (%p490) target = $region88
    $region87: #{autoencoder_forward.1} parent=5 // pred_region
      %s494 = ssub.s32 %s23, 1
      %s495 = smul.u32 64, %s28
      %p496 = scmp.lt.s32.totalorder %s495, 127
      %s497 = scalar_select %p496, %s495, 127
      %s498 = smul.addr %s497, 7
      %s499 = smul.addr %s498, 8
      %s500 = scalar_lea.vmem %s0, %s499
      %p501 = pneg %p49
      %p502 = pneg %p46
      %p503 = pneg %p70
      %p504 = pneg %p67
      %p505 = pneg %p91
      %p506 = pneg %p88
      %p507 = pneg %p112
      %p508 = pneg %p109
      %p509 = pneg %p133
      %p510 = pneg %p130
      %p511 = pneg %p154
      %p512 = pneg %p151
      %p513 = pneg %p175
      %p514 = pneg %p172
      %p515 = pneg %p196
      %p516 = pneg %p193
      %p517 = pneg %p217
      %p518 = pneg %p214
      %p519 = pneg %p238
      %p520 = pneg %p235
      %p521 = pneg %p259
      %p522 = pneg %p256
      %p523 = pneg %p280
      %p524 = pneg %p277
      %p525 = pneg %p301
      %p526 = pneg %p298
      %p527 = pneg %p322
      %p528 = pneg %p319
      %p529 = pneg %p343
      %p530 = pneg %p340
      %p531 = pneg %p364
      %p532 = pneg %p361
      %p533 = pneg %p385
      %p534 = pneg %p382
      %p535 = pneg %p411
      %p536 = pneg %p408
      %s537 = smul.u32 64, %s28
      %p538 = scmp.lt.s32.totalorder %s537, 127
      %s539 = scalar_select %p538, %s537, 127
      %s540 = smul.addr %s539, 7
      %s541 = smul.addr %s540, 8
      %s542 = scalar_lea.vmem %s17, %s541
      %s543 = smul.u32 64, %s28
      %p544 = scmp.lt.s32.totalorder %s543, 127
      %s545 = scalar_select %p544, %s543, 127
      %s546 = smul.addr %s545, 7
      %s547 = smul.addr %s546, 8
      %s548 = scalar_lea.vmem %s0, %s547
      %s549 = smul.u32 64, %s28
      %s550 = smul.u32 64, %s28
      %p551 = scmp.lt.s32.totalorder %s550, 127
      %s552 = scalar_select %p551, %s550, 127
      %s553 = smul.addr %s552, 7
      %s554 = smul.addr %s553, 8
      %s555 = scalar_lea.vmem %s17, %s554
      %s556 = smul.u32 64, %s28
      %v558 = vld [vmem:[%s548] sm:$0xff]
      %v559 = vld [vmem:[%s548 + $0x8] sm:$0xff]
      %v560 = vld [vmem:[%s548 + $0x10] sm:$0xff]
      %v561 = vld [vmem:[%s548 + $0x18] sm:$0xff]
      %v562 = vld [vmem:[%s548 + $0x20] sm:$0xff]
      %v563 = vld [vmem:[%s548 + $0x28] sm:$0xff]
      %v564 = vld [vmem:[%s548 + $0x30] sm:$0xff]
      %v565 = vld [vmem:[%s548 + $0x38] sm:$0xff]
      %v566 = vld [vmem:[%s548 + $0x40] sm:$0xff]
      %v567 = vld [vmem:[%s548 + $0x48] sm:$0xff]
      %v568 = vld [vmem:[%s548 + $0x50] sm:$0xff]
      %v569 = vld [vmem:[%s548 + $0x58] sm:$0xff]
      %v570 = vld [vmem:[%s548 + $0x60] sm:$0xff]
      %v571 = vld [vmem:[%s548 + $0x68] sm:$0xff]
      %v572 = vld [vmem:[%s548 + $0x70] sm:$0xff]
      %v573 = vld [vmem:[%s548 + $0x78] sm:$0xff]
      %v574 = vld [vmem:[%s548 + $0x80] sm:$0xff]
      %v575 = vld [vmem:[%s548 + $0x88] sm:$0xff]
      %v576 = vld [vmem:[%s548 + $0x90] sm:$0xff]
      %v577 = vld [vmem:[%s548 + $0x98] sm:$0xff]
      %v578 = vld [vmem:[%s548 + $0xa0] sm:$0xff]
      %v579 = vld [vmem:[%s548 + $0xa8] sm:$0xff]
      %v580 = vld [vmem:[%s548 + $0xb0] sm:$0xff]
      %v581 = vld [vmem:[%s548 + $0xb8] sm:$0xff]
      %v582 = vld [vmem:[%s548 + $0xc0] sm:$0xff]
      %v583 = vld [vmem:[%s548 + $0xc8] sm:$0xff]
      %v584 = vld [vmem:[%s548 + $0xd0] sm:$0xff]
      %v585 = vld [vmem:[%s548 + $0xd8] sm:$0xff]
      %v586 = vld [vmem:[%s548 + $0xe0] sm:$0xff]
      %v587 = vld [vmem:[%s548 + $0xe8] sm:$0xff]
      %v588 = vld [vmem:[%s548 + $0xf0] sm:$0xff]
      %v589 = vld [vmem:[%s548 + $0xf8] sm:$0xff]
      %v590 = vld [vmem:[%s548 + $0x100] sm:$0xff]
      %v591 = vld [vmem:[%s548 + $0x108] sm:$0xff]
      %v592 = vld [vmem:[%s548 + $0x110] sm:$0xff]
      %v593 = vld [vmem:[%s548 + $0x118] sm:$0xff]
      %v594 = vld [vmem:[%s548 + $0x120] sm:$0xff]
      %v595 = vld [vmem:[%s548 + $0x128] sm:$0xff]
      %v596 = vld [vmem:[%s548 + $0x130] sm:$0xff]
      %v597 = vld [vmem:[%s548 + $0x138] sm:$0xff]
      %v598 = vld [vmem:[%s548 + $0x140] sm:$0xff]
      %v599 = vld [vmem:[%s548 + $0x148] sm:$0xff]
      %v600 = vld [vmem:[%s548 + $0x150] sm:$0xff]
      %v601 = vld [vmem:[%s548 + $0x158] sm:$0xff]
      %v602 = vld [vmem:[%s548 + $0x160] sm:$0xff]
      %v603 = vld [vmem:[%s548 + $0x168] sm:$0xff]
      %v604 = vld [vmem:[%s548 + $0x170] sm:$0xff]
      %v605 = vld [vmem:[%s548 + $0x178] sm:$0xff]
      %v606 = vld [vmem:[%s548 + $0x180] sm:$0xff]
      %v607 = vld [vmem:[%s548 + $0x188] sm:$0xff]
      %v608 = vld [vmem:[%s548 + $0x190] sm:$0xff]
      %v609 = vld [vmem:[%s548 + $0x198] sm:$0xff]
      %v610 = vld [vmem:[%s548 + $0x1a0] sm:$0xff]
      %v611 = vld [vmem:[%s548 + $0x1a8] sm:$0xff]
      %v612 = vld [vmem:[%s548 + $0x1b0] sm:$0xff]
      %v613 = vld [vmem:[%s548 + $0x1b8] sm:$0xff]
      %v614 = vld [vmem:[%s548 + $0x1c0] sm:$0xff]
      %v615 = vld [vmem:[%s548 + $0x1c8] sm:$0xff]
      %v616 = vld [vmem:[%s548 + $0x1d0] sm:$0xff]
      %v617 = vld [vmem:[%s548 + $0x1d8] sm:$0xff]
      %v618 = vld [vmem:[%s548 + $0x1e0] sm:$0xff]
      %v619 = vld [vmem:[%s548 + $0x1e8] sm:$0xff]
      %v620 = vld [vmem:[%s548 + $0x1f0] sm:$0xff]
      %v621 = vld [vmem:[%s548 + $0x1f8] sm:$0xff]
      %v622 = vld [vmem:[%s548 + $0x200] sm:$0xff]
      %v623 = vld [vmem:[%s548 + $0x208] sm:$0xff]
      %v624 = vld [vmem:[%s548 + $0x210] sm:$0xff]
      %v625 = vld [vmem:[%s548 + $0x218] sm:$0xff]
      %v626 = vld [vmem:[%s548 + $0x220] sm:$0xff]
      %v627 = vld [vmem:[%s548 + $0x228] sm:$0xff]
      %v628 = vld [vmem:[%s548 + $0x230] sm:$0xff]
      %v629 = vld [vmem:[%s548 + $0x238] sm:$0xff]
      %v630 = vld [vmem:[%s548 + $0x240] sm:$0xff]
      %v631 = vld [vmem:[%s548 + $0x248] sm:$0xff]
      %v632 = vld [vmem:[%s548 + $0x250] sm:$0xff]
      %v633 = vld [vmem:[%s548 + $0x258] sm:$0xff]
      %v634 = vld [vmem:[%s548 + $0x260] sm:$0xff]
      %v635 = vld [vmem:[%s548 + $0x268] sm:$0xff]
      %v636 = vld [vmem:[%s548 + $0x270] sm:$0xff]
      %v637 = vld [vmem:[%s548 + $0x278] sm:$0xff]
      %v638 = vld [vmem:[%s548 + $0x280] sm:$0xff]
      %v639 = vld [vmem:[%s548 + $0x288] sm:$0xff]
      %v640 = vld [vmem:[%s548 + $0x290] sm:$0xff]
      %v641 = vld [vmem:[%s548 + $0x298] sm:$0xff]
      %v642 = vld [vmem:[%s548 + $0x2a0] sm:$0xff]
      %v643 = vld [vmem:[%s548 + $0x2a8] sm:$0xff]
      %v644 = vld [vmem:[%s548 + $0x2b0] sm:$0xff]
      %v645 = vld [vmem:[%s548 + $0x2b8] sm:$0xff]
      %v646 = vld [vmem:[%s548 + $0x2c0] sm:$0xff]
      %v647 = vld [vmem:[%s548 + $0x2c8] sm:$0xff]
      %v648 = vld [vmem:[%s548 + $0x2d0] sm:$0xff]
      %v649 = vld [vmem:[%s548 + $0x2d8] sm:$0xff]
      %v650 = vld [vmem:[%s548 + $0x2e0] sm:$0xff]
      %v651 = vld [vmem:[%s548 + $0x2e8] sm:$0xff]
      %v652 = vld [vmem:[%s548 + $0x2f0] sm:$0xff]
      %v653 = vld [vmem:[%s548 + $0x2f8] sm:$0xff]
      %v654 = vld [vmem:[%s548 + $0x300] sm:$0xff]
      %v655 = vld [vmem:[%s548 + $0x308] sm:$0xff]
      %v656 = vld [vmem:[%s548 + $0x310] sm:$0xff]
      %v657 = vld [vmem:[%s548 + $0x318] sm:$0xff]
      %v658 = vld [vmem:[%s548 + $0x320] sm:$0xff]
      %v659 = vld [vmem:[%s548 + $0x328] sm:$0xff]
      %v660 = vld [vmem:[%s548 + $0x330] sm:$0xff]
      %v661 = vld [vmem:[%s548 + $0x338] sm:$0xff]
      %v662 = vld [vmem:[%s548 + $0x340] sm:$0xff]
      %v663 = vld [vmem:[%s548 + $0x348] sm:$0xff]
      %v664 = vld [vmem:[%s548 + $0x350] sm:$0xff]
      %v665 = vld [vmem:[%s548 + $0x358] sm:$0xff]
      %v666 = vld [vmem:[%s548 + $0x360] sm:$0xff]
      %v667 = vld [vmem:[%s548 + $0x368] sm:$0xff]
      %v668 = vld [vmem:[%s548 + $0x370] sm:$0xff]
      %v669 = vld [vmem:[%s548 + $0x378] sm:$0xff]
      %v670 = vld [vmem:[%s548 + $0x380] sm:$0xff]
      %v671 = vld [vmem:[%s548 + $0x388] sm:$0xff]
      %v672 = vld [vmem:[%s548 + $0x390] sm:$0xff]
      %v673 = vld [vmem:[%s548 + $0x398] sm:$0xff]
      %v674 = vld [vmem:[%s548 + $0x3a0] sm:$0xff]
      %v675 = vld [vmem:[%s548 + $0x3a8] sm:$0xff]
      %v676 = vld [vmem:[%s548 + $0x3b0] sm:$0xff]
      %v677 = vld [vmem:[%s548 + $0x3b8] sm:$0xff]
      %v678 = vld [vmem:[%s548 + $0x3c0] sm:$0xff]
      %v679 = vld [vmem:[%s548 + $0x3c8] sm:$0xff]
      %v680 = vld [vmem:[%s548 + $0x3d0] sm:$0xff]
      %v681 = vld [vmem:[%s548 + $0x3d8] sm:$0xff]
      %v682 = vld [vmem:[%s548 + $0x3e0] sm:$0xff]
      %v683 = vld [vmem:[%s548 + $0x3e8] sm:$0xff]
      %v684 = vld [vmem:[%s548 + $0x3f0] sm:$0xff]
      %v685 = vld [vmem:[%s548 + $0x3f8] sm:$0xff]
      %v686 = vld [vmem:[%s548 + $0x400] sm:$0xff]
      %v687 = vld [vmem:[%s548 + $0x408] sm:$0xff]
      %v688 = vld [vmem:[%s548 + $0x410] sm:$0xff]
      %v689 = vld [vmem:[%s548 + $0x418] sm:$0xff]
      %v690 = vld [vmem:[%s548 + $0x420] sm:$0xff]
      %v691 = vld [vmem:[%s548 + $0x428] sm:$0xff]
      %v692 = vld [vmem:[%s548 + $0x430] sm:$0xff]
      %v693 = vld [vmem:[%s548 + $0x438] sm:$0xff]
      %v694 = vld [vmem:[%s548 + $0x440] sm:$0xff]
      %v695 = vld [vmem:[%s548 + $0x448] sm:$0xff]
      %v696 = vld [vmem:[%s548 + $0x450] sm:$0xff]
      %v697 = vld [vmem:[%s548 + $0x458] sm:$0xff]
      %v698 = vld [vmem:[%s548 + $0x460] sm:$0xff]
      %v699 = vld [vmem:[%s548 + $0x468] sm:$0xff]
      %v700 = vld [vmem:[%s548 + $0x470] sm:$0xff]
      %v701 = vld [vmem:[%s548 + $0x478] sm:$0xff]
      %v702 = vld [vmem:[%s548 + $0x480] sm:$0xff]
      %v703 = vld [vmem:[%s548 + $0x488] sm:$0xff]
      %v704 = vld [vmem:[%s548 + $0x490] sm:$0xff]
      %v705 = vld [vmem:[%s548 + $0x498] sm:$0xff]
      %v706 = vld [vmem:[%s548 + $0x4a0] sm:$0xff]
      %v707 = vld [vmem:[%s548 + $0x4a8] sm:$0xff]
      %v708 = vld [vmem:[%s548 + $0x4b0] sm:$0xff]
      %v709 = vld [vmem:[%s548 + $0x4b8] sm:$0xff]
      %v710 = vld [vmem:[%s548 + $0x4c0] sm:$0xff]
      %v711 = vld [vmem:[%s548 + $0x4c8] sm:$0xff]
      %v712 = vld [vmem:[%s548 + $0x4d0] sm:$0xff]
      %v713 = vld [vmem:[%s548 + $0x4d8] sm:$0xff]
      %v714 = vld [vmem:[%s548 + $0x4e0] sm:$0xff]
      %v715 = vld [vmem:[%s548 + $0x4e8] sm:$0xff]
      %v716 = vld [vmem:[%s548 + $0x4f0] sm:$0xff]
      %v717 = vld [vmem:[%s548 + $0x4f8] sm:$0xff]
      %v718 = vld [vmem:[%s548 + $0x500] sm:$0xff]
      %v719 = vld [vmem:[%s548 + $0x508] sm:$0xff]
      %v720 = vld [vmem:[%s548 + $0x510] sm:$0xff]
      %v721 = vld [vmem:[%s548 + $0x518] sm:$0xff]
      %v722 = vld [vmem:[%s548 + $0x520] sm:$0xff]
      %v723 = vld [vmem:[%s548 + $0x528] sm:$0xff]
      %v724 = vld [vmem:[%s548 + $0x530] sm:$0xff]
      %v725 = vld [vmem:[%s548 + $0x538] sm:$0xff]
      %v726 = vld [vmem:[%s548 + $0x540] sm:$0xff]
      %v727 = vld [vmem:[%s548 + $0x548] sm:$0xff]
      %v728 = vld [vmem:[%s548 + $0x550] sm:$0xff]
      %v729 = vld [vmem:[%s548 + $0x558] sm:$0xff]
      %v730 = vld [vmem:[%s548 + $0x560] sm:$0xff]
      %v731 = vld [vmem:[%s548 + $0x568] sm:$0xff]
      %v732 = vld [vmem:[%s548 + $0x570] sm:$0xff]
      %v733 = vld [vmem:[%s548 + $0x578] sm:$0xff]
      %v734 = vld [vmem:[%s548 + $0x580] sm:$0xff]
      %v735 = vld [vmem:[%s548 + $0x588] sm:$0xff]
      %v736 = vld [vmem:[%s548 + $0x590] sm:$0xff]
      %v737 = vld [vmem:[%s548 + $0x598] sm:$0xff]
      %v738 = vld [vmem:[%s548 + $0x5a0] sm:$0xff]
      %v739 = vld [vmem:[%s548 + $0x5a8] sm:$0xff]
      %v740 = vld [vmem:[%s548 + $0x5b0] sm:$0xff]
      %v741 = vld [vmem:[%s548 + $0x5b8] sm:$0xff]
      %v742 = vld [vmem:[%s548 + $0x5c0] sm:$0xff]
      %v743 = vld [vmem:[%s548 + $0x5c8] sm:$0xff]
      %v744 = vld [vmem:[%s548 + $0x5d0] sm:$0xff]
      %v745 = vld [vmem:[%s548 + $0x5d8] sm:$0xff]
      %v746 = vld [vmem:[%s548 + $0x5e0] sm:$0xff]
      %v747 = vld [vmem:[%s548 + $0x5e8] sm:$0xff]
      %v748 = vld [vmem:[%s548 + $0x5f0] sm:$0xff]
      %v749 = vld [vmem:[%s548 + $0x5f8] sm:$0xff]
      %v750 = vld [vmem:[%s548 + $0x600] sm:$0xff]
      %v751 = vld [vmem:[%s548 + $0x608] sm:$0xff]
      %v752 = vld [vmem:[%s548 + $0x610] sm:$0xff]
      %v753 = vld [vmem:[%s548 + $0x618] sm:$0xff]
      %v754 = vld [vmem:[%s548 + $0x620] sm:$0xff]
      %v755 = vld [vmem:[%s548 + $0x628] sm:$0xff]
      %v756 = vld [vmem:[%s548 + $0x630] sm:$0xff]
      %v757 = vld [vmem:[%s548 + $0x638] sm:$0xff]
      %v758 = vld [vmem:[%s548 + $0x640] sm:$0xff]
      %v759 = vld [vmem:[%s548 + $0x648] sm:$0xff]
      %v760 = vld [vmem:[%s548 + $0x650] sm:$0xff]
      %v761 = vld [vmem:[%s548 + $0x658] sm:$0xff]
      %v762 = vld [vmem:[%s548 + $0x660] sm:$0xff]
      %v763 = vld [vmem:[%s548 + $0x668] sm:$0xff]
      %v764 = vld [vmem:[%s548 + $0x670] sm:$0xff]
      %v765 = vld [vmem:[%s548 + $0x678] sm:$0xff]
      %v766 = vld [vmem:[%s548 + $0x680] sm:$0xff]
      %v767 = vld [vmem:[%s548 + $0x688] sm:$0xff]
      %v768 = vld [vmem:[%s548 + $0x690] sm:$0xff]
      %v769 = vld [vmem:[%s548 + $0x698] sm:$0xff]
      %v770 = vld [vmem:[%s548 + $0x6a0] sm:$0xff]
      %v771 = vld [vmem:[%s548 + $0x6a8] sm:$0xff]
      %v772 = vld [vmem:[%s548 + $0x6b0] sm:$0xff]
      %v773 = vld [vmem:[%s548 + $0x6b8] sm:$0xff]
      %v774 = vld [vmem:[%s548 + $0x6c0] sm:$0xff]
      %v775 = vld [vmem:[%s548 + $0x6c8] sm:$0xff]
      %v776 = vld [vmem:[%s548 + $0x6d0] sm:$0xff]
      %v777 = vld [vmem:[%s548 + $0x6d8] sm:$0xff]
      %v778 = vld [vmem:[%s548 + $0x6e0] sm:$0xff]
      %v779 = vld [vmem:[%s548 + $0x6e8] sm:$0xff]
      %v780 = vld [vmem:[%s548 + $0x6f0] sm:$0xff]
      %v781 = vld [vmem:[%s548 + $0x6f8] sm:$0xff]
      %v782 = vld [vmem:[%s548 + $0x700] sm:$0xff]
      %v783 = vld [vmem:[%s548 + $0x708] sm:$0xff]
      %v784 = vld [vmem:[%s548 + $0x710] sm:$0xff]
      %v785 = vld [vmem:[%s548 + $0x718] sm:$0xff]
      %v786 = vld [vmem:[%s548 + $0x720] sm:$0xff]
      %v787 = vld [vmem:[%s548 + $0x728] sm:$0xff]
      %v788 = vld [vmem:[%s548 + $0x730] sm:$0xff]
      %v789 = vld [vmem:[%s548 + $0x738] sm:$0xff]
      %v790 = vld [vmem:[%s548 + $0x740] sm:$0xff]
      %v791 = vld [vmem:[%s548 + $0x748] sm:$0xff]
      %v792 = vld [vmem:[%s548 + $0x750] sm:$0xff]
      %v793 = vld [vmem:[%s548 + $0x758] sm:$0xff]
      %v794 = vld [vmem:[%s548 + $0x760] sm:$0xff]
      %v795 = vld [vmem:[%s548 + $0x768] sm:$0xff]
      %v796 = vld [vmem:[%s548 + $0x770] sm:$0xff]
      %v797 = vld [vmem:[%s548 + $0x778] sm:$0xff]
      %v798 = vld [vmem:[%s548 + $0x780] sm:$0xff]
      %v799 = vld [vmem:[%s548 + $0x788] sm:$0xff]
      %v800 = vld [vmem:[%s548 + $0x790] sm:$0xff]
      %v801 = vld [vmem:[%s548 + $0x798] sm:$0xff]
      %v802 = vld [vmem:[%s548 + $0x7a0] sm:$0xff]
      %v803 = vld [vmem:[%s548 + $0x7a8] sm:$0xff]
      %v804 = vld [vmem:[%s548 + $0x7b0] sm:$0xff]
      %v805 = vld [vmem:[%s548 + $0x7b8] sm:$0xff]
      %v806 = vld [vmem:[%s548 + $0x7c0] sm:$0xff]
      %v807 = vld [vmem:[%s548 + $0x7c8] sm:$0xff]
      %v808 = vld [vmem:[%s548 + $0x7d0] sm:$0xff]
      %v809 = vld [vmem:[%s548 + $0x7d8] sm:$0xff]
      %v810 = vld [vmem:[%s548 + $0x7e0] sm:$0xff]
      %v811 = vld [vmem:[%s548 + $0x7e8] sm:$0xff]
      %v812 = vld [vmem:[%s548 + $0x7f0] sm:$0xff]
      %v813 = vld [vmem:[%s548 + $0x7f8] sm:$0xff]
      %v814 = vld [vmem:[%s548 + $0x800] sm:$0xff]
      %v815 = vld [vmem:[%s548 + $0x808] sm:$0xff]
      %v816 = vld [vmem:[%s548 + $0x810] sm:$0xff]
      %v817 = vld [vmem:[%s548 + $0x818] sm:$0xff]
      %v818 = vld [vmem:[%s548 + $0x820] sm:$0xff]
      %v819 = vld [vmem:[%s548 + $0x828] sm:$0xff]
      %v820 = vld [vmem:[%s548 + $0x830] sm:$0xff]
      %v821 = vld [vmem:[%s548 + $0x838] sm:$0xff]
      %v822 = vld [vmem:[%s548 + $0x840] sm:$0xff]
      %v823 = vld [vmem:[%s548 + $0x848] sm:$0xff]
      %v824 = vld [vmem:[%s548 + $0x850] sm:$0xff]
      %v825 = vld [vmem:[%s548 + $0x858] sm:$0xff]
      %v826 = vld [vmem:[%s548 + $0x860] sm:$0xff]
      %v827 = vld [vmem:[%s548 + $0x868] sm:$0xff]
      %v828 = vld [vmem:[%s548 + $0x870] sm:$0xff]
      %v829 = vld [vmem:[%s548 + $0x878] sm:$0xff]
      %v830 = vld [vmem:[%s548 + $0x880] sm:$0xff]
      %v831 = vld [vmem:[%s548 + $0x888] sm:$0xff]
      %v832 = vld [vmem:[%s548 + $0x890] sm:$0xff]
      %v833 = vld [vmem:[%s548 + $0x898] sm:$0xff]
      %v834 = vld [vmem:[%s548 + $0x8a0] sm:$0xff]
      %v835 = vld [vmem:[%s548 + $0x8a8] sm:$0xff]
      %v836 = vld [vmem:[%s548 + $0x8b0] sm:$0xff]
      %v837 = vld [vmem:[%s548 + $0x8b8] sm:$0xff]
      %v838 = vld [vmem:[%s548 + $0x8c0] sm:$0xff]
      %v839 = vld [vmem:[%s548 + $0x8c8] sm:$0xff]
      %v840 = vld [vmem:[%s548 + $0x8d0] sm:$0xff]
      %v841 = vld [vmem:[%s548 + $0x8d8] sm:$0xff]
      %v842 = vld [vmem:[%s548 + $0x8e0] sm:$0xff]
      %v843 = vld [vmem:[%s548 + $0x8e8] sm:$0xff]
      %v844 = vld [vmem:[%s548 + $0x8f0] sm:$0xff]
      %v845 = vld [vmem:[%s548 + $0x8f8] sm:$0xff]
      %v846 = vld [vmem:[%s548 + $0x900] sm:$0xff]
      %v847 = vld [vmem:[%s548 + $0x908] sm:$0xff]
      %v848 = vld [vmem:[%s548 + $0x910] sm:$0xff]
      %v849 = vld [vmem:[%s548 + $0x918] sm:$0xff]
      %v850 = vld [vmem:[%s548 + $0x920] sm:$0xff]
      %v851 = vld [vmem:[%s548 + $0x928] sm:$0xff]
      %v852 = vld [vmem:[%s548 + $0x930] sm:$0xff]
      %v853 = vld [vmem:[%s548 + $0x938] sm:$0xff]
      %v854 = vld [vmem:[%s548 + $0x940] sm:$0xff]
      %v855 = vld [vmem:[%s548 + $0x948] sm:$0xff]
      %v856 = vld [vmem:[%s548 + $0x950] sm:$0xff]
      %v857 = vld [vmem:[%s548 + $0x958] sm:$0xff]
      %v858 = vld [vmem:[%s548 + $0x960] sm:$0xff]
      %v859 = vld [vmem:[%s548 + $0x968] sm:$0xff]
      %v860 = vld [vmem:[%s548 + $0x970] sm:$0xff]
      %v861 = vld [vmem:[%s548 + $0x978] sm:$0xff]
      %v862 = vld [vmem:[%s548 + $0x980] sm:$0xff]
      %v863 = vld [vmem:[%s548 + $0x988] sm:$0xff]
      %v864 = vld [vmem:[%s548 + $0x990] sm:$0xff]
      %v865 = vld [vmem:[%s548 + $0x998] sm:$0xff]
      %v866 = vld [vmem:[%s548 + $0x9a0] sm:$0xff]
      %v867 = vld [vmem:[%s548 + $0x9a8] sm:$0xff]
      %v868 = vld [vmem:[%s548 + $0x9b0] sm:$0xff]
      %v869 = vld [vmem:[%s548 + $0x9b8] sm:$0xff]
      %v870 = vld [vmem:[%s548 + $0x9c0] sm:$0xff]
      %v871 = vld [vmem:[%s548 + $0x9c8] sm:$0xff]
      %v872 = vld [vmem:[%s548 + $0x9d0] sm:$0xff]
      %v873 = vld [vmem:[%s548 + $0x9d8] sm:$0xff]
      %v874 = vld [vmem:[%s548 + $0x9e0] sm:$0xff]
      %v875 = vld [vmem:[%s548 + $0x9e8] sm:$0xff]
      %v876 = vld [vmem:[%s548 + $0x9f0] sm:$0xff]
      %v877 = vld [vmem:[%s548 + $0x9f8] sm:$0xff]
      %v878 = vld [vmem:[%s548 + $0xa00] sm:$0xff]
      %v879 = vld [vmem:[%s548 + $0xa08] sm:$0xff]
      %v880 = vld [vmem:[%s548 + $0xa10] sm:$0xff]
      %v881 = vld [vmem:[%s548 + $0xa18] sm:$0xff]
      %v882 = vld [vmem:[%s548 + $0xa20] sm:$0xff]
      %v883 = vld [vmem:[%s548 + $0xa28] sm:$0xff]
      %v884 = vld [vmem:[%s548 + $0xa30] sm:$0xff]
      %v885 = vld [vmem:[%s548 + $0xa38] sm:$0xff]
      %v886 = vld [vmem:[%s548 + $0xa40] sm:$0xff]
      %v887 = vld [vmem:[%s548 + $0xa48] sm:$0xff]
      %v888 = vld [vmem:[%s548 + $0xa50] sm:$0xff]
      %v889 = vld [vmem:[%s548 + $0xa58] sm:$0xff]
      %v890 = vld [vmem:[%s548 + $0xa60] sm:$0xff]
      %v891 = vld [vmem:[%s548 + $0xa68] sm:$0xff]
      %v892 = vld [vmem:[%s548 + $0xa70] sm:$0xff]
      %v893 = vld [vmem:[%s548 + $0xa78] sm:$0xff]
      %v894 = vld [vmem:[%s548 + $0xa80] sm:$0xff]
      %v895 = vld [vmem:[%s548 + $0xa88] sm:$0xff]
      %v896 = vld [vmem:[%s548 + $0xa90] sm:$0xff]
      %v897 = vld [vmem:[%s548 + $0xa98] sm:$0xff]
      %v898 = vld [vmem:[%s548 + $0xaa0] sm:$0xff]
      %v899 = vld [vmem:[%s548 + $0xaa8] sm:$0xff]
      %v900 = vld [vmem:[%s548 + $0xab0] sm:$0xff]
      %v901 = vld [vmem:[%s548 + $0xab8] sm:$0xff]
      %v902 = vld [vmem:[%s548 + $0xac0] sm:$0xff]
      %v903 = vld [vmem:[%s548 + $0xac8] sm:$0xff]
      %v904 = vld [vmem:[%s548 + $0xad0] sm:$0xff]
      %v905 = vld [vmem:[%s548 + $0xad8] sm:$0xff]
      %v906 = vld [vmem:[%s548 + $0xae0] sm:$0xff]
      %v907 = vld [vmem:[%s548 + $0xae8] sm:$0xff]
      %v908 = vld [vmem:[%s548 + $0xaf0] sm:$0xff]
      %v909 = vld [vmem:[%s548 + $0xaf8] sm:$0xff]
      %v910 = vld [vmem:[%s548 + $0xb00] sm:$0xff]
      %v911 = vld [vmem:[%s548 + $0xb08] sm:$0xff]
      %v912 = vld [vmem:[%s548 + $0xb10] sm:$0xff]
      %v913 = vld [vmem:[%s548 + $0xb18] sm:$0xff]
      %v914 = vld [vmem:[%s548 + $0xb20] sm:$0xff]
      %v915 = vld [vmem:[%s548 + $0xb28] sm:$0xff]
      %v916 = vld [vmem:[%s548 + $0xb30] sm:$0xff]
      %v917 = vld [vmem:[%s548 + $0xb38] sm:$0xff]
      %v918 = vld [vmem:[%s548 + $0xb40] sm:$0xff]
      %v919 = vld [vmem:[%s548 + $0xb48] sm:$0xff]
      %v920 = vld [vmem:[%s548 + $0xb50] sm:$0xff]
      %v921 = vld [vmem:[%s548 + $0xb58] sm:$0xff]
      %v922 = vld [vmem:[%s548 + $0xb60] sm:$0xff]
      %v923 = vld [vmem:[%s548 + $0xb68] sm:$0xff]
      %v924 = vld [vmem:[%s548 + $0xb70] sm:$0xff]
      %v925 = vld [vmem:[%s548 + $0xb78] sm:$0xff]
      %v926 = vld [vmem:[%s548 + $0xb80] sm:$0xff]
      %v927 = vld [vmem:[%s548 + $0xb88] sm:$0xff]
      %v928 = vld [vmem:[%s548 + $0xb90] sm:$0xff]
      %v929 = vld [vmem:[%s548 + $0xb98] sm:$0xff]
      %v930 = vld [vmem:[%s548 + $0xba0] sm:$0xff]
      %v931 = vld [vmem:[%s548 + $0xba8] sm:$0xff]
      %v932 = vld [vmem:[%s548 + $0xbb0] sm:$0xff]
      %v933 = vld [vmem:[%s548 + $0xbb8] sm:$0xff]
      %v934 = vld [vmem:[%s548 + $0xbc0] sm:$0xff]
      %v935 = vld [vmem:[%s548 + $0xbc8] sm:$0xff]
      %v936 = vld [vmem:[%s548 + $0xbd0] sm:$0xff]
      %v937 = vld [vmem:[%s548 + $0xbd8] sm:$0xff]
      %v938 = vld [vmem:[%s548 + $0xbe0] sm:$0xff]
      %v939 = vld [vmem:[%s548 + $0xbe8] sm:$0xff]
      %v940 = vld [vmem:[%s548 + $0xbf0] sm:$0xff]
      %v941 = vld [vmem:[%s548 + $0xbf8] sm:$0xff]
      %v942 = vld [vmem:[%s548 + $0xc00] sm:$0xff]
      %v943 = vld [vmem:[%s548 + $0xc08] sm:$0xff]
      %v944 = vld [vmem:[%s548 + $0xc10] sm:$0xff]
      %v945 = vld [vmem:[%s548 + $0xc18] sm:$0xff]
      %v946 = vld [vmem:[%s548 + $0xc20] sm:$0xff]
      %v947 = vld [vmem:[%s548 + $0xc28] sm:$0xff]
      %v948 = vld [vmem:[%s548 + $0xc30] sm:$0xff]
      %v949 = vld [vmem:[%s548 + $0xc38] sm:$0xff]
      %v950 = vld [vmem:[%s548 + $0xc40] sm:$0xff]
      %v951 = vld [vmem:[%s548 + $0xc48] sm:$0xff]
      %v952 = vld [vmem:[%s548 + $0xc50] sm:$0xff]
      %v953 = vld [vmem:[%s548 + $0xc58] sm:$0xff]
      %v954 = vld [vmem:[%s548 + $0xc60] sm:$0xff]
      %v955 = vld [vmem:[%s548 + $0xc68] sm:$0xff]
      %v956 = vld [vmem:[%s548 + $0xc70] sm:$0xff]
      %v957 = vld [vmem:[%s548 + $0xc78] sm:$0xff]
      %v958 = vld [vmem:[%s548 + $0xc80] sm:$0xff]
      %v959 = vld [vmem:[%s548 + $0xc88] sm:$0xff]
      %v960 = vld [vmem:[%s548 + $0xc90] sm:$0xff]
      %v961 = vld [vmem:[%s548 + $0xc98] sm:$0xff]
      %v962 = vld [vmem:[%s548 + $0xca0] sm:$0xff]
      %v963 = vld [vmem:[%s548 + $0xca8] sm:$0xff]
      %v964 = vld [vmem:[%s548 + $0xcb0] sm:$0xff]
      %v965 = vld [vmem:[%s548 + $0xcb8] sm:$0xff]
      %v966 = vld [vmem:[%s548 + $0xcc0] sm:$0xff]
      %v967 = vld [vmem:[%s548 + $0xcc8] sm:$0xff]
      %v968 = vld [vmem:[%s548 + $0xcd0] sm:$0xff]
      %v969 = vld [vmem:[%s548 + $0xcd8] sm:$0xff]
      %v970 = vld [vmem:[%s548 + $0xce0] sm:$0xff]
      %v971 = vld [vmem:[%s548 + $0xce8] sm:$0xff]
      %v972 = vld [vmem:[%s548 + $0xcf0] sm:$0xff]
      %v973 = vld [vmem:[%s548 + $0xcf8] sm:$0xff]
      %v974 = vld [vmem:[%s548 + $0xd00] sm:$0xff]
      %v975 = vld [vmem:[%s548 + $0xd08] sm:$0xff]
      %v976 = vld [vmem:[%s548 + $0xd10] sm:$0xff]
      %v977 = vld [vmem:[%s548 + $0xd18] sm:$0xff]
      %v978 = vld [vmem:[%s548 + $0xd20] sm:$0xff]
      %v979 = vld [vmem:[%s548 + $0xd28] sm:$0xff]
      %v980 = vld [vmem:[%s548 + $0xd30] sm:$0xff]
      %v981 = vld [vmem:[%s548 + $0xd38] sm:$0xff]
      %v982 = vld [vmem:[%s548 + $0xd40] sm:$0xff]
      %v983 = vld [vmem:[%s548 + $0xd48] sm:$0xff]
      %v984 = vld [vmem:[%s548 + $0xd50] sm:$0xff]
      %v985 = vld [vmem:[%s548 + $0xd58] sm:$0xff]
      %v986 = vld [vmem:[%s548 + $0xd60] sm:$0xff]
      %v987 = vld [vmem:[%s548 + $0xd68] sm:$0xff]
      %v988 = vld [vmem:[%s548 + $0xd70] sm:$0xff]
      %v989 = vld [vmem:[%s548 + $0xd78] sm:$0xff]
      %v990 = vld [vmem:[%s548 + $0xd80] sm:$0xff]
      %v991 = vld [vmem:[%s548 + $0xd88] sm:$0xff]
      %v992 = vld [vmem:[%s548 + $0xd90] sm:$0xff]
      %v993 = vld [vmem:[%s548 + $0xd98] sm:$0xff]
      %v994 = vld [vmem:[%s548 + $0xda0] sm:$0xff]
      %v995 = vld [vmem:[%s548 + $0xda8] sm:$0xff]
      %v996 = vld [vmem:[%s548 + $0xdb0] sm:$0xff]
      %v997 = vld [vmem:[%s548 + $0xdb8] sm:$0xff]
      %v998 = vld [vmem:[%s548 + $0xdc0] sm:$0xff]
      %v999 = vld [vmem:[%s548 + $0xdc8] sm:$0xff]
      %v1000 = vld [vmem:[%s548 + $0xdd0] sm:$0xff]
      %v1001 = vld [vmem:[%s548 + $0xdd8] sm:$0xff]
      %v1002 = vld [vmem:[%s548 + $0xde0] sm:$0xff]
      %v1003 = vld [vmem:[%s548 + $0xde8] sm:$0xff]
      %v1004 = vld [vmem:[%s548 + $0xdf0] sm:$0xff]
      %v1005 = vld [vmem:[%s548 + $0xdf8] sm:$0xff]
      %v1006 = vld [vmem:[%s1] sm:$0xf]
      %v1007 = vld [vmem:[%s1 + $0x4] sm:$0xf]
      %v1008 = vld [vmem:[%s1 + $0x8] sm:$0xf]
      %v1009 = vld [vmem:[%s1 + $0xc] sm:$0xf]
      %v1010 = vld [vmem:[%s1 + $0x10] sm:$0xf]
      %v1011 = vld [vmem:[%s1 + $0x14] sm:$0xf]
      %v1012 = vld [vmem:[%s1 + $0x18] sm:$0xf]
      %v1013 = vld [vmem:[%s1 + $0x1c] sm:$0xf]
      %v1014 = vld [vmem:[%s1 + $0x20] sm:$0xf]
      %v1015 = vld [vmem:[%s1 + $0x24] sm:$0xf]
      %v1016 = vld [vmem:[%s1 + $0x28] sm:$0xf]
      %v1017 = vld [vmem:[%s1 + $0x2c] sm:$0xf]
      %v1018 = vld [vmem:[%s1 + $0x30] sm:$0xf]
      %v1019 = vld [vmem:[%s1 + $0x34] sm:$0xf]
      %v1020 = vld [vmem:[%s1 + $0x38] sm:$0xf]
      %v1021 = vld [vmem:[%s1 + $0x3c] sm:$0xf]
      %v1022 = vld [vmem:[%s1 + $0x40] sm:$0xf]
      %v1023 = vld [vmem:[%s1 + $0x44] sm:$0xf]
      %v1024 = vld [vmem:[%s1 + $0x48] sm:$0xf]
      %v1025 = vld [vmem:[%s1 + $0x4c] sm:$0xf]
      %v1026 = vld [vmem:[%s1 + $0x50] sm:$0xf]
      %v1027 = vld [vmem:[%s1 + $0x54] sm:$0xf]
      %v1028 = vld [vmem:[%s1 + $0x58] sm:$0xf]
      %v1029 = vld [vmem:[%s1 + $0x5c] sm:$0xf]
      %v1030 = vld [vmem:[%s1 + $0x60] sm:$0xf]
      %v1031 = vld [vmem:[%s1 + $0x64] sm:$0xf]
      %v1032 = vld [vmem:[%s1 + $0x68] sm:$0xf]
      %v1033 = vld [vmem:[%s1 + $0x6c] sm:$0xf]
      %v1034 = vld [vmem:[%s1 + $0x70] sm:$0xf]
      %v1035 = vld [vmem:[%s1 + $0x74] sm:$0xf]
      %v1036 = vld [vmem:[%s1 + $0x78] sm:$0xf]
      %v1037 = vld [vmem:[%s1 + $0x7c] sm:$0xf]
      %v1038 = vld [vmem:[%s1 + $0x80] sm:$0xf]
      %v1039 = vld [vmem:[%s1 + $0x84] sm:$0xf]
      %v1040 = vld [vmem:[%s1 + $0x88] sm:$0xf]
      %v1041 = vld [vmem:[%s1 + $0x8c] sm:$0xf]
      %v1042 = vld [vmem:[%s1 + $0x90] sm:$0xf]
      %v1043 = vld [vmem:[%s1 + $0x94] sm:$0xf]
      %v1044 = vld [vmem:[%s1 + $0x98] sm:$0xf]
      %v1045 = vld [vmem:[%s1 + $0x9c] sm:$0xf]
      %v1046 = vld [vmem:[%s1 + $0xa0] sm:$0xf]
      %v1047 = vld [vmem:[%s1 + $0xa4] sm:$0xf]
      %v1048 = vld [vmem:[%s1 + $0xa8] sm:$0xf]
      %v1049 = vld [vmem:[%s1 + $0xac] sm:$0xf]
      %v1050 = vld [vmem:[%s1 + $0xb0] sm:$0xf]
      %v1051 = vld [vmem:[%s1 + $0xb4] sm:$0xf]
      %v1052 = vld [vmem:[%s1 + $0xb8] sm:$0xf]
      %v1053 = vld [vmem:[%s1 + $0xbc] sm:$0xf]
      %v1054 = vld [vmem:[%s1 + $0xc0] sm:$0xf]
      %v1055 = vld [vmem:[%s1 + $0xc4] sm:$0xf]
      %v1056 = vld [vmem:[%s1 + $0xc8] sm:$0xf]
      %v1057 = vld [vmem:[%s1 + $0xcc] sm:$0xf]
      %v1058 = vld [vmem:[%s1 + $0xd0] sm:$0xf]
      %v1059 = vld [vmem:[%s1 + $0xd4] sm:$0xf]
      %v1060 = vld [vmem:[%s1 + $0xd8] sm:$0xf]
      %v1061 = vld [vmem:[%s1 + $0xdc] sm:$0xf]
      %v1062 = vld [vmem:[%s1 + $0xe0] sm:$0xf]
      %v1063 = vld [vmem:[%s1 + $0xe4] sm:$0xf]
      %v1064 = vld [vmem:[%s1 + $0xe8] sm:$0xf]
      %v1065 = vld [vmem:[%s1 + $0xec] sm:$0xf]
      %v1066 = vld [vmem:[%s1 + $0xf0] sm:$0xf]
      %v1067 = vld [vmem:[%s1 + $0xf4] sm:$0xf]
      %v1068 = vld [vmem:[%s1 + $0xf8] sm:$0xf]
      %v1069 = vld [vmem:[%s1 + $0xfc] sm:$0xf]
      %v1070 = vld [vmem:[%s1 + $0x100] sm:$0xf]
      %v1071 = vld [vmem:[%s1 + $0x104] sm:$0xf]
      %v1072 = vld [vmem:[%s1 + $0x108] sm:$0xf]
      %v1073 = vld [vmem:[%s1 + $0x10c] sm:$0xf]
      %v1074 = vld [vmem:[%s1 + $0x110] sm:$0xf]
      %v1075 = vld [vmem:[%s1 + $0x114] sm:$0xf]
      %v1076 = vld [vmem:[%s1 + $0x118] sm:$0xf]
      %v1077 = vld [vmem:[%s1 + $0x11c] sm:$0xf]
      %v1078 = vld [vmem:[%s1 + $0x120] sm:$0xf]
      %v1079 = vld [vmem:[%s1 + $0x124] sm:$0xf]
      %v1080 = vld [vmem:[%s1 + $0x128] sm:$0xf]
      %v1081 = vld [vmem:[%s1 + $0x12c] sm:$0xf]
      %v1082 = vld [vmem:[%s1 + $0x130] sm:$0xf]
      %v1083 = vld [vmem:[%s1 + $0x134] sm:$0xf]
      %v1084 = vld [vmem:[%s1 + $0x138] sm:$0xf]
      %v1085 = vld [vmem:[%s1 + $0x13c] sm:$0xf]
      %v1086 = vld [vmem:[%s1 + $0x140] sm:$0xf]
      %v1087 = vld [vmem:[%s1 + $0x144] sm:$0xf]
      %v1088 = vld [vmem:[%s1 + $0x148] sm:$0xf]
      %v1089 = vld [vmem:[%s1 + $0x14c] sm:$0xf]
      %v1090 = vld [vmem:[%s1 + $0x150] sm:$0xf]
      %v1091 = vld [vmem:[%s1 + $0x154] sm:$0xf]
      %v1092 = vld [vmem:[%s1 + $0x158] sm:$0xf]
      %v1093 = vld [vmem:[%s1 + $0x15c] sm:$0xf]
      %v1094 = vld [vmem:[%s1 + $0x160] sm:$0xf]
      %v1095 = vld [vmem:[%s1 + $0x164] sm:$0xf]
      %v1096 = vld [vmem:[%s1 + $0x168] sm:$0xf]
      %v1097 = vld [vmem:[%s1 + $0x16c] sm:$0xf]
      %v1098 = vld [vmem:[%s1 + $0x170] sm:$0xf]
      %v1099 = vld [vmem:[%s1 + $0x174] sm:$0xf]
      %v1100 = vld [vmem:[%s1 + $0x178] sm:$0xf]
      %v1101 = vld [vmem:[%s1 + $0x17c] sm:$0xf]
      %v1102 = vld [vmem:[%s1 + $0x180] sm:$0xf]
      %v1103 = vld [vmem:[%s1 + $0x184] sm:$0xf]
      %v1104 = vld [vmem:[%s2] sm:$0x1]
      %v1105 = vpack.c.bf16 %v565, %v558
      %v1106 = vpack.c.bf16 %v566, %v559
      %v1107 = vpack.c.bf16 %v567, %v560
      %v1108 = vpack.c.bf16 %v568, %v561
      %v1109 = vpack.c.bf16 %v569, %v562
      %v1110 = vpack.c.bf16 %v570, %v563
      %v1111 = vpack.c.bf16 %v571, %v564
      %v1112 = vpack.c.bf16 %v579, %v572
      %v1113 = vpack.c.bf16 %v580, %v573
      %v1114 = vpack.c.bf16 %v581, %v574
      %v1115 = vpack.c.bf16 %v582, %v575
      %v1116 = vpack.c.bf16 %v583, %v576
      %v1117 = vpack.c.bf16 %v584, %v577
      %v1118 = vpack.c.bf16 %v585, %v578
      %v1119 = vpack.c.bf16 %v593, %v586
      %v1120 = vpack.c.bf16 %v594, %v587
      %v1121 = vpack.c.bf16 %v595, %v588
      %v1122 = vpack.c.bf16 %v596, %v589
      %v1123 = vpack.c.bf16 %v597, %v590
      %v1124 = vpack.c.bf16 %v598, %v591
      %v1125 = vpack.c.bf16 %v599, %v592
      %v1126 = vpack.c.bf16 %v607, %v600
      %v1127 = vpack.c.bf16 %v608, %v601
      %v1128 = vpack.c.bf16 %v609, %v602
      %v1129 = vpack.c.bf16 %v610, %v603
      %v1130 = vpack.c.bf16 %v611, %v604
      %v1131 = vpack.c.bf16 %v612, %v605
      %v1132 = vpack.c.bf16 %v613, %v606
      %v1133 = vpack.c.bf16 %v621, %v614
      %v1134 = vpack.c.bf16 %v622, %v615
      %v1135 = vpack.c.bf16 %v623, %v616
      %v1136 = vpack.c.bf16 %v624, %v617
      %v1137 = vpack.c.bf16 %v625, %v618
      %v1138 = vpack.c.bf16 %v626, %v619
      %v1139 = vpack.c.bf16 %v627, %v620
      %v1140 = vpack.c.bf16 %v635, %v628
      %v1141 = vpack.c.bf16 %v636, %v629
      %v1142 = vpack.c.bf16 %v637, %v630
      %v1143 = vpack.c.bf16 %v638, %v631
      %v1144 = vpack.c.bf16 %v639, %v632
      %v1145 = vpack.c.bf16 %v640, %v633
      %v1146 = vpack.c.bf16 %v641, %v634
      %v1147 = vpack.c.bf16 %v649, %v642
      %v1148 = vpack.c.bf16 %v650, %v643
      %v1149 = vpack.c.bf16 %v651, %v644
      %v1150 = vpack.c.bf16 %v652, %v645
      %v1151 = vpack.c.bf16 %v653, %v646
      %v1152 = vpack.c.bf16 %v654, %v647
      %v1153 = vpack.c.bf16 %v655, %v648
      %v1154 = vpack.c.bf16 %v663, %v656
      %v1155 = vpack.c.bf16 %v664, %v657
      %v1156 = vpack.c.bf16 %v665, %v658
      %v1157 = vpack.c.bf16 %v666, %v659
      %v1158 = vpack.c.bf16 %v667, %v660
      %v1159 = vpack.c.bf16 %v668, %v661
      %v1160 = vpack.c.bf16 %v669, %v662
      %v1161 = vpack.c.bf16 %v677, %v670
      %v1162 = vpack.c.bf16 %v678, %v671
      %v1163 = vpack.c.bf16 %v679, %v672
      %v1164 = vpack.c.bf16 %v680, %v673
      %v1165 = vpack.c.bf16 %v681, %v674
      %v1166 = vpack.c.bf16 %v682, %v675
      %v1167 = vpack.c.bf16 %v683, %v676
      %v1168 = vpack.c.bf16 %v691, %v684
      %v1169 = vpack.c.bf16 %v692, %v685
      %v1170 = vpack.c.bf16 %v693, %v686
      %v1171 = vpack.c.bf16 %v694, %v687
      %v1172 = vpack.c.bf16 %v695, %v688
      %v1173 = vpack.c.bf16 %v696, %v689
      %v1174 = vpack.c.bf16 %v697, %v690
      %v1175 = vpack.c.bf16 %v705, %v698
      %v1176 = vpack.c.bf16 %v706, %v699
      %v1177 = vpack.c.bf16 %v707, %v700
      %v1178 = vpack.c.bf16 %v708, %v701
      %v1179 = vpack.c.bf16 %v709, %v702
      %v1180 = vpack.c.bf16 %v710, %v703
      %v1181 = vpack.c.bf16 %v711, %v704
      %v1182 = vpack.c.bf16 %v719, %v712
      %v1183 = vpack.c.bf16 %v720, %v713
      %v1184 = vpack.c.bf16 %v721, %v714
      %v1185 = vpack.c.bf16 %v722, %v715
      %v1186 = vpack.c.bf16 %v723, %v716
      %v1187 = vpack.c.bf16 %v724, %v717
      %v1188 = vpack.c.bf16 %v725, %v718
      %v1189 = vpack.c.bf16 %v733, %v726
      %v1190 = vpack.c.bf16 %v734, %v727
      %v1191 = vpack.c.bf16 %v735, %v728
      %v1192 = vpack.c.bf16 %v736, %v729
      %v1193 = vpack.c.bf16 %v737, %v730
      %v1194 = vpack.c.bf16 %v738, %v731
      %v1195 = vpack.c.bf16 %v739, %v732
      %v1196 = vpack.c.bf16 %v747, %v740
      %v1197 = vpack.c.bf16 %v748, %v741
      %v1198 = vpack.c.bf16 %v749, %v742
      %v1199 = vpack.c.bf16 %v750, %v743
      %v1200 = vpack.c.bf16 %v751, %v744
      %v1201 = vpack.c.bf16 %v752, %v745
      %v1202 = vpack.c.bf16 %v753, %v746
      %v1203 = vpack.c.bf16 %v761, %v754
      %v1204 = vpack.c.bf16 %v762, %v755
      %v1205 = vpack.c.bf16 %v763, %v756
      %v1206 = vpack.c.bf16 %v764, %v757
      %v1207 = vpack.c.bf16 %v765, %v758
      %v1208 = vpack.c.bf16 %v766, %v759
      %v1209 = vpack.c.bf16 %v767, %v760
      %v1210 = vpack.c.bf16 %v775, %v768
      %v1211 = vpack.c.bf16 %v776, %v769
      %v1212 = vpack.c.bf16 %v777, %v770
      %v1213 = vpack.c.bf16 %v778, %v771
      %v1214 = vpack.c.bf16 %v779, %v772
      %v1215 = vpack.c.bf16 %v780, %v773
      %v1216 = vpack.c.bf16 %v781, %v774
      %v1217 = vpack.c.bf16 %v789, %v782
      %v1218 = vpack.c.bf16 %v790, %v783
      %v1219 = vpack.c.bf16 %v791, %v784
      %v1220 = vpack.c.bf16 %v792, %v785
      %v1221 = vpack.c.bf16 %v793, %v786
      %v1222 = vpack.c.bf16 %v794, %v787
      %v1223 = vpack.c.bf16 %v795, %v788
      %v1224 = vpack.c.bf16 %v803, %v796
      %v1225 = vpack.c.bf16 %v804, %v797
      %v1226 = vpack.c.bf16 %v805, %v798
      %v1227 = vpack.c.bf16 %v806, %v799
      %v1228 = vpack.c.bf16 %v807, %v800
      %v1229 = vpack.c.bf16 %v808, %v801
      %v1230 = vpack.c.bf16 %v809, %v802
      %v1231 = vpack.c.bf16 %v817, %v810
      %v1232 = vpack.c.bf16 %v818, %v811
      %v1233 = vpack.c.bf16 %v819, %v812
      %v1234 = vpack.c.bf16 %v820, %v813
      %v1235 = vpack.c.bf16 %v821, %v814
      %v1236 = vpack.c.bf16 %v822, %v815
      %v1237 = vpack.c.bf16 %v823, %v816
      %v1238 = vpack.c.bf16 %v831, %v824
      %v1239 = vpack.c.bf16 %v832, %v825
      %v1240 = vpack.c.bf16 %v833, %v826
      %v1241 = vpack.c.bf16 %v834, %v827
      %v1242 = vpack.c.bf16 %v835, %v828
      %v1243 = vpack.c.bf16 %v836, %v829
      %v1244 = vpack.c.bf16 %v837, %v830
      %v1245 = vpack.c.bf16 %v845, %v838
      %v1246 = vpack.c.bf16 %v846, %v839
      %v1247 = vpack.c.bf16 %v847, %v840
      %v1248 = vpack.c.bf16 %v848, %v841
      %v1249 = vpack.c.bf16 %v849, %v842
      %v1250 = vpack.c.bf16 %v850, %v843
      %v1251 = vpack.c.bf16 %v851, %v844
      %v1252 = vpack.c.bf16 %v859, %v852
      %v1253 = vpack.c.bf16 %v860, %v853
      %v1254 = vpack.c.bf16 %v861, %v854
      %v1255 = vpack.c.bf16 %v862, %v855
      %v1256 = vpack.c.bf16 %v863, %v856
      %v1257 = vpack.c.bf16 %v864, %v857
      %v1258 = vpack.c.bf16 %v865, %v858
      %v1259 = vpack.c.bf16 %v873, %v866
      %v1260 = vpack.c.bf16 %v874, %v867
      %v1261 = vpack.c.bf16 %v875, %v868
      %v1262 = vpack.c.bf16 %v876, %v869
      %v1263 = vpack.c.bf16 %v877, %v870
      %v1264 = vpack.c.bf16 %v878, %v871
      %v1265 = vpack.c.bf16 %v879, %v872
      %v1266 = vpack.c.bf16 %v887, %v880
      %v1267 = vpack.c.bf16 %v888, %v881
      %v1268 = vpack.c.bf16 %v889, %v882
      %v1269 = vpack.c.bf16 %v890, %v883
      %v1270 = vpack.c.bf16 %v891, %v884
      %v1271 = vpack.c.bf16 %v892, %v885
      %v1272 = vpack.c.bf16 %v893, %v886
      %v1273 = vpack.c.bf16 %v901, %v894
      %v1274 = vpack.c.bf16 %v902, %v895
      %v1275 = vpack.c.bf16 %v903, %v896
      %v1276 = vpack.c.bf16 %v904, %v897
      %v1277 = vpack.c.bf16 %v905, %v898
      %v1278 = vpack.c.bf16 %v906, %v899
      %v1279 = vpack.c.bf16 %v907, %v900
      %v1280 = vpack.c.bf16 %v915, %v908
      %v1281 = vpack.c.bf16 %v916, %v909
      %v1282 = vpack.c.bf16 %v917, %v910
      %v1283 = vpack.c.bf16 %v918, %v911
      %v1284 = vpack.c.bf16 %v919, %v912
      %v1285 = vpack.c.bf16 %v920, %v913
      %v1286 = vpack.c.bf16 %v921, %v914
      %v1287 = vpack.c.bf16 %v929, %v922
      %v1288 = vpack.c.bf16 %v930, %v923
      %v1289 = vpack.c.bf16 %v931, %v924
      %v1290 = vpack.c.bf16 %v932, %v925
      %v1291 = vpack.c.bf16 %v933, %v926
      %v1292 = vpack.c.bf16 %v934, %v927
      %v1293 = vpack.c.bf16 %v935, %v928
      %v1294 = vpack.c.bf16 %v943, %v936
      %v1295 = vpack.c.bf16 %v944, %v937
      %v1296 = vpack.c.bf16 %v945, %v938
      %v1297 = vpack.c.bf16 %v946, %v939
      %v1298 = vpack.c.bf16 %v947, %v940
      %v1299 = vpack.c.bf16 %v948, %v941
      %v1300 = vpack.c.bf16 %v949, %v942
      %v1301 = vpack.c.bf16 %v957, %v950
      %v1302 = vpack.c.bf16 %v958, %v951
      %v1303 = vpack.c.bf16 %v959, %v952
      %v1304 = vpack.c.bf16 %v960, %v953
      %v1305 = vpack.c.bf16 %v961, %v954
      %v1306 = vpack.c.bf16 %v962, %v955
      %v1307 = vpack.c.bf16 %v963, %v956
      %v1308 = vpack.c.bf16 %v971, %v964
      %v1309 = vpack.c.bf16 %v972, %v965
      %v1310 = vpack.c.bf16 %v973, %v966
      %v1311 = vpack.c.bf16 %v974, %v967
      %v1312 = vpack.c.bf16 %v975, %v968
      %v1313 = vpack.c.bf16 %v976, %v969
      %v1314 = vpack.c.bf16 %v977, %v970
      %v1315 = vpack.c.bf16 %v985, %v978
      %v1316 = vpack.c.bf16 %v986, %v979
      %v1317 = vpack.c.bf16 %v987, %v980
      %v1318 = vpack.c.bf16 %v988, %v981
      %v1319 = vpack.c.bf16 %v989, %v982
      %v1320 = vpack.c.bf16 %v990, %v983
      %v1321 = vpack.c.bf16 %v991, %v984
      %v1322 = vpack.c.bf16 %v999, %v992
      %v1323 = vpack.c.bf16 %v1000, %v993
      %v1324 = vpack.c.bf16 %v1001, %v994
      %v1325 = vpack.c.bf16 %v1002, %v995
      %v1326 = vpack.c.bf16 %v1003, %v996
      %v1327 = vpack.c.bf16 %v1004, %v997
      %v1328 = vpack.c.bf16 %v1005, %v998
      %v1330 = vlaneseq
      %v1331 = vshrl.u32 %v1330, 7
      %v1332 = vsub.s32 0, %v1331
      %v1333 = vrot.slane %v1104, %v1332
      %v1433 = vunpack.c.l.b16 %v1006
      %v1434 = vunpack.c.l.b16 %v1007
      %v1435 = vunpack.c.l.b16 %v1008
      %v1436 = vunpack.c.l.b16 %v1009
      %v1437 = vunpack.c.l.b16 %v1010
      %v1438 = vunpack.c.l.b16 %v1011
      %v1439 = vunpack.c.l.b16 %v1012
      %v1440 = vunpack.c.l.b16 %v1013
      %v1441 = vunpack.c.l.b16 %v1014
      %v1442 = vunpack.c.l.b16 %v1015
      %v1443 = vunpack.c.l.b16 %v1016
      %v1444 = vunpack.c.l.b16 %v1017
      %v1445 = vunpack.c.l.b16 %v1018
      %v1446 = vunpack.c.l.b16 %v1019
      %v1447 = vunpack.c.l.b16 %v1020
      %v1448 = vunpack.c.l.b16 %v1021
      %v1449 = vunpack.c.l.b16 %v1022
      %v1450 = vunpack.c.l.b16 %v1023
      %v1451 = vunpack.c.l.b16 %v1024
      %v1452 = vunpack.c.l.b16 %v1025
      %v1453 = vunpack.c.l.b16 %v1026
      %v1454 = vunpack.c.l.b16 %v1027
      %v1455 = vunpack.c.l.b16 %v1028
      %v1456 = vunpack.c.l.b16 %v1029
      %v1457 = vunpack.c.l.b16 %v1030
      %v1458 = vunpack.c.l.b16 %v1031
      %v1459 = vunpack.c.l.b16 %v1032
      %v1460 = vunpack.c.l.b16 %v1033
      %v1461 = vunpack.c.l.b16 %v1034
      %v1462 = vunpack.c.l.b16 %v1035
      %v1463 = vunpack.c.l.b16 %v1036
      %v1464 = vunpack.c.l.b16 %v1037
      %v1465 = vunpack.c.l.b16 %v1038
      %v1466 = vunpack.c.l.b16 %v1039
      %v1467 = vunpack.c.l.b16 %v1040
      %v1468 = vunpack.c.l.b16 %v1041
      %v1469 = vunpack.c.l.b16 %v1042
      %v1470 = vunpack.c.l.b16 %v1043
      %v1471 = vunpack.c.l.b16 %v1044
      %v1472 = vunpack.c.l.b16 %v1045
      %v1473 = vunpack.c.l.b16 %v1046
      %v1474 = vunpack.c.l.b16 %v1047
      %v1475 = vunpack.c.l.b16 %v1048
      %v1476 = vunpack.c.l.b16 %v1049
      %v1477 = vunpack.c.l.b16 %v1050
      %v1478 = vunpack.c.l.b16 %v1051
      %v1479 = vunpack.c.l.b16 %v1052
      %v1480 = vunpack.c.l.b16 %v1053
      %v1481 = vunpack.c.l.b16 %v1054
      %v1482 = vunpack.c.l.b16 %v1055
      %v1483 = vunpack.c.l.b16 %v1056
      %v1484 = vunpack.c.l.b16 %v1057
      %v1485 = vunpack.c.l.b16 %v1058
      %v1486 = vunpack.c.l.b16 %v1059
      %v1487 = vunpack.c.l.b16 %v1060
      %v1488 = vunpack.c.l.b16 %v1061
      %v1489 = vunpack.c.l.b16 %v1062
      %v1490 = vunpack.c.l.b16 %v1063
      %v1491 = vunpack.c.l.b16 %v1064
      %v1492 = vunpack.c.l.b16 %v1065
      %v1493 = vunpack.c.l.b16 %v1066
      %v1494 = vunpack.c.l.b16 %v1067
      %v1495 = vunpack.c.l.b16 %v1068
      %v1496 = vunpack.c.l.b16 %v1069
      %v1497 = vunpack.c.l.b16 %v1070
      %v1498 = vunpack.c.l.b16 %v1071
      %v1499 = vunpack.c.l.b16 %v1072
      %v1500 = vunpack.c.l.b16 %v1073
      %v1501 = vunpack.c.l.b16 %v1074
      %v1502 = vunpack.c.l.b16 %v1075
      %v1503 = vunpack.c.l.b16 %v1076
      %v1504 = vunpack.c.l.b16 %v1077
      %v1505 = vunpack.c.l.b16 %v1078
      %v1506 = vunpack.c.l.b16 %v1079
      %v1507 = vunpack.c.l.b16 %v1080
      %v1508 = vunpack.c.l.b16 %v1081
      %v1509 = vunpack.c.l.b16 %v1082
      %v1510 = vunpack.c.l.b16 %v1083
      %v1511 = vunpack.c.l.b16 %v1084
      %v1512 = vunpack.c.l.b16 %v1085
      %v1513 = vunpack.c.l.b16 %v1086
      %v1514 = vunpack.c.l.b16 %v1087
      %v1515 = vunpack.c.l.b16 %v1088
      %v1516 = vunpack.c.l.b16 %v1089
      %v1517 = vunpack.c.l.b16 %v1090
      %v1518 = vunpack.c.l.b16 %v1091
      %v1519 = vunpack.c.l.b16 %v1092
      %v1520 = vunpack.c.l.b16 %v1093
      %v1521 = vunpack.c.l.b16 %v1094
      %v1522 = vunpack.c.l.b16 %v1095
      %v1523 = vunpack.c.l.b16 %v1096
      %v1524 = vunpack.c.l.b16 %v1097
      %v1525 = vunpack.c.l.b16 %v1098
      %v1526 = vunpack.c.l.b16 %v1099
      %v1527 = vunpack.c.l.b16 %v1100
      %v1528 = vunpack.c.l.b16 %v1101
      %v1529 = vunpack.c.l.b16 %v1102
      %v1530 = vunpack.c.l.b16 %v1103
      %v1531 = vpack.c.b16 %v1434, %v1433
      %v1532 = vpack.c.b16 %v1436, %v1435
      %v1533 = vpack.c.b16 %v1438, %v1437
      %v1534 = vpack.c.b16 %v1440, %v1439
      %v1535 = vpack.c.b16 %v1442, %v1441
      %v1536 = vpack.c.b16 %v1444, %v1443
      %v1537 = vpack.c.b16 %v1446, %v1445
      %v1538 = vpack.c.b16 %v1448, %v1447
      %v1539 = vpack.c.b16 %v1450, %v1449
      %v1540 = vpack.c.b16 %v1452, %v1451
      %v1541 = vpack.c.b16 %v1454, %v1453
      %v1542 = vpack.c.b16 %v1456, %v1455
      %v1543 = vpack.c.b16 %v1458, %v1457
      %v1544 = vpack.c.b16 %v1460, %v1459
      %v1545 = vpack.c.b16 %v1462, %v1461
      %v1546 = vpack.c.b16 %v1464, %v1463
      %v1547 = vpack.c.b16 %v1466, %v1465
      %v1548 = vpack.c.b16 %v1468, %v1467
      %v1549 = vpack.c.b16 %v1470, %v1469
      %v1550 = vpack.c.b16 %v1472, %v1471
      %v1551 = vpack.c.b16 %v1474, %v1473
      %v1552 = vpack.c.b16 %v1476, %v1475
      %v1553 = vpack.c.b16 %v1478, %v1477
      %v1554 = vpack.c.b16 %v1480, %v1479
      %v1555 = vpack.c.b16 %v1482, %v1481
      %v1556 = vpack.c.b16 %v1484, %v1483
      %v1557 = vpack.c.b16 %v1486, %v1485
      %v1558 = vpack.c.b16 %v1488, %v1487
      %v1559 = vpack.c.b16 %v1490, %v1489
      %v1560 = vpack.c.b16 %v1492, %v1491
      %v1561 = vpack.c.b16 %v1494, %v1493
      %v1562 = vpack.c.b16 %v1496, %v1495
      %v1563 = vpack.c.b16 %v1498, %v1497
      %v1564 = vpack.c.b16 %v1500, %v1499
      %v1565 = vpack.c.b16 %v1502, %v1501
      %v1566 = vpack.c.b16 %v1504, %v1503
      %v1567 = vpack.c.b16 %v1506, %v1505
      %v1568 = vpack.c.b16 %v1508, %v1507
      %v1569 = vpack.c.b16 %v1510, %v1509
      %v1570 = vpack.c.b16 %v1512, %v1511
      %v1571 = vpack.c.b16 %v1514, %v1513
      %v1572 = vpack.c.b16 %v1516, %v1515
      %v1573 = vpack.c.b16 %v1518, %v1517
      %v1574 = vpack.c.b16 %v1520, %v1519
      %v1575 = vpack.c.b16 %v1522, %v1521
      %v1576 = vpack.c.b16 %v1524, %v1523
      %v1577 = vpack.c.b16 %v1526, %v1525
      %v1578 = vpack.c.b16 %v1528, %v1527
      %v1579 = vpack.c.b16 %v1530, %v1529
      %vm1629 = vcmask 130048
      %v1631 = vsel %vm1629, %v1111, 0
      %v1634 = vsel %vm1629, %v1118, 0
      %v1637 = vsel %vm1629, %v1125, 0
      %v1640 = vsel %vm1629, %v1132, 0
      %v1643 = vsel %vm1629, %v1139, 0
      %v1646 = vsel %vm1629, %v1146, 0
      %v1649 = vsel %vm1629, %v1153, 0
      %v1652 = vsel %vm1629, %v1160, 0
      %v1655 = vsel %vm1629, %v1167, 0
      %v1658 = vsel %vm1629, %v1174, 0
      %v1661 = vsel %vm1629, %v1181, 0
      %v1664 = vsel %vm1629, %v1188, 0
      %v1667 = vsel %vm1629, %v1195, 0
      %v1670 = vsel %vm1629, %v1202, 0
      %v1673 = vsel %vm1629, %v1209, 0
      %v1676 = vsel %vm1629, %v1216, 0
      %v1679 = vsel %vm1629, %v1223, 0
      %v1682 = vsel %vm1629, %v1230, 0
      %v1685 = vsel %vm1629, %v1237, 0
      %v1688 = vsel %vm1629, %v1244, 0
      %v1691 = vsel %vm1629, %v1251, 0
      %v1694 = vsel %vm1629, %v1258, 0
      %v1697 = vsel %vm1629, %v1265, 0
      %v1700 = vsel %vm1629, %v1272, 0
      %v1703 = vsel %vm1629, %v1279, 0
      %v1706 = vsel %vm1629, %v1286, 0
      %v1709 = vsel %vm1629, %v1293, 0
      %v1712 = vsel %vm1629, %v1300, 0
      %v1715 = vsel %vm1629, %v1307, 0
      %v1718 = vsel %vm1629, %v1314, 0
      %v1721 = vsel %vm1629, %v1321, 0
      %v1724 = vsel %vm1629, %v1328, 0
      %1726 = vmatprep.subr.bf16.mxu0 0
      %1727 = vmatpush1.bf16.msra.mxu0 %v1531
      %1728 = vmatprep.subr.bf16.mxu0 0
      %1729 = vmatpush1.bf16.msra.mxu0 %v1532
      %1730 = vmatprep.subr.bf16.mxu0 0
      %1731 = vmatpush1.bf16.msra.mxu0 %v1533
      %1732 = vmatprep.subr.bf16.mxu0 0
      %1733 = vmatpush1.bf16.msra.mxu0 %v1534
      %1734 = vmatprep.subr.bf16.mxu0 0
      %1735 = vmatpush1.bf16.msra.mxu0 %v1535
      %1736 = vmatprep.subr.bf16.mxu0 0
      %1737 = vmatpush1.bf16.msra.mxu0 %v1536
      %1738 = vmatprep.subr.bf16.mxu0 0
      %1739 = vmatpush1.bf16.msra.mxu0 %v1537
      %1740 = vmatprep.subr.bf16.mxu0 0
      %1741 = vmatpush1.bf16.msra.mxu0 %v1538
      %1742 = vmatprep.subr.bf16.mxu0 0
      %1743 = vmatpush1.bf16.msra.mxu0 %v1539
      %1744 = vmatprep.subr.bf16.mxu0 0
      %1745 = vmatpush1.bf16.msra.mxu0 %v1540
      %1746 = vmatprep.subr.bf16.mxu0 0
      %1747 = vmatpush1.bf16.msra.mxu0 %v1541
      %1748 = vmatprep.subr.bf16.mxu0 0
      %1749 = vmatpush1.bf16.msra.mxu0 %v1542
      %1750 = vmatprep.subr.bf16.mxu0 0
      %1751 = vmatpush1.bf16.msra.mxu0 %v1543
      %1752 = vmatprep.subr.bf16.mxu0 0
      %1753 = vmatpush1.bf16.msra.mxu0 %v1544
      %1754 = vmatprep.subr.bf16.mxu0 0
      %1755 = vmatpush1.bf16.msra.mxu0 %v1545
      %1756 = vmatprep.subr.bf16.mxu0 0
      %1757 = vmatpush1.bf16.msra.mxu0 %v1546
      %1758 = vmatprep.mubr.bf16.mxu0 %v1106
      %1759 = vmatmul.mubr.bf16.gmra.mrb[0].mxu0 %v1105
      %v1760 = vpop.f32.mrb[0].mxu0
      %v1761 = vadd.f32 %v1333, %v1760
      %v1762 = vpop.f32.mrb[0].mxu0
      %v1763 = vpop.f32.mrb[0].mxu0
      %v1764 = vadd.f32 %v1333, %v1763
      %v1765 = vpop.f32.mrb[0].mxu0
      %1766 = vmatprep.mubr.bf16.mxu0 %v1113
      %1767 = vmatmul.mubr.bf16.gmra.mrb[0].mxu0 %v1112
      %v1768 = vpop.f32.mrb[0].mxu0
      %v1769 = vadd.f32 %v1333, %v1768
      %v1770 = vpop.f32.mrb[0].mxu0
      %v1771 = vpop.f32.mrb[0].mxu0
      %v1772 = vadd.f32 %v1333, %v1771
      %v1773 = vpop.f32.mrb[0].mxu0
      %1774 = vmatprep.mubr.bf16.mxu0 %v1120
      %1775 = vmatmul.mubr.bf16.gmra.mrb[0].mxu0 %v1119
      %v1776 = vpop.f32.mrb[0].mxu0
      %v1777 = vadd.f32 %v1333, %v1776
      %v1778 = vpop.f32.mrb[0].mxu0
      %v1779 = vpop.f32.mrb[0].mxu0
      %v1780 = vadd.f32 %v1333, %v1779
      %v1781 = vpop.f32.mrb[0].mxu0
      %1782 = vmatprep.mubr.bf16.mxu0 %v1127
      %1783 = vmatmul.mubr.bf16.gmra.mrb[0].mxu0 %v1126
      %v1784 = vpop.f32.mrb[0].mxu0
      %v1785 = vadd.f32 %v1333, %v1784
      %v1786 = vpop.f32.mrb[0].mxu0
      %v1787 = vpop.f32.mrb[0].mxu0
      %v1788 = vadd.f32 %v1333, %v1787
      %v1789 = vpop.f32.mrb[0].mxu0
      %1790 = vmatprep.mubr.bf16.mxu0 %v1134
      %1791 = vmatmul.mubr.bf16.gmra.mrb[0].mxu0 %v1133
      %v1792 = vpop.f32.mrb[0].mxu0
      %v1793 = vadd.f32 %v1333, %v1792
      %v1794 = vpop.f32.mrb[0].mxu0
      %v1795 = vpop.f32.mrb[0].mxu0
      %v1796 = vadd.f32 %v1333, %v1795
      %v1797 = vpop.f32.mrb[0].mxu0
      %1798 = vmatprep.mubr.bf16.mxu0 %v1141
      %1799 = vmatmul.mubr.bf16.gmra.mrb[0].mxu0 %v1140
      %v1800 = vpop.f32.mrb[0].mxu0
      %v1801 = vadd.f32 %v1333, %v1800
      %v1802 = vpop.f32.mrb[0].mxu0
      %v1803 = vpop.f32.mrb[0].mxu0
      %v1804 = vadd.f32 %v1333, %v1803
      %v1805 = vpop.f32.mrb[0].mxu0
      %1806 = vmatprep.mubr.bf16.mxu0 %v1148
      %1807 = vmatmul.mubr.bf16.gmra.mrb[0].mxu0 %v1147
      %v1808 = vpop.f32.mrb[0].mxu0
      %v1809 = vadd.f32 %v1333, %v1808
      %v1810 = vpop.f32.mrb[0].mxu0
      %v1811 = vpop.f32.mrb[0].mxu0
      %v1812 = vadd.f32 %v1333, %v1811
      %v1813 = vpop.f32.mrb[0].mxu0
      %1814 = vmatprep.mubr.bf16.mxu0 %v1155
      %1815 = vmatmul.mubr.bf16.gmra.mrb[0].mxu0 %v1154
      %v1816 = vpop.f32.mrb[0].mxu0
      %v1817 = vadd.f32 %v1333, %v1816
      %v1818 = vpop.f32.mrb[0].mxu0
      %v1819 = vpop.f32.mrb[0].mxu0
      %v1820 = vadd.f32 %v1333, %v1819
      %v1821 = vpop.f32.mrb[0].mxu0
      %1822 = vmatprep.mubr.bf16.mxu0 %v1162
      %1823 = vmatmul.mubr.bf16.gmra.mrb[0].mxu0 %v1161
      %v1824 = vpop.f32.mrb[0].mxu0
      %v1825 = vadd.f32 %v1333, %v1824
      %v1826 = vpop.f32.mrb[0].mxu0
      %v1827 = vpop.f32.mrb[0].mxu0
      %v1828 = vadd.f32 %v1333, %v1827
      %v1829 = vpop.f32.mrb[0].mxu0
      %1830 = vmatprep.mubr.bf16.mxu0 %v1169
      %1831 = vmatmul.mubr.bf16.gmra.mrb[0].mxu0 %v1168
      %v1832 = vpop.f32.mrb[0].mxu0
      %v1833 = vadd.f32 %v1333, %v1832
      %v1834 = vpop.f32.mrb[0].mxu0
      %v1835 = vpop.f32.mrb[0].mxu0
      %v1836 = vadd.f32 %v1333, %v1835
      %v1837 = vpop.f32.mrb[0].mxu0
      %1838 = vmatprep.mubr.bf16.mxu0 %v1176
      %1839 = vmatmul.mubr.bf16.gmra.mrb[0].mxu0 %v1175
      %v1840 = vpop.f32.mrb[0].mxu0
      %v1841 = vadd.f32 %v1333, %v1840
      %v1842 = vpop.f32.mrb[0].mxu0
      %v1843 = vpop.f32.mrb[0].mxu0
      %v1844 = vadd.f32 %v1333, %v1843
      %v1845 = vpop.f32.mrb[0].mxu0
      %1846 = vmatprep.mubr.bf16.mxu0 %v1183
      %1847 = vmatmul.mubr.bf16.gmra.mrb[0].mxu0 %v1182
      %v1848 = vpop.f32.mrb[0].mxu0
      %v1849 = vadd.f32 %v1333, %v1848
      %v1850 = vpop.f32.mrb[0].mxu0
      %v1851 = vpop.f32.mrb[0].mxu0
      %v1852 = vadd.f32 %v1333, %v1851
      %v1853 = vpop.f32.mrb[0].mxu0
      %1854 = vmatprep.mubr.bf16.mxu0 %v1190
      %1855 = vmatmul.mubr.bf16.gmra.mrb[0].mxu0 %v1189
      %v1856 = vpop.f32.mrb[0].mxu0
      %v1857 = vadd.f32 %v1333, %v1856
      %v1858 = vpop.f32.mrb[0].mxu0
      %v1859 = vpop.f32.mrb[0].mxu0
      %v1860 = vadd.f32 %v1333, %v1859
      %v1861 = vpop.f32.mrb[0].mxu0
      %1862 = vmatprep.mubr.bf16.mxu0 %v1197
      %1863 = vmatmul.mubr.bf16.gmra.mrb[0].mxu0 %v1196
      %v1864 = vpop.f32.mrb[0].mxu0
      %v1865 = vadd.f32 %v1333, %v1864
      %v1866 = vpop.f32.mrb[0].mxu0
      %v1867 = vpop.f32.mrb[0].mxu0
      %v1868 = vadd.f32 %v1333, %v1867
      %v1869 = vpop.f32.mrb[0].mxu0
      %1870 = vmatprep.mubr.bf16.mxu0 %v1204
      %1871 = vmatmul.mubr.bf16.gmra.mrb[0].mxu0 %v1203
      %v1872 = vpop.f32.mrb[0].mxu0
      %v1873 = vadd.f32 %v1333, %v1872
      %v1874 = vpop.f32.mrb[0].mxu0
      %v1875 = vpop.f32.mrb[0].mxu0
      %v1876 = vadd.f32 %v1333, %v1875
      %v1877 = vpop.f32.mrb[0].mxu0
      %1878 = vmatprep.mubr.bf16.mxu0 %v1211
      %1879 = vmatmul.mubr.bf16.gmra.mrb[0].mxu0 %v1210
      %v1880 = vpop.f32.mrb[0].mxu0
      %v1881 = vadd.f32 %v1333, %v1880
      %v1882 = vpop.f32.mrb[0].mxu0
      %v1883 = vpop.f32.mrb[0].mxu0
      %v1884 = vadd.f32 %v1333, %v1883
      %v1885 = vpop.f32.mrb[0].mxu0
      %1886 = vmatprep.mubr.bf16.mxu0 %v1218
      %1887 = vmatmul.mubr.bf16.gmra.mrb[0].mxu0 %v1217
      %v1888 = vpop.f32.mrb[0].mxu0
      %v1889 = vadd.f32 %v1333, %v1888
      %v1890 = vpop.f32.mrb[0].mxu0
      %v1891 = vpop.f32.mrb[0].mxu0
      %v1892 = vadd.f32 %v1333, %v1891
      %v1893 = vpop.f32.mrb[0].mxu0
      %1894 = vmatprep.mubr.bf16.mxu0 %v1225
      %1895 = vmatmul.mubr.bf16.gmra.mrb[0].mxu0 %v1224
      %v1896 = vpop.f32.mrb[0].mxu0
      %v1897 = vadd.f32 %v1333, %v1896
      %v1898 = vpop.f32.mrb[0].mxu0
      %v1899 = vpop.f32.mrb[0].mxu0
      %v1900 = vadd.f32 %v1333, %v1899
      %v1901 = vpop.f32.mrb[0].mxu0
      %1902 = vmatprep.mubr.bf16.mxu0 %v1232
      %1903 = vmatmul.mubr.bf16.gmra.mrb[0].mxu0 %v1231
      %v1904 = vpop.f32.mrb[0].mxu0
      %v1905 = vadd.f32 %v1333, %v1904
      %v1906 = vpop.f32.mrb[0].mxu0
      %v1907 = vpop.f32.mrb[0].mxu0
      %v1908 = vadd.f32 %v1333, %v1907
      %v1909 = vpop.f32.mrb[0].mxu0
      %1910 = vmatprep.mubr.bf16.mxu0 %v1239
      %1911 = vmatmul.mubr.bf16.gmra.mrb[0].mxu0 %v1238
      %v1912 = vpop.f32.mrb[0].mxu0
      %v1913 = vadd.f32 %v1333, %v1912
      %v1914 = vpop.f32.mrb[0].mxu0
      %v1915 = vpop.f32.mrb[0].mxu0
      %v1916 = vadd.f32 %v1333, %v1915
      %v1917 = vpop.f32.mrb[0].mxu0
      %1918 = vmatprep.mubr.bf16.mxu0 %v1246
      %1919 = vmatmul.mubr.bf16.gmra.mrb[0].mxu0 %v1245
      %v1920 = vpop.f32.mrb[0].mxu0
      %v1921 = vadd.f32 %v1333, %v1920
      %v1922 = vpop.f32.mrb[0].mxu0
      %v1923 = vpop.f32.mrb[0].mxu0
      %v1924 = vadd.f32 %v1333, %v1923
      %v1925 = vpop.f32.mrb[0].mxu0
      %1926 = vmatprep.mubr.bf16.mxu0 %v1253
      %1927 = vmatmul.mubr.bf16.gmra.mrb[0].mxu0 %v1252
      %v1928 = vpop.f32.mrb[0].mxu0
      %v1929 = vadd.f32 %v1333, %v1928
      %v1930 = vpop.f32.mrb[0].mxu0
      %v1931 = vpop.f32.mrb[0].mxu0
      %v1932 = vadd.f32 %v1333, %v1931
      %v1933 = vpop.f32.mrb[0].mxu0
      %1934 = vmatprep.mubr.bf16.mxu0 %v1260
      %1935 = vmatmul.mubr.bf16.gmra.mrb[0].mxu0 %v1259
      %v1936 = vpop.f32.mrb[0].mxu0
      %v1937 = vadd.f32 %v1333, %v1936
      %v1938 = vpop.f32.mrb[0].mxu0
      %v1939 = vpop.f32.mrb[0].mxu0
      %v1940 = vadd.f32 %v1333, %v1939
      %v1941 = vpop.f32.mrb[0].mxu0
      %1942 = vmatprep.mubr.bf16.mxu0 %v1267
      %1943 = vmatmul.mubr.bf16.gmra.mrb[0].mxu0 %v1266
      %v1944 = vpop.f32.mrb[0].mxu0
      %v1945 = vadd.f32 %v1333, %v1944
      %v1946 = vpop.f32.mrb[0].mxu0
      %v1947 = vpop.f32.mrb[0].mxu0
      %v1948 = vadd.f32 %v1333, %v1947
      %v1949 = vpop.f32.mrb[0].mxu0
      %1950 = vmatprep.mubr.bf16.mxu0 %v1274
      %1951 = vmatmul.mubr.bf16.gmra.mrb[0].mxu0 %v1273
      %v1952 = vpop.f32.mrb[0].mxu0
      %v1953 = vadd.f32 %v1333, %v1952
      %v1954 = vpop.f32.mrb[0].mxu0
      %v1955 = vpop.f32.mrb[0].mxu0
      %v1956 = vadd.f32 %v1333, %v1955
      %v1957 = vpop.f32.mrb[0].mxu0
      %1958 = vmatprep.mubr.bf16.mxu0 %v1281
      %1959 = vmatmul.mubr.bf16.gmra.mrb[0].mxu0 %v1280
      %v1960 = vpop.f32.mrb[0].mxu0
      %v1961 = vadd.f32 %v1333, %v1960
      %v1962 = vpop.f32.mrb[0].mxu0
      %v1963 = vpop.f32.mrb[0].mxu0
      %v1964 = vadd.f32 %v1333, %v1963
      %v1965 = vpop.f32.mrb[0].mxu0
      %1966 = vmatprep.mubr.bf16.mxu0 %v1288
      %1967 = vmatmul.mubr.bf16.gmra.mrb[0].mxu0 %v1287
      %v1968 = vpop.f32.mrb[0].mxu0
      %v1969 = vadd.f32 %v1333, %v1968
      %v1970 = vpop.f32.mrb[0].mxu0
      %v1971 = vpop.f32.mrb[0].mxu0
      %v1972 = vadd.f32 %v1333, %v1971
      %v1973 = vpop.f32.mrb[0].mxu0
      %1974 = vmatprep.mubr.bf16.mxu0 %v1295
      %1975 = vmatmul.mubr.bf16.gmra.mrb[0].mxu0 %v1294
      %v1976 = vpop.f32.mrb[0].mxu0
      %v1977 = vadd.f32 %v1333, %v1976
      %v1978 = vpop.f32.mrb[0].mxu0
      %v1979 = vpop.f32.mrb[0].mxu0
      %v1980 = vadd.f32 %v1333, %v1979
      %v1981 = vpop.f32.mrb[0].mxu0
      %1982 = vmatprep.mubr.bf16.mxu0 %v1302
      %1983 = vmatmul.mubr.bf16.gmra.mrb[0].mxu0 %v1301
      %v1984 = vpop.f32.mrb[0].mxu0
      %v1985 = vadd.f32 %v1333, %v1984
      %v1986 = vpop.f32.mrb[0].mxu0
      %v1987 = vpop.f32.mrb[0].mxu0
      %v1988 = vadd.f32 %v1333, %v1987
      %v1989 = vpop.f32.mrb[0].mxu0
      %1990 = vmatprep.mubr.bf16.mxu0 %v1309
      %1991 = vmatmul.mubr.bf16.gmra.mrb[0].mxu0 %v1308
      %v1992 = vpop.f32.mrb[0].mxu0
      %v1993 = vadd.f32 %v1333, %v1992
      %v1994 = vpop.f32.mrb[0].mxu0
      %v1995 = vpop.f32.mrb[0].mxu0
      %v1996 = vadd.f32 %v1333, %v1995
      %v1997 = vpop.f32.mrb[0].mxu0
      %1998 = vmatprep.mubr.bf16.mxu0 %v1316
      %1999 = vmatmul.mubr.bf16.gmra.mrb[0].mxu0 %v1315
      %v2000 = vpop.f32.mrb[0].mxu0
      %v2001 = vadd.f32 %v1333, %v2000
      %v2002 = vpop.f32.mrb[0].mxu0
      %v2003 = vpop.f32.mrb[0].mxu0
      %v2004 = vadd.f32 %v1333, %v2003
      %v2005 = vpop.f32.mrb[0].mxu0
      %2006 = vmatprep.mubr.bf16.mxu0 %v1323
      %2007 = vmatmul.mubr.bf16.gmra.mrb[0].mxu0 %v1322
      %v2008 = vpop.f32.mrb[0].mxu0
      %v2009 = vadd.f32 %v1333, %v2008
      %v2010 = vpop.f32.mrb[0].mxu0
      %v2011 = vpop.f32.mrb[0].mxu0
      %v2012 = vadd.f32 %v1333, %v2011
      %v2013 = vpop.f32.mrb[0].mxu0
      %2014 = vdwg.mxu0
      %2015 = vmatprep.subr.bf16.mxu0 0
      %2016 = vmatpush1.bf16.msra.mxu0 %v1547
      %2017 = vmatprep.subr.bf16.mxu0 0
      %2018 = vmatpush1.bf16.msra.mxu0 %v1548
      %2019 = vmatprep.subr.bf16.mxu0 0
      %2020 = vmatpush1.bf16.msra.mxu0 %v1549
      %2021 = vmatprep.subr.bf16.mxu0 0
      %2022 = vmatpush1.bf16.msra.mxu0 %v1550
      %2023 = vmatprep.subr.bf16.mxu0 0
      %2024 = vmatpush1.bf16.msra.mxu0 %v1551
      %2025 = vmatprep.subr.bf16.mxu0 0
      %2026 = vmatpush1.bf16.msra.mxu0 %v1552
      %2027 = vmatprep.subr.bf16.mxu0 0
      %2028 = vmatpush1.bf16.msra.mxu0 %v1553
      %2029 = vmatprep.subr.bf16.mxu0 0
      %2030 = vmatpush1.bf16.msra.mxu0 %v1554
      %2031 = vmatprep.subr.bf16.mxu0 0
      %2032 = vmatpush1.bf16.msra.mxu0 %v1555
      %2033 = vmatprep.subr.bf16.mxu0 0
      %2034 = vmatpush1.bf16.msra.mxu0 %v1556
      %2035 = vmatprep.subr.bf16.mxu0 0
      %2036 = vmatpush1.bf16.msra.mxu0 %v1557
      %2037 = vmatprep.subr.bf16.mxu0 0
      %2038 = vmatpush1.bf16.msra.mxu0 %v1558
      %2039 = vmatprep.subr.bf16.mxu0 0
      %2040 = vmatpush1.bf16.msra.mxu0 %v1559
      %2041 = vmatprep.subr.bf16.mxu0 0
      %2042 = vmatpush1.bf16.msra.mxu0 %v1560
      %2043 = vmatprep.subr.bf16.mxu0 0
      %2044 = vmatpush1.bf16.msra.mxu0 %v1561
      %2045 = vmatprep.subr.bf16.mxu0 0
      %2046 = vmatpush1.bf16.msra.mxu0 %v1562
      %2047 = vmatprep.mubr.bf16.mxu0 %v1108
      %2048 = vmatmul.mubr.bf16.gmra.mrb[0].mxu0 %v1107
      %v2049 = vpop.f32.mrb[0].mxu0
      %v2050 = vadd.f32 %v1761, %v2049
      %v2051 = vpop.f32.mrb[0].mxu0
      %v2052 = vpop.f32.mrb[0].mxu0
      %v2053 = vadd.f32 %v1764, %v2052
      %v2054 = vpop.f32.mrb[0].mxu0
      %2055 = vmatprep.mubr.bf16.mxu0 %v1115
      %2056 = vmatmul.mubr.bf16.gmra.mrb[0].mxu0 %v1114
      %v2057 = vpop.f32.mrb[0].mxu0
      %v2058 = vadd.f32 %v1769, %v2057
      %v2059 = vpop.f32.mrb[0].mxu0
      %v2060 = vpop.f32.mrb[0].mxu0
      %v2061 = vadd.f32 %v1772, %v2060
      %v2062 = vpop.f32.mrb[0].mxu0
      %2063 = vmatprep.mubr.bf16.mxu0 %v1122
      %2064 = vmatmul.mubr.bf16.gmra.mrb[0].mxu0 %v1121
      %v2065 = vpop.f32.mrb[0].mxu0
      %v2066 = vadd.f32 %v1777, %v2065
      %v2067 = vpop.f32.mrb[0].mxu0
      %v2068 = vpop.f32.mrb[0].mxu0
      %v2069 = vadd.f32 %v1780, %v2068
      %v2070 = vpop.f32.mrb[0].mxu0
      %2071 = vmatprep.mubr.bf16.mxu0 %v1129
      %2072 = vmatmul.mubr.bf16.gmra.mrb[0].mxu0 %v1128
      %v2073 = vpop.f32.mrb[0].mxu0
      %v2074 = vadd.f32 %v1785, %v2073
      %v2075 = vpop.f32.mrb[0].mxu0
      %v2076 = vpop.f32.mrb[0].mxu0
      %v2077 = vadd.f32 %v1788, %v2076
      %v2078 = vpop.f32.mrb[0].mxu0
      %2079 = vmatprep.mubr.bf16.mxu0 %v1136
      %2080 = vmatmul.mubr.bf16.gmra.mrb[0].mxu0 %v1135
      %v2081 = vpop.f32.mrb[0].mxu0
      %v2082 = vadd.f32 %v1793, %v2081
      %v2083 = vpop.f32.mrb[0].mxu0
      %v2084 = vpop.f32.mrb[0].mxu0
      %v2085 = vadd.f32 %v1796, %v2084
      %v2086 = vpop.f32.mrb[0].mxu0
      %2087 = vmatprep.mubr.bf16.mxu0 %v1143
      %2088 = vmatmul.mubr.bf16.gmra.mrb[0].mxu0 %v1142
      %v2089 = vpop.f32.mrb[0].mxu0
      %v2090 = vadd.f32 %v1801, %v2089
      %v2091 = vpop.f32.mrb[0].mxu0
      %v2092 = vpop.f32.mrb[0].mxu0
      %v2093 = vadd.f32 %v1804, %v2092
      %v2094 = vpop.f32.mrb[0].mxu0
      %2095 = vmatprep.mubr.bf16.mxu0 %v1150
      %2096 = vmatmul.mubr.bf16.gmra.mrb[0].mxu0 %v1149
      %v2097 = vpop.f32.mrb[0].mxu0
      %v2098 = vadd.f32 %v1809, %v2097
      %v2099 = vpop.f32.mrb[0].mxu0
      %v2100 = vpop.f32.mrb[0].mxu0
      %v2101 = vadd.f32 %v1812, %v2100
      %v2102 = vpop.f32.mrb[0].mxu0
      %2103 = vmatprep.mubr.bf16.mxu0 %v1157
      %2104 = vmatmul.mubr.bf16.gmra.mrb[0].mxu0 %v1156
      %v2105 = vpop.f32.mrb[0].mxu0
      %v2106 = vadd.f32 %v1817, %v2105
      %v2107 = vpop.f32.mrb[0].mxu0
      %v2108 = vpop.f32.mrb[0].mxu0
      %v2109 = vadd.f32 %v1820, %v2108
      %v2110 = vpop.f32.mrb[0].mxu0
      %2111 = vmatprep.mubr.bf16.mxu0 %v1164
      %2112 = vmatmul.mubr.bf16.gmra.mrb[0].mxu0 %v1163
      %v2113 = vpop.f32.mrb[0].mxu0
      %v2114 = vadd.f32 %v1825, %v2113
      %v2115 = vpop.f32.mrb[0].mxu0
      %v2116 = vpop.f32.mrb[0].mxu0
      %v2117 = vadd.f32 %v1828, %v2116
      %v2118 = vpop.f32.mrb[0].mxu0
      %2119 = vmatprep.mubr.bf16.mxu0 %v1171
      %2120 = vmatmul.mubr.bf16.gmra.mrb[0].mxu0 %v1170
      %v2121 = vpop.f32.mrb[0].mxu0
      %v2122 = vadd.f32 %v1833, %v2121
      %v2123 = vpop.f32.mrb[0].mxu0
      %v2124 = vpop.f32.mrb[0].mxu0
      %v2125 = vadd.f32 %v1836, %v2124
      %v2126 = vpop.f32.mrb[0].mxu0
      %2127 = vmatprep.mubr.bf16.mxu0 %v1178
      %2128 = vmatmul.mubr.bf16.gmra.mrb[0].mxu0 %v1177
      %v2129 = vpop.f32.mrb[0].mxu0
      %v2130 = vadd.f32 %v1841, %v2129
      %v2131 = vpop.f32.mrb[0].mxu0
      %v2132 = vpop.f32.mrb[0].mxu0
      %v2133 = vadd.f32 %v1844, %v2132
      %v2134 = vpop.f32.mrb[0].mxu0
      %2135 = vmatprep.mubr.bf16.mxu0 %v1185
      %2136 = vmatmul.mubr.bf16.gmra.mrb[0].mxu0 %v1184
      %v2137 = vpop.f32.mrb[0].mxu0
      %v2138 = vadd.f32 %v1849, %v2137
      %v2139 = vpop.f32.mrb[0].mxu0
      %v2140 = vpop.f32.mrb[0].mxu0
      %v2141 = vadd.f32 %v1852, %v2140
      %v2142 = vpop.f32.mrb[0].mxu0
      %2143 = vmatprep.mubr.bf16.mxu0 %v1192
      %2144 = vmatmul.mubr.bf16.gmra.mrb[0].mxu0 %v1191
      %v2145 = vpop.f32.mrb[0].mxu0
      %v2146 = vadd.f32 %v1857, %v2145
      %v2147 = vpop.f32.mrb[0].mxu0
      %v2148 = vpop.f32.mrb[0].mxu0
      %v2149 = vadd.f32 %v1860, %v2148
      %v2150 = vpop.f32.mrb[0].mxu0
      %2151 = vmatprep.mubr.bf16.mxu0 %v1199
      %2152 = vmatmul.mubr.bf16.gmra.mrb[0].mxu0 %v1198
      %v2153 = vpop.f32.mrb[0].mxu0
      %v2154 = vadd.f32 %v1865, %v2153
      %v2155 = vpop.f32.mrb[0].mxu0
      %v2156 = vpop.f32.mrb[0].mxu0
      %v2157 = vadd.f32 %v1868, %v2156
      %v2158 = vpop.f32.mrb[0].mxu0
      %2159 = vmatprep.mubr.bf16.mxu0 %v1206
      %2160 = vmatmul.mubr.bf16.gmra.mrb[0].mxu0 %v1205
      %v2161 = vpop.f32.mrb[0].mxu0
      %v2162 = vadd.f32 %v1873, %v2161
      %v2163 = vpop.f32.mrb[0].mxu0
      %v2164 = vpop.f32.mrb[0].mxu0
      %v2165 = vadd.f32 %v1876, %v2164
      %v2166 = vpop.f32.mrb[0].mxu0
      %2167 = vmatprep.mubr.bf16.mxu0 %v1213
      %2168 = vmatmul.mubr.bf16.gmra.mrb[0].mxu0 %v1212
      %v2169 = vpop.f32.mrb[0].mxu0
      %v2170 = vadd.f32 %v1881, %v2169
      %v2171 = vpop.f32.mrb[0].mxu0
      %v2172 = vpop.f32.mrb[0].mxu0
      %v2173 = vadd.f32 %v1884, %v2172
      %v2174 = vpop.f32.mrb[0].mxu0
      %2175 = vmatprep.mubr.bf16.mxu0 %v1220
      %2176 = vmatmul.mubr.bf16.gmra.mrb[0].mxu0 %v1219
      %v2177 = vpop.f32.mrb[0].mxu0
      %v2178 = vadd.f32 %v1889, %v2177
      %v2179 = vpop.f32.mrb[0].mxu0
      %v2180 = vpop.f32.mrb[0].mxu0
      %v2181 = vadd.f32 %v1892, %v2180
      %v2182 = vpop.f32.mrb[0].mxu0
      %2183 = vmatprep.mubr.bf16.mxu0 %v1227
      %2184 = vmatmul.mubr.bf16.gmra.mrb[0].mxu0 %v1226
      %v2185 = vpop.f32.mrb[0].mxu0
      %v2186 = vadd.f32 %v1897, %v2185
      %v2187 = vpop.f32.mrb[0].mxu0
      %v2188 = vpop.f32.mrb[0].mxu0
      %v2189 = vadd.f32 %v1900, %v2188
      %v2190 = vpop.f32.mrb[0].mxu0
      %2191 = vmatprep.mubr.bf16.mxu0 %v1234
      %2192 = vmatmul.mubr.bf16.gmra.mrb[0].mxu0 %v1233
      %v2193 = vpop.f32.mrb[0].mxu0
      %v2194 = vadd.f32 %v1905, %v2193
      %v2195 = vpop.f32.mrb[0].mxu0
      %v2196 = vpop.f32.mrb[0].mxu0
      %v2197 = vadd.f32 %v1908, %v2196
      %v2198 = vpop.f32.mrb[0].mxu0
      %2199 = vmatprep.mubr.bf16.mxu0 %v1241
      %2200 = vmatmul.mubr.bf16.gmra.mrb[0].mxu0 %v1240
      %v2201 = vpop.f32.mrb[0].mxu0
      %v2202 = vadd.f32 %v1913, %v2201
      %v2203 = vpop.f32.mrb[0].mxu0
      %v2204 = vpop.f32.mrb[0].mxu0
      %v2205 = vadd.f32 %v1916, %v2204
      %v2206 = vpop.f32.mrb[0].mxu0
      %2207 = vmatprep.mubr.bf16.mxu0 %v1248
      %2208 = vmatmul.mubr.bf16.gmra.mrb[0].mxu0 %v1247
      %v2209 = vpop.f32.mrb[0].mxu0
      %v2210 = vadd.f32 %v1921, %v2209
      %v2211 = vpop.f32.mrb[0].mxu0
      %v2212 = vpop.f32.mrb[0].mxu0
      %v2213 = vadd.f32 %v1924, %v2212
      %v2214 = vpop.f32.mrb[0].mxu0
      %2215 = vmatprep.mubr.bf16.mxu0 %v1255
      %2216 = vmatmul.mubr.bf16.gmra.mrb[0].mxu0 %v1254
      %v2217 = vpop.f32.mrb[0].mxu0
      %v2218 = vadd.f32 %v1929, %v2217
      %v2219 = vpop.f32.mrb[0].mxu0
      %v2220 = vpop.f32.mrb[0].mxu0
      %v2221 = vadd.f32 %v1932, %v2220
      %v2222 = vpop.f32.mrb[0].mxu0
      %2223 = vmatprep.mubr.bf16.mxu0 %v1262
      %2224 = vmatmul.mubr.bf16.gmra.mrb[0].mxu0 %v1261
      %v2225 = vpop.f32.mrb[0].mxu0
      %v2226 = vadd.f32 %v1937, %v2225
      %v2227 = vpop.f32.mrb[0].mxu0
      %v2228 = vpop.f32.mrb[0].mxu0
      %v2229 = vadd.f32 %v1940, %v2228
      %v2230 = vpop.f32.mrb[0].mxu0
      %2231 = vmatprep.mubr.bf16.mxu0 %v1269
      %2232 = vmatmul.mubr.bf16.gmra.mrb[0].mxu0 %v1268
      %v2233 = vpop.f32.mrb[0].mxu0
      %v2234 = vadd.f32 %v1945, %v2233
      %v2235 = vpop.f32.mrb[0].mxu0
      %v2236 = vpop.f32.mrb[0].mxu0
      %v2237 = vadd.f32 %v1948, %v2236
      %v2238 = vpop.f32.mrb[0].mxu0
      %2239 = vmatprep.mubr.bf16.mxu0 %v1276
      %2240 = vmatmul.mubr.bf16.gmra.mrb[0].mxu0 %v1275
      %v2241 = vpop.f32.mrb[0].mxu0
      %v2242 = vadd.f32 %v1953, %v2241
      %v2243 = vpop.f32.mrb[0].mxu0
      %v2244 = vpop.f32.mrb[0].mxu0
      %v2245 = vadd.f32 %v1956, %v2244
      %v2246 = vpop.f32.mrb[0].mxu0
      %2247 = vmatprep.mubr.bf16.mxu0 %v1283
      %2248 = vmatmul.mubr.bf16.gmra.mrb[0].mxu0 %v1282
      %v2249 = vpop.f32.mrb[0].mxu0
      %v2250 = vadd.f32 %v1961, %v2249
      %v2251 = vpop.f32.mrb[0].mxu0
      %v2252 = vpop.f32.mrb[0].mxu0
      %v2253 = vadd.f32 %v1964, %v2252
      %v2254 = vpop.f32.mrb[0].mxu0
      %2255 = vmatprep.mubr.bf16.mxu0 %v1290
      %2256 = vmatmul.mubr.bf16.gmra.mrb[0].mxu0 %v1289
      %v2257 = vpop.f32.mrb[0].mxu0
      %v2258 = vadd.f32 %v1969, %v2257
      %v2259 = vpop.f32.mrb[0].mxu0
      %v2260 = vpop.f32.mrb[0].mxu0
      %v2261 = vadd.f32 %v1972, %v2260
      %v2262 = vpop.f32.mrb[0].mxu0
      %2263 = vmatprep.mubr.bf16.mxu0 %v1297
      %2264 = vmatmul.mubr.bf16.gmra.mrb[0].mxu0 %v1296
      %v2265 = vpop.f32.mrb[0].mxu0
      %v2266 = vadd.f32 %v1977, %v2265
      %v2267 = vpop.f32.mrb[0].mxu0
      %v2268 = vpop.f32.mrb[0].mxu0
      %v2269 = vadd.f32 %v1980, %v2268
      %v2270 = vpop.f32.mrb[0].mxu0
      %2271 = vmatprep.mubr.bf16.mxu0 %v1304
      %2272 = vmatmul.mubr.bf16.gmra.mrb[0].mxu0 %v1303
      %v2273 = vpop.f32.mrb[0].mxu0
      %v2274 = vadd.f32 %v1985, %v2273
      %v2275 = vpop.f32.mrb[0].mxu0
      %v2276 = vpop.f32.mrb[0].mxu0
      %v2277 = vadd.f32 %v1988, %v2276
      %v2278 = vpop.f32.mrb[0].mxu0
      %2279 = vmatprep.mubr.bf16.mxu0 %v1311
      %2280 = vmatmul.mubr.bf16.gmra.mrb[0].mxu0 %v1310
      %v2281 = vpop.f32.mrb[0].mxu0
      %v2282 = vadd.f32 %v1993, %v2281
      %v2283 = vpop.f32.mrb[0].mxu0
      %v2284 = vpop.f32.mrb[0].mxu0
      %v2285 = vadd.f32 %v1996, %v2284
      %v2286 = vpop.f32.mrb[0].mxu0
      %2287 = vmatprep.mubr.bf16.mxu0 %v1318
      %2288 = vmatmul.mubr.bf16.gmra.mrb[0].mxu0 %v1317
      %v2289 = vpop.f32.mrb[0].mxu0
      %v2290 = vadd.f32 %v2001, %v2289
      %v2291 = vpop.f32.mrb[0].mxu0
      %v2292 = vpop.f32.mrb[0].mxu0
      %v2293 = vadd.f32 %v2004, %v2292
      %v2294 = vpop.f32.mrb[0].mxu0
      %2295 = vmatprep.mubr.bf16.mxu0 %v1325
      %2296 = vmatmul.mubr.bf16.gmra.mrb[0].mxu0 %v1324
      %v2297 = vpop.f32.mrb[0].mxu0
      %v2298 = vadd.f32 %v2009, %v2297
      %v2299 = vpop.f32.mrb[0].mxu0
      %v2300 = vpop.f32.mrb[0].mxu0
      %v2301 = vadd.f32 %v2012, %v2300
      %v2302 = vpop.f32.mrb[0].mxu0
      %2303 = vdwg.mxu0
      %2304 = vmatprep.subr.bf16.mxu0 0
      %2305 = vmatpush1.bf16.msra.mxu0 %v1563
      %2306 = vmatprep.subr.bf16.mxu0 0
      %2307 = vmatpush1.bf16.msra.mxu0 %v1564
      %2308 = vmatprep.subr.bf16.mxu0 0
      %2309 = vmatpush1.bf16.msra.mxu0 %v1565
      %2310 = vmatprep.subr.bf16.mxu0 0
      %2311 = vmatpush1.bf16.msra.mxu0 %v1566
      %2312 = vmatprep.subr.bf16.mxu0 0
      %2313 = vmatpush1.bf16.msra.mxu0 %v1567
      %2314 = vmatprep.subr.bf16.mxu0 0
      %2315 = vmatpush1.bf16.msra.mxu0 %v1568
      %2316 = vmatprep.subr.bf16.mxu0 0
      %2317 = vmatpush1.bf16.msra.mxu0 %v1569
      %2318 = vmatprep.subr.bf16.mxu0 0
      %2319 = vmatpush1.bf16.msra.mxu0 %v1570
      %2320 = vmatprep.subr.bf16.mxu0 0
      %2321 = vmatpush1.bf16.msra.mxu0 %v1571
      %2322 = vmatprep.subr.bf16.mxu0 0
      %2323 = vmatpush1.bf16.msra.mxu0 %v1572
      %2324 = vmatprep.subr.bf16.mxu0 0
      %2325 = vmatpush1.bf16.msra.mxu0 %v1573
      %2326 = vmatprep.subr.bf16.mxu0 0
      %2327 = vmatpush1.bf16.msra.mxu0 %v1574
      %2328 = vmatprep.subr.bf16.mxu0 0
      %2329 = vmatpush1.bf16.msra.mxu0 %v1575
      %2330 = vmatprep.subr.bf16.mxu0 0
      %2331 = vmatpush1.bf16.msra.mxu0 %v1576
      %2332 = vmatprep.subr.bf16.mxu0 0
      %2333 = vmatpush1.bf16.msra.mxu0 %v1577
      %2334 = vmatprep.subr.bf16.mxu0 0
      %2335 = vmatpush1.bf16.msra.mxu0 %v1578
      %2336 = vmatprep.mubr.bf16.mxu0 %v1110
      %2337 = vmatmul.mubr.bf16.gmra.mrb[0].mxu0 %v1109
      %v2338 = vpop.f32.mrb[0].mxu0
      %v2339 = vadd.f32 %v2050, %v2338
      %v2340 = vpop.f32.mrb[0].mxu0
      %v2341 = vpop.f32.mrb[0].mxu0
      %v2342 = vadd.f32 %v2053, %v2341
      %v2343 = vpop.f32.mrb[0].mxu0
      %2344 = vmatprep.mubr.bf16.mxu0 %v1117
      %2345 = vmatmul.mubr.bf16.gmra.mrb[0].mxu0 %v1116
      %v2346 = vpop.f32.mrb[0].mxu0
      %v2347 = vadd.f32 %v2058, %v2346
      %v2348 = vpop.f32.mrb[0].mxu0
      %v2349 = vpop.f32.mrb[0].mxu0
      %v2350 = vadd.f32 %v2061, %v2349
      %v2351 = vpop.f32.mrb[0].mxu0
      %2352 = vmatprep.mubr.bf16.mxu0 %v1124
      %2353 = vmatmul.mubr.bf16.gmra.mrb[0].mxu0 %v1123
      %v2354 = vpop.f32.mrb[0].mxu0
      %v2355 = vadd.f32 %v2066, %v2354
      %v2356 = vpop.f32.mrb[0].mxu0
      %v2357 = vpop.f32.mrb[0].mxu0
      %v2358 = vadd.f32 %v2069, %v2357
      %v2359 = vpop.f32.mrb[0].mxu0
      %2360 = vmatprep.mubr.bf16.mxu0 %v1131
      %2361 = vmatmul.mubr.bf16.gmra.mrb[0].mxu0 %v1130
      %v2362 = vpop.f32.mrb[0].mxu0
      %v2363 = vadd.f32 %v2074, %v2362
      %v2364 = vpop.f32.mrb[0].mxu0
      %v2365 = vpop.f32.mrb[0].mxu0
      %v2366 = vadd.f32 %v2077, %v2365
      %v2367 = vpop.f32.mrb[0].mxu0
      %2368 = vmatprep.mubr.bf16.mxu0 %v1138
      %2369 = vmatmul.mubr.bf16.gmra.mrb[0].mxu0 %v1137
      %v2370 = vpop.f32.mrb[0].mxu0
      %v2371 = vadd.f32 %v2082, %v2370
      %v2372 = vpop.f32.mrb[0].mxu0
      %v2373 = vpop.f32.mrb[0].mxu0
      %v2374 = vadd.f32 %v2085, %v2373
      %v2375 = vpop.f32.mrb[0].mxu0
      %2376 = vmatprep.mubr.bf16.mxu0 %v1145
      %2377 = vmatmul.mubr.bf16.gmra.mrb[0].mxu0 %v1144
      %v2378 = vpop.f32.mrb[0].mxu0
      %v2379 = vadd.f32 %v2090, %v2378
      %v2380 = vpop.f32.mrb[0].mxu0
      %v2381 = vpop.f32.mrb[0].mxu0
      %v2382 = vadd.f32 %v2093, %v2381
      %v2383 = vpop.f32.mrb[0].mxu0
      %2384 = vmatprep.mubr.bf16.mxu0 %v1152
      %2385 = vmatmul.mubr.bf16.gmra.mrb[0].mxu0 %v1151
      %v2386 = vpop.f32.mrb[0].mxu0
      %v2387 = vadd.f32 %v2098, %v2386
      %v2388 = vpop.f32.mrb[0].mxu0
      %v2389 = vpop.f32.mrb[0].mxu0
      %v2390 = vadd.f32 %v2101, %v2389
      %v2391 = vpop.f32.mrb[0].mxu0
      %2392 = vmatprep.mubr.bf16.mxu0 %v1159
      %2393 = vmatmul.mubr.bf16.gmra.mrb[0].mxu0 %v1158
      %v2394 = vpop.f32.mrb[0].mxu0
      %v2395 = vadd.f32 %v2106, %v2394
      %v2396 = vpop.f32.mrb[0].mxu0
      %v2397 = vpop.f32.mrb[0].mxu0
      %v2398 = vadd.f32 %v2109, %v2397
      %v2399 = vpop.f32.mrb[0].mxu0
      %2400 = vmatprep.mubr.bf16.mxu0 %v1166
      %2401 = vmatmul.mubr.bf16.gmra.mrb[0].mxu0 %v1165
      %v2402 = vpop.f32.mrb[0].mxu0
      %v2403 = vadd.f32 %v2114, %v2402
      %v2404 = vpop.f32.mrb[0].mxu0
      %v2405 = vpop.f32.mrb[0].mxu0
      %v2406 = vadd.f32 %v2117, %v2405
      %v2407 = vpop.f32.mrb[0].mxu0
      %2408 = vmatprep.mubr.bf16.mxu0 %v1173
      %2409 = vmatmul.mubr.bf16.gmra.mrb[0].mxu0 %v1172
      %v2410 = vpop.f32.mrb[0].mxu0
      %v2411 = vadd.f32 %v2122, %v2410
      %v2412 = vpop.f32.mrb[0].mxu0
      %v2413 = vpop.f32.mrb[0].mxu0
      %v2414 = vadd.f32 %v2125, %v2413
      %v2415 = vpop.f32.mrb[0].mxu0
      %2416 = vmatprep.mubr.bf16.mxu0 %v1180
      %2417 = vmatmul.mubr.bf16.gmra.mrb[0].mxu0 %v1179
      %v2418 = vpop.f32.mrb[0].mxu0
      %v2419 = vadd.f32 %v2130, %v2418
      %v2420 = vpop.f32.mrb[0].mxu0
      %v2421 = vpop.f32.mrb[0].mxu0
      %v2422 = vadd.f32 %v2133, %v2421
      %v2423 = vpop.f32.mrb[0].mxu0
      %2424 = vmatprep.mubr.bf16.mxu0 %v1187
      %2425 = vmatmul.mubr.bf16.gmra.mrb[0].mxu0 %v1186
      %v2426 = vpop.f32.mrb[0].mxu0
      %v2427 = vadd.f32 %v2138, %v2426
      %v2428 = vpop.f32.mrb[0].mxu0
      %v2429 = vpop.f32.mrb[0].mxu0
      %v2430 = vadd.f32 %v2141, %v2429
      %v2431 = vpop.f32.mrb[0].mxu0
      %2432 = vmatprep.mubr.bf16.mxu0 %v1194
      %2433 = vmatmul.mubr.bf16.gmra.mrb[0].mxu0 %v1193
      %v2434 = vpop.f32.mrb[0].mxu0
      %v2435 = vadd.f32 %v2146, %v2434
      %v2436 = vpop.f32.mrb[0].mxu0
      %v2437 = vpop.f32.mrb[0].mxu0
      %v2438 = vadd.f32 %v2149, %v2437
      %v2439 = vpop.f32.mrb[0].mxu0
      %2440 = vmatprep.mubr.bf16.mxu0 %v1201
      %2441 = vmatmul.mubr.bf16.gmra.mrb[0].mxu0 %v1200
      %v2442 = vpop.f32.mrb[0].mxu0
      %v2443 = vadd.f32 %v2154, %v2442
      %v2444 = vpop.f32.mrb[0].mxu0
      %v2445 = vpop.f32.mrb[0].mxu0
      %v2446 = vadd.f32 %v2157, %v2445
      %v2447 = vpop.f32.mrb[0].mxu0
      %2448 = vmatprep.mubr.bf16.mxu0 %v1208
      %2449 = vmatmul.mubr.bf16.gmra.mrb[0].mxu0 %v1207
      %v2450 = vpop.f32.mrb[0].mxu0
      %v2451 = vadd.f32 %v2162, %v2450
      %v2452 = vpop.f32.mrb[0].mxu0
      %v2453 = vpop.f32.mrb[0].mxu0
      %v2454 = vadd.f32 %v2165, %v2453
      %v2455 = vpop.f32.mrb[0].mxu0
      %2456 = vmatprep.mubr.bf16.mxu0 %v1215
      %2457 = vmatmul.mubr.bf16.gmra.mrb[0].mxu0 %v1214
      %v2458 = vpop.f32.mrb[0].mxu0
      %v2459 = vadd.f32 %v2170, %v2458
      %v2460 = vpop.f32.mrb[0].mxu0
      %v2461 = vpop.f32.mrb[0].mxu0
      %v2462 = vadd.f32 %v2173, %v2461
      %v2463 = vpop.f32.mrb[0].mxu0
      %2464 = vmatprep.mubr.bf16.mxu0 %v1222
      %2465 = vmatmul.mubr.bf16.gmra.mrb[0].mxu0 %v1221
      %v2466 = vpop.f32.mrb[0].mxu0
      %v2467 = vadd.f32 %v2178, %v2466
      %v2468 = vpop.f32.mrb[0].mxu0
      %v2469 = vpop.f32.mrb[0].mxu0
      %v2470 = vadd.f32 %v2181, %v2469
      %v2471 = vpop.f32.mrb[0].mxu0
      %2472 = vmatprep.mubr.bf16.mxu0 %v1229
      %2473 = vmatmul.mubr.bf16.gmra.mrb[0].mxu0 %v1228
      %v2474 = vpop.f32.mrb[0].mxu0
      %v2475 = vadd.f32 %v2186, %v2474
      %v2476 = vpop.f32.mrb[0].mxu0
      %v2477 = vpop.f32.mrb[0].mxu0
      %v2478 = vadd.f32 %v2189, %v2477
      %v2479 = vpop.f32.mrb[0].mxu0
      %2480 = vmatprep.mubr.bf16.mxu0 %v1236
      %2481 = vmatmul.mubr.bf16.gmra.mrb[0].mxu0 %v1235
      %v2482 = vpop.f32.mrb[0].mxu0
      %v2483 = vadd.f32 %v2194, %v2482
      %v2484 = vpop.f32.mrb[0].mxu0
      %v2485 = vpop.f32.mrb[0].mxu0
      %v2486 = vadd.f32 %v2197, %v2485
      %v2487 = vpop.f32.mrb[0].mxu0
      %2488 = vmatprep.mubr.bf16.mxu0 %v1243
      %2489 = vmatmul.mubr.bf16.gmra.mrb[0].mxu0 %v1242
      %v2490 = vpop.f32.mrb[0].mxu0
      %v2491 = vadd.f32 %v2202, %v2490
      %v2492 = vpop.f32.mrb[0].mxu0
      %v2493 = vpop.f32.mrb[0].mxu0
      %v2494 = vadd.f32 %v2205, %v2493
      %v2495 = vpop.f32.mrb[0].mxu0
      %2496 = vmatprep.mubr.bf16.mxu0 %v1250
      %2497 = vmatmul.mubr.bf16.gmra.mrb[0].mxu0 %v1249
      %v2498 = vpop.f32.mrb[0].mxu0
      %v2499 = vadd.f32 %v2210, %v2498
      %v2500 = vpop.f32.mrb[0].mxu0
      %v2501 = vpop.f32.mrb[0].mxu0
      %v2502 = vadd.f32 %v2213, %v2501
      %v2503 = vpop.f32.mrb[0].mxu0
      %2504 = vmatprep.mubr.bf16.mxu0 %v1257
      %2505 = vmatmul.mubr.bf16.gmra.mrb[0].mxu0 %v1256
      %v2506 = vpop.f32.mrb[0].mxu0
      %v2507 = vadd.f32 %v2218, %v2506
      %v2508 = vpop.f32.mrb[0].mxu0
      %v2509 = vpop.f32.mrb[0].mxu0
      %v2510 = vadd.f32 %v2221, %v2509
      %v2511 = vpop.f32.mrb[0].mxu0
      %2512 = vmatprep.mubr.bf16.mxu0 %v1264
      %2513 = vmatmul.mubr.bf16.gmra.mrb[0].mxu0 %v1263
      %v2514 = vpop.f32.mrb[0].mxu0
      %v2515 = vadd.f32 %v2226, %v2514
      %v2516 = vpop.f32.mrb[0].mxu0
      %v2517 = vpop.f32.mrb[0].mxu0
      %v2518 = vadd.f32 %v2229, %v2517
      %v2519 = vpop.f32.mrb[0].mxu0
      %2520 = vmatprep.mubr.bf16.mxu0 %v1271
      %2521 = vmatmul.mubr.bf16.gmra.mrb[0].mxu0 %v1270
      %v2522 = vpop.f32.mrb[0].mxu0
      %v2523 = vadd.f32 %v2234, %v2522
      %v2524 = vpop.f32.mrb[0].mxu0
      %v2525 = vpop.f32.mrb[0].mxu0
      %v2526 = vadd.f32 %v2237, %v2525
      %v2527 = vpop.f32.mrb[0].mxu0
      %2528 = vmatprep.mubr.bf16.mxu0 %v1278
      %2529 = vmatmul.mubr.bf16.gmra.mrb[0].mxu0 %v1277
      %v2530 = vpop.f32.mrb[0].mxu0
      %v2531 = vadd.f32 %v2242, %v2530
      %v2532 = vpop.f32.mrb[0].mxu0
      %v2533 = vpop.f32.mrb[0].mxu0
      %v2534 = vadd.f32 %v2245, %v2533
      %v2535 = vpop.f32.mrb[0].mxu0
      %2536 = vmatprep.mubr.bf16.mxu0 %v1285
      %2537 = vmatmul.mubr.bf16.gmra.mrb[0].mxu0 %v1284
      %v2538 = vpop.f32.mrb[0].mxu0
      %v2539 = vadd.f32 %v2250, %v2538
      %v2540 = vpop.f32.mrb[0].mxu0
      %v2541 = vpop.f32.mrb[0].mxu0
      %v2542 = vadd.f32 %v2253, %v2541
      %v2543 = vpop.f32.mrb[0].mxu0
      %2544 = vmatprep.mubr.bf16.mxu0 %v1292
      %2545 = vmatmul.mubr.bf16.gmra.mrb[0].mxu0 %v1291
      %v2546 = vpop.f32.mrb[0].mxu0
      %v2547 = vadd.f32 %v2258, %v2546
      %v2548 = vpop.f32.mrb[0].mxu0
      %v2549 = vpop.f32.mrb[0].mxu0
      %v2550 = vadd.f32 %v2261, %v2549
      %v2551 = vpop.f32.mrb[0].mxu0
      %2552 = vmatprep.mubr.bf16.mxu0 %v1299
      %2553 = vmatmul.mubr.bf16.gmra.mrb[0].mxu0 %v1298
      %v2554 = vpop.f32.mrb[0].mxu0
      %v2555 = vadd.f32 %v2266, %v2554
      %v2556 = vpop.f32.mrb[0].mxu0
      %v2557 = vpop.f32.mrb[0].mxu0
      %v2558 = vadd.f32 %v2269, %v2557
      %v2559 = vpop.f32.mrb[0].mxu0
      %2560 = vmatprep.mubr.bf16.mxu0 %v1306
      %2561 = vmatmul.mubr.bf16.gmra.mrb[0].mxu0 %v1305
      %v2562 = vpop.f32.mrb[0].mxu0
      %v2563 = vadd.f32 %v2274, %v2562
      %v2564 = vpop.f32.mrb[0].mxu0
      %v2565 = vpop.f32.mrb[0].mxu0
      %v2566 = vadd.f32 %v2277, %v2565
      %v2567 = vpop.f32.mrb[0].mxu0
      %2568 = vmatprep.mubr.bf16.mxu0 %v1313
      %2569 = vmatmul.mubr.bf16.gmra.mrb[0].mxu0 %v1312
      %v2570 = vpop.f32.mrb[0].mxu0
      %v2571 = vadd.f32 %v2282, %v2570
      %v2572 = vpop.f32.mrb[0].mxu0
      %v2573 = vpop.f32.mrb[0].mxu0
      %v2574 = vadd.f32 %v2285, %v2573
      %v2575 = vpop.f32.mrb[0].mxu0
      %2576 = vmatprep.mubr.bf16.mxu0 %v1320
      %2577 = vmatmul.mubr.bf16.gmra.mrb[0].mxu0 %v1319
      %v2578 = vpop.f32.mrb[0].mxu0
      %v2579 = vadd.f32 %v2290, %v2578
      %v2580 = vpop.f32.mrb[0].mxu0
      %v2581 = vpop.f32.mrb[0].mxu0
      %v2582 = vadd.f32 %v2293, %v2581
      %v2583 = vpop.f32.mrb[0].mxu0
      %2584 = vmatprep.mubr.bf16.mxu0 %v1327
      %2585 = vmatmul.mubr.bf16.gmra.mrb[0].mxu0 %v1326
      %v2586 = vpop.f32.mrb[0].mxu0
      %v2587 = vadd.f32 %v2298, %v2586
      %v2588 = vpop.f32.mrb[0].mxu0
      %v2589 = vpop.f32.mrb[0].mxu0
      %v2590 = vadd.f32 %v2301, %v2589
      %v2591 = vpop.f32.mrb[0].mxu0
      %2592 = vdwg.mxu0
      %2593 = vmatprep.subr.bf16.mxu0 0
      %2594 = vmatpush1.bf16.msra.mxu0 %v1579
      %2595 = vmatprep.subr.bf16.mxu0 0
      %2596 = vmatpush1.bf16.msra.mxu0 0
      %2597 = vmatprep.subr.bf16.mxu0 0
      %2598 = vmatpush1.bf16.msra.mxu0 0
      %2599 = vmatprep.subr.bf16.mxu0 0
      %2600 = vmatpush1.bf16.msra.mxu0 0
      %2601 = vmatprep.subr.bf16.mxu0 0
      %2602 = vmatpush1.bf16.msra.mxu0 0
      %2603 = vmatprep.subr.bf16.mxu0 0
      %2604 = vmatpush1.bf16.msra.mxu0 0
      %2605 = vmatprep.subr.bf16.mxu0 0
      %2606 = vmatpush1.bf16.msra.mxu0 0
      %2607 = vmatprep.subr.bf16.mxu0 0
      %2608 = vmatpush1.bf16.msra.mxu0 0
      %2609 = vmatprep.subr.bf16.mxu0 0
      %2610 = vmatpush1.bf16.msra.mxu0 0
      %2611 = vmatprep.subr.bf16.mxu0 0
      %2612 = vmatpush1.bf16.msra.mxu0 0
      %2613 = vmatprep.subr.bf16.mxu0 0
      %2614 = vmatpush1.bf16.msra.mxu0 0
      %2615 = vmatprep.subr.bf16.mxu0 0
      %2616 = vmatpush1.bf16.msra.mxu0 0
      %2617 = vmatprep.subr.bf16.mxu0 0
      %2618 = vmatpush1.bf16.msra.mxu0 0
      %2619 = vmatprep.subr.bf16.mxu0 0
      %2620 = vmatpush1.bf16.msra.mxu0 0
      %2621 = vmatprep.subr.bf16.mxu0 0
      %2622 = vmatpush1.bf16.msra.mxu0 0
      %2623 = vmatprep.subr.bf16.mxu0 0
      %2624 = vmatpush1.bf16.msra.mxu0 0
      %2625 = vmatprep.mubr.bf16.mxu0 0
      %2626 = vmatmul.mubr.bf16.gmra.mrb[0].mxu0 %v1631
      %v2627 = vpop.f32.mrb[0].mxu0
      %v2628 = vadd.f32 %v2339, %v2627
      %v2629 = vpop.f32.mrb[0].mxu0
      %v2630 = vpop.f32.mrb[0].mxu0
      %v2631 = vadd.f32 %v2342, %v2630
      %v2632 = vpop.f32.mrb[0].mxu0
      %2633 = vmatprep.mubr.bf16.mxu0 0
      %2634 = vmatmul.mubr.bf16.gmra.mrb[0].mxu0 %v1634
      %v2635 = vpop.f32.mrb[0].mxu0
      %v2636 = vadd.f32 %v2347, %v2635
      %v2637 = vpop.f32.mrb[0].mxu0
      %v2638 = vpop.f32.mrb[0].mxu0
      %v2639 = vadd.f32 %v2350, %v2638
      %v2640 = vpop.f32.mrb[0].mxu0
      %2641 = vmatprep.mubr.bf16.mxu0 0
      %2642 = vmatmul.mubr.bf16.gmra.mrb[0].mxu0 %v1637
      %v2643 = vpop.f32.mrb[0].mxu0
      %v2644 = vadd.f32 %v2355, %v2643
      %v2645 = vpop.f32.mrb[0].mxu0
      %v2646 = vpop.f32.mrb[0].mxu0
      %v2647 = vadd.f32 %v2358, %v2646
      %v2648 = vpop.f32.mrb[0].mxu0
      %2649 = vmatprep.mubr.bf16.mxu0 0
      %2650 = vmatmul.mubr.bf16.gmra.mrb[0].mxu0 %v1640
      %v2651 = vpop.f32.mrb[0].mxu0
      %v2652 = vadd.f32 %v2363, %v2651
      %v2653 = vpop.f32.mrb[0].mxu0
      %v2654 = vpop.f32.mrb[0].mxu0
      %v2655 = vadd.f32 %v2366, %v2654
      %v2656 = vpop.f32.mrb[0].mxu0
      %2657 = vmatprep.mubr.bf16.mxu0 0
      %2658 = vmatmul.mubr.bf16.gmra.mrb[0].mxu0 %v1643
      %v2659 = vpop.f32.mrb[0].mxu0
      %v2660 = vadd.f32 %v2371, %v2659
      %v2661 = vpop.f32.mrb[0].mxu0
      %v2662 = vpop.f32.mrb[0].mxu0
      %v2663 = vadd.f32 %v2374, %v2662
      %v2664 = vpop.f32.mrb[0].mxu0
      %2665 = vmatprep.mubr.bf16.mxu0 0
      %2666 = vmatmul.mubr.bf16.gmra.mrb[0].mxu0 %v1646
      %v2667 = vpop.f32.mrb[0].mxu0
      %v2668 = vadd.f32 %v2379, %v2667
      %v2669 = vpop.f32.mrb[0].mxu0
      %v2670 = vpop.f32.mrb[0].mxu0
      %v2671 = vadd.f32 %v2382, %v2670
      %v2672 = vpop.f32.mrb[0].mxu0
      %2673 = vmatprep.mubr.bf16.mxu0 0
      %2674 = vmatmul.mubr.bf16.gmra.mrb[0].mxu0 %v1649
      %v2675 = vpop.f32.mrb[0].mxu0
      %v2676 = vadd.f32 %v2387, %v2675
      %v2677 = vpop.f32.mrb[0].mxu0
      %v2678 = vpop.f32.mrb[0].mxu0
      %v2679 = vadd.f32 %v2390, %v2678
      %v2680 = vpop.f32.mrb[0].mxu0
      %2681 = vmatprep.mubr.bf16.mxu0 0
      %2682 = vmatmul.mubr.bf16.gmra.mrb[0].mxu0 %v1652
      %v2683 = vpop.f32.mrb[0].mxu0
      %v2684 = vadd.f32 %v2395, %v2683
      %v2685 = vpop.f32.mrb[0].mxu0
      %v2686 = vpop.f32.mrb[0].mxu0
      %v2687 = vadd.f32 %v2398, %v2686
      %v2688 = vpop.f32.mrb[0].mxu0
      %2689 = vmatprep.mubr.bf16.mxu0 0
      %2690 = vmatmul.mubr.bf16.gmra.mrb[0].mxu0 %v1655
      %v2691 = vpop.f32.mrb[0].mxu0
      %v2692 = vadd.f32 %v2403, %v2691
      %v2693 = vpop.f32.mrb[0].mxu0
      %v2694 = vpop.f32.mrb[0].mxu0
      %v2695 = vadd.f32 %v2406, %v2694
      %v2696 = vpop.f32.mrb[0].mxu0
      %2697 = vmatprep.mubr.bf16.mxu0 0
      %2698 = vmatmul.mubr.bf16.gmra.mrb[0].mxu0 %v1658
      %v2699 = vpop.f32.mrb[0].mxu0
      %v2700 = vadd.f32 %v2411, %v2699
      %v2701 = vpop.f32.mrb[0].mxu0
      %v2702 = vpop.f32.mrb[0].mxu0
      %v2703 = vadd.f32 %v2414, %v2702
      %v2704 = vpop.f32.mrb[0].mxu0
      %2705 = vmatprep.mubr.bf16.mxu0 0
      %2706 = vmatmul.mubr.bf16.gmra.mrb[0].mxu0 %v1661
      %v2707 = vpop.f32.mrb[0].mxu0
      %v2708 = vadd.f32 %v2419, %v2707
      %v2709 = vpop.f32.mrb[0].mxu0
      %v2710 = vpop.f32.mrb[0].mxu0
      %v2711 = vadd.f32 %v2422, %v2710
      %v2712 = vpop.f32.mrb[0].mxu0
      %2713 = vmatprep.mubr.bf16.mxu0 0
      %2714 = vmatmul.mubr.bf16.gmra.mrb[0].mxu0 %v1664
      %v2715 = vpop.f32.mrb[0].mxu0
      %v2716 = vadd.f32 %v2427, %v2715
      %v2717 = vpop.f32.mrb[0].mxu0
      %v2718 = vpop.f32.mrb[0].mxu0
      %v2719 = vadd.f32 %v2430, %v2718
      %v2720 = vpop.f32.mrb[0].mxu0
      %2721 = vmatprep.mubr.bf16.mxu0 0
      %2722 = vmatmul.mubr.bf16.gmra.mrb[0].mxu0 %v1667
      %v2723 = vpop.f32.mrb[0].mxu0
      %v2724 = vadd.f32 %v2435, %v2723
      %v2725 = vpop.f32.mrb[0].mxu0
      %v2726 = vpop.f32.mrb[0].mxu0
      %v2727 = vadd.f32 %v2438, %v2726
      %v2728 = vpop.f32.mrb[0].mxu0
      %2729 = vmatprep.mubr.bf16.mxu0 0
      %2730 = vmatmul.mubr.bf16.gmra.mrb[0].mxu0 %v1670
      %v2731 = vpop.f32.mrb[0].mxu0
      %v2732 = vadd.f32 %v2443, %v2731
      %v2733 = vpop.f32.mrb[0].mxu0
      %v2734 = vpop.f32.mrb[0].mxu0
      %v2735 = vadd.f32 %v2446, %v2734
      %v2736 = vpop.f32.mrb[0].mxu0
      %2737 = vmatprep.mubr.bf16.mxu0 0
      %2738 = vmatmul.mubr.bf16.gmra.mrb[0].mxu0 %v1673
      %v2739 = vpop.f32.mrb[0].mxu0
      %v2740 = vadd.f32 %v2451, %v2739
      %v2741 = vpop.f32.mrb[0].mxu0
      %v2742 = vpop.f32.mrb[0].mxu0
      %v2743 = vadd.f32 %v2454, %v2742
      %v2744 = vpop.f32.mrb[0].mxu0
      %2745 = vmatprep.mubr.bf16.mxu0 0
      %2746 = vmatmul.mubr.bf16.gmra.mrb[0].mxu0 %v1676
      %v2747 = vpop.f32.mrb[0].mxu0
      %v2748 = vadd.f32 %v2459, %v2747
      %v2749 = vpop.f32.mrb[0].mxu0
      %v2750 = vpop.f32.mrb[0].mxu0
      %v2751 = vadd.f32 %v2462, %v2750
      %v2752 = vpop.f32.mrb[0].mxu0
      %2753 = vmatprep.mubr.bf16.mxu0 0
      %2754 = vmatmul.mubr.bf16.gmra.mrb[0].mxu0 %v1679
      %v2755 = vpop.f32.mrb[0].mxu0
      %v2756 = vadd.f32 %v2467, %v2755
      %v2757 = vpop.f32.mrb[0].mxu0
      %v2758 = vpop.f32.mrb[0].mxu0
      %v2759 = vadd.f32 %v2470, %v2758
      %v2760 = vpop.f32.mrb[0].mxu0
      %2761 = vmatprep.mubr.bf16.mxu0 0
      %2762 = vmatmul.mubr.bf16.gmra.mrb[0].mxu0 %v1682
      %v2763 = vpop.f32.mrb[0].mxu0
      %v2764 = vadd.f32 %v2475, %v2763
      %v2765 = vpop.f32.mrb[0].mxu0
      %v2766 = vpop.f32.mrb[0].mxu0
      %v2767 = vadd.f32 %v2478, %v2766
      %v2768 = vpop.f32.mrb[0].mxu0
      %2769 = vmatprep.mubr.bf16.mxu0 0
      %2770 = vmatmul.mubr.bf16.gmra.mrb[0].mxu0 %v1685
      %v2771 = vpop.f32.mrb[0].mxu0
      %v2772 = vadd.f32 %v2483, %v2771
      %v2773 = vpop.f32.mrb[0].mxu0
      %v2774 = vpop.f32.mrb[0].mxu0
      %v2775 = vadd.f32 %v2486, %v2774
      %v2776 = vpop.f32.mrb[0].mxu0
      %2777 = vmatprep.mubr.bf16.mxu0 0
      %2778 = vmatmul.mubr.bf16.gmra.mrb[0].mxu0 %v1688
      %v2779 = vpop.f32.mrb[0].mxu0
      %v2780 = vadd.f32 %v2491, %v2779
      %v2781 = vpop.f32.mrb[0].mxu0
      %v2782 = vpop.f32.mrb[0].mxu0
      %v2783 = vadd.f32 %v2494, %v2782
      %v2784 = vpop.f32.mrb[0].mxu0
      %2785 = vmatprep.mubr.bf16.mxu0 0
      %2786 = vmatmul.mubr.bf16.gmra.mrb[0].mxu0 %v1691
      %v2787 = vpop.f32.mrb[0].mxu0
      %v2788 = vadd.f32 %v2499, %v2787
      %v2789 = vpop.f32.mrb[0].mxu0
      %v2790 = vpop.f32.mrb[0].mxu0
      %v2791 = vadd.f32 %v2502, %v2790
      %v2792 = vpop.f32.mrb[0].mxu0
      %2793 = vmatprep.mubr.bf16.mxu0 0
      %2794 = vmatmul.mubr.bf16.gmra.mrb[0].mxu0 %v1694
      %v2795 = vpop.f32.mrb[0].mxu0
      %v2796 = vadd.f32 %v2507, %v2795
      %v2797 = vpop.f32.mrb[0].mxu0
      %v2798 = vpop.f32.mrb[0].mxu0
      %v2799 = vadd.f32 %v2510, %v2798
      %v2800 = vpop.f32.mrb[0].mxu0
      %2801 = vmatprep.mubr.bf16.mxu0 0
      %2802 = vmatmul.mubr.bf16.gmra.mrb[0].mxu0 %v1697
      %v2803 = vpop.f32.mrb[0].mxu0
      %v2804 = vadd.f32 %v2515, %v2803
      %v2805 = vpop.f32.mrb[0].mxu0
      %v2806 = vpop.f32.mrb[0].mxu0
      %v2807 = vadd.f32 %v2518, %v2806
      %v2808 = vpop.f32.mrb[0].mxu0
      %2809 = vmatprep.mubr.bf16.mxu0 0
      %2810 = vmatmul.mubr.bf16.gmra.mrb[0].mxu0 %v1700
      %v2811 = vpop.f32.mrb[0].mxu0
      %v2812 = vadd.f32 %v2523, %v2811
      %v2813 = vpop.f32.mrb[0].mxu0
      %v2814 = vpop.f32.mrb[0].mxu0
      %v2815 = vadd.f32 %v2526, %v2814
      %v2816 = vpop.f32.mrb[0].mxu0
      %2817 = vmatprep.mubr.bf16.mxu0 0
      %2818 = vmatmul.mubr.bf16.gmra.mrb[0].mxu0 %v1703
      %v2819 = vpop.f32.mrb[0].mxu0
      %v2820 = vadd.f32 %v2531, %v2819
      %v2821 = vpop.f32.mrb[0].mxu0
      %v2822 = vpop.f32.mrb[0].mxu0
      %v2823 = vadd.f32 %v2534, %v2822
      %v2824 = vpop.f32.mrb[0].mxu0
      %2825 = vmatprep.mubr.bf16.mxu0 0
      %2826 = vmatmul.mubr.bf16.gmra.mrb[0].mxu0 %v1706
      %v2827 = vpop.f32.mrb[0].mxu0
      %v2828 = vadd.f32 %v2539, %v2827
      %v2829 = vpop.f32.mrb[0].mxu0
      %v2830 = vpop.f32.mrb[0].mxu0
      %v2831 = vadd.f32 %v2542, %v2830
      %v2832 = vpop.f32.mrb[0].mxu0
      %2833 = vmatprep.mubr.bf16.mxu0 0
      %2834 = vmatmul.mubr.bf16.gmra.mrb[0].mxu0 %v1709
      %v2835 = vpop.f32.mrb[0].mxu0
      %v2836 = vadd.f32 %v2547, %v2835
      %v2837 = vpop.f32.mrb[0].mxu0
      %v2838 = vpop.f32.mrb[0].mxu0
      %v2839 = vadd.f32 %v2550, %v2838
      %v2840 = vpop.f32.mrb[0].mxu0
      %2841 = vmatprep.mubr.bf16.mxu0 0
      %2842 = vmatmul.mubr.bf16.gmra.mrb[0].mxu0 %v1712
      %v2843 = vpop.f32.mrb[0].mxu0
      %v2844 = vadd.f32 %v2555, %v2843
      %v2845 = vpop.f32.mrb[0].mxu0
      %v2846 = vpop.f32.mrb[0].mxu0
      %v2847 = vadd.f32 %v2558, %v2846
      %v2848 = vpop.f32.mrb[0].mxu0
      %2849 = vmatprep.mubr.bf16.mxu0 0
      %2850 = vmatmul.mubr.bf16.gmra.mrb[0].mxu0 %v1715
      %v2851 = vpop.f32.mrb[0].mxu0
      %v2852 = vadd.f32 %v2563, %v2851
      %v2853 = vpop.f32.mrb[0].mxu0
      %v2854 = vpop.f32.mrb[0].mxu0
      %v2855 = vadd.f32 %v2566, %v2854
      %v2856 = vpop.f32.mrb[0].mxu0
      %2857 = vmatprep.mubr.bf16.mxu0 0
      %2858 = vmatmul.mubr.bf16.gmra.mrb[0].mxu0 %v1718
      %v2859 = vpop.f32.mrb[0].mxu0
      %v2860 = vadd.f32 %v2571, %v2859
      %v2861 = vpop.f32.mrb[0].mxu0
      %v2862 = vpop.f32.mrb[0].mxu0
      %v2863 = vadd.f32 %v2574, %v2862
      %v2864 = vpop.f32.mrb[0].mxu0
      %2865 = vmatprep.mubr.bf16.mxu0 0
      %2866 = vmatmul.mubr.bf16.gmra.mrb[0].mxu0 %v1721
      %v2867 = vpop.f32.mrb[0].mxu0
      %v2868 = vadd.f32 %v2579, %v2867
      %v2869 = vpop.f32.mrb[0].mxu0
      %v2870 = vpop.f32.mrb[0].mxu0
      %v2871 = vadd.f32 %v2582, %v2870
      %v2872 = vpop.f32.mrb[0].mxu0
      %2873 = vmatprep.mubr.bf16.mxu0 0
      %2874 = vmatmul.mubr.bf16.gmra.mrb[0].mxu0 %v1724
      %v2875 = vpop.f32.mrb[0].mxu0
      %v2876 = vadd.f32 %v2587, %v2875
      %v2877 = vpop.f32.mrb[0].mxu0
      %v2878 = vpop.f32.mrb[0].mxu0
      %v2879 = vadd.f32 %v2590, %v2878
      %v2880 = vpop.f32.mrb[0].mxu0
      %2881 = vdwg.mxu0
      %v2882 = vmax.f32 %v2628, 0.0
      %v2883 = vmax.f32 %v2631, 0.0
      %v2884 = vmax.f32 %v2636, 0.0
      %v2885 = vmax.f32 %v2639, 0.0
      %v2886 = vmax.f32 %v2644, 0.0
      %v2887 = vmax.f32 %v2647, 0.0
      %v2888 = vmax.f32 %v2652, 0.0
      %v2889 = vmax.f32 %v2655, 0.0
      %v2890 = vmax.f32 %v2660, 0.0
      %v2891 = vmax.f32 %v2663, 0.0
      %v2892 = vmax.f32 %v2668, 0.0
      %v2893 = vmax.f32 %v2671, 0.0
      %v2894 = vmax.f32 %v2676, 0.0
      %v2895 = vmax.f32 %v2679, 0.0
      %v2896 = vmax.f32 %v2684, 0.0
      %v2897 = vmax.f32 %v2687, 0.0
      %v2898 = vmax.f32 %v2692, 0.0
      %v2899 = vmax.f32 %v2695, 0.0
      %v2900 = vmax.f32 %v2700, 0.0
      %v2901 = vmax.f32 %v2703, 0.0
      %v2902 = vmax.f32 %v2708, 0.0
      %v2903 = vmax.f32 %v2711, 0.0
      %v2904 = vmax.f32 %v2716, 0.0
      %v2905 = vmax.f32 %v2719, 0.0
      %v2906 = vmax.f32 %v2724, 0.0
      %v2907 = vmax.f32 %v2727, 0.0
      %v2908 = vmax.f32 %v2732, 0.0
      %v2909 = vmax.f32 %v2735, 0.0
      %v2910 = vmax.f32 %v2740, 0.0
      %v2911 = vmax.f32 %v2743, 0.0
      %v2912 = vmax.f32 %v2748, 0.0
      %v2913 = vmax.f32 %v2751, 0.0
      %v2914 = vmax.f32 %v2756, 0.0
      %v2915 = vmax.f32 %v2759, 0.0
      %v2916 = vmax.f32 %v2764, 0.0
      %v2917 = vmax.f32 %v2767, 0.0
      %v2918 = vmax.f32 %v2772, 0.0
      %v2919 = vmax.f32 %v2775, 0.0
      %v2920 = vmax.f32 %v2780, 0.0
      %v2921 = vmax.f32 %v2783, 0.0
      %v2922 = vmax.f32 %v2788, 0.0
      %v2923 = vmax.f32 %v2791, 0.0
      %v2924 = vmax.f32 %v2796, 0.0
      %v2925 = vmax.f32 %v2799, 0.0
      %v2926 = vmax.f32 %v2804, 0.0
      %v2927 = vmax.f32 %v2807, 0.0
      %v2928 = vmax.f32 %v2812, 0.0
      %v2929 = vmax.f32 %v2815, 0.0
      %v2930 = vmax.f32 %v2820, 0.0
      %v2931 = vmax.f32 %v2823, 0.0
      %v2932 = vmax.f32 %v2828, 0.0
      %v2933 = vmax.f32 %v2831, 0.0
      %v2934 = vmax.f32 %v2836, 0.0
      %v2935 = vmax.f32 %v2839, 0.0
      %v2936 = vmax.f32 %v2844, 0.0
      %v2937 = vmax.f32 %v2847, 0.0
      %v2938 = vmax.f32 %v2852, 0.0
      %v2939 = vmax.f32 %v2855, 0.0
      %v2940 = vmax.f32 %v2860, 0.0
      %v2941 = vmax.f32 %v2863, 0.0
      %v2942 = vmax.f32 %v2868, 0.0
      %v2943 = vmax.f32 %v2871, 0.0
      %v2944 = vmax.f32 %v2876, 0.0
      %v2945 = vmax.f32 %v2879, 0.0
      %v2946 = vld [vmem:[%s3] sm:$0xf]
      %v2947 = vld [vmem:[%s3 + $0x4] sm:$0xf]
      %v2948 = vld [vmem:[%s3 + $0x8] sm:$0xf]
      %v2949 = vld [vmem:[%s3 + $0xc] sm:$0xf]
      %v2950 = vld [vmem:[%s3 + $0x10] sm:$0xf]
      %v2951 = vld [vmem:[%s3 + $0x14] sm:$0xf]
      %v2952 = vld [vmem:[%s3 + $0x18] sm:$0xf]
      %v2953 = vld [vmem:[%s3 + $0x1c] sm:$0xf]
      %v2954 = vld [vmem:[%s3 + $0x20] sm:$0xf]
      %v2955 = vld [vmem:[%s3 + $0x24] sm:$0xf]
      %v2956 = vld [vmem:[%s3 + $0x28] sm:$0xf]
      %v2957 = vld [vmem:[%s3 + $0x2c] sm:$0xf]
      %v2958 = vld [vmem:[%s3 + $0x30] sm:$0xf]
      %v2959 = vld [vmem:[%s3 + $0x34] sm:$0xf]
      %v2960 = vld [vmem:[%s3 + $0x38] sm:$0xf]
      %v2961 = vld [vmem:[%s3 + $0x3c] sm:$0xf]
      %v2962 = vld [vmem:[%s4] sm:$0x1]
      %v2963 = vpack.c.bf16 %v2883, %v2882
      %v2964 = vpack.c.bf16 %v2885, %v2884
      %v2965 = vpack.c.bf16 %v2887, %v2886
      %v2966 = vpack.c.bf16 %v2889, %v2888
      %v2967 = vpack.c.bf16 %v2891, %v2890
      %v2968 = vpack.c.bf16 %v2893, %v2892
      %v2969 = vpack.c.bf16 %v2895, %v2894
      %v2970 = vpack.c.bf16 %v2897, %v2896
      %v2971 = vpack.c.bf16 %v2899, %v2898
      %v2972 = vpack.c.bf16 %v2901, %v2900
      %v2973 = vpack.c.bf16 %v2903, %v2902
      %v2974 = vpack.c.bf16 %v2905, %v2904
      %v2975 = vpack.c.bf16 %v2907, %v2906
      %v2976 = vpack.c.bf16 %v2909, %v2908
      %v2977 = vpack.c.bf16 %v2911, %v2910
      %v2978 = vpack.c.bf16 %v2913, %v2912
      %v2979 = vpack.c.bf16 %v2915, %v2914
      %v2980 = vpack.c.bf16 %v2917, %v2916
      %v2981 = vpack.c.bf16 %v2919, %v2918
      %v2982 = vpack.c.bf16 %v2921, %v2920
      %v2983 = vpack.c.bf16 %v2923, %v2922
      %v2984 = vpack.c.bf16 %v2925, %v2924
      %v2985 = vpack.c.bf16 %v2927, %v2926
      %v2986 = vpack.c.bf16 %v2929, %v2928
      %v2987 = vpack.c.bf16 %v2931, %v2930
      %v2988 = vpack.c.bf16 %v2933, %v2932
      %v2989 = vpack.c.bf16 %v2935, %v2934
      %v2990 = vpack.c.bf16 %v2937, %v2936
      %v2991 = vpack.c.bf16 %v2939, %v2938
      %v2992 = vpack.c.bf16 %v2941, %v2940
      %v2993 = vpack.c.bf16 %v2943, %v2942
      %v2994 = vpack.c.bf16 %v2945, %v2944
      %v2996 = vlaneseq
      %v2997 = vshrl.u32 %v2996, 7
      %v2998 = vsub.s32 0, %v2997
      %v2999 = vrot.slane %v2962, %v2998
      %v3017 = vunpack.c.l.b16 %v2946
      %v3018 = vunpack.c.l.b16 %v2947
      %v3019 = vunpack.c.l.b16 %v2948
      %v3020 = vunpack.c.l.b16 %v2949
      %v3021 = vunpack.c.l.b16 %v2950
      %v3022 = vunpack.c.l.b16 %v2951
      %v3023 = vunpack.c.l.b16 %v2952
      %v3024 = vunpack.c.l.b16 %v2953
      %v3025 = vunpack.c.l.b16 %v2954
      %v3026 = vunpack.c.l.b16 %v2955
      %v3027 = vunpack.c.l.b16 %v2956
      %v3028 = vunpack.c.l.b16 %v2957
      %v3029 = vunpack.c.l.b16 %v2958
      %v3030 = vunpack.c.l.b16 %v2959
      %v3031 = vunpack.c.l.b16 %v2960
      %v3032 = vunpack.c.l.b16 %v2961
      %v3033 = vpack.c.b16 %v3018, %v3017
      %v3034 = vpack.c.b16 %v3020, %v3019
      %v3035 = vpack.c.b16 %v3022, %v3021
      %v3036 = vpack.c.b16 %v3024, %v3023
      %v3037 = vpack.c.b16 %v3026, %v3025
      %v3038 = vpack.c.b16 %v3028, %v3027
      %v3039 = vpack.c.b16 %v3030, %v3029
      %v3040 = vpack.c.b16 %v3032, %v3031
      %3049 = vmatprep.subr.bf16.mxu0 0
      %3050 = vmatpush1.bf16.msra.mxu0 %v3033
      %3051 = vmatprep.subr.bf16.mxu0 0
      %3052 = vmatpush1.bf16.msra.mxu0 %v3034
      %3053 = vmatprep.subr.bf16.mxu0 0
      %3054 = vmatpush1.bf16.msra.mxu0 %v3035
      %3055 = vmatprep.subr.bf16.mxu0 0
      %3056 = vmatpush1.bf16.msra.mxu0 %v3036
      %3057 = vmatprep.subr.bf16.mxu0 0
      %3058 = vmatpush1.bf16.msra.mxu0 %v3037
      %3059 = vmatprep.subr.bf16.mxu0 0
      %3060 = vmatpush1.bf16.msra.mxu0 %v3038
      %3061 = vmatprep.subr.bf16.mxu0 0
      %3062 = vmatpush1.bf16.msra.mxu0 %v3039
      %3063 = vmatprep.subr.bf16.mxu0 0
      %3064 = vmatpush1.bf16.msra.mxu0 %v3040
      %3065 = vmatprep.subr.bf16.mxu0 0
      %3066 = vmatpush1.bf16.msra.mxu0 0
      %3067 = vmatprep.subr.bf16.mxu0 0
      %3068 = vmatpush1.bf16.msra.mxu0 0
      %3069 = vmatprep.subr.bf16.mxu0 0
      %3070 = vmatpush1.bf16.msra.mxu0 0
      %3071 = vmatprep.subr.bf16.mxu0 0
      %3072 = vmatpush1.bf16.msra.mxu0 0
      %3073 = vmatprep.subr.bf16.mxu0 0
      %3074 = vmatpush1.bf16.msra.mxu0 0
      %3075 = vmatprep.subr.bf16.mxu0 0
      %3076 = vmatpush1.bf16.msra.mxu0 0
      %3077 = vmatprep.subr.bf16.mxu0 0
      %3078 = vmatpush1.bf16.msra.mxu0 0
      %3079 = vmatprep.subr.bf16.mxu0 0
      %3080 = vmatpush1.bf16.msra.mxu0 0
      %3081 = vmatprep.mubr.bf16.mxu0 0
      %3082 = vmatmul.mubr.bf16.gmra.mrb[0].mxu0 %v2963
      %v3083 = vpop.f32.mrb[0].mxu0
      %v3084 = vadd.f32 %v2999, %v3083
      %v3085 = vpop.f32.mrb[0].mxu0
      %v3086 = vpop.f32.mrb[0].mxu0
      %v3087 = vadd.f32 %v2999, %v3086
      %v3088 = vpop.f32.mrb[0].mxu0
      %3089 = vmatprep.mubr.bf16.mxu0 0
      %3090 = vmatmul.mubr.bf16.gmra.mrb[0].mxu0 %v2964
      %v3091 = vpop.f32.mrb[0].mxu0
      %v3092 = vadd.f32 %v2999, %v3091
      %v3093 = vpop.f32.mrb[0].mxu0
      %v3094 = vpop.f32.mrb[0].mxu0
      %v3095 = vadd.f32 %v2999, %v3094
      %v3096 = vpop.f32.mrb[0].mxu0
      %3097 = vmatprep.mubr.bf16.mxu0 0
      %3098 = vmatmul.mubr.bf16.gmra.mrb[0].mxu0 %v2965
      %v3099 = vpop.f32.mrb[0].mxu0
      %v3100 = vadd.f32 %v2999, %v3099
      %v3101 = vpop.f32.mrb[0].mxu0
      %v3102 = vpop.f32.mrb[0].mxu0
      %v3103 = vadd.f32 %v2999, %v3102
      %v3104 = vpop.f32.mrb[0].mxu0
      %3105 = vmatprep.mubr.bf16.mxu0 0
      %3106 = vmatmul.mubr.bf16.gmra.mrb[0].mxu0 %v2966
      %v3107 = vpop.f32.mrb[0].mxu0
      %v3108 = vadd.f32 %v2999, %v3107
      %v3109 = vpop.f32.mrb[0].mxu0
      %v3110 = vpop.f32.mrb[0].mxu0
      %v3111 = vadd.f32 %v2999, %v3110
      %v3112 = vpop.f32.mrb[0].mxu0
      %3113 = vmatprep.mubr.bf16.mxu0 0
      %3114 = vmatmul.mubr.bf16.gmra.mrb[0].mxu0 %v2967
      %v3115 = vpop.f32.mrb[0].mxu0
      %v3116 = vadd.f32 %v2999, %v3115
      %v3117 = vpop.f32.mrb[0].mxu0
      %v3118 = vpop.f32.mrb[0].mxu0
      %v3119 = vadd.f32 %v2999, %v3118
      %v3120 = vpop.f32.mrb[0].mxu0
      %3121 = vmatprep.mubr.bf16.mxu0 0
      %3122 = vmatmul.mubr.bf16.gmra.mrb[0].mxu0 %v2968
      %v3123 = vpop.f32.mrb[0].mxu0
      %v3124 = vadd.f32 %v2999, %v3123
      %v3125 = vpop.f32.mrb[0].mxu0
      %v3126 = vpop.f32.mrb[0].mxu0
      %v3127 = vadd.f32 %v2999, %v3126
      %v3128 = vpop.f32.mrb[0].mxu0
      %3129 = vmatprep.mubr.bf16.mxu0 0
      %3130 = vmatmul.mubr.bf16.gmra.mrb[0].mxu0 %v2969
      %v3131 = vpop.f32.mrb[0].mxu0
      %v3132 = vadd.f32 %v2999, %v3131
      %v3133 = vpop.f32.mrb[0].mxu0
      %v3134 = vpop.f32.mrb[0].mxu0
      %v3135 = vadd.f32 %v2999, %v3134
      %v3136 = vpop.f32.mrb[0].mxu0
      %3137 = vmatprep.mubr.bf16.mxu0 0
      %3138 = vmatmul.mubr.bf16.gmra.mrb[0].mxu0 %v2970
      %v3139 = vpop.f32.mrb[0].mxu0
      %v3140 = vadd.f32 %v2999, %v3139
      %v3141 = vpop.f32.mrb[0].mxu0
      %v3142 = vpop.f32.mrb[0].mxu0
      %v3143 = vadd.f32 %v2999, %v3142
      %v3144 = vpop.f32.mrb[0].mxu0
      %3145 = vmatprep.mubr.bf16.mxu0 0
      %3146 = vmatmul.mubr.bf16.gmra.mrb[0].mxu0 %v2971
      %v3147 = vpop.f32.mrb[0].mxu0
      %v3148 = vadd.f32 %v2999, %v3147
      %v3149 = vpop.f32.mrb[0].mxu0
      %v3150 = vpop.f32.mrb[0].mxu0
      %v3151 = vadd.f32 %v2999, %v3150
      %v3152 = vpop.f32.mrb[0].mxu0
      %3153 = vmatprep.mubr.bf16.mxu0 0
      %3154 = vmatmul.mubr.bf16.gmra.mrb[0].mxu0 %v2972
      %v3155 = vpop.f32.mrb[0].mxu0
      %v3156 = vadd.f32 %v2999, %v3155
      %v3157 = vpop.f32.mrb[0].mxu0
      %v3158 = vpop.f32.mrb[0].mxu0
      %v3159 = vadd.f32 %v2999, %v3158
      %v3160 = vpop.f32.mrb[0].mxu0
      %3161 = vmatprep.mubr.bf16.mxu0 0
      %3162 = vmatmul.mubr.bf16.gmra.mrb[0].mxu0 %v2973
      %v3163 = vpop.f32.mrb[0].mxu0
      %v3164 = vadd.f32 %v2999, %v3163
      %v3165 = vpop.f32.mrb[0].mxu0
      %v3166 = vpop.f32.mrb[0].mxu0
      %v3167 = vadd.f32 %v2999, %v3166
      %v3168 = vpop.f32.mrb[0].mxu0
      %3169 = vmatprep.mubr.bf16.mxu0 0
      %3170 = vmatmul.mubr.bf16.gmra.mrb[0].mxu0 %v2974
      %v3171 = vpop.f32.mrb[0].mxu0
      %v3172 = vadd.f32 %v2999, %v3171
      %v3173 = vpop.f32.mrb[0].mxu0
      %v3174 = vpop.f32.mrb[0].mxu0
      %v3175 = vadd.f32 %v2999, %v3174
      %v3176 = vpop.f32.mrb[0].mxu0
      %3177 = vmatprep.mubr.bf16.mxu0 0
      %3178 = vmatmul.mubr.bf16.gmra.mrb[0].mxu0 %v2975
      %v3179 = vpop.f32.mrb[0].mxu0
      %v3180 = vadd.f32 %v2999, %v3179
      %v3181 = vpop.f32.mrb[0].mxu0
      %v3182 = vpop.f32.mrb[0].mxu0
      %v3183 = vadd.f32 %v2999, %v3182
      %v3184 = vpop.f32.mrb[0].mxu0
      %3185 = vmatprep.mubr.bf16.mxu0 0
      %3186 = vmatmul.mubr.bf16.gmra.mrb[0].mxu0 %v2976
      %v3187 = vpop.f32.mrb[0].mxu0
      %v3188 = vadd.f32 %v2999, %v3187
      %v3189 = vpop.f32.mrb[0].mxu0
      %v3190 = vpop.f32.mrb[0].mxu0
      %v3191 = vadd.f32 %v2999, %v3190
      %v3192 = vpop.f32.mrb[0].mxu0
      %3193 = vmatprep.mubr.bf16.mxu0 0
      %3194 = vmatmul.mubr.bf16.gmra.mrb[0].mxu0 %v2977
      %v3195 = vpop.f32.mrb[0].mxu0
      %v3196 = vadd.f32 %v2999, %v3195
      %v3197 = vpop.f32.mrb[0].mxu0
      %v3198 = vpop.f32.mrb[0].mxu0
      %v3199 = vadd.f32 %v2999, %v3198
      %v3200 = vpop.f32.mrb[0].mxu0
      %3201 = vmatprep.mubr.bf16.mxu0 0
      %3202 = vmatmul.mubr.bf16.gmra.mrb[0].mxu0 %v2978
      %v3203 = vpop.f32.mrb[0].mxu0
      %v3204 = vadd.f32 %v2999, %v3203
      %v3205 = vpop.f32.mrb[0].mxu0
      %v3206 = vpop.f32.mrb[0].mxu0
      %v3207 = vadd.f32 %v2999, %v3206
      %v3208 = vpop.f32.mrb[0].mxu0
      %3209 = vmatprep.mubr.bf16.mxu0 0
      %3210 = vmatmul.mubr.bf16.gmra.mrb[0].mxu0 %v2979
      %v3211 = vpop.f32.mrb[0].mxu0
      %v3212 = vadd.f32 %v2999, %v3211
      %v3213 = vpop.f32.mrb[0].mxu0
      %v3214 = vpop.f32.mrb[0].mxu0
      %v3215 = vadd.f32 %v2999, %v3214
      %v3216 = vpop.f32.mrb[0].mxu0
      %3217 = vmatprep.mubr.bf16.mxu0 0
      %3218 = vmatmul.mubr.bf16.gmra.mrb[0].mxu0 %v2980
      %v3219 = vpop.f32.mrb[0].mxu0
      %v3220 = vadd.f32 %v2999, %v3219
      %v3221 = vpop.f32.mrb[0].mxu0
      %v3222 = vpop.f32.mrb[0].mxu0
      %v3223 = vadd.f32 %v2999, %v3222
      %v3224 = vpop.f32.mrb[0].mxu0
      %3225 = vmatprep.mubr.bf16.mxu0 0
      %3226 = vmatmul.mubr.bf16.gmra.mrb[0].mxu0 %v2981
      %v3227 = vpop.f32.mrb[0].mxu0
      %v3228 = vadd.f32 %v2999, %v3227
      %v3229 = vpop.f32.mrb[0].mxu0
      %v3230 = vpop.f32.mrb[0].mxu0
      %v3231 = vadd.f32 %v2999, %v3230
      %v3232 = vpop.f32.mrb[0].mxu0
      %3233 = vmatprep.mubr.bf16.mxu0 0
      %3234 = vmatmul.mubr.bf16.gmra.mrb[0].mxu0 %v2982
      %v3235 = vpop.f32.mrb[0].mxu0
      %v3236 = vadd.f32 %v2999, %v3235
      %v3237 = vpop.f32.mrb[0].mxu0
      %v3238 = vpop.f32.mrb[0].mxu0
      %v3239 = vadd.f32 %v2999, %v3238
      %v3240 = vpop.f32.mrb[0].mxu0
      %3241 = vmatprep.mubr.bf16.mxu0 0
      %3242 = vmatmul.mubr.bf16.gmra.mrb[0].mxu0 %v2983
      %v3243 = vpop.f32.mrb[0].mxu0
      %v3244 = vadd.f32 %v2999, %v3243
      %v3245 = vpop.f32.mrb[0].mxu0
      %v3246 = vpop.f32.mrb[0].mxu0
      %v3247 = vadd.f32 %v2999, %v3246
      %v3248 = vpop.f32.mrb[0].mxu0
      %3249 = vmatprep.mubr.bf16.mxu0 0
      %3250 = vmatmul.mubr.bf16.gmra.mrb[0].mxu0 %v2984
      %v3251 = vpop.f32.mrb[0].mxu0
      %v3252 = vadd.f32 %v2999, %v3251
      %v3253 = vpop.f32.mrb[0].mxu0
      %v3254 = vpop.f32.mrb[0].mxu0
      %v3255 = vadd.f32 %v2999, %v3254
      %v3256 = vpop.f32.mrb[0].mxu0
      %3257 = vmatprep.mubr.bf16.mxu0 0
      %3258 = vmatmul.mubr.bf16.gmra.mrb[0].mxu0 %v2985
      %v3259 = vpop.f32.mrb[0].mxu0
      %v3260 = vadd.f32 %v2999, %v3259
      %v3261 = vpop.f32.mrb[0].mxu0
      %v3262 = vpop.f32.mrb[0].mxu0
      %v3263 = vadd.f32 %v2999, %v3262
      %v3264 = vpop.f32.mrb[0].mxu0
      %3265 = vmatprep.mubr.bf16.mxu0 0
      %3266 = vmatmul.mubr.bf16.gmra.mrb[0].mxu0 %v2986
      %v3267 = vpop.f32.mrb[0].mxu0
      %v3268 = vadd.f32 %v2999, %v3267
      %v3269 = vpop.f32.mrb[0].mxu0
      %v3270 = vpop.f32.mrb[0].mxu0
      %v3271 = vadd.f32 %v2999, %v3270
      %v3272 = vpop.f32.mrb[0].mxu0
      %3273 = vmatprep.mubr.bf16.mxu0 0
      %3274 = vmatmul.mubr.bf16.gmra.mrb[0].mxu0 %v2987
      %v3275 = vpop.f32.mrb[0].mxu0
      %v3276 = vadd.f32 %v2999, %v3275
      %v3277 = vpop.f32.mrb[0].mxu0
      %v3278 = vpop.f32.mrb[0].mxu0
      %v3279 = vadd.f32 %v2999, %v3278
      %v3280 = vpop.f32.mrb[0].mxu0
      %3281 = vmatprep.mubr.bf16.mxu0 0
      %3282 = vmatmul.mubr.bf16.gmra.mrb[0].mxu0 %v2988
      %v3283 = vpop.f32.mrb[0].mxu0
      %v3284 = vadd.f32 %v2999, %v3283
      %v3285 = vpop.f32.mrb[0].mxu0
      %v3286 = vpop.f32.mrb[0].mxu0
      %v3287 = vadd.f32 %v2999, %v3286
      %v3288 = vpop.f32.mrb[0].mxu0
      %3289 = vmatprep.mubr.bf16.mxu0 0
      %3290 = vmatmul.mubr.bf16.gmra.mrb[0].mxu0 %v2989
      %v3291 = vpop.f32.mrb[0].mxu0
      %v3292 = vadd.f32 %v2999, %v3291
      %v3293 = vpop.f32.mrb[0].mxu0
      %v3294 = vpop.f32.mrb[0].mxu0
      %v3295 = vadd.f32 %v2999, %v3294
      %v3296 = vpop.f32.mrb[0].mxu0
      %3297 = vmatprep.mubr.bf16.mxu0 0
      %3298 = vmatmul.mubr.bf16.gmra.mrb[0].mxu0 %v2990
      %v3299 = vpop.f32.mrb[0].mxu0
      %v3300 = vadd.f32 %v2999, %v3299
      %v3301 = vpop.f32.mrb[0].mxu0
      %v3302 = vpop.f32.mrb[0].mxu0
      %v3303 = vadd.f32 %v2999, %v3302
      %v3304 = vpop.f32.mrb[0].mxu0
      %3305 = vmatprep.mubr.bf16.mxu0 0
      %3306 = vmatmul.mubr.bf16.gmra.mrb[0].mxu0 %v2991
      %v3307 = vpop.f32.mrb[0].mxu0
      %v3308 = vadd.f32 %v2999, %v3307
      %v3309 = vpop.f32.mrb[0].mxu0
      %v3310 = vpop.f32.mrb[0].mxu0
      %v3311 = vadd.f32 %v2999, %v3310
      %v3312 = vpop.f32.mrb[0].mxu0
      %3313 = vmatprep.mubr.bf16.mxu0 0
      %3314 = vmatmul.mubr.bf16.gmra.mrb[0].mxu0 %v2992
      %v3315 = vpop.f32.mrb[0].mxu0
      %v3316 = vadd.f32 %v2999, %v3315
      %v3317 = vpop.f32.mrb[0].mxu0
      %v3318 = vpop.f32.mrb[0].mxu0
      %v3319 = vadd.f32 %v2999, %v3318
      %v3320 = vpop.f32.mrb[0].mxu0
      %3321 = vmatprep.mubr.bf16.mxu0 0
      %3322 = vmatmul.mubr.bf16.gmra.mrb[0].mxu0 %v2993
      %v3323 = vpop.f32.mrb[0].mxu0
      %v3324 = vadd.f32 %v2999, %v3323
      %v3325 = vpop.f32.mrb[0].mxu0
      %v3326 = vpop.f32.mrb[0].mxu0
      %v3327 = vadd.f32 %v2999, %v3326
      %v3328 = vpop.f32.mrb[0].mxu0
      %3329 = vmatprep.mubr.bf16.mxu0 0
      %3330 = vmatmul.mubr.bf16.gmra.mrb[0].mxu0 %v2994
      %v3331 = vpop.f32.mrb[0].mxu0
      %v3332 = vadd.f32 %v2999, %v3331
      %v3333 = vpop.f32.mrb[0].mxu0
      %v3334 = vpop.f32.mrb[0].mxu0
      %v3335 = vadd.f32 %v2999, %v3334
      %v3336 = vpop.f32.mrb[0].mxu0
      %3337 = vdwg.mxu0
      %v3338 = vmax.f32 %v3084, 0.0
      %v3339 = vmax.f32 %v3087, 0.0
      %v3340 = vmax.f32 %v3092, 0.0
      %v3341 = vmax.f32 %v3095, 0.0
      %v3342 = vmax.f32 %v3100, 0.0
      %v3343 = vmax.f32 %v3103, 0.0
      %v3344 = vmax.f32 %v3108, 0.0
      %v3345 = vmax.f32 %v3111, 0.0
      %v3346 = vmax.f32 %v3116, 0.0
      %v3347 = vmax.f32 %v3119, 0.0
      %v3348 = vmax.f32 %v3124, 0.0
      %v3349 = vmax.f32 %v3127, 0.0
      %v3350 = vmax.f32 %v3132, 0.0
      %v3351 = vmax.f32 %v3135, 0.0
      %v3352 = vmax.f32 %v3140, 0.0
      %v3353 = vmax.f32 %v3143, 0.0
      %v3354 = vmax.f32 %v3148, 0.0
      %v3355 = vmax.f32 %v3151, 0.0
      %v3356 = vmax.f32 %v3156, 0.0
      %v3357 = vmax.f32 %v3159, 0.0
      %v3358 = vmax.f32 %v3164, 0.0
      %v3359 = vmax.f32 %v3167, 0.0
      %v3360 = vmax.f32 %v3172, 0.0
      %v3361 = vmax.f32 %v3175, 0.0
      %v3362 = vmax.f32 %v3180, 0.0
      %v3363 = vmax.f32 %v3183, 0.0
      %v3364 = vmax.f32 %v3188, 0.0
      %v3365 = vmax.f32 %v3191, 0.0
      %v3366 = vmax.f32 %v3196, 0.0
      %v3367 = vmax.f32 %v3199, 0.0
      %v3368 = vmax.f32 %v3204, 0.0
      %v3369 = vmax.f32 %v3207, 0.0
      %v3370 = vmax.f32 %v3212, 0.0
      %v3371 = vmax.f32 %v3215, 0.0
      %v3372 = vmax.f32 %v3220, 0.0
      %v3373 = vmax.f32 %v3223, 0.0
      %v3374 = vmax.f32 %v3228, 0.0
      %v3375 = vmax.f32 %v3231, 0.0
      %v3376 = vmax.f32 %v3236, 0.0
      %v3377 = vmax.f32 %v3239, 0.0
      %v3378 = vmax.f32 %v3244, 0.0
      %v3379 = vmax.f32 %v3247, 0.0
      %v3380 = vmax.f32 %v3252, 0.0
      %v3381 = vmax.f32 %v3255, 0.0
      %v3382 = vmax.f32 %v3260, 0.0
      %v3383 = vmax.f32 %v3263, 0.0
      %v3384 = vmax.f32 %v3268, 0.0
      %v3385 = vmax.f32 %v3271, 0.0
      %v3386 = vmax.f32 %v3276, 0.0
      %v3387 = vmax.f32 %v3279, 0.0
      %v3388 = vmax.f32 %v3284, 0.0
      %v3389 = vmax.f32 %v3287, 0.0
      %v3390 = vmax.f32 %v3292, 0.0
      %v3391 = vmax.f32 %v3295, 0.0
      %v3392 = vmax.f32 %v3300, 0.0
      %v3393 = vmax.f32 %v3303, 0.0
      %v3394 = vmax.f32 %v3308, 0.0
      %v3395 = vmax.f32 %v3311, 0.0
      %v3396 = vmax.f32 %v3316, 0.0
      %v3397 = vmax.f32 %v3319, 0.0
      %v3398 = vmax.f32 %v3324, 0.0
      %v3399 = vmax.f32 %v3327, 0.0
      %v3400 = vmax.f32 %v3332, 0.0
      %v3401 = vmax.f32 %v3335, 0.0
      %v3402 = vld [vmem:[%s5] sm:$0xf]
      %v3403 = vld [vmem:[%s5 + $0x4] sm:$0xf]
      %v3404 = vld [vmem:[%s5 + $0x8] sm:$0xf]
      %v3405 = vld [vmem:[%s5 + $0xc] sm:$0xf]
      %v3406 = vld [vmem:[%s5 + $0x10] sm:$0xf]
      %v3407 = vld [vmem:[%s5 + $0x14] sm:$0xf]
      %v3408 = vld [vmem:[%s5 + $0x18] sm:$0xf]
      %v3409 = vld [vmem:[%s5 + $0x1c] sm:$0xf]
      %v3410 = vld [vmem:[%s5 + $0x20] sm:$0xf]
      %v3411 = vld [vmem:[%s5 + $0x24] sm:$0xf]
      %v3412 = vld [vmem:[%s5 + $0x28] sm:$0xf]
      %v3413 = vld [vmem:[%s5 + $0x2c] sm:$0xf]
      %v3414 = vld [vmem:[%s5 + $0x30] sm:$0xf]
      %v3415 = vld [vmem:[%s5 + $0x34] sm:$0xf]
      %v3416 = vld [vmem:[%s5 + $0x38] sm:$0xf]
      %v3417 = vld [vmem:[%s5 + $0x3c] sm:$0xf]
      %v3418 = vld [vmem:[%s6] sm:$0x1]
      %v3419 = vpack.c.bf16 %v3339, %v3338
      %v3420 = vpack.c.bf16 %v3341, %v3340
      %v3421 = vpack.c.bf16 %v3343, %v3342
      %v3422 = vpack.c.bf16 %v3345, %v3344
      %v3423 = vpack.c.bf16 %v3347, %v3346
      %v3424 = vpack.c.bf16 %v3349, %v3348
      %v3425 = vpack.c.bf16 %v3351, %v3350
      %v3426 = vpack.c.bf16 %v3353, %v3352
      %v3427 = vpack.c.bf16 %v3355, %v3354
      %v3428 = vpack.c.bf16 %v3357, %v3356
      %v3429 = vpack.c.bf16 %v3359, %v3358
      %v3430 = vpack.c.bf16 %v3361, %v3360
      %v3431 = vpack.c.bf16 %v3363, %v3362
      %v3432 = vpack.c.bf16 %v3365, %v3364
      %v3433 = vpack.c.bf16 %v3367, %v3366
      %v3434 = vpack.c.bf16 %v3369, %v3368
      %v3435 = vpack.c.bf16 %v3371, %v3370
      %v3436 = vpack.c.bf16 %v3373, %v3372
      %v3437 = vpack.c.bf16 %v3375, %v3374
      %v3438 = vpack.c.bf16 %v3377, %v3376
      %v3439 = vpack.c.bf16 %v3379, %v3378
      %v3440 = vpack.c.bf16 %v3381, %v3380
      %v3441 = vpack.c.bf16 %v3383, %v3382
      %v3442 = vpack.c.bf16 %v3385, %v3384
      %v3443 = vpack.c.bf16 %v3387, %v3386
      %v3444 = vpack.c.bf16 %v3389, %v3388
      %v3445 = vpack.c.bf16 %v3391, %v3390
      %v3446 = vpack.c.bf16 %v3393, %v3392
      %v3447 = vpack.c.bf16 %v3395, %v3394
      %v3448 = vpack.c.bf16 %v3397, %v3396
      %v3449 = vpack.c.bf16 %v3399, %v3398
      %v3450 = vpack.c.bf16 %v3401, %v3400
      %v3452 = vlaneseq
      %v3453 = vshrl.u32 %v3452, 7
      %v3454 = vsub.s32 0, %v3453
      %v3455 = vrot.slane %v3418, %v3454
      %v3473 = vunpack.c.l.b16 %v3402
      %v3474 = vunpack.c.l.b16 %v3403
      %v3475 = vunpack.c.l.b16 %v3404
      %v3476 = vunpack.c.l.b16 %v3405
      %v3477 = vunpack.c.l.b16 %v3406
      %v3478 = vunpack.c.l.b16 %v3407
      %v3479 = vunpack.c.l.b16 %v3408
      %v3480 = vunpack.c.l.b16 %v3409
      %v3481 = vunpack.c.l.b16 %v3410
      %v3482 = vunpack.c.l.b16 %v3411
      %v3483 = vunpack.c.l.b16 %v3412
      %v3484 = vunpack.c.l.b16 %v3413
      %v3485 = vunpack.c.l.b16 %v3414
      %v3486 = vunpack.c.l.b16 %v3415
      %v3487 = vunpack.c.l.b16 %v3416
      %v3488 = vunpack.c.l.b16 %v3417
      %v3489 = vpack.c.b16 %v3474, %v3473
      %v3490 = vpack.c.b16 %v3476, %v3475
      %v3491 = vpack.c.b16 %v3478, %v3477
      %v3492 = vpack.c.b16 %v3480, %v3479
      %v3493 = vpack.c.b16 %v3482, %v3481
      %v3494 = vpack.c.b16 %v3484, %v3483
      %v3495 = vpack.c.b16 %v3486, %v3485
      %v3496 = vpack.c.b16 %v3488, %v3487
      %3505 = vmatprep.subr.bf16.mxu0 0
      %3506 = vmatpush1.bf16.msra.mxu0 %v3489
      %3507 = vmatprep.subr.bf16.mxu0 0
      %3508 = vmatpush1.bf16.msra.mxu0 %v3490
      %3509 = vmatprep.subr.bf16.mxu0 0
      %3510 = vmatpush1.bf16.msra.mxu0 %v3491
      %3511 = vmatprep.subr.bf16.mxu0 0
      %3512 = vmatpush1.bf16.msra.mxu0 %v3492
      %3513 = vmatprep.subr.bf16.mxu0 0
      %3514 = vmatpush1.bf16.msra.mxu0 %v3493
      %3515 = vmatprep.subr.bf16.mxu0 0
      %3516 = vmatpush1.bf16.msra.mxu0 %v3494
      %3517 = vmatprep.subr.bf16.mxu0 0
      %3518 = vmatpush1.bf16.msra.mxu0 %v3495
      %3519 = vmatprep.subr.bf16.mxu0 0
      %3520 = vmatpush1.bf16.msra.mxu0 %v3496
      %3521 = vmatprep.subr.bf16.mxu0 0
      %3522 = vmatpush1.bf16.msra.mxu0 0
      %3523 = vmatprep.subr.bf16.mxu0 0
      %3524 = vmatpush1.bf16.msra.mxu0 0
      %3525 = vmatprep.subr.bf16.mxu0 0
      %3526 = vmatpush1.bf16.msra.mxu0 0
      %3527 = vmatprep.subr.bf16.mxu0 0
      %3528 = vmatpush1.bf16.msra.mxu0 0
      %3529 = vmatprep.subr.bf16.mxu0 0
      %3530 = vmatpush1.bf16.msra.mxu0 0
      %3531 = vmatprep.subr.bf16.mxu0 0
      %3532 = vmatpush1.bf16.msra.mxu0 0
      %3533 = vmatprep.subr.bf16.mxu0 0
      %3534 = vmatpush1.bf16.msra.mxu0 0
      %3535 = vmatprep.subr.bf16.mxu0 0
      %3536 = vmatpush1.bf16.msra.mxu0 0
      %3537 = vmatprep.mubr.bf16.mxu0 0
      %3538 = vmatmul.mubr.bf16.gmra.mrb[0].mxu0 %v3419
      %v3539 = vpop.f32.mrb[0].mxu0
      %v3540 = vadd.f32 %v3455, %v3539
      %v3541 = vpop.f32.mrb[0].mxu0
      %v3542 = vpop.f32.mrb[0].mxu0
      %v3543 = vadd.f32 %v3455, %v3542
      %v3544 = vpop.f32.mrb[0].mxu0
      %3545 = vmatprep.mubr.bf16.mxu0 0
      %3546 = vmatmul.mubr.bf16.gmra.mrb[0].mxu0 %v3420
      %v3547 = vpop.f32.mrb[0].mxu0
      %v3548 = vadd.f32 %v3455, %v3547
      %v3549 = vpop.f32.mrb[0].mxu0
      %v3550 = vpop.f32.mrb[0].mxu0
      %v3551 = vadd.f32 %v3455, %v3550
      %v3552 = vpop.f32.mrb[0].mxu0
      %3553 = vmatprep.mubr.bf16.mxu0 0
      %3554 = vmatmul.mubr.bf16.gmra.mrb[0].mxu0 %v3421
      %v3555 = vpop.f32.mrb[0].mxu0
      %v3556 = vadd.f32 %v3455, %v3555
      %v3557 = vpop.f32.mrb[0].mxu0
      %v3558 = vpop.f32.mrb[0].mxu0
      %v3559 = vadd.f32 %v3455, %v3558
      %v3560 = vpop.f32.mrb[0].mxu0
      %3561 = vmatprep.mubr.bf16.mxu0 0
      %3562 = vmatmul.mubr.bf16.gmra.mrb[0].mxu0 %v3422
      %v3563 = vpop.f32.mrb[0].mxu0
      %v3564 = vadd.f32 %v3455, %v3563
      %v3565 = vpop.f32.mrb[0].mxu0
      %v3566 = vpop.f32.mrb[0].mxu0
      %v3567 = vadd.f32 %v3455, %v3566
      %v3568 = vpop.f32.mrb[0].mxu0
      %3569 = vmatprep.mubr.bf16.mxu0 0
      %3570 = vmatmul.mubr.bf16.gmra.mrb[0].mxu0 %v3423
      %v3571 = vpop.f32.mrb[0].mxu0
      %v3572 = vadd.f32 %v3455, %v3571
      %v3573 = vpop.f32.mrb[0].mxu0
      %v3574 = vpop.f32.mrb[0].mxu0
      %v3575 = vadd.f32 %v3455, %v3574
      %v3576 = vpop.f32.mrb[0].mxu0
      %3577 = vmatprep.mubr.bf16.mxu0 0
      %3578 = vmatmul.mubr.bf16.gmra.mrb[0].mxu0 %v3424
      %v3579 = vpop.f32.mrb[0].mxu0
      %v3580 = vadd.f32 %v3455, %v3579
      %v3581 = vpop.f32.mrb[0].mxu0
      %v3582 = vpop.f32.mrb[0].mxu0
      %v3583 = vadd.f32 %v3455, %v3582
      %v3584 = vpop.f32.mrb[0].mxu0
      %3585 = vmatprep.mubr.bf16.mxu0 0
      %3586 = vmatmul.mubr.bf16.gmra.mrb[0].mxu0 %v3425
      %v3587 = vpop.f32.mrb[0].mxu0
      %v3588 = vadd.f32 %v3455, %v3587
      %v3589 = vpop.f32.mrb[0].mxu0
      %v3590 = vpop.f32.mrb[0].mxu0
      %v3591 = vadd.f32 %v3455, %v3590
      %v3592 = vpop.f32.mrb[0].mxu0
      %3593 = vmatprep.mubr.bf16.mxu0 0
      %3594 = vmatmul.mubr.bf16.gmra.mrb[0].mxu0 %v3426
      %v3595 = vpop.f32.mrb[0].mxu0
      %v3596 = vadd.f32 %v3455, %v3595
      %v3597 = vpop.f32.mrb[0].mxu0
      %v3598 = vpop.f32.mrb[0].mxu0
      %v3599 = vadd.f32 %v3455, %v3598
      %v3600 = vpop.f32.mrb[0].mxu0
      %3601 = vmatprep.mubr.bf16.mxu0 0
      %3602 = vmatmul.mubr.bf16.gmra.mrb[0].mxu0 %v3427
      %v3603 = vpop.f32.mrb[0].mxu0
      %v3604 = vadd.f32 %v3455, %v3603
      %v3605 = vpop.f32.mrb[0].mxu0
      %v3606 = vpop.f32.mrb[0].mxu0
      %v3607 = vadd.f32 %v3455, %v3606
      %v3608 = vpop.f32.mrb[0].mxu0
      %3609 = vmatprep.mubr.bf16.mxu0 0
      %3610 = vmatmul.mubr.bf16.gmra.mrb[0].mxu0 %v3428
      %v3611 = vpop.f32.mrb[0].mxu0
      %v3612 = vadd.f32 %v3455, %v3611
      %v3613 = vpop.f32.mrb[0].mxu0
      %v3614 = vpop.f32.mrb[0].mxu0
      %v3615 = vadd.f32 %v3455, %v3614
      %v3616 = vpop.f32.mrb[0].mxu0
      %3617 = vmatprep.mubr.bf16.mxu0 0
      %3618 = vmatmul.mubr.bf16.gmra.mrb[0].mxu0 %v3429
      %v3619 = vpop.f32.mrb[0].mxu0
      %v3620 = vadd.f32 %v3455, %v3619
      %v3621 = vpop.f32.mrb[0].mxu0
      %v3622 = vpop.f32.mrb[0].mxu0
      %v3623 = vadd.f32 %v3455, %v3622
      %v3624 = vpop.f32.mrb[0].mxu0
      %3625 = vmatprep.mubr.bf16.mxu0 0
      %3626 = vmatmul.mubr.bf16.gmra.mrb[0].mxu0 %v3430
      %v3627 = vpop.f32.mrb[0].mxu0
      %v3628 = vadd.f32 %v3455, %v3627
      %v3629 = vpop.f32.mrb[0].mxu0
      %v3630 = vpop.f32.mrb[0].mxu0
      %v3631 = vadd.f32 %v3455, %v3630
      %v3632 = vpop.f32.mrb[0].mxu0
      %3633 = vmatprep.mubr.bf16.mxu0 0
      %3634 = vmatmul.mubr.bf16.gmra.mrb[0].mxu0 %v3431
      %v3635 = vpop.f32.mrb[0].mxu0
      %v3636 = vadd.f32 %v3455, %v3635
      %v3637 = vpop.f32.mrb[0].mxu0
      %v3638 = vpop.f32.mrb[0].mxu0
      %v3639 = vadd.f32 %v3455, %v3638
      %v3640 = vpop.f32.mrb[0].mxu0
      %3641 = vmatprep.mubr.bf16.mxu0 0
      %3642 = vmatmul.mubr.bf16.gmra.mrb[0].mxu0 %v3432
      %v3643 = vpop.f32.mrb[0].mxu0
      %v3644 = vadd.f32 %v3455, %v3643
      %v3645 = vpop.f32.mrb[0].mxu0
      %v3646 = vpop.f32.mrb[0].mxu0
      %v3647 = vadd.f32 %v3455, %v3646
      %v3648 = vpop.f32.mrb[0].mxu0
      %3649 = vmatprep.mubr.bf16.mxu0 0
      %3650 = vmatmul.mubr.bf16.gmra.mrb[0].mxu0 %v3433
      %v3651 = vpop.f32.mrb[0].mxu0
      %v3652 = vadd.f32 %v3455, %v3651
      %v3653 = vpop.f32.mrb[0].mxu0
      %v3654 = vpop.f32.mrb[0].mxu0
      %v3655 = vadd.f32 %v3455, %v3654
      %v3656 = vpop.f32.mrb[0].mxu0
      %3657 = vmatprep.mubr.bf16.mxu0 0
      %3658 = vmatmul.mubr.bf16.gmra.mrb[0].mxu0 %v3434
      %v3659 = vpop.f32.mrb[0].mxu0
      %v3660 = vadd.f32 %v3455, %v3659
      %v3661 = vpop.f32.mrb[0].mxu0
      %v3662 = vpop.f32.mrb[0].mxu0
      %v3663 = vadd.f32 %v3455, %v3662
      %v3664 = vpop.f32.mrb[0].mxu0
      %3665 = vmatprep.mubr.bf16.mxu0 0
      %3666 = vmatmul.mubr.bf16.gmra.mrb[0].mxu0 %v3435
      %v3667 = vpop.f32.mrb[0].mxu0
      %v3668 = vadd.f32 %v3455, %v3667
      %v3669 = vpop.f32.mrb[0].mxu0
      %v3670 = vpop.f32.mrb[0].mxu0
      %v3671 = vadd.f32 %v3455, %v3670
      %v3672 = vpop.f32.mrb[0].mxu0
      %3673 = vmatprep.mubr.bf16.mxu0 0
      %3674 = vmatmul.mubr.bf16.gmra.mrb[0].mxu0 %v3436
      %v3675 = vpop.f32.mrb[0].mxu0
      %v3676 = vadd.f32 %v3455, %v3675
      %v3677 = vpop.f32.mrb[0].mxu0
      %v3678 = vpop.f32.mrb[0].mxu0
      %v3679 = vadd.f32 %v3455, %v3678
      %v3680 = vpop.f32.mrb[0].mxu0
      %3681 = vmatprep.mubr.bf16.mxu0 0
      %3682 = vmatmul.mubr.bf16.gmra.mrb[0].mxu0 %v3437
      %v3683 = vpop.f32.mrb[0].mxu0
      %v3684 = vadd.f32 %v3455, %v3683
      %v3685 = vpop.f32.mrb[0].mxu0
      %v3686 = vpop.f32.mrb[0].mxu0
      %v3687 = vadd.f32 %v3455, %v3686
      %v3688 = vpop.f32.mrb[0].mxu0
      %3689 = vmatprep.mubr.bf16.mxu0 0
      %3690 = vmatmul.mubr.bf16.gmra.mrb[0].mxu0 %v3438
      %v3691 = vpop.f32.mrb[0].mxu0
      %v3692 = vadd.f32 %v3455, %v3691
      %v3693 = vpop.f32.mrb[0].mxu0
      %v3694 = vpop.f32.mrb[0].mxu0
      %v3695 = vadd.f32 %v3455, %v3694
      %v3696 = vpop.f32.mrb[0].mxu0
      %3697 = vmatprep.mubr.bf16.mxu0 0
      %3698 = vmatmul.mubr.bf16.gmra.mrb[0].mxu0 %v3439
      %v3699 = vpop.f32.mrb[0].mxu0
      %v3700 = vadd.f32 %v3455, %v3699
      %v3701 = vpop.f32.mrb[0].mxu0
      %v3702 = vpop.f32.mrb[0].mxu0
      %v3703 = vadd.f32 %v3455, %v3702
      %v3704 = vpop.f32.mrb[0].mxu0
      %3705 = vmatprep.mubr.bf16.mxu0 0
      %3706 = vmatmul.mubr.bf16.gmra.mrb[0].mxu0 %v3440
      %v3707 = vpop.f32.mrb[0].mxu0
      %v3708 = vadd.f32 %v3455, %v3707
      %v3709 = vpop.f32.mrb[0].mxu0
      %v3710 = vpop.f32.mrb[0].mxu0
      %v3711 = vadd.f32 %v3455, %v3710
      %v3712 = vpop.f32.mrb[0].mxu0
      %3713 = vmatprep.mubr.bf16.mxu0 0
      %3714 = vmatmul.mubr.bf16.gmra.mrb[0].mxu0 %v3441
      %v3715 = vpop.f32.mrb[0].mxu0
      %v3716 = vadd.f32 %v3455, %v3715
      %v3717 = vpop.f32.mrb[0].mxu0
      %v3718 = vpop.f32.mrb[0].mxu0
      %v3719 = vadd.f32 %v3455, %v3718
      %v3720 = vpop.f32.mrb[0].mxu0
      %3721 = vmatprep.mubr.bf16.mxu0 0
      %3722 = vmatmul.mubr.bf16.gmra.mrb[0].mxu0 %v3442
      %v3723 = vpop.f32.mrb[0].mxu0
      %v3724 = vadd.f32 %v3455, %v3723
      %v3725 = vpop.f32.mrb[0].mxu0
      %v3726 = vpop.f32.mrb[0].mxu0
      %v3727 = vadd.f32 %v3455, %v3726
      %v3728 = vpop.f32.mrb[0].mxu0
      %3729 = vmatprep.mubr.bf16.mxu0 0
      %3730 = vmatmul.mubr.bf16.gmra.mrb[0].mxu0 %v3443
      %v3731 = vpop.f32.mrb[0].mxu0
      %v3732 = vadd.f32 %v3455, %v3731
      %v3733 = vpop.f32.mrb[0].mxu0
      %v3734 = vpop.f32.mrb[0].mxu0
      %v3735 = vadd.f32 %v3455, %v3734
      %v3736 = vpop.f32.mrb[0].mxu0
      %3737 = vmatprep.mubr.bf16.mxu0 0
      %3738 = vmatmul.mubr.bf16.gmra.mrb[0].mxu0 %v3444
      %v3739 = vpop.f32.mrb[0].mxu0
      %v3740 = vadd.f32 %v3455, %v3739
      %v3741 = vpop.f32.mrb[0].mxu0
      %v3742 = vpop.f32.mrb[0].mxu0
      %v3743 = vadd.f32 %v3455, %v3742
      %v3744 = vpop.f32.mrb[0].mxu0
      %3745 = vmatprep.mubr.bf16.mxu0 0
      %3746 = vmatmul.mubr.bf16.gmra.mrb[0].mxu0 %v3445
      %v3747 = vpop.f32.mrb[0].mxu0
      %v3748 = vadd.f32 %v3455, %v3747
      %v3749 = vpop.f32.mrb[0].mxu0
      %v3750 = vpop.f32.mrb[0].mxu0
      %v3751 = vadd.f32 %v3455, %v3750
      %v3752 = vpop.f32.mrb[0].mxu0
      %3753 = vmatprep.mubr.bf16.mxu0 0
      %3754 = vmatmul.mubr.bf16.gmra.mrb[0].mxu0 %v3446
      %v3755 = vpop.f32.mrb[0].mxu0
      %v3756 = vadd.f32 %v3455, %v3755
      %v3757 = vpop.f32.mrb[0].mxu0
      %v3758 = vpop.f32.mrb[0].mxu0
      %v3759 = vadd.f32 %v3455, %v3758
      %v3760 = vpop.f32.mrb[0].mxu0
      %3761 = vmatprep.mubr.bf16.mxu0 0
      %3762 = vmatmul.mubr.bf16.gmra.mrb[0].mxu0 %v3447
      %v3763 = vpop.f32.mrb[0].mxu0
      %v3764 = vadd.f32 %v3455, %v3763
      %v3765 = vpop.f32.mrb[0].mxu0
      %v3766 = vpop.f32.mrb[0].mxu0
      %v3767 = vadd.f32 %v3455, %v3766
      %v3768 = vpop.f32.mrb[0].mxu0
      %3769 = vmatprep.mubr.bf16.mxu0 0
      %3770 = vmatmul.mubr.bf16.gmra.mrb[0].mxu0 %v3448
      %v3771 = vpop.f32.mrb[0].mxu0
      %v3772 = vadd.f32 %v3455, %v3771
      %v3773 = vpop.f32.mrb[0].mxu0
      %v3774 = vpop.f32.mrb[0].mxu0
      %v3775 = vadd.f32 %v3455, %v3774
      %v3776 = vpop.f32.mrb[0].mxu0
      %3777 = vmatprep.mubr.bf16.mxu0 0
      %3778 = vmatmul.mubr.bf16.gmra.mrb[0].mxu0 %v3449
      %v3779 = vpop.f32.mrb[0].mxu0
      %v3780 = vadd.f32 %v3455, %v3779
      %v3781 = vpop.f32.mrb[0].mxu0
      %v3782 = vpop.f32.mrb[0].mxu0
      %v3783 = vadd.f32 %v3455, %v3782
      %v3784 = vpop.f32.mrb[0].mxu0
      %3785 = vmatprep.mubr.bf16.mxu0 0
      %3786 = vmatmul.mubr.bf16.gmra.mrb[0].mxu0 %v3450
      %v3787 = vpop.f32.mrb[0].mxu0
      %v3788 = vadd.f32 %v3455, %v3787
      %v3789 = vpop.f32.mrb[0].mxu0
      %v3790 = vpop.f32.mrb[0].mxu0
      %v3791 = vadd.f32 %v3455, %v3790
      %v3792 = vpop.f32.mrb[0].mxu0
      %3793 = vdwg.mxu0
      %v3794 = vmax.f32 %v3540, 0.0
      %v3795 = vmax.f32 %v3543, 0.0
      %v3796 = vmax.f32 %v3548, 0.0
      %v3797 = vmax.f32 %v3551, 0.0
      %v3798 = vmax.f32 %v3556, 0.0
      %v3799 = vmax.f32 %v3559, 0.0
      %v3800 = vmax.f32 %v3564, 0.0
      %v3801 = vmax.f32 %v3567, 0.0
      %v3802 = vmax.f32 %v3572, 0.0
      %v3803 = vmax.f32 %v3575, 0.0
      %v3804 = vmax.f32 %v3580, 0.0
      %v3805 = vmax.f32 %v3583, 0.0
      %v3806 = vmax.f32 %v3588, 0.0
      %v3807 = vmax.f32 %v3591, 0.0
      %v3808 = vmax.f32 %v3596, 0.0
      %v3809 = vmax.f32 %v3599, 0.0
      %v3810 = vmax.f32 %v3604, 0.0
      %v3811 = vmax.f32 %v3607, 0.0
      %v3812 = vmax.f32 %v3612, 0.0
      %v3813 = vmax.f32 %v3615, 0.0
      %v3814 = vmax.f32 %v3620, 0.0
      %v3815 = vmax.f32 %v3623, 0.0
      %v3816 = vmax.f32 %v3628, 0.0
      %v3817 = vmax.f32 %v3631, 0.0
      %v3818 = vmax.f32 %v3636, 0.0
      %v3819 = vmax.f32 %v3639, 0.0
      %v3820 = vmax.f32 %v3644, 0.0
      %v3821 = vmax.f32 %v3647, 0.0
      %v3822 = vmax.f32 %v3652, 0.0
      %v3823 = vmax.f32 %v3655, 0.0
      %v3824 = vmax.f32 %v3660, 0.0
      %v3825 = vmax.f32 %v3663, 0.0
      %v3826 = vmax.f32 %v3668, 0.0
      %v3827 = vmax.f32 %v3671, 0.0
      %v3828 = vmax.f32 %v3676, 0.0
      %v3829 = vmax.f32 %v3679, 0.0
      %v3830 = vmax.f32 %v3684, 0.0
      %v3831 = vmax.f32 %v3687, 0.0
      %v3832 = vmax.f32 %v3692, 0.0
      %v3833 = vmax.f32 %v3695, 0.0
      %v3834 = vmax.f32 %v3700, 0.0
      %v3835 = vmax.f32 %v3703, 0.0
      %v3836 = vmax.f32 %v3708, 0.0
      %v3837 = vmax.f32 %v3711, 0.0
      %v3838 = vmax.f32 %v3716, 0.0
      %v3839 = vmax.f32 %v3719, 0.0
      %v3840 = vmax.f32 %v3724, 0.0
      %v3841 = vmax.f32 %v3727, 0.0
      %v3842 = vmax.f32 %v3732, 0.0
      %v3843 = vmax.f32 %v3735, 0.0
      %v3844 = vmax.f32 %v3740, 0.0
      %v3845 = vmax.f32 %v3743, 0.0
      %v3846 = vmax.f32 %v3748, 0.0
      %v3847 = vmax.f32 %v3751, 0.0
      %v3848 = vmax.f32 %v3756, 0.0
      %v3849 = vmax.f32 %v3759, 0.0
      %v3850 = vmax.f32 %v3764, 0.0
      %v3851 = vmax.f32 %v3767, 0.0
      %v3852 = vmax.f32 %v3772, 0.0
      %v3853 = vmax.f32 %v3775, 0.0
      %v3854 = vmax.f32 %v3780, 0.0
      %v3855 = vmax.f32 %v3783, 0.0
      %v3856 = vmax.f32 %v3788, 0.0
      %v3857 = vmax.f32 %v3791, 0.0
      %v3858 = vld [vmem:[%s7] sm:$0xf]
      %v3859 = vld [vmem:[%s7 + $0x4] sm:$0xf]
      %v3860 = vld [vmem:[%s7 + $0x8] sm:$0xf]
      %v3861 = vld [vmem:[%s7 + $0xc] sm:$0xf]
      %v3862 = vld [vmem:[%s7 + $0x10] sm:$0xf]
      %v3863 = vld [vmem:[%s7 + $0x14] sm:$0xf]
      %v3864 = vld [vmem:[%s7 + $0x18] sm:$0xf]
      %v3865 = vld [vmem:[%s7 + $0x1c] sm:$0xf]
      %v3866 = vld [vmem:[%s7 + $0x20] sm:$0xf]
      %v3867 = vld [vmem:[%s7 + $0x24] sm:$0xf]
      %v3868 = vld [vmem:[%s7 + $0x28] sm:$0xf]
      %v3869 = vld [vmem:[%s7 + $0x2c] sm:$0xf]
      %v3870 = vld [vmem:[%s7 + $0x30] sm:$0xf]
      %v3871 = vld [vmem:[%s7 + $0x34] sm:$0xf]
      %v3872 = vld [vmem:[%s7 + $0x38] sm:$0xf]
      %v3873 = vld [vmem:[%s7 + $0x3c] sm:$0xf]
      %v3874 = vld [vmem:[%s8] sm:$0x1]
      %v3875 = vpack.c.bf16 %v3795, %v3794
      %v3876 = vpack.c.bf16 %v3797, %v3796
      %v3877 = vpack.c.bf16 %v3799, %v3798
      %v3878 = vpack.c.bf16 %v3801, %v3800
      %v3879 = vpack.c.bf16 %v3803, %v3802
      %v3880 = vpack.c.bf16 %v3805, %v3804
      %v3881 = vpack.c.bf16 %v3807, %v3806
      %v3882 = vpack.c.bf16 %v3809, %v3808
      %v3883 = vpack.c.bf16 %v3811, %v3810
      %v3884 = vpack.c.bf16 %v3813, %v3812
      %v3885 = vpack.c.bf16 %v3815, %v3814
      %v3886 = vpack.c.bf16 %v3817, %v3816
      %v3887 = vpack.c.bf16 %v3819, %v3818
      %v3888 = vpack.c.bf16 %v3821, %v3820
      %v3889 = vpack.c.bf16 %v3823, %v3822
      %v3890 = vpack.c.bf16 %v3825, %v3824
      %v3891 = vpack.c.bf16 %v3827, %v3826
      %v3892 = vpack.c.bf16 %v3829, %v3828
      %v3893 = vpack.c.bf16 %v3831, %v3830
      %v3894 = vpack.c.bf16 %v3833, %v3832
      %v3895 = vpack.c.bf16 %v3835, %v3834
      %v3896 = vpack.c.bf16 %v3837, %v3836
      %v3897 = vpack.c.bf16 %v3839, %v3838
      %v3898 = vpack.c.bf16 %v3841, %v3840
      %v3899 = vpack.c.bf16 %v3843, %v3842
      %v3900 = vpack.c.bf16 %v3845, %v3844
      %v3901 = vpack.c.bf16 %v3847, %v3846
      %v3902 = vpack.c.bf16 %v3849, %v3848
      %v3903 = vpack.c.bf16 %v3851, %v3850
      %v3904 = vpack.c.bf16 %v3853, %v3852
      %v3905 = vpack.c.bf16 %v3855, %v3854
      %v3906 = vpack.c.bf16 %v3857, %v3856
      %v3908 = vlaneseq
      %v3909 = vshrl.u32 %v3908, 7
      %v3910 = vsub.s32 0, %v3909
      %v3911 = vrot.slane %v3874, %v3910
      %v3929 = vunpack.c.l.b16 %v3858
      %v3930 = vunpack.c.l.b16 %v3859
      %v3931 = vunpack.c.l.b16 %v3860
      %v3932 = vunpack.c.l.b16 %v3861
      %v3933 = vunpack.c.l.b16 %v3862
      %v3934 = vunpack.c.l.b16 %v3863
      %v3935 = vunpack.c.l.b16 %v3864
      %v3936 = vunpack.c.l.b16 %v3865
      %v3937 = vunpack.c.l.b16 %v3866
      %v3938 = vunpack.c.l.b16 %v3867
      %v3939 = vunpack.c.l.b16 %v3868
      %v3940 = vunpack.c.l.b16 %v3869
      %v3941 = vunpack.c.l.b16 %v3870
      %v3942 = vunpack.c.l.b16 %v3871
      %v3943 = vunpack.c.l.b16 %v3872
      %v3944 = vunpack.c.l.b16 %v3873
      %v3945 = vpack.c.b16 %v3930, %v3929
      %v3946 = vpack.c.b16 %v3932, %v3931
      %v3947 = vpack.c.b16 %v3934, %v3933
      %v3948 = vpack.c.b16 %v3936, %v3935
      %v3949 = vpack.c.b16 %v3938, %v3937
      %v3950 = vpack.c.b16 %v3940, %v3939
      %v3951 = vpack.c.b16 %v3942, %v3941
      %v3952 = vpack.c.b16 %v3944, %v3943
      %3961 = vmatprep.subr.bf16.mxu0 0
      %3962 = vmatpush1.bf16.msra.mxu0 %v3945
      %3963 = vmatprep.subr.bf16.mxu0 0
      %3964 = vmatpush1.bf16.msra.mxu0 %v3946
      %3965 = vmatprep.subr.bf16.mxu0 0
      %3966 = vmatpush1.bf16.msra.mxu0 %v3947
      %3967 = vmatprep.subr.bf16.mxu0 0
      %3968 = vmatpush1.bf16.msra.mxu0 %v3948
      %3969 = vmatprep.subr.bf16.mxu0 0
      %3970 = vmatpush1.bf16.msra.mxu0 %v3949
      %3971 = vmatprep.subr.bf16.mxu0 0
      %3972 = vmatpush1.bf16.msra.mxu0 %v3950
      %3973 = vmatprep.subr.bf16.mxu0 0
      %3974 = vmatpush1.bf16.msra.mxu0 %v3951
      %3975 = vmatprep.subr.bf16.mxu0 0
      %3976 = vmatpush1.bf16.msra.mxu0 %v3952
      %3977 = vmatprep.subr.bf16.mxu0 0
      %3978 = vmatpush1.bf16.msra.mxu0 0
      %3979 = vmatprep.subr.bf16.mxu0 0
      %3980 = vmatpush1.bf16.msra.mxu0 0
      %3981 = vmatprep.subr.bf16.mxu0 0
      %3982 = vmatpush1.bf16.msra.mxu0 0
      %3983 = vmatprep.subr.bf16.mxu0 0
      %3984 = vmatpush1.bf16.msra.mxu0 0
      %3985 = vmatprep.subr.bf16.mxu0 0
      %3986 = vmatpush1.bf16.msra.mxu0 0
      %3987 = vmatprep.subr.bf16.mxu0 0
      %3988 = vmatpush1.bf16.msra.mxu0 0
      %3989 = vmatprep.subr.bf16.mxu0 0
      %3990 = vmatpush1.bf16.msra.mxu0 0
      %3991 = vmatprep.subr.bf16.mxu0 0
      %3992 = vmatpush1.bf16.msra.mxu0 0
      %3993 = vmatprep.mubr.bf16.mxu0 0
      %3994 = vmatmul.mubr.bf16.gmra.mrb[0].mxu0 %v3875
      %v3995 = vpop.f32.mrb[0].mxu0
      %v3996 = vadd.f32 %v3911, %v3995
      %v3997 = vpop.f32.mrb[0].mxu0
      %v3998 = vpop.f32.mrb[0].mxu0
      %v3999 = vadd.f32 %v3911, %v3998
      %v4000 = vpop.f32.mrb[0].mxu0
      %4001 = vmatprep.mubr.bf16.mxu0 0
      %4002 = vmatmul.mubr.bf16.gmra.mrb[0].mxu0 %v3876
      %v4003 = vpop.f32.mrb[0].mxu0
      %v4004 = vadd.f32 %v3911, %v4003
      %v4005 = vpop.f32.mrb[0].mxu0
      %v4006 = vpop.f32.mrb[0].mxu0
      %v4007 = vadd.f32 %v3911, %v4006
      %v4008 = vpop.f32.mrb[0].mxu0
      %4009 = vmatprep.mubr.bf16.mxu0 0
      %4010 = vmatmul.mubr.bf16.gmra.mrb[0].mxu0 %v3877
      %v4011 = vpop.f32.mrb[0].mxu0
      %v4012 = vadd.f32 %v3911, %v4011
      %v4013 = vpop.f32.mrb[0].mxu0
      %v4014 = vpop.f32.mrb[0].mxu0
      %v4015 = vadd.f32 %v3911, %v4014
      %v4016 = vpop.f32.mrb[0].mxu0
      %4017 = vmatprep.mubr.bf16.mxu0 0
      %4018 = vmatmul.mubr.bf16.gmra.mrb[0].mxu0 %v3878
      %v4019 = vpop.f32.mrb[0].mxu0
      %v4020 = vadd.f32 %v3911, %v4019
      %v4021 = vpop.f32.mrb[0].mxu0
      %v4022 = vpop.f32.mrb[0].mxu0
      %v4023 = vadd.f32 %v3911, %v4022
      %v4024 = vpop.f32.mrb[0].mxu0
      %4025 = vmatprep.mubr.bf16.mxu0 0
      %4026 = vmatmul.mubr.bf16.gmra.mrb[0].mxu0 %v3879
      %v4027 = vpop.f32.mrb[0].mxu0
      %v4028 = vadd.f32 %v3911, %v4027
      %v4029 = vpop.f32.mrb[0].mxu0
      %v4030 = vpop.f32.mrb[0].mxu0
      %v4031 = vadd.f32 %v3911, %v4030
      %v4032 = vpop.f32.mrb[0].mxu0
      %4033 = vmatprep.mubr.bf16.mxu0 0
      %4034 = vmatmul.mubr.bf16.gmra.mrb[0].mxu0 %v3880
      %v4035 = vpop.f32.mrb[0].mxu0
      %v4036 = vadd.f32 %v3911, %v4035
      %v4037 = vpop.f32.mrb[0].mxu0
      %v4038 = vpop.f32.mrb[0].mxu0
      %v4039 = vadd.f32 %v3911, %v4038
      %v4040 = vpop.f32.mrb[0].mxu0
      %4041 = vmatprep.mubr.bf16.mxu0 0
      %4042 = vmatmul.mubr.bf16.gmra.mrb[0].mxu0 %v3881
      %v4043 = vpop.f32.mrb[0].mxu0
      %v4044 = vadd.f32 %v3911, %v4043
      %v4045 = vpop.f32.mrb[0].mxu0
      %v4046 = vpop.f32.mrb[0].mxu0
      %v4047 = vadd.f32 %v3911, %v4046
      %v4048 = vpop.f32.mrb[0].mxu0
      %4049 = vmatprep.mubr.bf16.mxu0 0
      %4050 = vmatmul.mubr.bf16.gmra.mrb[0].mxu0 %v3882
      %v4051 = vpop.f32.mrb[0].mxu0
      %v4052 = vadd.f32 %v3911, %v4051
      %v4053 = vpop.f32.mrb[0].mxu0
      %v4054 = vpop.f32.mrb[0].mxu0
      %v4055 = vadd.f32 %v3911, %v4054
      %v4056 = vpop.f32.mrb[0].mxu0
      %4057 = vmatprep.mubr.bf16.mxu0 0
      %4058 = vmatmul.mubr.bf16.gmra.mrb[0].mxu0 %v3883
      %v4059 = vpop.f32.mrb[0].mxu0
      %v4060 = vadd.f32 %v3911, %v4059
      %v4061 = vpop.f32.mrb[0].mxu0
      %v4062 = vpop.f32.mrb[0].mxu0
      %v4063 = vadd.f32 %v3911, %v4062
      %v4064 = vpop.f32.mrb[0].mxu0
      %4065 = vmatprep.mubr.bf16.mxu0 0
      %4066 = vmatmul.mubr.bf16.gmra.mrb[0].mxu0 %v3884
      %v4067 = vpop.f32.mrb[0].mxu0
      %v4068 = vadd.f32 %v3911, %v4067
      %v4069 = vpop.f32.mrb[0].mxu0
      %v4070 = vpop.f32.mrb[0].mxu0
      %v4071 = vadd.f32 %v3911, %v4070
      %v4072 = vpop.f32.mrb[0].mxu0
      %4073 = vmatprep.mubr.bf16.mxu0 0
      %4074 = vmatmul.mubr.bf16.gmra.mrb[0].mxu0 %v3885
      %v4075 = vpop.f32.mrb[0].mxu0
      %v4076 = vadd.f32 %v3911, %v4075
      %v4077 = vpop.f32.mrb[0].mxu0
      %v4078 = vpop.f32.mrb[0].mxu0
      %v4079 = vadd.f32 %v3911, %v4078
      %v4080 = vpop.f32.mrb[0].mxu0
      %4081 = vmatprep.mubr.bf16.mxu0 0
      %4082 = vmatmul.mubr.bf16.gmra.mrb[0].mxu0 %v3886
      %v4083 = vpop.f32.mrb[0].mxu0
      %v4084 = vadd.f32 %v3911, %v4083
      %v4085 = vpop.f32.mrb[0].mxu0
      %v4086 = vpop.f32.mrb[0].mxu0
      %v4087 = vadd.f32 %v3911, %v4086
      %v4088 = vpop.f32.mrb[0].mxu0
      %4089 = vmatprep.mubr.bf16.mxu0 0
      %4090 = vmatmul.mubr.bf16.gmra.mrb[0].mxu0 %v3887
      %v4091 = vpop.f32.mrb[0].mxu0
      %v4092 = vadd.f32 %v3911, %v4091
      %v4093 = vpop.f32.mrb[0].mxu0
      %v4094 = vpop.f32.mrb[0].mxu0
      %v4095 = vadd.f32 %v3911, %v4094
      %v4096 = vpop.f32.mrb[0].mxu0
      %4097 = vmatprep.mubr.bf16.mxu0 0
      %4098 = vmatmul.mubr.bf16.gmra.mrb[0].mxu0 %v3888
      %v4099 = vpop.f32.mrb[0].mxu0
      %v4100 = vadd.f32 %v3911, %v4099
      %v4101 = vpop.f32.mrb[0].mxu0
      %v4102 = vpop.f32.mrb[0].mxu0
      %v4103 = vadd.f32 %v3911, %v4102
      %v4104 = vpop.f32.mrb[0].mxu0
      %4105 = vmatprep.mubr.bf16.mxu0 0
      %4106 = vmatmul.mubr.bf16.gmra.mrb[0].mxu0 %v3889
      %v4107 = vpop.f32.mrb[0].mxu0
      %v4108 = vadd.f32 %v3911, %v4107
      %v4109 = vpop.f32.mrb[0].mxu0
      %v4110 = vpop.f32.mrb[0].mxu0
      %v4111 = vadd.f32 %v3911, %v4110
      %v4112 = vpop.f32.mrb[0].mxu0
      %4113 = vmatprep.mubr.bf16.mxu0 0
      %4114 = vmatmul.mubr.bf16.gmra.mrb[0].mxu0 %v3890
      %v4115 = vpop.f32.mrb[0].mxu0
      %v4116 = vadd.f32 %v3911, %v4115
      %v4117 = vpop.f32.mrb[0].mxu0
      %v4118 = vpop.f32.mrb[0].mxu0
      %v4119 = vadd.f32 %v3911, %v4118
      %v4120 = vpop.f32.mrb[0].mxu0
      %4121 = vmatprep.mubr.bf16.mxu0 0
      %4122 = vmatmul.mubr.bf16.gmra.mrb[0].mxu0 %v3891
      %v4123 = vpop.f32.mrb[0].mxu0
      %v4124 = vadd.f32 %v3911, %v4123
      %v4125 = vpop.f32.mrb[0].mxu0
      %v4126 = vpop.f32.mrb[0].mxu0
      %v4127 = vadd.f32 %v3911, %v4126
      %v4128 = vpop.f32.mrb[0].mxu0
      %4129 = vmatprep.mubr.bf16.mxu0 0
      %4130 = vmatmul.mubr.bf16.gmra.mrb[0].mxu0 %v3892
      %v4131 = vpop.f32.mrb[0].mxu0
      %v4132 = vadd.f32 %v3911, %v4131
      %v4133 = vpop.f32.mrb[0].mxu0
      %v4134 = vpop.f32.mrb[0].mxu0
      %v4135 = vadd.f32 %v3911, %v4134
      %v4136 = vpop.f32.mrb[0].mxu0
      %4137 = vmatprep.mubr.bf16.mxu0 0
      %4138 = vmatmul.mubr.bf16.gmra.mrb[0].mxu0 %v3893
      %v4139 = vpop.f32.mrb[0].mxu0
      %v4140 = vadd.f32 %v3911, %v4139
      %v4141 = vpop.f32.mrb[0].mxu0
      %v4142 = vpop.f32.mrb[0].mxu0
      %v4143 = vadd.f32 %v3911, %v4142
      %v4144 = vpop.f32.mrb[0].mxu0
      %4145 = vmatprep.mubr.bf16.mxu0 0
      %4146 = vmatmul.mubr.bf16.gmra.mrb[0].mxu0 %v3894
      %v4147 = vpop.f32.mrb[0].mxu0
      %v4148 = vadd.f32 %v3911, %v4147
      %v4149 = vpop.f32.mrb[0].mxu0
      %v4150 = vpop.f32.mrb[0].mxu0
      %v4151 = vadd.f32 %v3911, %v4150
      %v4152 = vpop.f32.mrb[0].mxu0
      %4153 = vmatprep.mubr.bf16.mxu0 0
      %4154 = vmatmul.mubr.bf16.gmra.mrb[0].mxu0 %v3895
      %v4155 = vpop.f32.mrb[0].mxu0
      %v4156 = vadd.f32 %v3911, %v4155
      %v4157 = vpop.f32.mrb[0].mxu0
      %v4158 = vpop.f32.mrb[0].mxu0
      %v4159 = vadd.f32 %v3911, %v4158
      %v4160 = vpop.f32.mrb[0].mxu0
      %4161 = vmatprep.mubr.bf16.mxu0 0
      %4162 = vmatmul.mubr.bf16.gmra.mrb[0].mxu0 %v3896
      %v4163 = vpop.f32.mrb[0].mxu0
      %v4164 = vadd.f32 %v3911, %v4163
      %v4165 = vpop.f32.mrb[0].mxu0
      %v4166 = vpop.f32.mrb[0].mxu0
      %v4167 = vadd.f32 %v3911, %v4166
      %v4168 = vpop.f32.mrb[0].mxu0
      %4169 = vmatprep.mubr.bf16.mxu0 0
      %4170 = vmatmul.mubr.bf16.gmra.mrb[0].mxu0 %v3897
      %v4171 = vpop.f32.mrb[0].mxu0
      %v4172 = vadd.f32 %v3911, %v4171
      %v4173 = vpop.f32.mrb[0].mxu0
      %v4174 = vpop.f32.mrb[0].mxu0
      %v4175 = vadd.f32 %v3911, %v4174
      %v4176 = vpop.f32.mrb[0].mxu0
      %4177 = vmatprep.mubr.bf16.mxu0 0
      %4178 = vmatmul.mubr.bf16.gmra.mrb[0].mxu0 %v3898
      %v4179 = vpop.f32.mrb[0].mxu0
      %v4180 = vadd.f32 %v3911, %v4179
      %v4181 = vpop.f32.mrb[0].mxu0
      %v4182 = vpop.f32.mrb[0].mxu0
      %v4183 = vadd.f32 %v3911, %v4182
      %v4184 = vpop.f32.mrb[0].mxu0
      %4185 = vmatprep.mubr.bf16.mxu0 0
      %4186 = vmatmul.mubr.bf16.gmra.mrb[0].mxu0 %v3899
      %v4187 = vpop.f32.mrb[0].mxu0
      %v4188 = vadd.f32 %v3911, %v4187
      %v4189 = vpop.f32.mrb[0].mxu0
      %v4190 = vpop.f32.mrb[0].mxu0
      %v4191 = vadd.f32 %v3911, %v4190
      %v4192 = vpop.f32.mrb[0].mxu0
      %4193 = vmatprep.mubr.bf16.mxu0 0
      %4194 = vmatmul.mubr.bf16.gmra.mrb[0].mxu0 %v3900
      %v4195 = vpop.f32.mrb[0].mxu0
      %v4196 = vadd.f32 %v3911, %v4195
      %v4197 = vpop.f32.mrb[0].mxu0
      %v4198 = vpop.f32.mrb[0].mxu0
      %v4199 = vadd.f32 %v3911, %v4198
      %v4200 = vpop.f32.mrb[0].mxu0
      %4201 = vmatprep.mubr.bf16.mxu0 0
      %4202 = vmatmul.mubr.bf16.gmra.mrb[0].mxu0 %v3901
      %v4203 = vpop.f32.mrb[0].mxu0
      %v4204 = vadd.f32 %v3911, %v4203
      %v4205 = vpop.f32.mrb[0].mxu0
      %v4206 = vpop.f32.mrb[0].mxu0
      %v4207 = vadd.f32 %v3911, %v4206
      %v4208 = vpop.f32.mrb[0].mxu0
      %4209 = vmatprep.mubr.bf16.mxu0 0
      %4210 = vmatmul.mubr.bf16.gmra.mrb[0].mxu0 %v3902
      %v4211 = vpop.f32.mrb[0].mxu0
      %v4212 = vadd.f32 %v3911, %v4211
      %v4213 = vpop.f32.mrb[0].mxu0
      %v4214 = vpop.f32.mrb[0].mxu0
      %v4215 = vadd.f32 %v3911, %v4214
      %v4216 = vpop.f32.mrb[0].mxu0
      %4217 = vmatprep.mubr.bf16.mxu0 0
      %4218 = vmatmul.mubr.bf16.gmra.mrb[0].mxu0 %v3903
      %v4219 = vpop.f32.mrb[0].mxu0
      %v4220 = vadd.f32 %v3911, %v4219
      %v4221 = vpop.f32.mrb[0].mxu0
      %v4222 = vpop.f32.mrb[0].mxu0
      %v4223 = vadd.f32 %v3911, %v4222
      %v4224 = vpop.f32.mrb[0].mxu0
      %4225 = vmatprep.mubr.bf16.mxu0 0
      %4226 = vmatmul.mubr.bf16.gmra.mrb[0].mxu0 %v3904
      %v4227 = vpop.f32.mrb[0].mxu0
      %v4228 = vadd.f32 %v3911, %v4227
      %v4229 = vpop.f32.mrb[0].mxu0
      %v4230 = vpop.f32.mrb[0].mxu0
      %v4231 = vadd.f32 %v3911, %v4230
      %v4232 = vpop.f32.mrb[0].mxu0
      %4233 = vmatprep.mubr.bf16.mxu0 0
      %4234 = vmatmul.mubr.bf16.gmra.mrb[0].mxu0 %v3905
      %v4235 = vpop.f32.mrb[0].mxu0
      %v4236 = vadd.f32 %v3911, %v4235
      %v4237 = vpop.f32.mrb[0].mxu0
      %v4238 = vpop.f32.mrb[0].mxu0
      %v4239 = vadd.f32 %v3911, %v4238
      %v4240 = vpop.f32.mrb[0].mxu0
      %4241 = vmatprep.mubr.bf16.mxu0 0
      %4242 = vmatmul.mubr.bf16.gmra.mrb[0].mxu0 %v3906
      %v4243 = vpop.f32.mrb[0].mxu0
      %v4244 = vadd.f32 %v3911, %v4243
      %v4245 = vpop.f32.mrb[0].mxu0
      %v4246 = vpop.f32.mrb[0].mxu0
      %v4247 = vadd.f32 %v3911, %v4246
      %v4248 = vpop.f32.mrb[0].mxu0
      %4249 = vdwg.mxu0
      %v4250 = vld [vmem:[%s9] sm:$0xf]
      %v4251 = vld [vmem:[%s9 + $0x4] sm:$0xf]
      %v4252 = vld [vmem:[%s9 + $0x8] sm:$0xf]
      %v4253 = vld [vmem:[%s9 + $0xc] sm:$0xf]
      %v4254 = vld [vmem:[%s9 + $0x10] sm:$0xf]
      %v4255 = vld [vmem:[%s9 + $0x14] sm:$0xf]
      %v4256 = vld [vmem:[%s9 + $0x18] sm:$0xf]
      %v4257 = vld [vmem:[%s9 + $0x1c] sm:$0xf]
      %v4258 = vld [vmem:[%s9 + $0x20] sm:$0xf]
      %v4259 = vld [vmem:[%s9 + $0x24] sm:$0xf]
      %v4260 = vld [vmem:[%s9 + $0x28] sm:$0xf]
      %v4261 = vld [vmem:[%s9 + $0x2c] sm:$0xf]
      %v4262 = vld [vmem:[%s9 + $0x30] sm:$0xf]
      %v4263 = vld [vmem:[%s9 + $0x34] sm:$0xf]
      %v4264 = vld [vmem:[%s9 + $0x38] sm:$0xf]
      %v4265 = vld [vmem:[%s9 + $0x3c] sm:$0xf]
      %v4266 = vld [vmem:[%s10] sm:$0x1]
      %v4267 = vpack.c.bf16 %v3999, %v3996
      %v4268 = vpack.c.bf16 %v4007, %v4004
      %v4269 = vpack.c.bf16 %v4015, %v4012
      %v4270 = vpack.c.bf16 %v4023, %v4020
      %v4271 = vpack.c.bf16 %v4031, %v4028
      %v4272 = vpack.c.bf16 %v4039, %v4036
      %v4273 = vpack.c.bf16 %v4047, %v4044
      %v4274 = vpack.c.bf16 %v4055, %v4052
      %v4275 = vpack.c.bf16 %v4063, %v4060
      %v4276 = vpack.c.bf16 %v4071, %v4068
      %v4277 = vpack.c.bf16 %v4079, %v4076
      %v4278 = vpack.c.bf16 %v4087, %v4084
      %v4279 = vpack.c.bf16 %v4095, %v4092
      %v4280 = vpack.c.bf16 %v4103, %v4100
      %v4281 = vpack.c.bf16 %v4111, %v4108
      %v4282 = vpack.c.bf16 %v4119, %v4116
      %v4283 = vpack.c.bf16 %v4127, %v4124
      %v4284 = vpack.c.bf16 %v4135, %v4132
      %v4285 = vpack.c.bf16 %v4143, %v4140
      %v4286 = vpack.c.bf16 %v4151, %v4148
      %v4287 = vpack.c.bf16 %v4159, %v4156
      %v4288 = vpack.c.bf16 %v4167, %v4164
      %v4289 = vpack.c.bf16 %v4175, %v4172
      %v4290 = vpack.c.bf16 %v4183, %v4180
      %v4291 = vpack.c.bf16 %v4191, %v4188
      %v4292 = vpack.c.bf16 %v4199, %v4196
      %v4293 = vpack.c.bf16 %v4207, %v4204
      %v4294 = vpack.c.bf16 %v4215, %v4212
      %v4295 = vpack.c.bf16 %v4223, %v4220
      %v4296 = vpack.c.bf16 %v4231, %v4228
      %v4297 = vpack.c.bf16 %v4239, %v4236
      %v4298 = vpack.c.bf16 %v4247, %v4244
      %v4300 = vlaneseq
      %v4301 = vshrl.u32 %v4300, 7
      %v4302 = vsub.s32 0, %v4301
      %v4303 = vrot.slane %v4266, %v4302
      %v4321 = vunpack.c.l.b16 %v4250
      %v4322 = vunpack.c.l.b16 %v4251
      %v4323 = vunpack.c.l.b16 %v4252
      %v4324 = vunpack.c.l.b16 %v4253
      %v4325 = vunpack.c.l.b16 %v4254
      %v4326 = vunpack.c.l.b16 %v4255
      %v4327 = vunpack.c.l.b16 %v4256
      %v4328 = vunpack.c.l.b16 %v4257
      %v4329 = vunpack.c.l.b16 %v4258
      %v4330 = vunpack.c.l.b16 %v4259
      %v4331 = vunpack.c.l.b16 %v4260
      %v4332 = vunpack.c.l.b16 %v4261
      %v4333 = vunpack.c.l.b16 %v4262
      %v4334 = vunpack.c.l.b16 %v4263
      %v4335 = vunpack.c.l.b16 %v4264
      %v4336 = vunpack.c.l.b16 %v4265
      %v4337 = vpack.c.b16 %v4322, %v4321
      %v4338 = vpack.c.b16 %v4324, %v4323
      %v4339 = vpack.c.b16 %v4326, %v4325
      %v4340 = vpack.c.b16 %v4328, %v4327
      %v4341 = vpack.c.b16 %v4330, %v4329
      %v4342 = vpack.c.b16 %v4332, %v4331
      %v4343 = vpack.c.b16 %v4334, %v4333
      %v4344 = vpack.c.b16 %v4336, %v4335
      %4353 = vmatprep.subr.bf16.mxu0 0
      %4354 = vmatpush1.bf16.msra.mxu0 %v4337
      %4355 = vmatprep.subr.bf16.mxu0 0
      %4356 = vmatpush1.bf16.msra.mxu0 %v4338
      %4357 = vmatprep.subr.bf16.mxu0 0
      %4358 = vmatpush1.bf16.msra.mxu0 %v4339
      %4359 = vmatprep.subr.bf16.mxu0 0
      %4360 = vmatpush1.bf16.msra.mxu0 %v4340
      %4361 = vmatprep.subr.bf16.mxu0 0
      %4362 = vmatpush1.bf16.msra.mxu0 %v4341
      %4363 = vmatprep.subr.bf16.mxu0 0
      %4364 = vmatpush1.bf16.msra.mxu0 %v4342
      %4365 = vmatprep.subr.bf16.mxu0 0
      %4366 = vmatpush1.bf16.msra.mxu0 %v4343
      %4367 = vmatprep.subr.bf16.mxu0 0
      %4368 = vmatpush1.bf16.msra.mxu0 %v4344
      %4369 = vmatprep.subr.bf16.mxu0 0
      %4370 = vmatpush1.bf16.msra.mxu0 0
      %4371 = vmatprep.subr.bf16.mxu0 0
      %4372 = vmatpush1.bf16.msra.mxu0 0
      %4373 = vmatprep.subr.bf16.mxu0 0
      %4374 = vmatpush1.bf16.msra.mxu0 0
      %4375 = vmatprep.subr.bf16.mxu0 0
      %4376 = vmatpush1.bf16.msra.mxu0 0
      %4377 = vmatprep.subr.bf16.mxu0 0
      %4378 = vmatpush1.bf16.msra.mxu0 0
      %4379 = vmatprep.subr.bf16.mxu0 0
      %4380 = vmatpush1.bf16.msra.mxu0 0
      %4381 = vmatprep.subr.bf16.mxu0 0
      %4382 = vmatpush1.bf16.msra.mxu0 0
      %4383 = vmatprep.subr.bf16.mxu0 0
      %4384 = vmatpush1.bf16.msra.mxu0 0
      %4385 = vmatprep.mubr.bf16.mxu0 0
      %4386 = vmatmul.mubr.bf16.gmra.mrb[0].mxu0 %v4267
      %v4387 = vpop.f32.mrb[0].mxu0
      %v4388 = vadd.f32 %v4303, %v4387
      %v4389 = vpop.f32.mrb[0].mxu0
      %v4390 = vpop.f32.mrb[0].mxu0
      %v4391 = vadd.f32 %v4303, %v4390
      %v4392 = vpop.f32.mrb[0].mxu0
      %4393 = vmatprep.mubr.bf16.mxu0 0
      %4394 = vmatmul.mubr.bf16.gmra.mrb[0].mxu0 %v4268
      %v4395 = vpop.f32.mrb[0].mxu0
      %v4396 = vadd.f32 %v4303, %v4395
      %v4397 = vpop.f32.mrb[0].mxu0
      %v4398 = vpop.f32.mrb[0].mxu0
      %v4399 = vadd.f32 %v4303, %v4398
      %v4400 = vpop.f32.mrb[0].mxu0
      %4401 = vmatprep.mubr.bf16.mxu0 0
      %4402 = vmatmul.mubr.bf16.gmra.mrb[0].mxu0 %v4269
      %v4403 = vpop.f32.mrb[0].mxu0
      %v4404 = vadd.f32 %v4303, %v4403
      %v4405 = vpop.f32.mrb[0].mxu0
      %v4406 = vpop.f32.mrb[0].mxu0
      %v4407 = vadd.f32 %v4303, %v4406
      %v4408 = vpop.f32.mrb[0].mxu0
      %4409 = vmatprep.mubr.bf16.mxu0 0
      %4410 = vmatmul.mubr.bf16.gmra.mrb[0].mxu0 %v4270
      %v4411 = vpop.f32.mrb[0].mxu0
      %v4412 = vadd.f32 %v4303, %v4411
      %v4413 = vpop.f32.mrb[0].mxu0
      %v4414 = vpop.f32.mrb[0].mxu0
      %v4415 = vadd.f32 %v4303, %v4414
      %v4416 = vpop.f32.mrb[0].mxu0
      %4417 = vmatprep.mubr.bf16.mxu0 0
      %4418 = vmatmul.mubr.bf16.gmra.mrb[0].mxu0 %v4271
      %v4419 = vpop.f32.mrb[0].mxu0
      %v4420 = vadd.f32 %v4303, %v4419
      %v4421 = vpop.f32.mrb[0].mxu0
      %v4422 = vpop.f32.mrb[0].mxu0
      %v4423 = vadd.f32 %v4303, %v4422
      %v4424 = vpop.f32.mrb[0].mxu0
      %4425 = vmatprep.mubr.bf16.mxu0 0
      %4426 = vmatmul.mubr.bf16.gmra.mrb[0].mxu0 %v4272
      %v4427 = vpop.f32.mrb[0].mxu0
      %v4428 = vadd.f32 %v4303, %v4427
      %v4429 = vpop.f32.mrb[0].mxu0
      %v4430 = vpop.f32.mrb[0].mxu0
      %v4431 = vadd.f32 %v4303, %v4430
      %v4432 = vpop.f32.mrb[0].mxu0
      %4433 = vmatprep.mubr.bf16.mxu0 0
      %4434 = vmatmul.mubr.bf16.gmra.mrb[0].mxu0 %v4273
      %v4435 = vpop.f32.mrb[0].mxu0
      %v4436 = vadd.f32 %v4303, %v4435
      %v4437 = vpop.f32.mrb[0].mxu0
      %v4438 = vpop.f32.mrb[0].mxu0
      %v4439 = vadd.f32 %v4303, %v4438
      %v4440 = vpop.f32.mrb[0].mxu0
      %4441 = vmatprep.mubr.bf16.mxu0 0
      %4442 = vmatmul.mubr.bf16.gmra.mrb[0].mxu0 %v4274
      %v4443 = vpop.f32.mrb[0].mxu0
      %v4444 = vadd.f32 %v4303, %v4443
      %v4445 = vpop.f32.mrb[0].mxu0
      %v4446 = vpop.f32.mrb[0].mxu0
      %v4447 = vadd.f32 %v4303, %v4446
      %v4448 = vpop.f32.mrb[0].mxu0
      %4449 = vmatprep.mubr.bf16.mxu0 0
      %4450 = vmatmul.mubr.bf16.gmra.mrb[0].mxu0 %v4275
      %v4451 = vpop.f32.mrb[0].mxu0
      %v4452 = vadd.f32 %v4303, %v4451
      %v4453 = vpop.f32.mrb[0].mxu0
      %v4454 = vpop.f32.mrb[0].mxu0
      %v4455 = vadd.f32 %v4303, %v4454
      %v4456 = vpop.f32.mrb[0].mxu0
      %4457 = vmatprep.mubr.bf16.mxu0 0
      %4458 = vmatmul.mubr.bf16.gmra.mrb[0].mxu0 %v4276
      %v4459 = vpop.f32.mrb[0].mxu0
      %v4460 = vadd.f32 %v4303, %v4459
      %v4461 = vpop.f32.mrb[0].mxu0
      %v4462 = vpop.f32.mrb[0].mxu0
      %v4463 = vadd.f32 %v4303, %v4462
      %v4464 = vpop.f32.mrb[0].mxu0
      %4465 = vmatprep.mubr.bf16.mxu0 0
      %4466 = vmatmul.mubr.bf16.gmra.mrb[0].mxu0 %v4277
      %v4467 = vpop.f32.mrb[0].mxu0
      %v4468 = vadd.f32 %v4303, %v4467
      %v4469 = vpop.f32.mrb[0].mxu0
      %v4470 = vpop.f32.mrb[0].mxu0
      %v4471 = vadd.f32 %v4303, %v4470
      %v4472 = vpop.f32.mrb[0].mxu0
      %4473 = vmatprep.mubr.bf16.mxu0 0
      %4474 = vmatmul.mubr.bf16.gmra.mrb[0].mxu0 %v4278
      %v4475 = vpop.f32.mrb[0].mxu0
      %v4476 = vadd.f32 %v4303, %v4475
      %v4477 = vpop.f32.mrb[0].mxu0
      %v4478 = vpop.f32.mrb[0].mxu0
      %v4479 = vadd.f32 %v4303, %v4478
      %v4480 = vpop.f32.mrb[0].mxu0
      %4481 = vmatprep.mubr.bf16.mxu0 0
      %4482 = vmatmul.mubr.bf16.gmra.mrb[0].mxu0 %v4279
      %v4483 = vpop.f32.mrb[0].mxu0
      %v4484 = vadd.f32 %v4303, %v4483
      %v4485 = vpop.f32.mrb[0].mxu0
      %v4486 = vpop.f32.mrb[0].mxu0
      %v4487 = vadd.f32 %v4303, %v4486
      %v4488 = vpop.f32.mrb[0].mxu0
      %4489 = vmatprep.mubr.bf16.mxu0 0
      %4490 = vmatmul.mubr.bf16.gmra.mrb[0].mxu0 %v4280
      %v4491 = vpop.f32.mrb[0].mxu0
      %v4492 = vadd.f32 %v4303, %v4491
      %v4493 = vpop.f32.mrb[0].mxu0
      %v4494 = vpop.f32.mrb[0].mxu0
      %v4495 = vadd.f32 %v4303, %v4494
      %v4496 = vpop.f32.mrb[0].mxu0
      %4497 = vmatprep.mubr.bf16.mxu0 0
      %4498 = vmatmul.mubr.bf16.gmra.mrb[0].mxu0 %v4281
      %v4499 = vpop.f32.mrb[0].mxu0
      %v4500 = vadd.f32 %v4303, %v4499
      %v4501 = vpop.f32.mrb[0].mxu0
      %v4502 = vpop.f32.mrb[0].mxu0
      %v4503 = vadd.f32 %v4303, %v4502
      %v4504 = vpop.f32.mrb[0].mxu0
      %4505 = vmatprep.mubr.bf16.mxu0 0
      %4506 = vmatmul.mubr.bf16.gmra.mrb[0].mxu0 %v4282
      %v4507 = vpop.f32.mrb[0].mxu0
      %v4508 = vadd.f32 %v4303, %v4507
      %v4509 = vpop.f32.mrb[0].mxu0
      %v4510 = vpop.f32.mrb[0].mxu0
      %v4511 = vadd.f32 %v4303, %v4510
      %v4512 = vpop.f32.mrb[0].mxu0
      %4513 = vmatprep.mubr.bf16.mxu0 0
      %4514 = vmatmul.mubr.bf16.gmra.mrb[0].mxu0 %v4283
      %v4515 = vpop.f32.mrb[0].mxu0
      %v4516 = vadd.f32 %v4303, %v4515
      %v4517 = vpop.f32.mrb[0].mxu0
      %v4518 = vpop.f32.mrb[0].mxu0
      %v4519 = vadd.f32 %v4303, %v4518
      %v4520 = vpop.f32.mrb[0].mxu0
      %4521 = vmatprep.mubr.bf16.mxu0 0
      %4522 = vmatmul.mubr.bf16.gmra.mrb[0].mxu0 %v4284
      %v4523 = vpop.f32.mrb[0].mxu0
      %v4524 = vadd.f32 %v4303, %v4523
      %v4525 = vpop.f32.mrb[0].mxu0
      %v4526 = vpop.f32.mrb[0].mxu0
      %v4527 = vadd.f32 %v4303, %v4526
      %v4528 = vpop.f32.mrb[0].mxu0
      %4529 = vmatprep.mubr.bf16.mxu0 0
      %4530 = vmatmul.mubr.bf16.gmra.mrb[0].mxu0 %v4285
      %v4531 = vpop.f32.mrb[0].mxu0
      %v4532 = vadd.f32 %v4303, %v4531
      %v4533 = vpop.f32.mrb[0].mxu0
      %v4534 = vpop.f32.mrb[0].mxu0
      %v4535 = vadd.f32 %v4303, %v4534
      %v4536 = vpop.f32.mrb[0].mxu0
      %4537 = vmatprep.mubr.bf16.mxu0 0
      %4538 = vmatmul.mubr.bf16.gmra.mrb[0].mxu0 %v4286
      %v4539 = vpop.f32.mrb[0].mxu0
      %v4540 = vadd.f32 %v4303, %v4539
      %v4541 = vpop.f32.mrb[0].mxu0
      %v4542 = vpop.f32.mrb[0].mxu0
      %v4543 = vadd.f32 %v4303, %v4542
      %v4544 = vpop.f32.mrb[0].mxu0
      %4545 = vmatprep.mubr.bf16.mxu0 0
      %4546 = vmatmul.mubr.bf16.gmra.mrb[0].mxu0 %v4287
      %v4547 = vpop.f32.mrb[0].mxu0
      %v4548 = vadd.f32 %v4303, %v4547
      %v4549 = vpop.f32.mrb[0].mxu0
      %v4550 = vpop.f32.mrb[0].mxu0
      %v4551 = vadd.f32 %v4303, %v4550
      %v4552 = vpop.f32.mrb[0].mxu0
      %4553 = vmatprep.mubr.bf16.mxu0 0
      %4554 = vmatmul.mubr.bf16.gmra.mrb[0].mxu0 %v4288
      %v4555 = vpop.f32.mrb[0].mxu0
      %v4556 = vadd.f32 %v4303, %v4555
      %v4557 = vpop.f32.mrb[0].mxu0
      %v4558 = vpop.f32.mrb[0].mxu0
      %v4559 = vadd.f32 %v4303, %v4558
      %v4560 = vpop.f32.mrb[0].mxu0
      %4561 = vmatprep.mubr.bf16.mxu0 0
      %4562 = vmatmul.mubr.bf16.gmra.mrb[0].mxu0 %v4289
      %v4563 = vpop.f32.mrb[0].mxu0
      %v4564 = vadd.f32 %v4303, %v4563
      %v4565 = vpop.f32.mrb[0].mxu0
      %v4566 = vpop.f32.mrb[0].mxu0
      %v4567 = vadd.f32 %v4303, %v4566
      %v4568 = vpop.f32.mrb[0].mxu0
      %4569 = vmatprep.mubr.bf16.mxu0 0
      %4570 = vmatmul.mubr.bf16.gmra.mrb[0].mxu0 %v4290
      %v4571 = vpop.f32.mrb[0].mxu0
      %v4572 = vadd.f32 %v4303, %v4571
      %v4573 = vpop.f32.mrb[0].mxu0
      %v4574 = vpop.f32.mrb[0].mxu0
      %v4575 = vadd.f32 %v4303, %v4574
      %v4576 = vpop.f32.mrb[0].mxu0
      %4577 = vmatprep.mubr.bf16.mxu0 0
      %4578 = vmatmul.mubr.bf16.gmra.mrb[0].mxu0 %v4291
      %v4579 = vpop.f32.mrb[0].mxu0
      %v4580 = vadd.f32 %v4303, %v4579
      %v4581 = vpop.f32.mrb[0].mxu0
      %v4582 = vpop.f32.mrb[0].mxu0
      %v4583 = vadd.f32 %v4303, %v4582
      %v4584 = vpop.f32.mrb[0].mxu0
      %4585 = vmatprep.mubr.bf16.mxu0 0
      %4586 = vmatmul.mubr.bf16.gmra.mrb[0].mxu0 %v4292
      %v4587 = vpop.f32.mrb[0].mxu0
      %v4588 = vadd.f32 %v4303, %v4587
      %v4589 = vpop.f32.mrb[0].mxu0
      %v4590 = vpop.f32.mrb[0].mxu0
      %v4591 = vadd.f32 %v4303, %v4590
      %v4592 = vpop.f32.mrb[0].mxu0
      %4593 = vmatprep.mubr.bf16.mxu0 0
      %4594 = vmatmul.mubr.bf16.gmra.mrb[0].mxu0 %v4293
      %v4595 = vpop.f32.mrb[0].mxu0
      %v4596 = vadd.f32 %v4303, %v4595
      %v4597 = vpop.f32.mrb[0].mxu0
      %v4598 = vpop.f32.mrb[0].mxu0
      %v4599 = vadd.f32 %v4303, %v4598
      %v4600 = vpop.f32.mrb[0].mxu0
      %4601 = vmatprep.mubr.bf16.mxu0 0
      %4602 = vmatmul.mubr.bf16.gmra.mrb[0].mxu0 %v4294
      %v4603 = vpop.f32.mrb[0].mxu0
      %v4604 = vadd.f32 %v4303, %v4603
      %v4605 = vpop.f32.mrb[0].mxu0
      %v4606 = vpop.f32.mrb[0].mxu0
      %v4607 = vadd.f32 %v4303, %v4606
      %v4608 = vpop.f32.mrb[0].mxu0
      %4609 = vmatprep.mubr.bf16.mxu0 0
      %4610 = vmatmul.mubr.bf16.gmra.mrb[0].mxu0 %v4295
      %v4611 = vpop.f32.mrb[0].mxu0
      %v4612 = vadd.f32 %v4303, %v4611
      %v4613 = vpop.f32.mrb[0].mxu0
      %v4614 = vpop.f32.mrb[0].mxu0
      %v4615 = vadd.f32 %v4303, %v4614
      %v4616 = vpop.f32.mrb[0].mxu0
      %4617 = vmatprep.mubr.bf16.mxu0 0
      %4618 = vmatmul.mubr.bf16.gmra.mrb[0].mxu0 %v4296
      %v4619 = vpop.f32.mrb[0].mxu0
      %v4620 = vadd.f32 %v4303, %v4619
      %v4621 = vpop.f32.mrb[0].mxu0
      %v4622 = vpop.f32.mrb[0].mxu0
      %v4623 = vadd.f32 %v4303, %v4622
      %v4624 = vpop.f32.mrb[0].mxu0
      %4625 = vmatprep.mubr.bf16.mxu0 0
      %4626 = vmatmul.mubr.bf16.gmra.mrb[0].mxu0 %v4297
      %v4627 = vpop.f32.mrb[0].mxu0
      %v4628 = vadd.f32 %v4303, %v4627
      %v4629 = vpop.f32.mrb[0].mxu0
      %v4630 = vpop.f32.mrb[0].mxu0
      %v4631 = vadd.f32 %v4303, %v4630
      %v4632 = vpop.f32.mrb[0].mxu0
      %4633 = vmatprep.mubr.bf16.mxu0 0
      %4634 = vmatmul.mubr.bf16.gmra.mrb[0].mxu0 %v4298
      %v4635 = vpop.f32.mrb[0].mxu0
      %v4636 = vadd.f32 %v4303, %v4635
      %v4637 = vpop.f32.mrb[0].mxu0
      %v4638 = vpop.f32.mrb[0].mxu0
      %v4639 = vadd.f32 %v4303, %v4638
      %v4640 = vpop.f32.mrb[0].mxu0
      %4641 = vdwg.mxu0
      %v4642 = vmax.f32 %v4388, 0.0
      %v4643 = vmax.f32 %v4391, 0.0
      %v4644 = vmax.f32 %v4396, 0.0
      %v4645 = vmax.f32 %v4399, 0.0
      %v4646 = vmax.f32 %v4404, 0.0
      %v4647 = vmax.f32 %v4407, 0.0
      %v4648 = vmax.f32 %v4412, 0.0
      %v4649 = vmax.f32 %v4415, 0.0
      %v4650 = vmax.f32 %v4420, 0.0
      %v4651 = vmax.f32 %v4423, 0.0
      %v4652 = vmax.f32 %v4428, 0.0
      %v4653 = vmax.f32 %v4431, 0.0
      %v4654 = vmax.f32 %v4436, 0.0
      %v4655 = vmax.f32 %v4439, 0.0
      %v4656 = vmax.f32 %v4444, 0.0
      %v4657 = vmax.f32 %v4447, 0.0
      %v4658 = vmax.f32 %v4452, 0.0
      %v4659 = vmax.f32 %v4455, 0.0
      %v4660 = vmax.f32 %v4460, 0.0
      %v4661 = vmax.f32 %v4463, 0.0
      %v4662 = vmax.f32 %v4468, 0.0
      %v4663 = vmax.f32 %v4471, 0.0
      %v4664 = vmax.f32 %v4476, 0.0
      %v4665 = vmax.f32 %v4479, 0.0
      %v4666 = vmax.f32 %v4484, 0.0
      %v4667 = vmax.f32 %v4487, 0.0
      %v4668 = vmax.f32 %v4492, 0.0
      %v4669 = vmax.f32 %v4495, 0.0
      %v4670 = vmax.f32 %v4500, 0.0
      %v4671 = vmax.f32 %v4503, 0.0
      %v4672 = vmax.f32 %v4508, 0.0
      %v4673 = vmax.f32 %v4511, 0.0
      %v4674 = vmax.f32 %v4516, 0.0
      %v4675 = vmax.f32 %v4519, 0.0
      %v4676 = vmax.f32 %v4524, 0.0
      %v4677 = vmax.f32 %v4527, 0.0
      %v4678 = vmax.f32 %v4532, 0.0
      %v4679 = vmax.f32 %v4535, 0.0
      %v4680 = vmax.f32 %v4540, 0.0
      %v4681 = vmax.f32 %v4543, 0.0
      %v4682 = vmax.f32 %v4548, 0.0
      %v4683 = vmax.f32 %v4551, 0.0
      %v4684 = vmax.f32 %v4556, 0.0
      %v4685 = vmax.f32 %v4559, 0.0
      %v4686 = vmax.f32 %v4564, 0.0
      %v4687 = vmax.f32 %v4567, 0.0
      %v4688 = vmax.f32 %v4572, 0.0
      %v4689 = vmax.f32 %v4575, 0.0
      %v4690 = vmax.f32 %v4580, 0.0
      %v4691 = vmax.f32 %v4583, 0.0
      %v4692 = vmax.f32 %v4588, 0.0
      %v4693 = vmax.f32 %v4591, 0.0
      %v4694 = vmax.f32 %v4596, 0.0
      %v4695 = vmax.f32 %v4599, 0.0
      %v4696 = vmax.f32 %v4604, 0.0
      %v4697 = vmax.f32 %v4607, 0.0
      %v4698 = vmax.f32 %v4612, 0.0
      %v4699 = vmax.f32 %v4615, 0.0
      %v4700 = vmax.f32 %v4620, 0.0
      %v4701 = vmax.f32 %v4623, 0.0
      %v4702 = vmax.f32 %v4628, 0.0
      %v4703 = vmax.f32 %v4631, 0.0
      %v4704 = vmax.f32 %v4636, 0.0
      %v4705 = vmax.f32 %v4639, 0.0
      %v4706 = vld [vmem:[%s11] sm:$0xf]
      %v4707 = vld [vmem:[%s11 + $0x4] sm:$0xf]
      %v4708 = vld [vmem:[%s11 + $0x8] sm:$0xf]
      %v4709 = vld [vmem:[%s11 + $0xc] sm:$0xf]
      %v4710 = vld [vmem:[%s11 + $0x10] sm:$0xf]
      %v4711 = vld [vmem:[%s11 + $0x14] sm:$0xf]
      %v4712 = vld [vmem:[%s11 + $0x18] sm:$0xf]
      %v4713 = vld [vmem:[%s11 + $0x1c] sm:$0xf]
      %v4714 = vld [vmem:[%s11 + $0x20] sm:$0xf]
      %v4715 = vld [vmem:[%s11 + $0x24] sm:$0xf]
      %v4716 = vld [vmem:[%s11 + $0x28] sm:$0xf]
      %v4717 = vld [vmem:[%s11 + $0x2c] sm:$0xf]
      %v4718 = vld [vmem:[%s11 + $0x30] sm:$0xf]
      %v4719 = vld [vmem:[%s11 + $0x34] sm:$0xf]
      %v4720 = vld [vmem:[%s11 + $0x38] sm:$0xf]
      %v4721 = vld [vmem:[%s11 + $0x3c] sm:$0xf]
      %v4722 = vld [vmem:[%s12] sm:$0x1]
      %v4723 = vpack.c.bf16 %v4643, %v4642
      %v4724 = vpack.c.bf16 %v4645, %v4644
      %v4725 = vpack.c.bf16 %v4647, %v4646
      %v4726 = vpack.c.bf16 %v4649, %v4648
      %v4727 = vpack.c.bf16 %v4651, %v4650
      %v4728 = vpack.c.bf16 %v4653, %v4652
      %v4729 = vpack.c.bf16 %v4655, %v4654
      %v4730 = vpack.c.bf16 %v4657, %v4656
      %v4731 = vpack.c.bf16 %v4659, %v4658
      %v4732 = vpack.c.bf16 %v4661, %v4660
      %v4733 = vpack.c.bf16 %v4663, %v4662
      %v4734 = vpack.c.bf16 %v4665, %v4664
      %v4735 = vpack.c.bf16 %v4667, %v4666
      %v4736 = vpack.c.bf16 %v4669, %v4668
      %v4737 = vpack.c.bf16 %v4671, %v4670
      %v4738 = vpack.c.bf16 %v4673, %v4672
      %v4739 = vpack.c.bf16 %v4675, %v4674
      %v4740 = vpack.c.bf16 %v4677, %v4676
      %v4741 = vpack.c.bf16 %v4679, %v4678
      %v4742 = vpack.c.bf16 %v4681, %v4680
      %v4743 = vpack.c.bf16 %v4683, %v4682
      %v4744 = vpack.c.bf16 %v4685, %v4684
      %v4745 = vpack.c.bf16 %v4687, %v4686
      %v4746 = vpack.c.bf16 %v4689, %v4688
      %v4747 = vpack.c.bf16 %v4691, %v4690
      %v4748 = vpack.c.bf16 %v4693, %v4692
      %v4749 = vpack.c.bf16 %v4695, %v4694
      %v4750 = vpack.c.bf16 %v4697, %v4696
      %v4751 = vpack.c.bf16 %v4699, %v4698
      %v4752 = vpack.c.bf16 %v4701, %v4700
      %v4753 = vpack.c.bf16 %v4703, %v4702
      %v4754 = vpack.c.bf16 %v4705, %v4704
      %v4756 = vlaneseq
      %v4757 = vshrl.u32 %v4756, 7
      %v4758 = vsub.s32 0, %v4757
      %v4759 = vrot.slane %v4722, %v4758
      %v4777 = vunpack.c.l.b16 %v4706
      %v4778 = vunpack.c.l.b16 %v4707
      %v4779 = vunpack.c.l.b16 %v4708
      %v4780 = vunpack.c.l.b16 %v4709
      %v4781 = vunpack.c.l.b16 %v4710
      %v4782 = vunpack.c.l.b16 %v4711
      %v4783 = vunpack.c.l.b16 %v4712
      %v4784 = vunpack.c.l.b16 %v4713
      %v4785 = vunpack.c.l.b16 %v4714
      %v4786 = vunpack.c.l.b16 %v4715
      %v4787 = vunpack.c.l.b16 %v4716
      %v4788 = vunpack.c.l.b16 %v4717
      %v4789 = vunpack.c.l.b16 %v4718
      %v4790 = vunpack.c.l.b16 %v4719
      %v4791 = vunpack.c.l.b16 %v4720
      %v4792 = vunpack.c.l.b16 %v4721
      %v4793 = vpack.c.b16 %v4778, %v4777
      %v4794 = vpack.c.b16 %v4780, %v4779
      %v4795 = vpack.c.b16 %v4782, %v4781
      %v4796 = vpack.c.b16 %v4784, %v4783
      %v4797 = vpack.c.b16 %v4786, %v4785
      %v4798 = vpack.c.b16 %v4788, %v4787
      %v4799 = vpack.c.b16 %v4790, %v4789
      %v4800 = vpack.c.b16 %v4792, %v4791
      %4809 = vmatprep.subr.bf16.mxu0 0
      %4810 = vmatpush1.bf16.msra.mxu0 %v4793
      %4811 = vmatprep.subr.bf16.mxu0 0
      %4812 = vmatpush1.bf16.msra.mxu0 %v4794
      %4813 = vmatprep.subr.bf16.mxu0 0
      %4814 = vmatpush1.bf16.msra.mxu0 %v4795
      %4815 = vmatprep.subr.bf16.mxu0 0
      %4816 = vmatpush1.bf16.msra.mxu0 %v4796
      %4817 = vmatprep.subr.bf16.mxu0 0
      %4818 = vmatpush1.bf16.msra.mxu0 %v4797
      %4819 = vmatprep.subr.bf16.mxu0 0
      %4820 = vmatpush1.bf16.msra.mxu0 %v4798
      %4821 = vmatprep.subr.bf16.mxu0 0
      %4822 = vmatpush1.bf16.msra.mxu0 %v4799
      %4823 = vmatprep.subr.bf16.mxu0 0
      %4824 = vmatpush1.bf16.msra.mxu0 %v4800
      %4825 = vmatprep.subr.bf16.mxu0 0
      %4826 = vmatpush1.bf16.msra.mxu0 0
      %4827 = vmatprep.subr.bf16.mxu0 0
      %4828 = vmatpush1.bf16.msra.mxu0 0
      %4829 = vmatprep.subr.bf16.mxu0 0
      %4830 = vmatpush1.bf16.msra.mxu0 0
      %4831 = vmatprep.subr.bf16.mxu0 0
      %4832 = vmatpush1.bf16.msra.mxu0 0
      %4833 = vmatprep.subr.bf16.mxu0 0
      %4834 = vmatpush1.bf16.msra.mxu0 0
      %4835 = vmatprep.subr.bf16.mxu0 0
      %4836 = vmatpush1.bf16.msra.mxu0 0
      %4837 = vmatprep.subr.bf16.mxu0 0
      %4838 = vmatpush1.bf16.msra.mxu0 0
      %4839 = vmatprep.subr.bf16.mxu0 0
      %4840 = vmatpush1.bf16.msra.mxu0 0
      %4841 = vmatprep.mubr.bf16.mxu0 0
      %4842 = vmatmul.mubr.bf16.gmra.mrb[0].mxu0 %v4723
      %v4843 = vpop.f32.mrb[0].mxu0
      %v4844 = vadd.f32 %v4759, %v4843
      %v4845 = vpop.f32.mrb[0].mxu0
      %v4846 = vpop.f32.mrb[0].mxu0
      %v4847 = vadd.f32 %v4759, %v4846
      %v4848 = vpop.f32.mrb[0].mxu0
      %4849 = vmatprep.mubr.bf16.mxu0 0
      %4850 = vmatmul.mubr.bf16.gmra.mrb[0].mxu0 %v4724
      %v4851 = vpop.f32.mrb[0].mxu0
      %v4852 = vadd.f32 %v4759, %v4851
      %v4853 = vpop.f32.mrb[0].mxu0
      %v4854 = vpop.f32.mrb[0].mxu0
      %v4855 = vadd.f32 %v4759, %v4854
      %v4856 = vpop.f32.mrb[0].mxu0
      %4857 = vmatprep.mubr.bf16.mxu0 0
      %4858 = vmatmul.mubr.bf16.gmra.mrb[0].mxu0 %v4725
      %v4859 = vpop.f32.mrb[0].mxu0
      %v4860 = vadd.f32 %v4759, %v4859
      %v4861 = vpop.f32.mrb[0].mxu0
      %v4862 = vpop.f32.mrb[0].mxu0
      %v4863 = vadd.f32 %v4759, %v4862
      %v4864 = vpop.f32.mrb[0].mxu0
      %4865 = vmatprep.mubr.bf16.mxu0 0
      %4866 = vmatmul.mubr.bf16.gmra.mrb[0].mxu0 %v4726
      %v4867 = vpop.f32.mrb[0].mxu0
      %v4868 = vadd.f32 %v4759, %v4867
      %v4869 = vpop.f32.mrb[0].mxu0
      %v4870 = vpop.f32.mrb[0].mxu0
      %v4871 = vadd.f32 %v4759, %v4870
      %v4872 = vpop.f32.mrb[0].mxu0
      %4873 = vmatprep.mubr.bf16.mxu0 0
      %4874 = vmatmul.mubr.bf16.gmra.mrb[0].mxu0 %v4727
      %v4875 = vpop.f32.mrb[0].mxu0
      %v4876 = vadd.f32 %v4759, %v4875
      %v4877 = vpop.f32.mrb[0].mxu0
      %v4878 = vpop.f32.mrb[0].mxu0
      %v4879 = vadd.f32 %v4759, %v4878
      %v4880 = vpop.f32.mrb[0].mxu0
      %4881 = vmatprep.mubr.bf16.mxu0 0
      %4882 = vmatmul.mubr.bf16.gmra.mrb[0].mxu0 %v4728
      %v4883 = vpop.f32.mrb[0].mxu0
      %v4884 = vadd.f32 %v4759, %v4883
      %v4885 = vpop.f32.mrb[0].mxu0
      %v4886 = vpop.f32.mrb[0].mxu0
      %v4887 = vadd.f32 %v4759, %v4886
      %v4888 = vpop.f32.mrb[0].mxu0
      %4889 = vmatprep.mubr.bf16.mxu0 0
      %4890 = vmatmul.mubr.bf16.gmra.mrb[0].mxu0 %v4729
      %v4891 = vpop.f32.mrb[0].mxu0
      %v4892 = vadd.f32 %v4759, %v4891
      %v4893 = vpop.f32.mrb[0].mxu0
      %v4894 = vpop.f32.mrb[0].mxu0
      %v4895 = vadd.f32 %v4759, %v4894
      %v4896 = vpop.f32.mrb[0].mxu0
      %4897 = vmatprep.mubr.bf16.mxu0 0
      %4898 = vmatmul.mubr.bf16.gmra.mrb[0].mxu0 %v4730
      %v4899 = vpop.f32.mrb[0].mxu0
      %v4900 = vadd.f32 %v4759, %v4899
      %v4901 = vpop.f32.mrb[0].mxu0
      %v4902 = vpop.f32.mrb[0].mxu0
      %v4903 = vadd.f32 %v4759, %v4902
      %v4904 = vpop.f32.mrb[0].mxu0
      %4905 = vmatprep.mubr.bf16.mxu0 0
      %4906 = vmatmul.mubr.bf16.gmra.mrb[0].mxu0 %v4731
      %v4907 = vpop.f32.mrb[0].mxu0
      %v4908 = vadd.f32 %v4759, %v4907
      %v4909 = vpop.f32.mrb[0].mxu0
      %v4910 = vpop.f32.mrb[0].mxu0
      %v4911 = vadd.f32 %v4759, %v4910
      %v4912 = vpop.f32.mrb[0].mxu0
      %4913 = vmatprep.mubr.bf16.mxu0 0
      %4914 = vmatmul.mubr.bf16.gmra.mrb[0].mxu0 %v4732
      %v4915 = vpop.f32.mrb[0].mxu0
      %v4916 = vadd.f32 %v4759, %v4915
      %v4917 = vpop.f32.mrb[0].mxu0
      %v4918 = vpop.f32.mrb[0].mxu0
      %v4919 = vadd.f32 %v4759, %v4918
      %v4920 = vpop.f32.mrb[0].mxu0
      %4921 = vmatprep.mubr.bf16.mxu0 0
      %4922 = vmatmul.mubr.bf16.gmra.mrb[0].mxu0 %v4733
      %v4923 = vpop.f32.mrb[0].mxu0
      %v4924 = vadd.f32 %v4759, %v4923
      %v4925 = vpop.f32.mrb[0].mxu0
      %v4926 = vpop.f32.mrb[0].mxu0
      %v4927 = vadd.f32 %v4759, %v4926
      %v4928 = vpop.f32.mrb[0].mxu0
      %4929 = vmatprep.mubr.bf16.mxu0 0
      %4930 = vmatmul.mubr.bf16.gmra.mrb[0].mxu0 %v4734
      %v4931 = vpop.f32.mrb[0].mxu0
      %v4932 = vadd.f32 %v4759, %v4931
      %v4933 = vpop.f32.mrb[0].mxu0
      %v4934 = vpop.f32.mrb[0].mxu0
      %v4935 = vadd.f32 %v4759, %v4934
      %v4936 = vpop.f32.mrb[0].mxu0
      %4937 = vmatprep.mubr.bf16.mxu0 0
      %4938 = vmatmul.mubr.bf16.gmra.mrb[0].mxu0 %v4735
      %v4939 = vpop.f32.mrb[0].mxu0
      %v4940 = vadd.f32 %v4759, %v4939
      %v4941 = vpop.f32.mrb[0].mxu0
      %v4942 = vpop.f32.mrb[0].mxu0
      %v4943 = vadd.f32 %v4759, %v4942
      %v4944 = vpop.f32.mrb[0].mxu0
      %4945 = vmatprep.mubr.bf16.mxu0 0
      %4946 = vmatmul.mubr.bf16.gmra.mrb[0].mxu0 %v4736
      %v4947 = vpop.f32.mrb[0].mxu0
      %v4948 = vadd.f32 %v4759, %v4947
      %v4949 = vpop.f32.mrb[0].mxu0
      %v4950 = vpop.f32.mrb[0].mxu0
      %v4951 = vadd.f32 %v4759, %v4950
      %v4952 = vpop.f32.mrb[0].mxu0
      %4953 = vmatprep.mubr.bf16.mxu0 0
      %4954 = vmatmul.mubr.bf16.gmra.mrb[0].mxu0 %v4737
      %v4955 = vpop.f32.mrb[0].mxu0
      %v4956 = vadd.f32 %v4759, %v4955
      %v4957 = vpop.f32.mrb[0].mxu0
      %v4958 = vpop.f32.mrb[0].mxu0
      %v4959 = vadd.f32 %v4759, %v4958
      %v4960 = vpop.f32.mrb[0].mxu0
      %4961 = vmatprep.mubr.bf16.mxu0 0
      %4962 = vmatmul.mubr.bf16.gmra.mrb[0].mxu0 %v4738
      %v4963 = vpop.f32.mrb[0].mxu0
      %v4964 = vadd.f32 %v4759, %v4963
      %v4965 = vpop.f32.mrb[0].mxu0
      %v4966 = vpop.f32.mrb[0].mxu0
      %v4967 = vadd.f32 %v4759, %v4966
      %v4968 = vpop.f32.mrb[0].mxu0
      %4969 = vmatprep.mubr.bf16.mxu0 0
      %4970 = vmatmul.mubr.bf16.gmra.mrb[0].mxu0 %v4739
      %v4971 = vpop.f32.mrb[0].mxu0
      %v4972 = vadd.f32 %v4759, %v4971
      %v4973 = vpop.f32.mrb[0].mxu0
      %v4974 = vpop.f32.mrb[0].mxu0
      %v4975 = vadd.f32 %v4759, %v4974
      %v4976 = vpop.f32.mrb[0].mxu0
      %4977 = vmatprep.mubr.bf16.mxu0 0
      %4978 = vmatmul.mubr.bf16.gmra.mrb[0].mxu0 %v4740
      %v4979 = vpop.f32.mrb[0].mxu0
      %v4980 = vadd.f32 %v4759, %v4979
      %v4981 = vpop.f32.mrb[0].mxu0
      %v4982 = vpop.f32.mrb[0].mxu0
      %v4983 = vadd.f32 %v4759, %v4982
      %v4984 = vpop.f32.mrb[0].mxu0
      %4985 = vmatprep.mubr.bf16.mxu0 0
      %4986 = vmatmul.mubr.bf16.gmra.mrb[0].mxu0 %v4741
      %v4987 = vpop.f32.mrb[0].mxu0
      %v4988 = vadd.f32 %v4759, %v4987
      %v4989 = vpop.f32.mrb[0].mxu0
      %v4990 = vpop.f32.mrb[0].mxu0
      %v4991 = vadd.f32 %v4759, %v4990
      %v4992 = vpop.f32.mrb[0].mxu0
      %4993 = vmatprep.mubr.bf16.mxu0 0
      %4994 = vmatmul.mubr.bf16.gmra.mrb[0].mxu0 %v4742
      %v4995 = vpop.f32.mrb[0].mxu0
      %v4996 = vadd.f32 %v4759, %v4995
      %v4997 = vpop.f32.mrb[0].mxu0
      %v4998 = vpop.f32.mrb[0].mxu0
      %v4999 = vadd.f32 %v4759, %v4998
      %v5000 = vpop.f32.mrb[0].mxu0
      %5001 = vmatprep.mubr.bf16.mxu0 0
      %5002 = vmatmul.mubr.bf16.gmra.mrb[0].mxu0 %v4743
      %v5003 = vpop.f32.mrb[0].mxu0
      %v5004 = vadd.f32 %v4759, %v5003
      %v5005 = vpop.f32.mrb[0].mxu0
      %v5006 = vpop.f32.mrb[0].mxu0
      %v5007 = vadd.f32 %v4759, %v5006
      %v5008 = vpop.f32.mrb[0].mxu0
      %5009 = vmatprep.mubr.bf16.mxu0 0
      %5010 = vmatmul.mubr.bf16.gmra.mrb[0].mxu0 %v4744
      %v5011 = vpop.f32.mrb[0].mxu0
      %v5012 = vadd.f32 %v4759, %v5011
      %v5013 = vpop.f32.mrb[0].mxu0
      %v5014 = vpop.f32.mrb[0].mxu0
      %v5015 = vadd.f32 %v4759, %v5014
      %v5016 = vpop.f32.mrb[0].mxu0
      %5017 = vmatprep.mubr.bf16.mxu0 0
      %5018 = vmatmul.mubr.bf16.gmra.mrb[0].mxu0 %v4745
      %v5019 = vpop.f32.mrb[0].mxu0
      %v5020 = vadd.f32 %v4759, %v5019
      %v5021 = vpop.f32.mrb[0].mxu0
      %v5022 = vpop.f32.mrb[0].mxu0
      %v5023 = vadd.f32 %v4759, %v5022
      %v5024 = vpop.f32.mrb[0].mxu0
      %5025 = vmatprep.mubr.bf16.mxu0 0
      %5026 = vmatmul.mubr.bf16.gmra.mrb[0].mxu0 %v4746
      %v5027 = vpop.f32.mrb[0].mxu0
      %v5028 = vadd.f32 %v4759, %v5027
      %v5029 = vpop.f32.mrb[0].mxu0
      %v5030 = vpop.f32.mrb[0].mxu0
      %v5031 = vadd.f32 %v4759, %v5030
      %v5032 = vpop.f32.mrb[0].mxu0
      %5033 = vmatprep.mubr.bf16.mxu0 0
      %5034 = vmatmul.mubr.bf16.gmra.mrb[0].mxu0 %v4747
      %v5035 = vpop.f32.mrb[0].mxu0
      %v5036 = vadd.f32 %v4759, %v5035
      %v5037 = vpop.f32.mrb[0].mxu0
      %v5038 = vpop.f32.mrb[0].mxu0
      %v5039 = vadd.f32 %v4759, %v5038
      %v5040 = vpop.f32.mrb[0].mxu0
      %5041 = vmatprep.mubr.bf16.mxu0 0
      %5042 = vmatmul.mubr.bf16.gmra.mrb[0].mxu0 %v4748
      %v5043 = vpop.f32.mrb[0].mxu0
      %v5044 = vadd.f32 %v4759, %v5043
      %v5045 = vpop.f32.mrb[0].mxu0
      %v5046 = vpop.f32.mrb[0].mxu0
      %v5047 = vadd.f32 %v4759, %v5046
      %v5048 = vpop.f32.mrb[0].mxu0
      %5049 = vmatprep.mubr.bf16.mxu0 0
      %5050 = vmatmul.mubr.bf16.gmra.mrb[0].mxu0 %v4749
      %v5051 = vpop.f32.mrb[0].mxu0
      %v5052 = vadd.f32 %v4759, %v5051
      %v5053 = vpop.f32.mrb[0].mxu0
      %v5054 = vpop.f32.mrb[0].mxu0
      %v5055 = vadd.f32 %v4759, %v5054
      %v5056 = vpop.f32.mrb[0].mxu0
      %5057 = vmatprep.mubr.bf16.mxu0 0
      %5058 = vmatmul.mubr.bf16.gmra.mrb[0].mxu0 %v4750
      %v5059 = vpop.f32.mrb[0].mxu0
      %v5060 = vadd.f32 %v4759, %v5059
      %v5061 = vpop.f32.mrb[0].mxu0
      %v5062 = vpop.f32.mrb[0].mxu0
      %v5063 = vadd.f32 %v4759, %v5062
      %v5064 = vpop.f32.mrb[0].mxu0
      %5065 = vmatprep.mubr.bf16.mxu0 0
      %5066 = vmatmul.mubr.bf16.gmra.mrb[0].mxu0 %v4751
      %v5067 = vpop.f32.mrb[0].mxu0
      %v5068 = vadd.f32 %v4759, %v5067
      %v5069 = vpop.f32.mrb[0].mxu0
      %v5070 = vpop.f32.mrb[0].mxu0
      %v5071 = vadd.f32 %v4759, %v5070
      %v5072 = vpop.f32.mrb[0].mxu0
      %5073 = vmatprep.mubr.bf16.mxu0 0
      %5074 = vmatmul.mubr.bf16.gmra.mrb[0].mxu0 %v4752
      %v5075 = vpop.f32.mrb[0].mxu0
      %v5076 = vadd.f32 %v4759, %v5075
      %v5077 = vpop.f32.mrb[0].mxu0
      %v5078 = vpop.f32.mrb[0].mxu0
      %v5079 = vadd.f32 %v4759, %v5078
      %v5080 = vpop.f32.mrb[0].mxu0
      %5081 = vmatprep.mubr.bf16.mxu0 0
      %5082 = vmatmul.mubr.bf16.gmra.mrb[0].mxu0 %v4753
      %v5083 = vpop.f32.mrb[0].mxu0
      %v5084 = vadd.f32 %v4759, %v5083
      %v5085 = vpop.f32.mrb[0].mxu0
      %v5086 = vpop.f32.mrb[0].mxu0
      %v5087 = vadd.f32 %v4759, %v5086
      %v5088 = vpop.f32.mrb[0].mxu0
      %5089 = vmatprep.mubr.bf16.mxu0 0
      %5090 = vmatmul.mubr.bf16.gmra.mrb[0].mxu0 %v4754
      %v5091 = vpop.f32.mrb[0].mxu0
      %v5092 = vadd.f32 %v4759, %v5091
      %v5093 = vpop.f32.mrb[0].mxu0
      %v5094 = vpop.f32.mrb[0].mxu0
      %v5095 = vadd.f32 %v4759, %v5094
      %v5096 = vpop.f32.mrb[0].mxu0
      %5097 = vdwg.mxu0
      %v5098 = vmax.f32 %v4844, 0.0
      %v5099 = vmax.f32 %v4847, 0.0
      %v5100 = vmax.f32 %v4852, 0.0
      %v5101 = vmax.f32 %v4855, 0.0
      %v5102 = vmax.f32 %v4860, 0.0
      %v5103 = vmax.f32 %v4863, 0.0
      %v5104 = vmax.f32 %v4868, 0.0
      %v5105 = vmax.f32 %v4871, 0.0
      %v5106 = vmax.f32 %v4876, 0.0
      %v5107 = vmax.f32 %v4879, 0.0
      %v5108 = vmax.f32 %v4884, 0.0
      %v5109 = vmax.f32 %v4887, 0.0
      %v5110 = vmax.f32 %v4892, 0.0
      %v5111 = vmax.f32 %v4895, 0.0
      %v5112 = vmax.f32 %v4900, 0.0
      %v5113 = vmax.f32 %v4903, 0.0
      %v5114 = vmax.f32 %v4908, 0.0
      %v5115 = vmax.f32 %v4911, 0.0
      %v5116 = vmax.f32 %v4916, 0.0
      %v5117 = vmax.f32 %v4919, 0.0
      %v5118 = vmax.f32 %v4924, 0.0
      %v5119 = vmax.f32 %v4927, 0.0
      %v5120 = vmax.f32 %v4932, 0.0
      %v5121 = vmax.f32 %v4935, 0.0
      %v5122 = vmax.f32 %v4940, 0.0
      %v5123 = vmax.f32 %v4943, 0.0
      %v5124 = vmax.f32 %v4948, 0.0
      %v5125 = vmax.f32 %v4951, 0.0
      %v5126 = vmax.f32 %v4956, 0.0
      %v5127 = vmax.f32 %v4959, 0.0
      %v5128 = vmax.f32 %v4964, 0.0
      %v5129 = vmax.f32 %v4967, 0.0
      %v5130 = vmax.f32 %v4972, 0.0
      %v5131 = vmax.f32 %v4975, 0.0
      %v5132 = vmax.f32 %v4980, 0.0
      %v5133 = vmax.f32 %v4983, 0.0
      %v5134 = vmax.f32 %v4988, 0.0
      %v5135 = vmax.f32 %v4991, 0.0
      %v5136 = vmax.f32 %v4996, 0.0
      %v5137 = vmax.f32 %v4999, 0.0
      %v5138 = vmax.f32 %v5004, 0.0
      %v5139 = vmax.f32 %v5007, 0.0
      %v5140 = vmax.f32 %v5012, 0.0
      %v5141 = vmax.f32 %v5015, 0.0
      %v5142 = vmax.f32 %v5020, 0.0
      %v5143 = vmax.f32 %v5023, 0.0
      %v5144 = vmax.f32 %v5028, 0.0
      %v5145 = vmax.f32 %v5031, 0.0
      %v5146 = vmax.f32 %v5036, 0.0
      %v5147 = vmax.f32 %v5039, 0.0
      %v5148 = vmax.f32 %v5044, 0.0
      %v5149 = vmax.f32 %v5047, 0.0
      %v5150 = vmax.f32 %v5052, 0.0
      %v5151 = vmax.f32 %v5055, 0.0
      %v5152 = vmax.f32 %v5060, 0.0
      %v5153 = vmax.f32 %v5063, 0.0
      %v5154 = vmax.f32 %v5068, 0.0
      %v5155 = vmax.f32 %v5071, 0.0
      %v5156 = vmax.f32 %v5076, 0.0
      %v5157 = vmax.f32 %v5079, 0.0
      %v5158 = vmax.f32 %v5084, 0.0
      %v5159 = vmax.f32 %v5087, 0.0
      %v5160 = vmax.f32 %v5092, 0.0
      %v5161 = vmax.f32 %v5095, 0.0
      %v5162 = vld [vmem:[%s13] sm:$0xf]
      %v5163 = vld [vmem:[%s13 + $0x4] sm:$0xf]
      %v5164 = vld [vmem:[%s13 + $0x8] sm:$0xf]
      %v5165 = vld [vmem:[%s13 + $0xc] sm:$0xf]
      %v5166 = vld [vmem:[%s13 + $0x10] sm:$0xf]
      %v5167 = vld [vmem:[%s13 + $0x14] sm:$0xf]
      %v5168 = vld [vmem:[%s13 + $0x18] sm:$0xf]
      %v5169 = vld [vmem:[%s13 + $0x1c] sm:$0xf]
      %v5170 = vld [vmem:[%s13 + $0x20] sm:$0xf]
      %v5171 = vld [vmem:[%s13 + $0x24] sm:$0xf]
      %v5172 = vld [vmem:[%s13 + $0x28] sm:$0xf]
      %v5173 = vld [vmem:[%s13 + $0x2c] sm:$0xf]
      %v5174 = vld [vmem:[%s13 + $0x30] sm:$0xf]
      %v5175 = vld [vmem:[%s13 + $0x34] sm:$0xf]
      %v5176 = vld [vmem:[%s13 + $0x38] sm:$0xf]
      %v5177 = vld [vmem:[%s13 + $0x3c] sm:$0xf]
      %v5178 = vld [vmem:[%s14] sm:$0x1]
      %v5179 = vpack.c.bf16 %v5099, %v5098
      %v5180 = vpack.c.bf16 %v5101, %v5100
      %v5181 = vpack.c.bf16 %v5103, %v5102
      %v5182 = vpack.c.bf16 %v5105, %v5104
      %v5183 = vpack.c.bf16 %v5107, %v5106
      %v5184 = vpack.c.bf16 %v5109, %v5108
      %v5185 = vpack.c.bf16 %v5111, %v5110
      %v5186 = vpack.c.bf16 %v5113, %v5112
      %v5187 = vpack.c.bf16 %v5115, %v5114
      %v5188 = vpack.c.bf16 %v5117, %v5116
      %v5189 = vpack.c.bf16 %v5119, %v5118
      %v5190 = vpack.c.bf16 %v5121, %v5120
      %v5191 = vpack.c.bf16 %v5123, %v5122
      %v5192 = vpack.c.bf16 %v5125, %v5124
      %v5193 = vpack.c.bf16 %v5127, %v5126
      %v5194 = vpack.c.bf16 %v5129, %v5128
      %v5195 = vpack.c.bf16 %v5131, %v5130
      %v5196 = vpack.c.bf16 %v5133, %v5132
      %v5197 = vpack.c.bf16 %v5135, %v5134
      %v5198 = vpack.c.bf16 %v5137, %v5136
      %v5199 = vpack.c.bf16 %v5139, %v5138
      %v5200 = vpack.c.bf16 %v5141, %v5140
      %v5201 = vpack.c.bf16 %v5143, %v5142
      %v5202 = vpack.c.bf16 %v5145, %v5144
      %v5203 = vpack.c.bf16 %v5147, %v5146
      %v5204 = vpack.c.bf16 %v5149, %v5148
      %v5205 = vpack.c.bf16 %v5151, %v5150
      %v5206 = vpack.c.bf16 %v5153, %v5152
      %v5207 = vpack.c.bf16 %v5155, %v5154
      %v5208 = vpack.c.bf16 %v5157, %v5156
      %v5209 = vpack.c.bf16 %v5159, %v5158
      %v5210 = vpack.c.bf16 %v5161, %v5160
      %v5212 = vlaneseq
      %v5213 = vshrl.u32 %v5212, 7
      %v5214 = vsub.s32 0, %v5213
      %v5215 = vrot.slane %v5178, %v5214
      %v5233 = vunpack.c.l.b16 %v5162
      %v5234 = vunpack.c.l.b16 %v5163
      %v5235 = vunpack.c.l.b16 %v5164
      %v5236 = vunpack.c.l.b16 %v5165
      %v5237 = vunpack.c.l.b16 %v5166
      %v5238 = vunpack.c.l.b16 %v5167
      %v5239 = vunpack.c.l.b16 %v5168
      %v5240 = vunpack.c.l.b16 %v5169
      %v5241 = vunpack.c.l.b16 %v5170
      %v5242 = vunpack.c.l.b16 %v5171
      %v5243 = vunpack.c.l.b16 %v5172
      %v5244 = vunpack.c.l.b16 %v5173
      %v5245 = vunpack.c.l.b16 %v5174
      %v5246 = vunpack.c.l.b16 %v5175
      %v5247 = vunpack.c.l.b16 %v5176
      %v5248 = vunpack.c.l.b16 %v5177
      %v5249 = vpack.c.b16 %v5234, %v5233
      %v5250 = vpack.c.b16 %v5236, %v5235
      %v5251 = vpack.c.b16 %v5238, %v5237
      %v5252 = vpack.c.b16 %v5240, %v5239
      %v5253 = vpack.c.b16 %v5242, %v5241
      %v5254 = vpack.c.b16 %v5244, %v5243
      %v5255 = vpack.c.b16 %v5246, %v5245
      %v5256 = vpack.c.b16 %v5248, %v5247
      %5265 = vmatprep.subr.bf16.mxu0 0
      %5266 = vmatpush1.bf16.msra.mxu0 %v5249
      %5267 = vmatprep.subr.bf16.mxu0 0
      %5268 = vmatpush1.bf16.msra.mxu0 %v5250
      %5269 = vmatprep.subr.bf16.mxu0 0
      %5270 = vmatpush1.bf16.msra.mxu0 %v5251
      %5271 = vmatprep.subr.bf16.mxu0 0
      %5272 = vmatpush1.bf16.msra.mxu0 %v5252
      %5273 = vmatprep.subr.bf16.mxu0 0
      %5274 = vmatpush1.bf16.msra.mxu0 %v5253
      %5275 = vmatprep.subr.bf16.mxu0 0
      %5276 = vmatpush1.bf16.msra.mxu0 %v5254
      %5277 = vmatprep.subr.bf16.mxu0 0
      %5278 = vmatpush1.bf16.msra.mxu0 %v5255
      %5279 = vmatprep.subr.bf16.mxu0 0
      %5280 = vmatpush1.bf16.msra.mxu0 %v5256
      %5281 = vmatprep.subr.bf16.mxu0 0
      %5282 = vmatpush1.bf16.msra.mxu0 0
      %5283 = vmatprep.subr.bf16.mxu0 0
      %5284 = vmatpush1.bf16.msra.mxu0 0
      %5285 = vmatprep.subr.bf16.mxu0 0
      %5286 = vmatpush1.bf16.msra.mxu0 0
      %5287 = vmatprep.subr.bf16.mxu0 0
      %5288 = vmatpush1.bf16.msra.mxu0 0
      %5289 = vmatprep.subr.bf16.mxu0 0
      %5290 = vmatpush1.bf16.msra.mxu0 0
      %5291 = vmatprep.subr.bf16.mxu0 0
      %5292 = vmatpush1.bf16.msra.mxu0 0
      %5293 = vmatprep.subr.bf16.mxu0 0
      %5294 = vmatpush1.bf16.msra.mxu0 0
      %5295 = vmatprep.subr.bf16.mxu0 0
      %5296 = vmatpush1.bf16.msra.mxu0 0
      %5297 = vmatprep.mubr.bf16.mxu0 0
      %5298 = vmatmul.mubr.bf16.gmra.mrb[0].mxu0 %v5179
      %v5299 = vpop.f32.mrb[0].mxu0
      %v5300 = vadd.f32 %v5215, %v5299
      %v5301 = vpop.f32.mrb[0].mxu0
      %v5302 = vpop.f32.mrb[0].mxu0
      %v5303 = vadd.f32 %v5215, %v5302
      %v5304 = vpop.f32.mrb[0].mxu0
      %5305 = vmatprep.mubr.bf16.mxu0 0
      %5306 = vmatmul.mubr.bf16.gmra.mrb[0].mxu0 %v5180
      %v5307 = vpop.f32.mrb[0].mxu0
      %v5308 = vadd.f32 %v5215, %v5307
      %v5309 = vpop.f32.mrb[0].mxu0
      %v5310 = vpop.f32.mrb[0].mxu0
      %v5311 = vadd.f32 %v5215, %v5310
      %v5312 = vpop.f32.mrb[0].mxu0
      %5313 = vmatprep.mubr.bf16.mxu0 0
      %5314 = vmatmul.mubr.bf16.gmra.mrb[0].mxu0 %v5181
      %v5315 = vpop.f32.mrb[0].mxu0
      %v5316 = vadd.f32 %v5215, %v5315
      %v5317 = vpop.f32.mrb[0].mxu0
      %v5318 = vpop.f32.mrb[0].mxu0
      %v5319 = vadd.f32 %v5215, %v5318
      %v5320 = vpop.f32.mrb[0].mxu0
      %5321 = vmatprep.mubr.bf16.mxu0 0
      %5322 = vmatmul.mubr.bf16.gmra.mrb[0].mxu0 %v5182
      %v5323 = vpop.f32.mrb[0].mxu0
      %v5324 = vadd.f32 %v5215, %v5323
      %v5325 = vpop.f32.mrb[0].mxu0
      %v5326 = vpop.f32.mrb[0].mxu0
      %v5327 = vadd.f32 %v5215, %v5326
      %v5328 = vpop.f32.mrb[0].mxu0
      %5329 = vmatprep.mubr.bf16.mxu0 0
      %5330 = vmatmul.mubr.bf16.gmra.mrb[0].mxu0 %v5183
      %v5331 = vpop.f32.mrb[0].mxu0
      %v5332 = vadd.f32 %v5215, %v5331
      %v5333 = vpop.f32.mrb[0].mxu0
      %v5334 = vpop.f32.mrb[0].mxu0
      %v5335 = vadd.f32 %v5215, %v5334
      %v5336 = vpop.f32.mrb[0].mxu0
      %5337 = vmatprep.mubr.bf16.mxu0 0
      %5338 = vmatmul.mubr.bf16.gmra.mrb[0].mxu0 %v5184
      %v5339 = vpop.f32.mrb[0].mxu0
      %v5340 = vadd.f32 %v5215, %v5339
      %v5341 = vpop.f32.mrb[0].mxu0
      %v5342 = vpop.f32.mrb[0].mxu0
      %v5343 = vadd.f32 %v5215, %v5342
      %v5344 = vpop.f32.mrb[0].mxu0
      %5345 = vmatprep.mubr.bf16.mxu0 0
      %5346 = vmatmul.mubr.bf16.gmra.mrb[0].mxu0 %v5185
      %v5347 = vpop.f32.mrb[0].mxu0
      %v5348 = vadd.f32 %v5215, %v5347
      %v5349 = vpop.f32.mrb[0].mxu0
      %v5350 = vpop.f32.mrb[0].mxu0
      %v5351 = vadd.f32 %v5215, %v5350
      %v5352 = vpop.f32.mrb[0].mxu0
      %5353 = vmatprep.mubr.bf16.mxu0 0
      %5354 = vmatmul.mubr.bf16.gmra.mrb[0].mxu0 %v5186
      %v5355 = vpop.f32.mrb[0].mxu0
      %v5356 = vadd.f32 %v5215, %v5355
      %v5357 = vpop.f32.mrb[0].mxu0
      %v5358 = vpop.f32.mrb[0].mxu0
      %v5359 = vadd.f32 %v5215, %v5358
      %v5360 = vpop.f32.mrb[0].mxu0
      %5361 = vmatprep.mubr.bf16.mxu0 0
      %5362 = vmatmul.mubr.bf16.gmra.mrb[0].mxu0 %v5187
      %v5363 = vpop.f32.mrb[0].mxu0
      %v5364 = vadd.f32 %v5215, %v5363
      %v5365 = vpop.f32.mrb[0].mxu0
      %v5366 = vpop.f32.mrb[0].mxu0
      %v5367 = vadd.f32 %v5215, %v5366
      %v5368 = vpop.f32.mrb[0].mxu0
      %5369 = vmatprep.mubr.bf16.mxu0 0
      %5370 = vmatmul.mubr.bf16.gmra.mrb[0].mxu0 %v5188
      %v5371 = vpop.f32.mrb[0].mxu0
      %v5372 = vadd.f32 %v5215, %v5371
      %v5373 = vpop.f32.mrb[0].mxu0
      %v5374 = vpop.f32.mrb[0].mxu0
      %v5375 = vadd.f32 %v5215, %v5374
      %v5376 = vpop.f32.mrb[0].mxu0
      %5377 = vmatprep.mubr.bf16.mxu0 0
      %5378 = vmatmul.mubr.bf16.gmra.mrb[0].mxu0 %v5189
      %v5379 = vpop.f32.mrb[0].mxu0
      %v5380 = vadd.f32 %v5215, %v5379
      %v5381 = vpop.f32.mrb[0].mxu0
      %v5382 = vpop.f32.mrb[0].mxu0
      %v5383 = vadd.f32 %v5215, %v5382
      %v5384 = vpop.f32.mrb[0].mxu0
      %5385 = vmatprep.mubr.bf16.mxu0 0
      %5386 = vmatmul.mubr.bf16.gmra.mrb[0].mxu0 %v5190
      %v5387 = vpop.f32.mrb[0].mxu0
      %v5388 = vadd.f32 %v5215, %v5387
      %v5389 = vpop.f32.mrb[0].mxu0
      %v5390 = vpop.f32.mrb[0].mxu0
      %v5391 = vadd.f32 %v5215, %v5390
      %v5392 = vpop.f32.mrb[0].mxu0
      %5393 = vmatprep.mubr.bf16.mxu0 0
      %5394 = vmatmul.mubr.bf16.gmra.mrb[0].mxu0 %v5191
      %v5395 = vpop.f32.mrb[0].mxu0
      %v5396 = vadd.f32 %v5215, %v5395
      %v5397 = vpop.f32.mrb[0].mxu0
      %v5398 = vpop.f32.mrb[0].mxu0
      %v5399 = vadd.f32 %v5215, %v5398
      %v5400 = vpop.f32.mrb[0].mxu0
      %5401 = vmatprep.mubr.bf16.mxu0 0
      %5402 = vmatmul.mubr.bf16.gmra.mrb[0].mxu0 %v5192
      %v5403 = vpop.f32.mrb[0].mxu0
      %v5404 = vadd.f32 %v5215, %v5403
      %v5405 = vpop.f32.mrb[0].mxu0
      %v5406 = vpop.f32.mrb[0].mxu0
      %v5407 = vadd.f32 %v5215, %v5406
      %v5408 = vpop.f32.mrb[0].mxu0
      %5409 = vmatprep.mubr.bf16.mxu0 0
      %5410 = vmatmul.mubr.bf16.gmra.mrb[0].mxu0 %v5193
      %v5411 = vpop.f32.mrb[0].mxu0
      %v5412 = vadd.f32 %v5215, %v5411
      %v5413 = vpop.f32.mrb[0].mxu0
      %v5414 = vpop.f32.mrb[0].mxu0
      %v5415 = vadd.f32 %v5215, %v5414
      %v5416 = vpop.f32.mrb[0].mxu0
      %5417 = vmatprep.mubr.bf16.mxu0 0
      %5418 = vmatmul.mubr.bf16.gmra.mrb[0].mxu0 %v5194
      %v5419 = vpop.f32.mrb[0].mxu0
      %v5420 = vadd.f32 %v5215, %v5419
      %v5421 = vpop.f32.mrb[0].mxu0
      %v5422 = vpop.f32.mrb[0].mxu0
      %v5423 = vadd.f32 %v5215, %v5422
      %v5424 = vpop.f32.mrb[0].mxu0
      %5425 = vmatprep.mubr.bf16.mxu0 0
      %5426 = vmatmul.mubr.bf16.gmra.mrb[0].mxu0 %v5195
      %v5427 = vpop.f32.mrb[0].mxu0
      %v5428 = vadd.f32 %v5215, %v5427
      %v5429 = vpop.f32.mrb[0].mxu0
      %v5430 = vpop.f32.mrb[0].mxu0
      %v5431 = vadd.f32 %v5215, %v5430
      %v5432 = vpop.f32.mrb[0].mxu0
      %5433 = vmatprep.mubr.bf16.mxu0 0
      %5434 = vmatmul.mubr.bf16.gmra.mrb[0].mxu0 %v5196
      %v5435 = vpop.f32.mrb[0].mxu0
      %v5436 = vadd.f32 %v5215, %v5435
      %v5437 = vpop.f32.mrb[0].mxu0
      %v5438 = vpop.f32.mrb[0].mxu0
      %v5439 = vadd.f32 %v5215, %v5438
      %v5440 = vpop.f32.mrb[0].mxu0
      %5441 = vmatprep.mubr.bf16.mxu0 0
      %5442 = vmatmul.mubr.bf16.gmra.mrb[0].mxu0 %v5197
      %v5443 = vpop.f32.mrb[0].mxu0
      %v5444 = vadd.f32 %v5215, %v5443
      %v5445 = vpop.f32.mrb[0].mxu0
      %v5446 = vpop.f32.mrb[0].mxu0
      %v5447 = vadd.f32 %v5215, %v5446
      %v5448 = vpop.f32.mrb[0].mxu0
      %5449 = vmatprep.mubr.bf16.mxu0 0
      %5450 = vmatmul.mubr.bf16.gmra.mrb[0].mxu0 %v5198
      %v5451 = vpop.f32.mrb[0].mxu0
      %v5452 = vadd.f32 %v5215, %v5451
      %v5453 = vpop.f32.mrb[0].mxu0
      %v5454 = vpop.f32.mrb[0].mxu0
      %v5455 = vadd.f32 %v5215, %v5454
      %v5456 = vpop.f32.mrb[0].mxu0
      %5457 = vmatprep.mubr.bf16.mxu0 0
      %5458 = vmatmul.mubr.bf16.gmra.mrb[0].mxu0 %v5199
      %v5459 = vpop.f32.mrb[0].mxu0
      %v5460 = vadd.f32 %v5215, %v5459
      %v5461 = vpop.f32.mrb[0].mxu0
      %v5462 = vpop.f32.mrb[0].mxu0
      %v5463 = vadd.f32 %v5215, %v5462
      %v5464 = vpop.f32.mrb[0].mxu0
      %5465 = vmatprep.mubr.bf16.mxu0 0
      %5466 = vmatmul.mubr.bf16.gmra.mrb[0].mxu0 %v5200
      %v5467 = vpop.f32.mrb[0].mxu0
      %v5468 = vadd.f32 %v5215, %v5467
      %v5469 = vpop.f32.mrb[0].mxu0
      %v5470 = vpop.f32.mrb[0].mxu0
      %v5471 = vadd.f32 %v5215, %v5470
      %v5472 = vpop.f32.mrb[0].mxu0
      %5473 = vmatprep.mubr.bf16.mxu0 0
      %5474 = vmatmul.mubr.bf16.gmra.mrb[0].mxu0 %v5201
      %v5475 = vpop.f32.mrb[0].mxu0
      %v5476 = vadd.f32 %v5215, %v5475
      %v5477 = vpop.f32.mrb[0].mxu0
      %v5478 = vpop.f32.mrb[0].mxu0
      %v5479 = vadd.f32 %v5215, %v5478
      %v5480 = vpop.f32.mrb[0].mxu0
      %5481 = vmatprep.mubr.bf16.mxu0 0
      %5482 = vmatmul.mubr.bf16.gmra.mrb[0].mxu0 %v5202
      %v5483 = vpop.f32.mrb[0].mxu0
      %v5484 = vadd.f32 %v5215, %v5483
      %v5485 = vpop.f32.mrb[0].mxu0
      %v5486 = vpop.f32.mrb[0].mxu0
      %v5487 = vadd.f32 %v5215, %v5486
      %v5488 = vpop.f32.mrb[0].mxu0
      %5489 = vmatprep.mubr.bf16.mxu0 0
      %5490 = vmatmul.mubr.bf16.gmra.mrb[0].mxu0 %v5203
      %v5491 = vpop.f32.mrb[0].mxu0
      %v5492 = vadd.f32 %v5215, %v5491
      %v5493 = vpop.f32.mrb[0].mxu0
      %v5494 = vpop.f32.mrb[0].mxu0
      %v5495 = vadd.f32 %v5215, %v5494
      %v5496 = vpop.f32.mrb[0].mxu0
      %5497 = vmatprep.mubr.bf16.mxu0 0
      %5498 = vmatmul.mubr.bf16.gmra.mrb[0].mxu0 %v5204
      %v5499 = vpop.f32.mrb[0].mxu0
      %v5500 = vadd.f32 %v5215, %v5499
      %v5501 = vpop.f32.mrb[0].mxu0
      %v5502 = vpop.f32.mrb[0].mxu0
      %v5503 = vadd.f32 %v5215, %v5502
      %v5504 = vpop.f32.mrb[0].mxu0
      %5505 = vmatprep.mubr.bf16.mxu0 0
      %5506 = vmatmul.mubr.bf16.gmra.mrb[0].mxu0 %v5205
      %v5507 = vpop.f32.mrb[0].mxu0
      %v5508 = vadd.f32 %v5215, %v5507
      %v5509 = vpop.f32.mrb[0].mxu0
      %v5510 = vpop.f32.mrb[0].mxu0
      %v5511 = vadd.f32 %v5215, %v5510
      %v5512 = vpop.f32.mrb[0].mxu0
      %5513 = vmatprep.mubr.bf16.mxu0 0
      %5514 = vmatmul.mubr.bf16.gmra.mrb[0].mxu0 %v5206
      %v5515 = vpop.f32.mrb[0].mxu0
      %v5516 = vadd.f32 %v5215, %v5515
      %v5517 = vpop.f32.mrb[0].mxu0
      %v5518 = vpop.f32.mrb[0].mxu0
      %v5519 = vadd.f32 %v5215, %v5518
      %v5520 = vpop.f32.mrb[0].mxu0
      %5521 = vmatprep.mubr.bf16.mxu0 0
      %5522 = vmatmul.mubr.bf16.gmra.mrb[0].mxu0 %v5207
      %v5523 = vpop.f32.mrb[0].mxu0
      %v5524 = vadd.f32 %v5215, %v5523
      %v5525 = vpop.f32.mrb[0].mxu0
      %v5526 = vpop.f32.mrb[0].mxu0
      %v5527 = vadd.f32 %v5215, %v5526
      %v5528 = vpop.f32.mrb[0].mxu0
      %5529 = vmatprep.mubr.bf16.mxu0 0
      %5530 = vmatmul.mubr.bf16.gmra.mrb[0].mxu0 %v5208
      %v5531 = vpop.f32.mrb[0].mxu0
      %v5532 = vadd.f32 %v5215, %v5531
      %v5533 = vpop.f32.mrb[0].mxu0
      %v5534 = vpop.f32.mrb[0].mxu0
      %v5535 = vadd.f32 %v5215, %v5534
      %v5536 = vpop.f32.mrb[0].mxu0
      %5537 = vmatprep.mubr.bf16.mxu0 0
      %5538 = vmatmul.mubr.bf16.gmra.mrb[0].mxu0 %v5209
      %v5539 = vpop.f32.mrb[0].mxu0
      %v5540 = vadd.f32 %v5215, %v5539
      %v5541 = vpop.f32.mrb[0].mxu0
      %v5542 = vpop.f32.mrb[0].mxu0
      %v5543 = vadd.f32 %v5215, %v5542
      %v5544 = vpop.f32.mrb[0].mxu0
      %5545 = vmatprep.mubr.bf16.mxu0 0
      %5546 = vmatmul.mubr.bf16.gmra.mrb[0].mxu0 %v5210
      %v5547 = vpop.f32.mrb[0].mxu0
      %v5548 = vadd.f32 %v5215, %v5547
      %v5549 = vpop.f32.mrb[0].mxu0
      %v5550 = vpop.f32.mrb[0].mxu0
      %v5551 = vadd.f32 %v5215, %v5550
      %v5552 = vpop.f32.mrb[0].mxu0
      %5553 = vdwg.mxu0
      %v5554 = vmax.f32 %v5300, 0.0
      %v5555 = vmax.f32 %v5303, 0.0
      %v5556 = vmax.f32 %v5308, 0.0
      %v5557 = vmax.f32 %v5311, 0.0
      %v5558 = vmax.f32 %v5316, 0.0
      %v5559 = vmax.f32 %v5319, 0.0
      %v5560 = vmax.f32 %v5324, 0.0
      %v5561 = vmax.f32 %v5327, 0.0
      %v5562 = vmax.f32 %v5332, 0.0
      %v5563 = vmax.f32 %v5335, 0.0
      %v5564 = vmax.f32 %v5340, 0.0
      %v5565 = vmax.f32 %v5343, 0.0
      %v5566 = vmax.f32 %v5348, 0.0
      %v5567 = vmax.f32 %v5351, 0.0
      %v5568 = vmax.f32 %v5356, 0.0
      %v5569 = vmax.f32 %v5359, 0.0
      %v5570 = vmax.f32 %v5364, 0.0
      %v5571 = vmax.f32 %v5367, 0.0
      %v5572 = vmax.f32 %v5372, 0.0
      %v5573 = vmax.f32 %v5375, 0.0
      %v5574 = vmax.f32 %v5380, 0.0
      %v5575 = vmax.f32 %v5383, 0.0
      %v5576 = vmax.f32 %v5388, 0.0
      %v5577 = vmax.f32 %v5391, 0.0
      %v5578 = vmax.f32 %v5396, 0.0
      %v5579 = vmax.f32 %v5399, 0.0
      %v5580 = vmax.f32 %v5404, 0.0
      %v5581 = vmax.f32 %v5407, 0.0
      %v5582 = vmax.f32 %v5412, 0.0
      %v5583 = vmax.f32 %v5415, 0.0
      %v5584 = vmax.f32 %v5420, 0.0
      %v5585 = vmax.f32 %v5423, 0.0
      %v5586 = vmax.f32 %v5428, 0.0
      %v5587 = vmax.f32 %v5431, 0.0
      %v5588 = vmax.f32 %v5436, 0.0
      %v5589 = vmax.f32 %v5439, 0.0
      %v5590 = vmax.f32 %v5444, 0.0
      %v5591 = vmax.f32 %v5447, 0.0
      %v5592 = vmax.f32 %v5452, 0.0
      %v5593 = vmax.f32 %v5455, 0.0
      %v5594 = vmax.f32 %v5460, 0.0
      %v5595 = vmax.f32 %v5463, 0.0
      %v5596 = vmax.f32 %v5468, 0.0
      %v5597 = vmax.f32 %v5471, 0.0
      %v5598 = vmax.f32 %v5476, 0.0
      %v5599 = vmax.f32 %v5479, 0.0
      %v5600 = vmax.f32 %v5484, 0.0
      %v5601 = vmax.f32 %v5487, 0.0
      %v5602 = vmax.f32 %v5492, 0.0
      %v5603 = vmax.f32 %v5495, 0.0
      %v5604 = vmax.f32 %v5500, 0.0
      %v5605 = vmax.f32 %v5503, 0.0
      %v5606 = vmax.f32 %v5508, 0.0
      %v5607 = vmax.f32 %v5511, 0.0
      %v5608 = vmax.f32 %v5516, 0.0
      %v5609 = vmax.f32 %v5519, 0.0
      %v5610 = vmax.f32 %v5524, 0.0
      %v5611 = vmax.f32 %v5527, 0.0
      %v5612 = vmax.f32 %v5532, 0.0
      %v5613 = vmax.f32 %v5535, 0.0
      %v5614 = vmax.f32 %v5540, 0.0
      %v5615 = vmax.f32 %v5543, 0.0
      %v5616 = vmax.f32 %v5548, 0.0
      %v5617 = vmax.f32 %v5551, 0.0
      %v5618 = vld [vmem:[%s15] sm:$0xff]
      %v5619 = vld [vmem:[%s15 + $0x8] sm:$0xff]
      %v5620 = vld [vmem:[%s15 + $0x10] sm:$0xff]
      %v5621 = vld [vmem:[%s15 + $0x18] sm:$0xf]
      %v5622 = vld [vmem:[%s15 + $0x1c] sm:$0xff]
      %v5623 = vld [vmem:[%s15 + $0x24] sm:$0xff]
      %v5624 = vld [vmem:[%s15 + $0x2c] sm:$0xff]
      %v5625 = vld [vmem:[%s15 + $0x34] sm:$0xf]
      %v5626 = vld [vmem:[%s15 + $0x38] sm:$0xff]
      %v5627 = vld [vmem:[%s15 + $0x40] sm:$0xff]
      %v5628 = vld [vmem:[%s15 + $0x48] sm:$0xff]
      %v5629 = vld [vmem:[%s15 + $0x50] sm:$0xf]
      %v5630 = vld [vmem:[%s15 + $0x54] sm:$0xff]
      %v5631 = vld [vmem:[%s15 + $0x5c] sm:$0xff]
      %v5632 = vld [vmem:[%s15 + $0x64] sm:$0xff]
      %v5633 = vld [vmem:[%s15 + $0x6c] sm:$0xf]
      %v5634 = vld [vmem:[%s15 + $0x70] sm:$0xff]
      %v5635 = vld [vmem:[%s15 + $0x78] sm:$0xff]
      %v5636 = vld [vmem:[%s15 + $0x80] sm:$0xff]
      %v5637 = vld [vmem:[%s15 + $0x88] sm:$0xf]
      %v5638 = vld [vmem:[%s15 + $0x8c] sm:$0xff]
      %v5639 = vld [vmem:[%s15 + $0x94] sm:$0xff]
      %v5640 = vld [vmem:[%s15 + $0x9c] sm:$0xff]
      %v5641 = vld [vmem:[%s15 + $0xa4] sm:$0xf]
      %v5642 = vld [vmem:[%s15 + $0xa8] sm:$0xff]
      %v5643 = vld [vmem:[%s15 + $0xb0] sm:$0xff]
      %v5644 = vld [vmem:[%s15 + $0xb8] sm:$0xff]
      %v5645 = vld [vmem:[%s15 + $0xc0] sm:$0xf]
      %v5646 = vld [vmem:[%s15 + $0xc4] sm:$0xff]
      %v5647 = vld [vmem:[%s15 + $0xcc] sm:$0xff]
      %v5648 = vld [vmem:[%s15 + $0xd4] sm:$0xff]
      %v5649 = vld [vmem:[%s15 + $0xdc] sm:$0xf]
      %v5650 = vld [vmem:[%s15 + $0xe0] sm:$0xff]
      %v5651 = vld [vmem:[%s15 + $0xe8] sm:$0xff]
      %v5652 = vld [vmem:[%s15 + $0xf0] sm:$0xff]
      %v5653 = vld [vmem:[%s15 + $0xf8] sm:$0xf]
      %v5654 = vld [vmem:[%s15 + $0xfc] sm:$0xff]
      %v5655 = vld [vmem:[%s15 + $0x104] sm:$0xff]
      %v5656 = vld [vmem:[%s15 + $0x10c] sm:$0xff]
      %v5657 = vld [vmem:[%s15 + $0x114] sm:$0xf]
      %v5658 = vld [vmem:[%s15 + $0x118] sm:$0xff]
      %v5659 = vld [vmem:[%s15 + $0x120] sm:$0xff]
      %v5660 = vld [vmem:[%s15 + $0x128] sm:$0xff]
      %v5661 = vld [vmem:[%s15 + $0x130] sm:$0xf]
      %v5662 = vld [vmem:[%s15 + $0x134] sm:$0xff]
      %v5663 = vld [vmem:[%s15 + $0x13c] sm:$0xff]
      %v5664 = vld [vmem:[%s15 + $0x144] sm:$0xff]
      %v5665 = vld [vmem:[%s15 + $0x14c] sm:$0xf]
      %v5666 = vld [vmem:[%s15 + $0x150] sm:$0xff]
      %v5667 = vld [vmem:[%s15 + $0x158] sm:$0xff]
      %v5668 = vld [vmem:[%s15 + $0x160] sm:$0xff]
      %v5669 = vld [vmem:[%s15 + $0x168] sm:$0xf]
      %v5670 = vld [vmem:[%s15 + $0x16c] sm:$0xff]
      %v5671 = vld [vmem:[%s15 + $0x174] sm:$0xff]
      %v5672 = vld [vmem:[%s15 + $0x17c] sm:$0xff]
      %v5673 = vld [vmem:[%s15 + $0x184] sm:$0xf]
      %v5674 = vld [vmem:[%s15 + $0x188] sm:$0xff]
      %v5675 = vld [vmem:[%s15 + $0x190] sm:$0xff]
      %v5676 = vld [vmem:[%s15 + $0x198] sm:$0xff]
      %v5677 = vld [vmem:[%s15 + $0x1a0] sm:$0xf]
      %v5678 = vld [vmem:[%s15 + $0x1a4] sm:$0xff]
      %v5679 = vld [vmem:[%s15 + $0x1ac] sm:$0xff]
      %v5680 = vld [vmem:[%s15 + $0x1b4] sm:$0xff]
      %v5681 = vld [vmem:[%s15 + $0x1bc] sm:$0xf]
      %v5682 = vld [vmem:[%s16] sm:$0x7f]
      %v5683 = vpack.c.bf16 %v5555, %v5554
      %v5684 = vpack.c.bf16 %v5557, %v5556
      %v5685 = vpack.c.bf16 %v5559, %v5558
      %v5686 = vpack.c.bf16 %v5561, %v5560
      %v5687 = vpack.c.bf16 %v5563, %v5562
      %v5688 = vpack.c.bf16 %v5565, %v5564
      %v5689 = vpack.c.bf16 %v5567, %v5566
      %v5690 = vpack.c.bf16 %v5569, %v5568
      %v5691 = vpack.c.bf16 %v5571, %v5570
      %v5692 = vpack.c.bf16 %v5573, %v5572
      %v5693 = vpack.c.bf16 %v5575, %v5574
      %v5694 = vpack.c.bf16 %v5577, %v5576
      %v5695 = vpack.c.bf16 %v5579, %v5578
      %v5696 = vpack.c.bf16 %v5581, %v5580
      %v5697 = vpack.c.bf16 %v5583, %v5582
      %v5698 = vpack.c.bf16 %v5585, %v5584
      %v5699 = vpack.c.bf16 %v5587, %v5586
      %v5700 = vpack.c.bf16 %v5589, %v5588
      %v5701 = vpack.c.bf16 %v5591, %v5590
      %v5702 = vpack.c.bf16 %v5593, %v5592
      %v5703 = vpack.c.bf16 %v5595, %v5594
      %v5704 = vpack.c.bf16 %v5597, %v5596
      %v5705 = vpack.c.bf16 %v5599, %v5598
      %v5706 = vpack.c.bf16 %v5601, %v5600
      %v5707 = vpack.c.bf16 %v5603, %v5602
      %v5708 = vpack.c.bf16 %v5605, %v5604
      %v5709 = vpack.c.bf16 %v5607, %v5606
      %v5710 = vpack.c.bf16 %v5609, %v5608
      %v5711 = vpack.c.bf16 %v5611, %v5610
      %v5712 = vpack.c.bf16 %v5613, %v5612
      %v5713 = vpack.c.bf16 %v5615, %v5614
      %v5714 = vpack.c.bf16 %v5617, %v5616
      %v5716 = vlaneseq
      %v5717 = vshrl.u32 %v5716, 7
      %v5718 = vsub.s32 0, %v5717
      %v5719 = vrot.slane %v5682, %v5718
      %v5720 = vlaneseq
      %v5721 = vshrl.u32 %v5720, 7
      %v5722 = vsub.s32 1, %v5721
      %v5723 = vrot.slane %v5682, %v5722
      %v5724 = vlaneseq
      %v5725 = vshrl.u32 %v5724, 7
      %v5726 = vsub.s32 2, %v5725
      %v5727 = vrot.slane %v5682, %v5726
      %v5728 = vlaneseq
      %v5729 = vshrl.u32 %v5728, 7
      %v5730 = vsub.s32 3, %v5729
      %v5731 = vrot.slane %v5682, %v5730
      %v5732 = vlaneseq
      %v5733 = vshrl.u32 %v5732, 7
      %v5734 = vsub.s32 4, %v5733
      %v5735 = vrot.slane %v5682, %v5734
      %v5736 = vlaneseq
      %v5737 = vshrl.u32 %v5736, 7
      %v5738 = vsub.s32 5, %v5737
      %v5739 = vrot.slane %v5682, %v5738
      %v5740 = vlaneseq
      %v5741 = vshrl.u32 %v5740, 7
      %v5742 = vsub.s32 6, %v5741
      %v5743 = vrot.slane %v5682, %v5742
      %v5815 = vunpack.c.l.b16 %v5618
      %v5816 = vunpack.c.h.b16 %v5618
      %v5817 = vunpack.c.l.b16 %v5619
      %v5818 = vunpack.c.h.b16 %v5619
      %v5819 = vunpack.c.l.b16 %v5620
      %v5820 = vunpack.c.h.b16 %v5620
      %v5821 = vunpack.c.l.b16 %v5621
      %v5822 = vunpack.c.l.b16 %v5622
      %v5823 = vunpack.c.h.b16 %v5622
      %v5824 = vunpack.c.l.b16 %v5623
      %v5825 = vunpack.c.h.b16 %v5623
      %v5826 = vunpack.c.l.b16 %v5624
      %v5827 = vunpack.c.h.b16 %v5624
      %v5828 = vunpack.c.l.b16 %v5625
      %v5829 = vunpack.c.l.b16 %v5626
      %v5830 = vunpack.c.h.b16 %v5626
      %v5831 = vunpack.c.l.b16 %v5627
      %v5832 = vunpack.c.h.b16 %v5627
      %v5833 = vunpack.c.l.b16 %v5628
      %v5834 = vunpack.c.h.b16 %v5628
      %v5835 = vunpack.c.l.b16 %v5629
      %v5836 = vunpack.c.l.b16 %v5630
      %v5837 = vunpack.c.h.b16 %v5630
      %v5838 = vunpack.c.l.b16 %v5631
      %v5839 = vunpack.c.h.b16 %v5631
      %v5840 = vunpack.c.l.b16 %v5632
      %v5841 = vunpack.c.h.b16 %v5632
      %v5842 = vunpack.c.l.b16 %v5633
      %v5843 = vunpack.c.l.b16 %v5634
      %v5844 = vunpack.c.h.b16 %v5634
      %v5845 = vunpack.c.l.b16 %v5635
      %v5846 = vunpack.c.h.b16 %v5635
      %v5847 = vunpack.c.l.b16 %v5636
      %v5848 = vunpack.c.h.b16 %v5636
      %v5849 = vunpack.c.l.b16 %v5637
      %v5850 = vunpack.c.l.b16 %v5638
      %v5851 = vunpack.c.h.b16 %v5638
      %v5852 = vunpack.c.l.b16 %v5639
      %v5853 = vunpack.c.h.b16 %v5639
      %v5854 = vunpack.c.l.b16 %v5640
      %v5855 = vunpack.c.h.b16 %v5640
      %v5856 = vunpack.c.l.b16 %v5641
      %v5857 = vunpack.c.l.b16 %v5642
      %v5858 = vunpack.c.h.b16 %v5642
      %v5859 = vunpack.c.l.b16 %v5643
      %v5860 = vunpack.c.h.b16 %v5643
      %v5861 = vunpack.c.l.b16 %v5644
      %v5862 = vunpack.c.h.b16 %v5644
      %v5863 = vunpack.c.l.b16 %v5645
      %v5864 = vunpack.c.l.b16 %v5646
      %v5865 = vunpack.c.h.b16 %v5646
      %v5866 = vunpack.c.l.b16 %v5647
      %v5867 = vunpack.c.h.b16 %v5647
      %v5868 = vunpack.c.l.b16 %v5648
      %v5869 = vunpack.c.h.b16 %v5648
      %v5870 = vunpack.c.l.b16 %v5649
      %v5871 = vunpack.c.l.b16 %v5650
      %v5872 = vunpack.c.h.b16 %v5650
      %v5873 = vunpack.c.l.b16 %v5651
      %v5874 = vunpack.c.h.b16 %v5651
      %v5875 = vunpack.c.l.b16 %v5652
      %v5876 = vunpack.c.h.b16 %v5652
      %v5877 = vunpack.c.l.b16 %v5653
      %v5878 = vunpack.c.l.b16 %v5654
      %v5879 = vunpack.c.h.b16 %v5654
      %v5880 = vunpack.c.l.b16 %v5655
      %v5881 = vunpack.c.h.b16 %v5655
      %v5882 = vunpack.c.l.b16 %v5656
      %v5883 = vunpack.c.h.b16 %v5656
      %v5884 = vunpack.c.l.b16 %v5657
      %v5885 = vunpack.c.l.b16 %v5658
      %v5886 = vunpack.c.h.b16 %v5658
      %v5887 = vunpack.c.l.b16 %v5659
      %v5888 = vunpack.c.h.b16 %v5659
      %v5889 = vunpack.c.l.b16 %v5660
      %v5890 = vunpack.c.h.b16 %v5660
      %v5891 = vunpack.c.l.b16 %v5661
      %v5892 = vunpack.c.l.b16 %v5662
      %v5893 = vunpack.c.h.b16 %v5662
      %v5894 = vunpack.c.l.b16 %v5663
      %v5895 = vunpack.c.h.b16 %v5663
      %v5896 = vunpack.c.l.b16 %v5664
      %v5897 = vunpack.c.h.b16 %v5664
      %v5898 = vunpack.c.l.b16 %v5665
      %v5899 = vunpack.c.l.b16 %v5666
      %v5900 = vunpack.c.h.b16 %v5666
      %v5901 = vunpack.c.l.b16 %v5667
      %v5902 = vunpack.c.h.b16 %v5667
      %v5903 = vunpack.c.l.b16 %v5668
      %v5904 = vunpack.c.h.b16 %v5668
      %v5905 = vunpack.c.l.b16 %v5669
      %v5906 = vunpack.c.l.b16 %v5670
      %v5907 = vunpack.c.h.b16 %v5670
      %v5908 = vunpack.c.l.b16 %v5671
      %v5909 = vunpack.c.h.b16 %v5671
      %v5910 = vunpack.c.l.b16 %v5672
      %v5911 = vunpack.c.h.b16 %v5672
      %v5912 = vunpack.c.l.b16 %v5673
      %v5913 = vunpack.c.l.b16 %v5674
      %v5914 = vunpack.c.h.b16 %v5674
      %v5915 = vunpack.c.l.b16 %v5675
      %v5916 = vunpack.c.h.b16 %v5675
      %v5917 = vunpack.c.l.b16 %v5676
      %v5918 = vunpack.c.h.b16 %v5676
      %v5919 = vunpack.c.l.b16 %v5677
      %v5920 = vunpack.c.l.b16 %v5678
      %v5921 = vunpack.c.h.b16 %v5678
      %v5922 = vunpack.c.l.b16 %v5679
      %v5923 = vunpack.c.h.b16 %v5679
      %v5924 = vunpack.c.l.b16 %v5680
      %v5925 = vunpack.c.h.b16 %v5680
      %v5926 = vunpack.c.l.b16 %v5681
      %v5927 = vpack.c.b16 %v5822, %v5815
      %v5928 = vpack.c.b16 %v5823, %v5816
      %v5929 = vpack.c.b16 %v5824, %v5817
      %v5930 = vpack.c.b16 %v5825, %v5818
      %v5931 = vpack.c.b16 %v5826, %v5819
      %v5932 = vpack.c.b16 %v5827, %v5820
      %v5933 = vpack.c.b16 %v5828, %v5821
      %v5934 = vpack.c.b16 %v5836, %v5829
      %v5935 = vpack.c.b16 %v5837, %v5830
      %v5936 = vpack.c.b16 %v5838, %v5831
      %v5937 = vpack.c.b16 %v5839, %v5832
      %v5938 = vpack.c.b16 %v5840, %v5833
      %v5939 = vpack.c.b16 %v5841, %v5834
      %v5940 = vpack.c.b16 %v5842, %v5835
      %v5941 = vpack.c.b16 %v5850, %v5843
      %v5942 = vpack.c.b16 %v5851, %v5844
      %v5943 = vpack.c.b16 %v5852, %v5845
      %v5944 = vpack.c.b16 %v5853, %v5846
      %v5945 = vpack.c.b16 %v5854, %v5847
      %v5946 = vpack.c.b16 %v5855, %v5848
      %v5947 = vpack.c.b16 %v5856, %v5849
      %v5948 = vpack.c.b16 %v5864, %v5857
      %v5949 = vpack.c.b16 %v5865, %v5858
      %v5950 = vpack.c.b16 %v5866, %v5859
      %v5951 = vpack.c.b16 %v5867, %v5860
      %v5952 = vpack.c.b16 %v5868, %v5861
      %v5953 = vpack.c.b16 %v5869, %v5862
      %v5954 = vpack.c.b16 %v5870, %v5863
      %v5955 = vpack.c.b16 %v5878, %v5871
      %v5956 = vpack.c.b16 %v5879, %v5872
      %v5957 = vpack.c.b16 %v5880, %v5873
      %v5958 = vpack.c.b16 %v5881, %v5874
      %v5959 = vpack.c.b16 %v5882, %v5875
      %v5960 = vpack.c.b16 %v5883, %v5876
      %v5961 = vpack.c.b16 %v5884, %v5877
      %v5962 = vpack.c.b16 %v5892, %v5885
      %v5963 = vpack.c.b16 %v5893, %v5886
      %v5964 = vpack.c.b16 %v5894, %v5887
      %v5965 = vpack.c.b16 %v5895, %v5888
      %v5966 = vpack.c.b16 %v5896, %v5889
      %v5967 = vpack.c.b16 %v5897, %v5890
      %v5968 = vpack.c.b16 %v5898, %v5891
      %v5969 = vpack.c.b16 %v5906, %v5899
      %v5970 = vpack.c.b16 %v5907, %v5900
      %v5971 = vpack.c.b16 %v5908, %v5901
      %v5972 = vpack.c.b16 %v5909, %v5902
      %v5973 = vpack.c.b16 %v5910, %v5903
      %v5974 = vpack.c.b16 %v5911, %v5904
      %v5975 = vpack.c.b16 %v5912, %v5905
      %v5976 = vpack.c.b16 %v5920, %v5913
      %v5977 = vpack.c.b16 %v5921, %v5914
      %v5978 = vpack.c.b16 %v5922, %v5915
      %v5979 = vpack.c.b16 %v5923, %v5916
      %v5980 = vpack.c.b16 %v5924, %v5917
      %v5981 = vpack.c.b16 %v5925, %v5918
      %v5982 = vpack.c.b16 %v5926, %v5919
      %6039 = vmatprep.subr.bf16.mxu0 %v5928
      %6040 = vmatpush1.bf16.msra.mxu0 %v5927
      %6041 = vmatprep.subr.bf16.mxu0 %v5935
      %6042 = vmatpush1.bf16.msra.mxu0 %v5934
      %6043 = vmatprep.subr.bf16.mxu0 %v5942
      %6044 = vmatpush1.bf16.msra.mxu0 %v5941
      %6045 = vmatprep.subr.bf16.mxu0 %v5949
      %6046 = vmatpush1.bf16.msra.mxu0 %v5948
      %6047 = vmatprep.subr.bf16.mxu0 %v5956
      %6048 = vmatpush1.bf16.msra.mxu0 %v5955
      %6049 = vmatprep.subr.bf16.mxu0 %v5963
      %6050 = vmatpush1.bf16.msra.mxu0 %v5962
      %6051 = vmatprep.subr.bf16.mxu0 %v5970
      %6052 = vmatpush1.bf16.msra.mxu0 %v5969
      %6053 = vmatprep.subr.bf16.mxu0 %v5977
      %6054 = vmatpush1.bf16.msra.mxu0 %v5976
      %6055 = vmatprep.subr.bf16.mxu0 0
      %6056 = vmatpush1.bf16.msra.mxu0 0
      %6057 = vmatprep.subr.bf16.mxu0 0
      %6058 = vmatpush1.bf16.msra.mxu0 0
      %6059 = vmatprep.subr.bf16.mxu0 0
      %6060 = vmatpush1.bf16.msra.mxu0 0
      %6061 = vmatprep.subr.bf16.mxu0 0
      %6062 = vmatpush1.bf16.msra.mxu0 0
      %6063 = vmatprep.subr.bf16.mxu0 0
      %6064 = vmatpush1.bf16.msra.mxu0 0
      %6065 = vmatprep.subr.bf16.mxu0 0
      %6066 = vmatpush1.bf16.msra.mxu0 0
      %6067 = vmatprep.subr.bf16.mxu0 0
      %6068 = vmatpush1.bf16.msra.mxu0 0
      %6069 = vmatprep.subr.bf16.mxu0 0
      %6070 = vmatpush1.bf16.msra.mxu0 0
      %6071 = vmatprep.mubr.bf16.mxu0 0
      %6072 = vmatmul.mubr.bf16.gmra.mrb[0].mxu0 %v5683
      %v6073 = vpop.f32.mrb[0].mxu0
      %v6074 = vadd.f32 %v5719, %v6073
      %v6075 = vpop.f32.mrb[0].mxu0
      %v6076 = vadd.f32 %v5723, %v6075
      %v6077 = vpop.f32.mrb[0].mxu0
      %v6078 = vadd.f32 %v5719, %v6077
      %v6079 = vpop.f32.mrb[0].mxu0
      %v6080 = vadd.f32 %v5723, %v6079
      %6081 = vmatprep.mubr.bf16.mxu0 0
      %6082 = vmatmul.mubr.bf16.gmra.mrb[0].mxu0 %v5684
      %v6083 = vpop.f32.mrb[0].mxu0
      %v6084 = vadd.f32 %v5719, %v6083
      %v6085 = vpop.f32.mrb[0].mxu0
      %v6086 = vadd.f32 %v5723, %v6085
      %v6087 = vpop.f32.mrb[0].mxu0
      %v6088 = vadd.f32 %v5719, %v6087
      %v6089 = vpop.f32.mrb[0].mxu0
      %v6090 = vadd.f32 %v5723, %v6089
      %6091 = vmatprep.mubr.bf16.mxu0 0
      %6092 = vmatmul.mubr.bf16.gmra.mrb[0].mxu0 %v5685
      %v6093 = vpop.f32.mrb[0].mxu0
      %v6094 = vadd.f32 %v5719, %v6093
      %v6095 = vpop.f32.mrb[0].mxu0
      %v6096 = vadd.f32 %v5723, %v6095
      %v6097 = vpop.f32.mrb[0].mxu0
      %v6098 = vadd.f32 %v5719, %v6097
      %v6099 = vpop.f32.mrb[0].mxu0
      %v6100 = vadd.f32 %v5723, %v6099
      %6101 = vmatprep.mubr.bf16.mxu0 0
      %6102 = vmatmul.mubr.bf16.gmra.mrb[0].mxu0 %v5686
      %v6103 = vpop.f32.mrb[0].mxu0
      %v6104 = vadd.f32 %v5719, %v6103
      %v6105 = vpop.f32.mrb[0].mxu0
      %v6106 = vadd.f32 %v5723, %v6105
      %v6107 = vpop.f32.mrb[0].mxu0
      %v6108 = vadd.f32 %v5719, %v6107
      %v6109 = vpop.f32.mrb[0].mxu0
      %v6110 = vadd.f32 %v5723, %v6109
      %6111 = vmatprep.mubr.bf16.mxu0 0
      %6112 = vmatmul.mubr.bf16.gmra.mrb[0].mxu0 %v5687
      %v6113 = vpop.f32.mrb[0].mxu0
      %v6114 = vadd.f32 %v5719, %v6113
      %v6115 = vpop.f32.mrb[0].mxu0
      %v6116 = vadd.f32 %v5723, %v6115
      %v6117 = vpop.f32.mrb[0].mxu0
      %v6118 = vadd.f32 %v5719, %v6117
      %v6119 = vpop.f32.mrb[0].mxu0
      %v6120 = vadd.f32 %v5723, %v6119
      %6121 = vmatprep.mubr.bf16.mxu0 0
      %6122 = vmatmul.mubr.bf16.gmra.mrb[0].mxu0 %v5688
      %v6123 = vpop.f32.mrb[0].mxu0
      %v6124 = vadd.f32 %v5719, %v6123
      %v6125 = vpop.f32.mrb[0].mxu0
      %v6126 = vadd.f32 %v5723, %v6125
      %v6127 = vpop.f32.mrb[0].mxu0
      %v6128 = vadd.f32 %v5719, %v6127
      %v6129 = vpop.f32.mrb[0].mxu0
      %v6130 = vadd.f32 %v5723, %v6129
      %6131 = vmatprep.mubr.bf16.mxu0 0
      %6132 = vmatmul.mubr.bf16.gmra.mrb[0].mxu0 %v5689
      %v6133 = vpop.f32.mrb[0].mxu0
      %v6134 = vadd.f32 %v5719, %v6133
      %v6135 = vpop.f32.mrb[0].mxu0
      %v6136 = vadd.f32 %v5723, %v6135
      %v6137 = vpop.f32.mrb[0].mxu0
      %v6138 = vadd.f32 %v5719, %v6137
      %v6139 = vpop.f32.mrb[0].mxu0
      %v6140 = vadd.f32 %v5723, %v6139
      %6141 = vmatprep.mubr.bf16.mxu0 0
      %6142 = vmatmul.mubr.bf16.gmra.mrb[0].mxu0 %v5690
      %v6143 = vpop.f32.mrb[0].mxu0
      %v6144 = vadd.f32 %v5719, %v6143
      %v6145 = vpop.f32.mrb[0].mxu0
      %v6146 = vadd.f32 %v5723, %v6145
      %v6147 = vpop.f32.mrb[0].mxu0
      %v6148 = vadd.f32 %v5719, %v6147
      %v6149 = vpop.f32.mrb[0].mxu0
      %v6150 = vadd.f32 %v5723, %v6149
      %6151 = vmatprep.mubr.bf16.mxu0 0
      %6152 = vmatmul.mubr.bf16.gmra.mrb[0].mxu0 %v5691
      %v6153 = vpop.f32.mrb[0].mxu0
      %v6154 = vadd.f32 %v5719, %v6153
      %v6155 = vpop.f32.mrb[0].mxu0
      %v6156 = vadd.f32 %v5723, %v6155
      %v6157 = vpop.f32.mrb[0].mxu0
      %v6158 = vadd.f32 %v5719, %v6157
      %v6159 = vpop.f32.mrb[0].mxu0
      %v6160 = vadd.f32 %v5723, %v6159
      %6161 = vmatprep.mubr.bf16.mxu0 0
      %6162 = vmatmul.mubr.bf16.gmra.mrb[0].mxu0 %v5692
      %v6163 = vpop.f32.mrb[0].mxu0
      %v6164 = vadd.f32 %v5719, %v6163
      %v6165 = vpop.f32.mrb[0].mxu0
      %v6166 = vadd.f32 %v5723, %v6165
      %v6167 = vpop.f32.mrb[0].mxu0
      %v6168 = vadd.f32 %v5719, %v6167
      %v6169 = vpop.f32.mrb[0].mxu0
      %v6170 = vadd.f32 %v5723, %v6169
      %6171 = vmatprep.mubr.bf16.mxu0 0
      %6172 = vmatmul.mubr.bf16.gmra.mrb[0].mxu0 %v5693
      %v6173 = vpop.f32.mrb[0].mxu0
      %v6174 = vadd.f32 %v5719, %v6173
      %v6175 = vpop.f32.mrb[0].mxu0
      %v6176 = vadd.f32 %v5723, %v6175
      %v6177 = vpop.f32.mrb[0].mxu0
      %v6178 = vadd.f32 %v5719, %v6177
      %v6179 = vpop.f32.mrb[0].mxu0
      %v6180 = vadd.f32 %v5723, %v6179
      %6181 = vmatprep.mubr.bf16.mxu0 0
      %6182 = vmatmul.mubr.bf16.gmra.mrb[0].mxu0 %v5694
      %v6183 = vpop.f32.mrb[0].mxu0
      %v6184 = vadd.f32 %v5719, %v6183
      %v6185 = vpop.f32.mrb[0].mxu0
      %v6186 = vadd.f32 %v5723, %v6185
      %v6187 = vpop.f32.mrb[0].mxu0
      %v6188 = vadd.f32 %v5719, %v6187
      %v6189 = vpop.f32.mrb[0].mxu0
      %v6190 = vadd.f32 %v5723, %v6189
      %6191 = vmatprep.mubr.bf16.mxu0 0
      %6192 = vmatmul.mubr.bf16.gmra.mrb[0].mxu0 %v5695
      %v6193 = vpop.f32.mrb[0].mxu0
      %v6194 = vadd.f32 %v5719, %v6193
      %v6195 = vpop.f32.mrb[0].mxu0
      %v6196 = vadd.f32 %v5723, %v6195
      %v6197 = vpop.f32.mrb[0].mxu0
      %v6198 = vadd.f32 %v5719, %v6197
      %v6199 = vpop.f32.mrb[0].mxu0
      %v6200 = vadd.f32 %v5723, %v6199
      %6201 = vmatprep.mubr.bf16.mxu0 0
      %6202 = vmatmul.mubr.bf16.gmra.mrb[0].mxu0 %v5696
      %v6203 = vpop.f32.mrb[0].mxu0
      %v6204 = vadd.f32 %v5719, %v6203
      %v6205 = vpop.f32.mrb[0].mxu0
      %v6206 = vadd.f32 %v5723, %v6205
      %v6207 = vpop.f32.mrb[0].mxu0
      %v6208 = vadd.f32 %v5719, %v6207
      %v6209 = vpop.f32.mrb[0].mxu0
      %v6210 = vadd.f32 %v5723, %v6209
      %6211 = vmatprep.mubr.bf16.mxu0 0
      %6212 = vmatmul.mubr.bf16.gmra.mrb[0].mxu0 %v5697
      %v6213 = vpop.f32.mrb[0].mxu0
      %v6214 = vadd.f32 %v5719, %v6213
      %v6215 = vpop.f32.mrb[0].mxu0
      %v6216 = vadd.f32 %v5723, %v6215
      %v6217 = vpop.f32.mrb[0].mxu0
      %v6218 = vadd.f32 %v5719, %v6217
      %v6219 = vpop.f32.mrb[0].mxu0
      %v6220 = vadd.f32 %v5723, %v6219
      %6221 = vmatprep.mubr.bf16.mxu0 0
      %6222 = vmatmul.mubr.bf16.gmra.mrb[0].mxu0 %v5698
      %v6223 = vpop.f32.mrb[0].mxu0
      %v6224 = vadd.f32 %v5719, %v6223
      %v6225 = vpop.f32.mrb[0].mxu0
      %v6226 = vadd.f32 %v5723, %v6225
      %v6227 = vpop.f32.mrb[0].mxu0
      %v6228 = vadd.f32 %v5719, %v6227
      %v6229 = vpop.f32.mrb[0].mxu0
      %v6230 = vadd.f32 %v5723, %v6229
      %6231 = vmatprep.mubr.bf16.mxu0 0
      %6232 = vmatmul.mubr.bf16.gmra.mrb[0].mxu0 %v5699
      %v6233 = vpop.f32.mrb[0].mxu0
      %v6234 = vadd.f32 %v5719, %v6233
      %v6235 = vpop.f32.mrb[0].mxu0
      %v6236 = vadd.f32 %v5723, %v6235
      %v6237 = vpop.f32.mrb[0].mxu0
      %v6238 = vadd.f32 %v5719, %v6237
      %v6239 = vpop.f32.mrb[0].mxu0
      %v6240 = vadd.f32 %v5723, %v6239
      %6241 = vmatprep.mubr.bf16.mxu0 0
      %6242 = vmatmul.mubr.bf16.gmra.mrb[0].mxu0 %v5700
      %v6243 = vpop.f32.mrb[0].mxu0
      %v6244 = vadd.f32 %v5719, %v6243
      %v6245 = vpop.f32.mrb[0].mxu0
      %v6246 = vadd.f32 %v5723, %v6245
      %v6247 = vpop.f32.mrb[0].mxu0
      %v6248 = vadd.f32 %v5719, %v6247
      %v6249 = vpop.f32.mrb[0].mxu0
      %v6250 = vadd.f32 %v5723, %v6249
      %6251 = vmatprep.mubr.bf16.mxu0 0
      %6252 = vmatmul.mubr.bf16.gmra.mrb[0].mxu0 %v5701
      %v6253 = vpop.f32.mrb[0].mxu0
      %v6254 = vadd.f32 %v5719, %v6253
      %v6255 = vpop.f32.mrb[0].mxu0
      %v6256 = vadd.f32 %v5723, %v6255
      %v6257 = vpop.f32.mrb[0].mxu0
      %v6258 = vadd.f32 %v5719, %v6257
      %v6259 = vpop.f32.mrb[0].mxu0
      %v6260 = vadd.f32 %v5723, %v6259
      %6261 = vmatprep.mubr.bf16.mxu0 0
      %6262 = vmatmul.mubr.bf16.gmra.mrb[0].mxu0 %v5702
      %v6263 = vpop.f32.mrb[0].mxu0
      %v6264 = vadd.f32 %v5719, %v6263
      %v6265 = vpop.f32.mrb[0].mxu0
      %v6266 = vadd.f32 %v5723, %v6265
      %v6267 = vpop.f32.mrb[0].mxu0
      %v6268 = vadd.f32 %v5719, %v6267
      %v6269 = vpop.f32.mrb[0].mxu0
      %v6270 = vadd.f32 %v5723, %v6269
      %6271 = vmatprep.mubr.bf16.mxu0 0
      %6272 = vmatmul.mubr.bf16.gmra.mrb[0].mxu0 %v5703
      %v6273 = vpop.f32.mrb[0].mxu0
      %v6274 = vadd.f32 %v5719, %v6273
      %v6275 = vpop.f32.mrb[0].mxu0
      %v6276 = vadd.f32 %v5723, %v6275
      %v6277 = vpop.f32.mrb[0].mxu0
      %v6278 = vadd.f32 %v5719, %v6277
      %v6279 = vpop.f32.mrb[0].mxu0
      %v6280 = vadd.f32 %v5723, %v6279
      %6281 = vmatprep.mubr.bf16.mxu0 0
      %6282 = vmatmul.mubr.bf16.gmra.mrb[0].mxu0 %v5704
      %v6283 = vpop.f32.mrb[0].mxu0
      %v6284 = vadd.f32 %v5719, %v6283
      %v6285 = vpop.f32.mrb[0].mxu0
      %v6286 = vadd.f32 %v5723, %v6285
      %v6287 = vpop.f32.mrb[0].mxu0
      %v6288 = vadd.f32 %v5719, %v6287
      %v6289 = vpop.f32.mrb[0].mxu0
      %v6290 = vadd.f32 %v5723, %v6289
      %6291 = vmatprep.mubr.bf16.mxu0 0
      %6292 = vmatmul.mubr.bf16.gmra.mrb[0].mxu0 %v5705
      %v6293 = vpop.f32.mrb[0].mxu0
      %v6294 = vadd.f32 %v5719, %v6293
      %v6295 = vpop.f32.mrb[0].mxu0
      %v6296 = vadd.f32 %v5723, %v6295
      %v6297 = vpop.f32.mrb[0].mxu0
      %v6298 = vadd.f32 %v5719, %v6297
      %v6299 = vpop.f32.mrb[0].mxu0
      %v6300 = vadd.f32 %v5723, %v6299
      %6301 = vmatprep.mubr.bf16.mxu0 0
      %6302 = vmatmul.mubr.bf16.gmra.mrb[0].mxu0 %v5706
      %v6303 = vpop.f32.mrb[0].mxu0
      %v6304 = vadd.f32 %v5719, %v6303
      %v6305 = vpop.f32.mrb[0].mxu0
      %v6306 = vadd.f32 %v5723, %v6305
      %v6307 = vpop.f32.mrb[0].mxu0
      %v6308 = vadd.f32 %v5719, %v6307
      %v6309 = vpop.f32.mrb[0].mxu0
      %v6310 = vadd.f32 %v5723, %v6309
      %6311 = vmatprep.mubr.bf16.mxu0 0
      %6312 = vmatmul.mubr.bf16.gmra.mrb[0].mxu0 %v5707
      %v6313 = vpop.f32.mrb[0].mxu0
      %v6314 = vadd.f32 %v5719, %v6313
      %v6315 = vpop.f32.mrb[0].mxu0
      %v6316 = vadd.f32 %v5723, %v6315
      %v6317 = vpop.f32.mrb[0].mxu0
      %v6318 = vadd.f32 %v5719, %v6317
      %v6319 = vpop.f32.mrb[0].mxu0
      %v6320 = vadd.f32 %v5723, %v6319
      %6321 = vmatprep.mubr.bf16.mxu0 0
      %6322 = vmatmul.mubr.bf16.gmra.mrb[0].mxu0 %v5708
      %v6323 = vpop.f32.mrb[0].mxu0
      %v6324 = vadd.f32 %v5719, %v6323
      %v6325 = vpop.f32.mrb[0].mxu0
      %v6326 = vadd.f32 %v5723, %v6325
      %v6327 = vpop.f32.mrb[0].mxu0
      %v6328 = vadd.f32 %v5719, %v6327
      %v6329 = vpop.f32.mrb[0].mxu0
      %v6330 = vadd.f32 %v5723, %v6329
      %6331 = vmatprep.mubr.bf16.mxu0 0
      %6332 = vmatmul.mubr.bf16.gmra.mrb[0].mxu0 %v5709
      %v6333 = vpop.f32.mrb[0].mxu0
      %v6334 = vadd.f32 %v5719, %v6333
      %v6335 = vpop.f32.mrb[0].mxu0
      %v6336 = vadd.f32 %v5723, %v6335
      %v6337 = vpop.f32.mrb[0].mxu0
      %v6338 = vadd.f32 %v5719, %v6337
      %v6339 = vpop.f32.mrb[0].mxu0
      %v6340 = vadd.f32 %v5723, %v6339
      %6341 = vmatprep.mubr.bf16.mxu0 0
      %6342 = vmatmul.mubr.bf16.gmra.mrb[0].mxu0 %v5710
      %v6343 = vpop.f32.mrb[0].mxu0
      %v6344 = vadd.f32 %v5719, %v6343
      %v6345 = vpop.f32.mrb[0].mxu0
      %v6346 = vadd.f32 %v5723, %v6345
      %v6347 = vpop.f32.mrb[0].mxu0
      %v6348 = vadd.f32 %v5719, %v6347
      %v6349 = vpop.f32.mrb[0].mxu0
      %v6350 = vadd.f32 %v5723, %v6349
      %6351 = vmatprep.mubr.bf16.mxu0 0
      %6352 = vmatmul.mubr.bf16.gmra.mrb[0].mxu0 %v5711
      %v6353 = vpop.f32.mrb[0].mxu0
      %v6354 = vadd.f32 %v5719, %v6353
      %v6355 = vpop.f32.mrb[0].mxu0
      %v6356 = vadd.f32 %v5723, %v6355
      %v6357 = vpop.f32.mrb[0].mxu0
      %v6358 = vadd.f32 %v5719, %v6357
      %v6359 = vpop.f32.mrb[0].mxu0
      %v6360 = vadd.f32 %v5723, %v6359
      %6361 = vmatprep.mubr.bf16.mxu0 0
      %6362 = vmatmul.mubr.bf16.gmra.mrb[0].mxu0 %v5712
      %v6363 = vpop.f32.mrb[0].mxu0
      %v6364 = vadd.f32 %v5719, %v6363
      %v6365 = vpop.f32.mrb[0].mxu0
      %v6366 = vadd.f32 %v5723, %v6365
      %v6367 = vpop.f32.mrb[0].mxu0
      %v6368 = vadd.f32 %v5719, %v6367
      %v6369 = vpop.f32.mrb[0].mxu0
      %v6370 = vadd.f32 %v5723, %v6369
      %6371 = vmatprep.mubr.bf16.mxu0 0
      %6372 = vmatmul.mubr.bf16.gmra.mrb[0].mxu0 %v5713
      %v6373 = vpop.f32.mrb[0].mxu0
      %v6374 = vadd.f32 %v5719, %v6373
      %v6375 = vpop.f32.mrb[0].mxu0
      %v6376 = vadd.f32 %v5723, %v6375
      %v6377 = vpop.f32.mrb[0].mxu0
      %v6378 = vadd.f32 %v5719, %v6377
      %v6379 = vpop.f32.mrb[0].mxu0
      %v6380 = vadd.f32 %v5723, %v6379
      %6381 = vmatprep.mubr.bf16.mxu0 0
      %6382 = vmatmul.mubr.bf16.gmra.mrb[0].mxu0 %v5714
      %v6383 = vpop.f32.mrb[0].mxu0
      %v6384 = vadd.f32 %v5719, %v6383
      %v6385 = vpop.f32.mrb[0].mxu0
      %v6386 = vadd.f32 %v5723, %v6385
      %v6387 = vpop.f32.mrb[0].mxu0
      %v6388 = vadd.f32 %v5719, %v6387
      %v6389 = vpop.f32.mrb[0].mxu0
      %v6390 = vadd.f32 %v5723, %v6389
      %6391 = vdwg.mxu0
      %6392 = vmatprep.subr.bf16.mxu0 %v5930
      %6393 = vmatpush1.bf16.msra.mxu0 %v5929
      %6394 = vmatprep.subr.bf16.mxu0 %v5937
      %6395 = vmatpush1.bf16.msra.mxu0 %v5936
      %6396 = vmatprep.subr.bf16.mxu0 %v5944
      %6397 = vmatpush1.bf16.msra.mxu0 %v5943
      %6398 = vmatprep.subr.bf16.mxu0 %v5951
      %6399 = vmatpush1.bf16.msra.mxu0 %v5950
      %6400 = vmatprep.subr.bf16.mxu0 %v5958
      %6401 = vmatpush1.bf16.msra.mxu0 %v5957
      %6402 = vmatprep.subr.bf16.mxu0 %v5965
      %6403 = vmatpush1.bf16.msra.mxu0 %v5964
      %6404 = vmatprep.subr.bf16.mxu0 %v5972
      %6405 = vmatpush1.bf16.msra.mxu0 %v5971
      %6406 = vmatprep.subr.bf16.mxu0 %v5979
      %6407 = vmatpush1.bf16.msra.mxu0 %v5978
      %6408 = vmatprep.subr.bf16.mxu0 0
      %6409 = vmatpush1.bf16.msra.mxu0 0
      %6410 = vmatprep.subr.bf16.mxu0 0
      %6411 = vmatpush1.bf16.msra.mxu0 0
      %6412 = vmatprep.subr.bf16.mxu0 0
      %6413 = vmatpush1.bf16.msra.mxu0 0
      %6414 = vmatprep.subr.bf16.mxu0 0
      %6415 = vmatpush1.bf16.msra.mxu0 0
      %6416 = vmatprep.subr.bf16.mxu0 0
      %6417 = vmatpush1.bf16.msra.mxu0 0
      %6418 = vmatprep.subr.bf16.mxu0 0
      %6419 = vmatpush1.bf16.msra.mxu0 0
      %6420 = vmatprep.subr.bf16.mxu0 0
      %6421 = vmatpush1.bf16.msra.mxu0 0
      %6422 = vmatprep.subr.bf16.mxu0 0
      %6423 = vmatpush1.bf16.msra.mxu0 0
      %6424 = vmatprep.mubr.bf16.mxu0 0
      %6425 = vmatmul.mubr.bf16.gmra.mrb[0].mxu0 %v5683
      %v6426 = vpop.f32.mrb[0].mxu0
      %v6427 = vadd.f32 %v5727, %v6426
      %v6428 = vpop.f32.mrb[0].mxu0
      %v6429 = vadd.f32 %v5731, %v6428
      %v6430 = vpop.f32.mrb[0].mxu0
      %v6431 = vadd.f32 %v5727, %v6430
      %v6432 = vpop.f32.mrb[0].mxu0
      %v6433 = vadd.f32 %v5731, %v6432
      %6434 = vmatprep.mubr.bf16.mxu0 0
      %6435 = vmatmul.mubr.bf16.gmra.mrb[0].mxu0 %v5684
      %v6436 = vpop.f32.mrb[0].mxu0
      %v6437 = vadd.f32 %v5727, %v6436
      %v6438 = vpop.f32.mrb[0].mxu0
      %v6439 = vadd.f32 %v5731, %v6438
      %v6440 = vpop.f32.mrb[0].mxu0
      %v6441 = vadd.f32 %v5727, %v6440
      %v6442 = vpop.f32.mrb[0].mxu0
      %v6443 = vadd.f32 %v5731, %v6442
      %6444 = vmatprep.mubr.bf16.mxu0 0
      %6445 = vmatmul.mubr.bf16.gmra.mrb[0].mxu0 %v5685
      %v6446 = vpop.f32.mrb[0].mxu0
      %v6447 = vadd.f32 %v5727, %v6446
      %v6448 = vpop.f32.mrb[0].mxu0
      %v6449 = vadd.f32 %v5731, %v6448
      %v6450 = vpop.f32.mrb[0].mxu0
      %v6451 = vadd.f32 %v5727, %v6450
      %v6452 = vpop.f32.mrb[0].mxu0
      %v6453 = vadd.f32 %v5731, %v6452
      %6454 = vmatprep.mubr.bf16.mxu0 0
      %6455 = vmatmul.mubr.bf16.gmra.mrb[0].mxu0 %v5686
      %v6456 = vpop.f32.mrb[0].mxu0
      %v6457 = vadd.f32 %v5727, %v6456
      %v6458 = vpop.f32.mrb[0].mxu0
      %v6459 = vadd.f32 %v5731, %v6458
      %v6460 = vpop.f32.mrb[0].mxu0
      %v6461 = vadd.f32 %v5727, %v6460
      %v6462 = vpop.f32.mrb[0].mxu0
      %v6463 = vadd.f32 %v5731, %v6462
      %6464 = vmatprep.mubr.bf16.mxu0 0
      %6465 = vmatmul.mubr.bf16.gmra.mrb[0].mxu0 %v5687
      %v6466 = vpop.f32.mrb[0].mxu0
      %v6467 = vadd.f32 %v5727, %v6466
      %v6468 = vpop.f32.mrb[0].mxu0
      %v6469 = vadd.f32 %v5731, %v6468
      %v6470 = vpop.f32.mrb[0].mxu0
      %v6471 = vadd.f32 %v5727, %v6470
      %v6472 = vpop.f32.mrb[0].mxu0
      %v6473 = vadd.f32 %v5731, %v6472
      %6474 = vmatprep.mubr.bf16.mxu0 0
      %6475 = vmatmul.mubr.bf16.gmra.mrb[0].mxu0 %v5688
      %v6476 = vpop.f32.mrb[0].mxu0
      %v6477 = vadd.f32 %v5727, %v6476
      %v6478 = vpop.f32.mrb[0].mxu0
      %v6479 = vadd.f32 %v5731, %v6478
      %v6480 = vpop.f32.mrb[0].mxu0
      %v6481 = vadd.f32 %v5727, %v6480
      %v6482 = vpop.f32.mrb[0].mxu0
      %v6483 = vadd.f32 %v5731, %v6482
      %6484 = vmatprep.mubr.bf16.mxu0 0
      %6485 = vmatmul.mubr.bf16.gmra.mrb[0].mxu0 %v5689
      %v6486 = vpop.f32.mrb[0].mxu0
      %v6487 = vadd.f32 %v5727, %v6486
      %v6488 = vpop.f32.mrb[0].mxu0
      %v6489 = vadd.f32 %v5731, %v6488
      %v6490 = vpop.f32.mrb[0].mxu0
      %v6491 = vadd.f32 %v5727, %v6490
      %v6492 = vpop.f32.mrb[0].mxu0
      %v6493 = vadd.f32 %v5731, %v6492
      %6494 = vmatprep.mubr.bf16.mxu0 0
      %6495 = vmatmul.mubr.bf16.gmra.mrb[0].mxu0 %v5690
      %v6496 = vpop.f32.mrb[0].mxu0
      %v6497 = vadd.f32 %v5727, %v6496
      %v6498 = vpop.f32.mrb[0].mxu0
      %v6499 = vadd.f32 %v5731, %v6498
      %v6500 = vpop.f32.mrb[0].mxu0
      %v6501 = vadd.f32 %v5727, %v6500
      %v6502 = vpop.f32.mrb[0].mxu0
      %v6503 = vadd.f32 %v5731, %v6502
      %6504 = vmatprep.mubr.bf16.mxu0 0
      %6505 = vmatmul.mubr.bf16.gmra.mrb[0].mxu0 %v5691
      %v6506 = vpop.f32.mrb[0].mxu0
      %v6507 = vadd.f32 %v5727, %v6506
      %v6508 = vpop.f32.mrb[0].mxu0
      %v6509 = vadd.f32 %v5731, %v6508
      %v6510 = vpop.f32.mrb[0].mxu0
      %v6511 = vadd.f32 %v5727, %v6510
      %v6512 = vpop.f32.mrb[0].mxu0
      %v6513 = vadd.f32 %v5731, %v6512
      %6514 = vmatprep.mubr.bf16.mxu0 0
      %6515 = vmatmul.mubr.bf16.gmra.mrb[0].mxu0 %v5692
      %v6516 = vpop.f32.mrb[0].mxu0
      %v6517 = vadd.f32 %v5727, %v6516
      %v6518 = vpop.f32.mrb[0].mxu0
      %v6519 = vadd.f32 %v5731, %v6518
      %v6520 = vpop.f32.mrb[0].mxu0
      %v6521 = vadd.f32 %v5727, %v6520
      %v6522 = vpop.f32.mrb[0].mxu0
      %v6523 = vadd.f32 %v5731, %v6522
      %6524 = vmatprep.mubr.bf16.mxu0 0
      %6525 = vmatmul.mubr.bf16.gmra.mrb[0].mxu0 %v5693
      %v6526 = vpop.f32.mrb[0].mxu0
      %v6527 = vadd.f32 %v5727, %v6526
      %v6528 = vpop.f32.mrb[0].mxu0
      %v6529 = vadd.f32 %v5731, %v6528
      %v6530 = vpop.f32.mrb[0].mxu0
      %v6531 = vadd.f32 %v5727, %v6530
      %v6532 = vpop.f32.mrb[0].mxu0
      %v6533 = vadd.f32 %v5731, %v6532
      %6534 = vmatprep.mubr.bf16.mxu0 0
      %6535 = vmatmul.mubr.bf16.gmra.mrb[0].mxu0 %v5694
      %v6536 = vpop.f32.mrb[0].mxu0
      %v6537 = vadd.f32 %v5727, %v6536
      %v6538 = vpop.f32.mrb[0].mxu0
      %v6539 = vadd.f32 %v5731, %v6538
      %v6540 = vpop.f32.mrb[0].mxu0
      %v6541 = vadd.f32 %v5727, %v6540
      %v6542 = vpop.f32.mrb[0].mxu0
      %v6543 = vadd.f32 %v5731, %v6542
      %6544 = vmatprep.mubr.bf16.mxu0 0
      %6545 = vmatmul.mubr.bf16.gmra.mrb[0].mxu0 %v5695
      %v6546 = vpop.f32.mrb[0].mxu0
      %v6547 = vadd.f32 %v5727, %v6546
      %v6548 = vpop.f32.mrb[0].mxu0
      %v6549 = vadd.f32 %v5731, %v6548
      %v6550 = vpop.f32.mrb[0].mxu0
      %v6551 = vadd.f32 %v5727, %v6550
      %v6552 = vpop.f32.mrb[0].mxu0
      %v6553 = vadd.f32 %v5731, %v6552
      %6554 = vmatprep.mubr.bf16.mxu0 0
      %6555 = vmatmul.mubr.bf16.gmra.mrb[0].mxu0 %v5696
      %v6556 = vpop.f32.mrb[0].mxu0
      %v6557 = vadd.f32 %v5727, %v6556
      %v6558 = vpop.f32.mrb[0].mxu0
      %v6559 = vadd.f32 %v5731, %v6558
      %v6560 = vpop.f32.mrb[0].mxu0
      %v6561 = vadd.f32 %v5727, %v6560
      %v6562 = vpop.f32.mrb[0].mxu0
      %v6563 = vadd.f32 %v5731, %v6562
      %6564 = vmatprep.mubr.bf16.mxu0 0
      %6565 = vmatmul.mubr.bf16.gmra.mrb[0].mxu0 %v5697
      %v6566 = vpop.f32.mrb[0].mxu0
      %v6567 = vadd.f32 %v5727, %v6566
      %v6568 = vpop.f32.mrb[0].mxu0
      %v6569 = vadd.f32 %v5731, %v6568
      %v6570 = vpop.f32.mrb[0].mxu0
      %v6571 = vadd.f32 %v5727, %v6570
      %v6572 = vpop.f32.mrb[0].mxu0
      %v6573 = vadd.f32 %v5731, %v6572
      %6574 = vmatprep.mubr.bf16.mxu0 0
      %6575 = vmatmul.mubr.bf16.gmra.mrb[0].mxu0 %v5698
      %v6576 = vpop.f32.mrb[0].mxu0
      %v6577 = vadd.f32 %v5727, %v6576
      %v6578 = vpop.f32.mrb[0].mxu0
      %v6579 = vadd.f32 %v5731, %v6578
      %v6580 = vpop.f32.mrb[0].mxu0
      %v6581 = vadd.f32 %v5727, %v6580
      %v6582 = vpop.f32.mrb[0].mxu0
      %v6583 = vadd.f32 %v5731, %v6582
      %6584 = vmatprep.mubr.bf16.mxu0 0
      %6585 = vmatmul.mubr.bf16.gmra.mrb[0].mxu0 %v5699
      %v6586 = vpop.f32.mrb[0].mxu0
      %v6587 = vadd.f32 %v5727, %v6586
      %v6588 = vpop.f32.mrb[0].mxu0
      %v6589 = vadd.f32 %v5731, %v6588
      %v6590 = vpop.f32.mrb[0].mxu0
      %v6591 = vadd.f32 %v5727, %v6590
      %v6592 = vpop.f32.mrb[0].mxu0
      %v6593 = vadd.f32 %v5731, %v6592
      %6594 = vmatprep.mubr.bf16.mxu0 0
      %6595 = vmatmul.mubr.bf16.gmra.mrb[0].mxu0 %v5700
      %v6596 = vpop.f32.mrb[0].mxu0
      %v6597 = vadd.f32 %v5727, %v6596
      %v6598 = vpop.f32.mrb[0].mxu0
      %v6599 = vadd.f32 %v5731, %v6598
      %v6600 = vpop.f32.mrb[0].mxu0
      %v6601 = vadd.f32 %v5727, %v6600
      %v6602 = vpop.f32.mrb[0].mxu0
      %v6603 = vadd.f32 %v5731, %v6602
      %6604 = vmatprep.mubr.bf16.mxu0 0
      %6605 = vmatmul.mubr.bf16.gmra.mrb[0].mxu0 %v5701
      %v6606 = vpop.f32.mrb[0].mxu0
      %v6607 = vadd.f32 %v5727, %v6606
      %v6608 = vpop.f32.mrb[0].mxu0
      %v6609 = vadd.f32 %v5731, %v6608
      %v6610 = vpop.f32.mrb[0].mxu0
      %v6611 = vadd.f32 %v5727, %v6610
      %v6612 = vpop.f32.mrb[0].mxu0
      %v6613 = vadd.f32 %v5731, %v6612
      %6614 = vmatprep.mubr.bf16.mxu0 0
      %6615 = vmatmul.mubr.bf16.gmra.mrb[0].mxu0 %v5702
      %v6616 = vpop.f32.mrb[0].mxu0
      %v6617 = vadd.f32 %v5727, %v6616
      %v6618 = vpop.f32.mrb[0].mxu0
      %v6619 = vadd.f32 %v5731, %v6618
      %v6620 = vpop.f32.mrb[0].mxu0
      %v6621 = vadd.f32 %v5727, %v6620
      %v6622 = vpop.f32.mrb[0].mxu0
      %v6623 = vadd.f32 %v5731, %v6622
      %6624 = vmatprep.mubr.bf16.mxu0 0
      %6625 = vmatmul.mubr.bf16.gmra.mrb[0].mxu0 %v5703
      %v6626 = vpop.f32.mrb[0].mxu0
      %v6627 = vadd.f32 %v5727, %v6626
      %v6628 = vpop.f32.mrb[0].mxu0
      %v6629 = vadd.f32 %v5731, %v6628
      %v6630 = vpop.f32.mrb[0].mxu0
      %v6631 = vadd.f32 %v5727, %v6630
      %v6632 = vpop.f32.mrb[0].mxu0
      %v6633 = vadd.f32 %v5731, %v6632
      %6634 = vmatprep.mubr.bf16.mxu0 0
      %6635 = vmatmul.mubr.bf16.gmra.mrb[0].mxu0 %v5704
      %v6636 = vpop.f32.mrb[0].mxu0
      %v6637 = vadd.f32 %v5727, %v6636
      %v6638 = vpop.f32.mrb[0].mxu0
      %v6639 = vadd.f32 %v5731, %v6638
      %v6640 = vpop.f32.mrb[0].mxu0
      %v6641 = vadd.f32 %v5727, %v6640
      %v6642 = vpop.f32.mrb[0].mxu0
      %v6643 = vadd.f32 %v5731, %v6642
      %6644 = vmatprep.mubr.bf16.mxu0 0
      %6645 = vmatmul.mubr.bf16.gmra.mrb[0].mxu0 %v5705
      %v6646 = vpop.f32.mrb[0].mxu0
      %v6647 = vadd.f32 %v5727, %v6646
      %v6648 = vpop.f32.mrb[0].mxu0
      %v6649 = vadd.f32 %v5731, %v6648
      %v6650 = vpop.f32.mrb[0].mxu0
      %v6651 = vadd.f32 %v5727, %v6650
      %v6652 = vpop.f32.mrb[0].mxu0
      %v6653 = vadd.f32 %v5731, %v6652
      %6654 = vmatprep.mubr.bf16.mxu0 0
      %6655 = vmatmul.mubr.bf16.gmra.mrb[0].mxu0 %v5706
      %v6656 = vpop.f32.mrb[0].mxu0
      %v6657 = vadd.f32 %v5727, %v6656
      %v6658 = vpop.f32.mrb[0].mxu0
      %v6659 = vadd.f32 %v5731, %v6658
      %v6660 = vpop.f32.mrb[0].mxu0
      %v6661 = vadd.f32 %v5727, %v6660
      %v6662 = vpop.f32.mrb[0].mxu0
      %v6663 = vadd.f32 %v5731, %v6662
      %6664 = vmatprep.mubr.bf16.mxu0 0
      %6665 = vmatmul.mubr.bf16.gmra.mrb[0].mxu0 %v5707
      %v6666 = vpop.f32.mrb[0].mxu0
      %v6667 = vadd.f32 %v5727, %v6666
      %v6668 = vpop.f32.mrb[0].mxu0
      %v6669 = vadd.f32 %v5731, %v6668
      %v6670 = vpop.f32.mrb[0].mxu0
      %v6671 = vadd.f32 %v5727, %v6670
      %v6672 = vpop.f32.mrb[0].mxu0
      %v6673 = vadd.f32 %v5731, %v6672
      %6674 = vmatprep.mubr.bf16.mxu0 0
      %6675 = vmatmul.mubr.bf16.gmra.mrb[0].mxu0 %v5708
      %v6676 = vpop.f32.mrb[0].mxu0
      %v6677 = vadd.f32 %v5727, %v6676
      %v6678 = vpop.f32.mrb[0].mxu0
      %v6679 = vadd.f32 %v5731, %v6678
      %v6680 = vpop.f32.mrb[0].mxu0
      %v6681 = vadd.f32 %v5727, %v6680
      %v6682 = vpop.f32.mrb[0].mxu0
      %v6683 = vadd.f32 %v5731, %v6682
      %6684 = vmatprep.mubr.bf16.mxu0 0
      %6685 = vmatmul.mubr.bf16.gmra.mrb[0].mxu0 %v5709
      %v6686 = vpop.f32.mrb[0].mxu0
      %v6687 = vadd.f32 %v5727, %v6686
      %v6688 = vpop.f32.mrb[0].mxu0
      %v6689 = vadd.f32 %v5731, %v6688
      %v6690 = vpop.f32.mrb[0].mxu0
      %v6691 = vadd.f32 %v5727, %v6690
      %v6692 = vpop.f32.mrb[0].mxu0
      %v6693 = vadd.f32 %v5731, %v6692
      %6694 = vmatprep.mubr.bf16.mxu0 0
      %6695 = vmatmul.mubr.bf16.gmra.mrb[0].mxu0 %v5710
      %v6696 = vpop.f32.mrb[0].mxu0
      %v6697 = vadd.f32 %v5727, %v6696
      %v6698 = vpop.f32.mrb[0].mxu0
      %v6699 = vadd.f32 %v5731, %v6698
      %v6700 = vpop.f32.mrb[0].mxu0
      %v6701 = vadd.f32 %v5727, %v6700
      %v6702 = vpop.f32.mrb[0].mxu0
      %v6703 = vadd.f32 %v5731, %v6702
      %6704 = vmatprep.mubr.bf16.mxu0 0
      %6705 = vmatmul.mubr.bf16.gmra.mrb[0].mxu0 %v5711
      %v6706 = vpop.f32.mrb[0].mxu0
      %v6707 = vadd.f32 %v5727, %v6706
      %v6708 = vpop.f32.mrb[0].mxu0
      %v6709 = vadd.f32 %v5731, %v6708
      %v6710 = vpop.f32.mrb[0].mxu0
      %v6711 = vadd.f32 %v5727, %v6710
      %v6712 = vpop.f32.mrb[0].mxu0
      %v6713 = vadd.f32 %v5731, %v6712
      %6714 = vmatprep.mubr.bf16.mxu0 0
      %6715 = vmatmul.mubr.bf16.gmra.mrb[0].mxu0 %v5712
      %v6716 = vpop.f32.mrb[0].mxu0
      %v6717 = vadd.f32 %v5727, %v6716
      %v6718 = vpop.f32.mrb[0].mxu0
      %v6719 = vadd.f32 %v5731, %v6718
      %v6720 = vpop.f32.mrb[0].mxu0
      %v6721 = vadd.f32 %v5727, %v6720
      %v6722 = vpop.f32.mrb[0].mxu0
      %v6723 = vadd.f32 %v5731, %v6722
      %6724 = vmatprep.mubr.bf16.mxu0 0
      %6725 = vmatmul.mubr.bf16.gmra.mrb[0].mxu0 %v5713
      %v6726 = vpop.f32.mrb[0].mxu0
      %v6727 = vadd.f32 %v5727, %v6726
      %v6728 = vpop.f32.mrb[0].mxu0
      %v6729 = vadd.f32 %v5731, %v6728
      %v6730 = vpop.f32.mrb[0].mxu0
      %v6731 = vadd.f32 %v5727, %v6730
      %v6732 = vpop.f32.mrb[0].mxu0
      %v6733 = vadd.f32 %v5731, %v6732
      %6734 = vmatprep.mubr.bf16.mxu0 0
      %6735 = vmatmul.mubr.bf16.gmra.mrb[0].mxu0 %v5714
      %v6736 = vpop.f32.mrb[0].mxu0
      %v6737 = vadd.f32 %v5727, %v6736
      %v6738 = vpop.f32.mrb[0].mxu0
      %v6739 = vadd.f32 %v5731, %v6738
      %v6740 = vpop.f32.mrb[0].mxu0
      %v6741 = vadd.f32 %v5727, %v6740
      %v6742 = vpop.f32.mrb[0].mxu0
      %v6743 = vadd.f32 %v5731, %v6742
      %6744 = vdwg.mxu0
      %6745 = vmatprep.subr.bf16.mxu0 %v5932
      %6746 = vmatpush1.bf16.msra.mxu0 %v5931
      %6747 = vmatprep.subr.bf16.mxu0 %v5939
      %6748 = vmatpush1.bf16.msra.mxu0 %v5938
      %6749 = vmatprep.subr.bf16.mxu0 %v5946
      %6750 = vmatpush1.bf16.msra.mxu0 %v5945
      %6751 = vmatprep.subr.bf16.mxu0 %v5953
      %6752 = vmatpush1.bf16.msra.mxu0 %v5952
      %6753 = vmatprep.subr.bf16.mxu0 %v5960
      %6754 = vmatpush1.bf16.msra.mxu0 %v5959
      %6755 = vmatprep.subr.bf16.mxu0 %v5967
      %6756 = vmatpush1.bf16.msra.mxu0 %v5966
      %6757 = vmatprep.subr.bf16.mxu0 %v5974
      %6758 = vmatpush1.bf16.msra.mxu0 %v5973
      %6759 = vmatprep.subr.bf16.mxu0 %v5981
      %6760 = vmatpush1.bf16.msra.mxu0 %v5980
      %6761 = vmatprep.subr.bf16.mxu0 0
      %6762 = vmatpush1.bf16.msra.mxu0 0
      %6763 = vmatprep.subr.bf16.mxu0 0
      %6764 = vmatpush1.bf16.msra.mxu0 0
      %6765 = vmatprep.subr.bf16.mxu0 0
      %6766 = vmatpush1.bf16.msra.mxu0 0
      %6767 = vmatprep.subr.bf16.mxu0 0
      %6768 = vmatpush1.bf16.msra.mxu0 0
      %6769 = vmatprep.subr.bf16.mxu0 0
      %6770 = vmatpush1.bf16.msra.mxu0 0
      %6771 = vmatprep.subr.bf16.mxu0 0
      %6772 = vmatpush1.bf16.msra.mxu0 0
      %6773 = vmatprep.subr.bf16.mxu0 0
      %6774 = vmatpush1.bf16.msra.mxu0 0
      %6775 = vmatprep.subr.bf16.mxu0 0
      %6776 = vmatpush1.bf16.msra.mxu0 0
      %6777 = vmatprep.mubr.bf16.mxu0 0
      %6778 = vmatmul.mubr.bf16.gmra.mrb[0].mxu0 %v5683
      %v6779 = vpop.f32.mrb[0].mxu0
      %v6780 = vadd.f32 %v5735, %v6779
      %v6781 = vpop.f32.mrb[0].mxu0
      %v6782 = vadd.f32 %v5739, %v6781
      %v6783 = vpop.f32.mrb[0].mxu0
      %v6784 = vadd.f32 %v5735, %v6783
      %v6785 = vpop.f32.mrb[0].mxu0
      %v6786 = vadd.f32 %v5739, %v6785
      %6787 = vmatprep.mubr.bf16.mxu0 0
      %6788 = vmatmul.mubr.bf16.gmra.mrb[0].mxu0 %v5684
      %v6789 = vpop.f32.mrb[0].mxu0
      %v6790 = vadd.f32 %v5735, %v6789
      %v6791 = vpop.f32.mrb[0].mxu0
      %v6792 = vadd.f32 %v5739, %v6791
      %v6793 = vpop.f32.mrb[0].mxu0
      %v6794 = vadd.f32 %v5735, %v6793
      %v6795 = vpop.f32.mrb[0].mxu0
      %v6796 = vadd.f32 %v5739, %v6795
      %6797 = vmatprep.mubr.bf16.mxu0 0
      %6798 = vmatmul.mubr.bf16.gmra.mrb[0].mxu0 %v5685
      %v6799 = vpop.f32.mrb[0].mxu0
      %v6800 = vadd.f32 %v5735, %v6799
      %v6801 = vpop.f32.mrb[0].mxu0
      %v6802 = vadd.f32 %v5739, %v6801
      %v6803 = vpop.f32.mrb[0].mxu0
      %v6804 = vadd.f32 %v5735, %v6803
      %v6805 = vpop.f32.mrb[0].mxu0
      %v6806 = vadd.f32 %v5739, %v6805
      %6807 = vmatprep.mubr.bf16.mxu0 0
      %6808 = vmatmul.mubr.bf16.gmra.mrb[0].mxu0 %v5686
      %v6809 = vpop.f32.mrb[0].mxu0
      %v6810 = vadd.f32 %v5735, %v6809
      %v6811 = vpop.f32.mrb[0].mxu0
      %v6812 = vadd.f32 %v5739, %v6811
      %v6813 = vpop.f32.mrb[0].mxu0
      %v6814 = vadd.f32 %v5735, %v6813
      %v6815 = vpop.f32.mrb[0].mxu0
      %v6816 = vadd.f32 %v5739, %v6815
      %6817 = vmatprep.mubr.bf16.mxu0 0
      %6818 = vmatmul.mubr.bf16.gmra.mrb[0].mxu0 %v5687
      %v6819 = vpop.f32.mrb[0].mxu0
      %v6820 = vadd.f32 %v5735, %v6819
      %v6821 = vpop.f32.mrb[0].mxu0
      %v6822 = vadd.f32 %v5739, %v6821
      %v6823 = vpop.f32.mrb[0].mxu0
      %v6824 = vadd.f32 %v5735, %v6823
      %v6825 = vpop.f32.mrb[0].mxu0
      %v6826 = vadd.f32 %v5739, %v6825
      %6827 = vmatprep.mubr.bf16.mxu0 0
      %6828 = vmatmul.mubr.bf16.gmra.mrb[0].mxu0 %v5688
      %v6829 = vpop.f32.mrb[0].mxu0
      %v6830 = vadd.f32 %v5735, %v6829
      %v6831 = vpop.f32.mrb[0].mxu0
      %v6832 = vadd.f32 %v5739, %v6831
      %v6833 = vpop.f32.mrb[0].mxu0
      %v6834 = vadd.f32 %v5735, %v6833
      %v6835 = vpop.f32.mrb[0].mxu0
      %v6836 = vadd.f32 %v5739, %v6835
      %6837 = vmatprep.mubr.bf16.mxu0 0
      %6838 = vmatmul.mubr.bf16.gmra.mrb[0].mxu0 %v5689
      %v6839 = vpop.f32.mrb[0].mxu0
      %v6840 = vadd.f32 %v5735, %v6839
      %v6841 = vpop.f32.mrb[0].mxu0
      %v6842 = vadd.f32 %v5739, %v6841
      %v6843 = vpop.f32.mrb[0].mxu0
      %v6844 = vadd.f32 %v5735, %v6843
      %v6845 = vpop.f32.mrb[0].mxu0
      %v6846 = vadd.f32 %v5739, %v6845
      %6847 = vmatprep.mubr.bf16.mxu0 0
      %6848 = vmatmul.mubr.bf16.gmra.mrb[0].mxu0 %v5690
      %v6849 = vpop.f32.mrb[0].mxu0
      %v6850 = vadd.f32 %v5735, %v6849
      %v6851 = vpop.f32.mrb[0].mxu0
      %v6852 = vadd.f32 %v5739, %v6851
      %v6853 = vpop.f32.mrb[0].mxu0
      %v6854 = vadd.f32 %v5735, %v6853
      %v6855 = vpop.f32.mrb[0].mxu0
      %v6856 = vadd.f32 %v5739, %v6855
      %6857 = vmatprep.mubr.bf16.mxu0 0
      %6858 = vmatmul.mubr.bf16.gmra.mrb[0].mxu0 %v5691
      %v6859 = vpop.f32.mrb[0].mxu0
      %v6860 = vadd.f32 %v5735, %v6859
      %v6861 = vpop.f32.mrb[0].mxu0
      %v6862 = vadd.f32 %v5739, %v6861
      %v6863 = vpop.f32.mrb[0].mxu0
      %v6864 = vadd.f32 %v5735, %v6863
      %v6865 = vpop.f32.mrb[0].mxu0
      %v6866 = vadd.f32 %v5739, %v6865
      %6867 = vmatprep.mubr.bf16.mxu0 0
      %6868 = vmatmul.mubr.bf16.gmra.mrb[0].mxu0 %v5692
      %v6869 = vpop.f32.mrb[0].mxu0
      %v6870 = vadd.f32 %v5735, %v6869
      %v6871 = vpop.f32.mrb[0].mxu0
      %v6872 = vadd.f32 %v5739, %v6871
      %v6873 = vpop.f32.mrb[0].mxu0
      %v6874 = vadd.f32 %v5735, %v6873
      %v6875 = vpop.f32.mrb[0].mxu0
      %v6876 = vadd.f32 %v5739, %v6875
      %6877 = vmatprep.mubr.bf16.mxu0 0
      %6878 = vmatmul.mubr.bf16.gmra.mrb[0].mxu0 %v5693
      %v6879 = vpop.f32.mrb[0].mxu0
      %v6880 = vadd.f32 %v5735, %v6879
      %v6881 = vpop.f32.mrb[0].mxu0
      %v6882 = vadd.f32 %v5739, %v6881
      %v6883 = vpop.f32.mrb[0].mxu0
      %v6884 = vadd.f32 %v5735, %v6883
      %v6885 = vpop.f32.mrb[0].mxu0
      %v6886 = vadd.f32 %v5739, %v6885
      %6887 = vmatprep.mubr.bf16.mxu0 0
      %6888 = vmatmul.mubr.bf16.gmra.mrb[0].mxu0 %v5694
      %v6889 = vpop.f32.mrb[0].mxu0
      %v6890 = vadd.f32 %v5735, %v6889
      %v6891 = vpop.f32.mrb[0].mxu0
      %v6892 = vadd.f32 %v5739, %v6891
      %v6893 = vpop.f32.mrb[0].mxu0
      %v6894 = vadd.f32 %v5735, %v6893
      %v6895 = vpop.f32.mrb[0].mxu0
      %v6896 = vadd.f32 %v5739, %v6895
      %6897 = vmatprep.mubr.bf16.mxu0 0
      %6898 = vmatmul.mubr.bf16.gmra.mrb[0].mxu0 %v5695
      %v6899 = vpop.f32.mrb[0].mxu0
      %v6900 = vadd.f32 %v5735, %v6899
      %v6901 = vpop.f32.mrb[0].mxu0
      %v6902 = vadd.f32 %v5739, %v6901
      %v6903 = vpop.f32.mrb[0].mxu0
      %v6904 = vadd.f32 %v5735, %v6903
      %v6905 = vpop.f32.mrb[0].mxu0
      %v6906 = vadd.f32 %v5739, %v6905
      %6907 = vmatprep.mubr.bf16.mxu0 0
      %6908 = vmatmul.mubr.bf16.gmra.mrb[0].mxu0 %v5696
      %v6909 = vpop.f32.mrb[0].mxu0
      %v6910 = vadd.f32 %v5735, %v6909
      %v6911 = vpop.f32.mrb[0].mxu0
      %v6912 = vadd.f32 %v5739, %v6911
      %v6913 = vpop.f32.mrb[0].mxu0
      %v6914 = vadd.f32 %v5735, %v6913
      %v6915 = vpop.f32.mrb[0].mxu0
      %v6916 = vadd.f32 %v5739, %v6915
      %6917 = vmatprep.mubr.bf16.mxu0 0
      %6918 = vmatmul.mubr.bf16.gmra.mrb[0].mxu0 %v5697
      %v6919 = vpop.f32.mrb[0].mxu0
      %v6920 = vadd.f32 %v5735, %v6919
      %v6921 = vpop.f32.mrb[0].mxu0
      %v6922 = vadd.f32 %v5739, %v6921
      %v6923 = vpop.f32.mrb[0].mxu0
      %v6924 = vadd.f32 %v5735, %v6923
      %v6925 = vpop.f32.mrb[0].mxu0
      %v6926 = vadd.f32 %v5739, %v6925
      %6927 = vmatprep.mubr.bf16.mxu0 0
      %6928 = vmatmul.mubr.bf16.gmra.mrb[0].mxu0 %v5698
      %v6929 = vpop.f32.mrb[0].mxu0
      %v6930 = vadd.f32 %v5735, %v6929
      %v6931 = vpop.f32.mrb[0].mxu0
      %v6932 = vadd.f32 %v5739, %v6931
      %v6933 = vpop.f32.mrb[0].mxu0
      %v6934 = vadd.f32 %v5735, %v6933
      %v6935 = vpop.f32.mrb[0].mxu0
      %v6936 = vadd.f32 %v5739, %v6935
      %6937 = vmatprep.mubr.bf16.mxu0 0
      %6938 = vmatmul.mubr.bf16.gmra.mrb[0].mxu0 %v5699
      %v6939 = vpop.f32.mrb[0].mxu0
      %v6940 = vadd.f32 %v5735, %v6939
      %v6941 = vpop.f32.mrb[0].mxu0
      %v6942 = vadd.f32 %v5739, %v6941
      %v6943 = vpop.f32.mrb[0].mxu0
      %v6944 = vadd.f32 %v5735, %v6943
      %v6945 = vpop.f32.mrb[0].mxu0
      %v6946 = vadd.f32 %v5739, %v6945
      %6947 = vmatprep.mubr.bf16.mxu0 0
      %6948 = vmatmul.mubr.bf16.gmra.mrb[0].mxu0 %v5700
      %v6949 = vpop.f32.mrb[0].mxu0
      %v6950 = vadd.f32 %v5735, %v6949
      %v6951 = vpop.f32.mrb[0].mxu0
      %v6952 = vadd.f32 %v5739, %v6951
      %v6953 = vpop.f32.mrb[0].mxu0
      %v6954 = vadd.f32 %v5735, %v6953
      %v6955 = vpop.f32.mrb[0].mxu0
      %v6956 = vadd.f32 %v5739, %v6955
      %6957 = vmatprep.mubr.bf16.mxu0 0
      %6958 = vmatmul.mubr.bf16.gmra.mrb[0].mxu0 %v5701
      %v6959 = vpop.f32.mrb[0].mxu0
      %v6960 = vadd.f32 %v5735, %v6959
      %v6961 = vpop.f32.mrb[0].mxu0
      %v6962 = vadd.f32 %v5739, %v6961
      %v6963 = vpop.f32.mrb[0].mxu0
      %v6964 = vadd.f32 %v5735, %v6963
      %v6965 = vpop.f32.mrb[0].mxu0
      %v6966 = vadd.f32 %v5739, %v6965
      %6967 = vmatprep.mubr.bf16.mxu0 0
      %6968 = vmatmul.mubr.bf16.gmra.mrb[0].mxu0 %v5702
      %v6969 = vpop.f32.mrb[0].mxu0
      %v6970 = vadd.f32 %v5735, %v6969
      %v6971 = vpop.f32.mrb[0].mxu0
      %v6972 = vadd.f32 %v5739, %v6971
      %v6973 = vpop.f32.mrb[0].mxu0
      %v6974 = vadd.f32 %v5735, %v6973
      %v6975 = vpop.f32.mrb[0].mxu0
      %v6976 = vadd.f32 %v5739, %v6975
      %6977 = vmatprep.mubr.bf16.mxu0 0
      %6978 = vmatmul.mubr.bf16.gmra.mrb[0].mxu0 %v5703
      %v6979 = vpop.f32.mrb[0].mxu0
      %v6980 = vadd.f32 %v5735, %v6979
      %v6981 = vpop.f32.mrb[0].mxu0
      %v6982 = vadd.f32 %v5739, %v6981
      %v6983 = vpop.f32.mrb[0].mxu0
      %v6984 = vadd.f32 %v5735, %v6983
      %v6985 = vpop.f32.mrb[0].mxu0
      %v6986 = vadd.f32 %v5739, %v6985
      %6987 = vmatprep.mubr.bf16.mxu0 0
      %6988 = vmatmul.mubr.bf16.gmra.mrb[0].mxu0 %v5704
      %v6989 = vpop.f32.mrb[0].mxu0
      %v6990 = vadd.f32 %v5735, %v6989
      %v6991 = vpop.f32.mrb[0].mxu0
      %v6992 = vadd.f32 %v5739, %v6991
      %v6993 = vpop.f32.mrb[0].mxu0
      %v6994 = vadd.f32 %v5735, %v6993
      %v6995 = vpop.f32.mrb[0].mxu0
      %v6996 = vadd.f32 %v5739, %v6995
      %6997 = vmatprep.mubr.bf16.mxu0 0
      %6998 = vmatmul.mubr.bf16.gmra.mrb[0].mxu0 %v5705
      %v6999 = vpop.f32.mrb[0].mxu0
      %v7000 = vadd.f32 %v5735, %v6999
      %v7001 = vpop.f32.mrb[0].mxu0
      %v7002 = vadd.f32 %v5739, %v7001
      %v7003 = vpop.f32.mrb[0].mxu0
      %v7004 = vadd.f32 %v5735, %v7003
      %v7005 = vpop.f32.mrb[0].mxu0
      %v7006 = vadd.f32 %v5739, %v7005
      %7007 = vmatprep.mubr.bf16.mxu0 0
      %7008 = vmatmul.mubr.bf16.gmra.mrb[0].mxu0 %v5706
      %v7009 = vpop.f32.mrb[0].mxu0
      %v7010 = vadd.f32 %v5735, %v7009
      %v7011 = vpop.f32.mrb[0].mxu0
      %v7012 = vadd.f32 %v5739, %v7011
      %v7013 = vpop.f32.mrb[0].mxu0
      %v7014 = vadd.f32 %v5735, %v7013
      %v7015 = vpop.f32.mrb[0].mxu0
      %v7016 = vadd.f32 %v5739, %v7015
      %7017 = vmatprep.mubr.bf16.mxu0 0
      %7018 = vmatmul.mubr.bf16.gmra.mrb[0].mxu0 %v5707
      %v7019 = vpop.f32.mrb[0].mxu0
      %v7020 = vadd.f32 %v5735, %v7019
      %v7021 = vpop.f32.mrb[0].mxu0
      %v7022 = vadd.f32 %v5739, %v7021
      %v7023 = vpop.f32.mrb[0].mxu0
      %v7024 = vadd.f32 %v5735, %v7023
      %v7025 = vpop.f32.mrb[0].mxu0
      %v7026 = vadd.f32 %v5739, %v7025
      %7027 = vmatprep.mubr.bf16.mxu0 0
      %7028 = vmatmul.mubr.bf16.gmra.mrb[0].mxu0 %v5708
      %v7029 = vpop.f32.mrb[0].mxu0
      %v7030 = vadd.f32 %v5735, %v7029
      %v7031 = vpop.f32.mrb[0].mxu0
      %v7032 = vadd.f32 %v5739, %v7031
      %v7033 = vpop.f32.mrb[0].mxu0
      %v7034 = vadd.f32 %v5735, %v7033
      %v7035 = vpop.f32.mrb[0].mxu0
      %v7036 = vadd.f32 %v5739, %v7035
      %7037 = vmatprep.mubr.bf16.mxu0 0
      %7038 = vmatmul.mubr.bf16.gmra.mrb[0].mxu0 %v5709
      %v7039 = vpop.f32.mrb[0].mxu0
      %v7040 = vadd.f32 %v5735, %v7039
      %v7041 = vpop.f32.mrb[0].mxu0
      %v7042 = vadd.f32 %v5739, %v7041
      %v7043 = vpop.f32.mrb[0].mxu0
      %v7044 = vadd.f32 %v5735, %v7043
      %v7045 = vpop.f32.mrb[0].mxu0
      %v7046 = vadd.f32 %v5739, %v7045
      %7047 = vmatprep.mubr.bf16.mxu0 0
      %7048 = vmatmul.mubr.bf16.gmra.mrb[0].mxu0 %v5710
      %v7049 = vpop.f32.mrb[0].mxu0
      %v7050 = vadd.f32 %v5735, %v7049
      %v7051 = vpop.f32.mrb[0].mxu0
      %v7052 = vadd.f32 %v5739, %v7051
      %v7053 = vpop.f32.mrb[0].mxu0
      %v7054 = vadd.f32 %v5735, %v7053
      %v7055 = vpop.f32.mrb[0].mxu0
      %v7056 = vadd.f32 %v5739, %v7055
      %7057 = vmatprep.mubr.bf16.mxu0 0
      %7058 = vmatmul.mubr.bf16.gmra.mrb[0].mxu0 %v5711
      %v7059 = vpop.f32.mrb[0].mxu0
      %v7060 = vadd.f32 %v5735, %v7059
      %v7061 = vpop.f32.mrb[0].mxu0
      %v7062 = vadd.f32 %v5739, %v7061
      %v7063 = vpop.f32.mrb[0].mxu0
      %v7064 = vadd.f32 %v5735, %v7063
      %v7065 = vpop.f32.mrb[0].mxu0
      %v7066 = vadd.f32 %v5739, %v7065
      %7067 = vmatprep.mubr.bf16.mxu0 0
      %7068 = vmatmul.mubr.bf16.gmra.mrb[0].mxu0 %v5712
      %v7069 = vpop.f32.mrb[0].mxu0
      %v7070 = vadd.f32 %v5735, %v7069
      %v7071 = vpop.f32.mrb[0].mxu0
      %v7072 = vadd.f32 %v5739, %v7071
      %v7073 = vpop.f32.mrb[0].mxu0
      %v7074 = vadd.f32 %v5735, %v7073
      %v7075 = vpop.f32.mrb[0].mxu0
      %v7076 = vadd.f32 %v5739, %v7075
      %7077 = vmatprep.mubr.bf16.mxu0 0
      %7078 = vmatmul.mubr.bf16.gmra.mrb[0].mxu0 %v5713
      %v7079 = vpop.f32.mrb[0].mxu0
      %v7080 = vadd.f32 %v5735, %v7079
      %v7081 = vpop.f32.mrb[0].mxu0
      %v7082 = vadd.f32 %v5739, %v7081
      %v7083 = vpop.f32.mrb[0].mxu0
      %v7084 = vadd.f32 %v5735, %v7083
      %v7085 = vpop.f32.mrb[0].mxu0
      %v7086 = vadd.f32 %v5739, %v7085
      %7087 = vmatprep.mubr.bf16.mxu0 0
      %7088 = vmatmul.mubr.bf16.gmra.mrb[0].mxu0 %v5714
      %v7089 = vpop.f32.mrb[0].mxu0
      %v7090 = vadd.f32 %v5735, %v7089
      %v7091 = vpop.f32.mrb[0].mxu0
      %v7092 = vadd.f32 %v5739, %v7091
      %v7093 = vpop.f32.mrb[0].mxu0
      %v7094 = vadd.f32 %v5735, %v7093
      %v7095 = vpop.f32.mrb[0].mxu0
      %v7096 = vadd.f32 %v5739, %v7095
      %7097 = vdwg.mxu0
      %7098 = vmatprep.subr.bf16.mxu0 0
      %7099 = vmatpush1.bf16.msra.mxu0 %v5933
      %7100 = vmatprep.subr.bf16.mxu0 0
      %7101 = vmatpush1.bf16.msra.mxu0 %v5940
      %7102 = vmatprep.subr.bf16.mxu0 0
      %7103 = vmatpush1.bf16.msra.mxu0 %v5947
      %7104 = vmatprep.subr.bf16.mxu0 0
      %7105 = vmatpush1.bf16.msra.mxu0 %v5954
      %7106 = vmatprep.subr.bf16.mxu0 0
      %7107 = vmatpush1.bf16.msra.mxu0 %v5961
      %7108 = vmatprep.subr.bf16.mxu0 0
      %7109 = vmatpush1.bf16.msra.mxu0 %v5968
      %7110 = vmatprep.subr.bf16.mxu0 0
      %7111 = vmatpush1.bf16.msra.mxu0 %v5975
      %7112 = vmatprep.subr.bf16.mxu0 0
      %7113 = vmatpush1.bf16.msra.mxu0 %v5982
      %7114 = vmatprep.subr.bf16.mxu0 0
      %7115 = vmatpush1.bf16.msra.mxu0 0
      %7116 = vmatprep.subr.bf16.mxu0 0
      %7117 = vmatpush1.bf16.msra.mxu0 0
      %7118 = vmatprep.subr.bf16.mxu0 0
      %7119 = vmatpush1.bf16.msra.mxu0 0
      %7120 = vmatprep.subr.bf16.mxu0 0
      %7121 = vmatpush1.bf16.msra.mxu0 0
      %7122 = vmatprep.subr.bf16.mxu0 0
      %7123 = vmatpush1.bf16.msra.mxu0 0
      %7124 = vmatprep.subr.bf16.mxu0 0
      %7125 = vmatpush1.bf16.msra.mxu0 0
      %7126 = vmatprep.subr.bf16.mxu0 0
      %7127 = vmatpush1.bf16.msra.mxu0 0
      %7128 = vmatprep.subr.bf16.mxu0 0
      %7129 = vmatpush1.bf16.msra.mxu0 0
      %7130 = vmatprep.mubr.bf16.mxu0 0
      %7131 = vmatmul.mubr.bf16.gmra.mrb[0].mxu0 %v5683
      %v7132 = vpop.f32.mrb[0].mxu0
      %v7133 = vadd.f32 %v5743, %v7132
      %v7134 = vpop.f32.mrb[0].mxu0
      %v7135 = vpop.f32.mrb[0].mxu0
      %v7136 = vadd.f32 %v5743, %v7135
      %v7137 = vpop.f32.mrb[0].mxu0
      %7138 = vmatprep.mubr.bf16.mxu0 0
      %7139 = vmatmul.mubr.bf16.gmra.mrb[0].mxu0 %v5684
      %v7140 = vpop.f32.mrb[0].mxu0
      %v7141 = vadd.f32 %v5743, %v7140
      %v7142 = vpop.f32.mrb[0].mxu0
      %v7143 = vpop.f32.mrb[0].mxu0
      %v7144 = vadd.f32 %v5743, %v7143
      %v7145 = vpop.f32.mrb[0].mxu0
      %7146 = vmatprep.mubr.bf16.mxu0 0
      %7147 = vmatmul.mubr.bf16.gmra.mrb[0].mxu0 %v5685
      %v7148 = vpop.f32.mrb[0].mxu0
      %v7149 = vadd.f32 %v5743, %v7148
      %v7150 = vpop.f32.mrb[0].mxu0
      %v7151 = vpop.f32.mrb[0].mxu0
      %v7152 = vadd.f32 %v5743, %v7151
      %v7153 = vpop.f32.mrb[0].mxu0
      %7154 = vmatprep.mubr.bf16.mxu0 0
      %7155 = vmatmul.mubr.bf16.gmra.mrb[0].mxu0 %v5686
      %v7156 = vpop.f32.mrb[0].mxu0
      %v7157 = vadd.f32 %v5743, %v7156
      %v7158 = vpop.f32.mrb[0].mxu0
      %v7159 = vpop.f32.mrb[0].mxu0
      %v7160 = vadd.f32 %v5743, %v7159
      %v7161 = vpop.f32.mrb[0].mxu0
      %7162 = vmatprep.mubr.bf16.mxu0 0
      %7163 = vmatmul.mubr.bf16.gmra.mrb[0].mxu0 %v5687
      %v7164 = vpop.f32.mrb[0].mxu0
      %v7165 = vadd.f32 %v5743, %v7164
      %v7166 = vpop.f32.mrb[0].mxu0
      %v7167 = vpop.f32.mrb[0].mxu0
      %v7168 = vadd.f32 %v5743, %v7167
      %v7169 = vpop.f32.mrb[0].mxu0
      %7170 = vmatprep.mubr.bf16.mxu0 0
      %7171 = vmatmul.mubr.bf16.gmra.mrb[0].mxu0 %v5688
      %v7172 = vpop.f32.mrb[0].mxu0
      %v7173 = vadd.f32 %v5743, %v7172
      %v7174 = vpop.f32.mrb[0].mxu0
      %v7175 = vpop.f32.mrb[0].mxu0
      %v7176 = vadd.f32 %v5743, %v7175
      %v7177 = vpop.f32.mrb[0].mxu0
      %7178 = vmatprep.mubr.bf16.mxu0 0
      %7179 = vmatmul.mubr.bf16.gmra.mrb[0].mxu0 %v5689
      %v7180 = vpop.f32.mrb[0].mxu0
      %v7181 = vadd.f32 %v5743, %v7180
      %v7182 = vpop.f32.mrb[0].mxu0
      %v7183 = vpop.f32.mrb[0].mxu0
      %v7184 = vadd.f32 %v5743, %v7183
      %v7185 = vpop.f32.mrb[0].mxu0
      %7186 = vmatprep.mubr.bf16.mxu0 0
      %7187 = vmatmul.mubr.bf16.gmra.mrb[0].mxu0 %v5690
      %v7188 = vpop.f32.mrb[0].mxu0
      %v7189 = vadd.f32 %v5743, %v7188
      %v7190 = vpop.f32.mrb[0].mxu0
      %v7191 = vpop.f32.mrb[0].mxu0
      %v7192 = vadd.f32 %v5743, %v7191
      %v7193 = vpop.f32.mrb[0].mxu0
      %7194 = vmatprep.mubr.bf16.mxu0 0
      %7195 = vmatmul.mubr.bf16.gmra.mrb[0].mxu0 %v5691
      %v7196 = vpop.f32.mrb[0].mxu0
      %v7197 = vadd.f32 %v5743, %v7196
      %v7198 = vpop.f32.mrb[0].mxu0
      %v7199 = vpop.f32.mrb[0].mxu0
      %v7200 = vadd.f32 %v5743, %v7199
      %v7201 = vpop.f32.mrb[0].mxu0
      %7202 = vmatprep.mubr.bf16.mxu0 0
      %7203 = vmatmul.mubr.bf16.gmra.mrb[0].mxu0 %v5692
      %v7204 = vpop.f32.mrb[0].mxu0
      %v7205 = vadd.f32 %v5743, %v7204
      %v7206 = vpop.f32.mrb[0].mxu0
      %v7207 = vpop.f32.mrb[0].mxu0
      %v7208 = vadd.f32 %v5743, %v7207
      %v7209 = vpop.f32.mrb[0].mxu0
      %7210 = vmatprep.mubr.bf16.mxu0 0
      %7211 = vmatmul.mubr.bf16.gmra.mrb[0].mxu0 %v5693
      %v7212 = vpop.f32.mrb[0].mxu0
      %v7213 = vadd.f32 %v5743, %v7212
      %v7214 = vpop.f32.mrb[0].mxu0
      %v7215 = vpop.f32.mrb[0].mxu0
      %v7216 = vadd.f32 %v5743, %v7215
      %v7217 = vpop.f32.mrb[0].mxu0
      %7218 = vmatprep.mubr.bf16.mxu0 0
      %7219 = vmatmul.mubr.bf16.gmra.mrb[0].mxu0 %v5694
      %v7220 = vpop.f32.mrb[0].mxu0
      %v7221 = vadd.f32 %v5743, %v7220
      %v7222 = vpop.f32.mrb[0].mxu0
      %v7223 = vpop.f32.mrb[0].mxu0
      %v7224 = vadd.f32 %v5743, %v7223
      %v7225 = vpop.f32.mrb[0].mxu0
      %7226 = vmatprep.mubr.bf16.mxu0 0
      %7227 = vmatmul.mubr.bf16.gmra.mrb[0].mxu0 %v5695
      %v7228 = vpop.f32.mrb[0].mxu0
      %v7229 = vadd.f32 %v5743, %v7228
      %v7230 = vpop.f32.mrb[0].mxu0
      %v7231 = vpop.f32.mrb[0].mxu0
      %v7232 = vadd.f32 %v5743, %v7231
      %v7233 = vpop.f32.mrb[0].mxu0
      %7234 = vmatprep.mubr.bf16.mxu0 0
      %7235 = vmatmul.mubr.bf16.gmra.mrb[0].mxu0 %v5696
      %v7236 = vpop.f32.mrb[0].mxu0
      %v7237 = vadd.f32 %v5743, %v7236
      %v7238 = vpop.f32.mrb[0].mxu0
      %v7239 = vpop.f32.mrb[0].mxu0
      %v7240 = vadd.f32 %v5743, %v7239
      %v7241 = vpop.f32.mrb[0].mxu0
      %7242 = vmatprep.mubr.bf16.mxu0 0
      %7243 = vmatmul.mubr.bf16.gmra.mrb[0].mxu0 %v5697
      %v7244 = vpop.f32.mrb[0].mxu0
      %v7245 = vadd.f32 %v5743, %v7244
      %v7246 = vpop.f32.mrb[0].mxu0
      %v7247 = vpop.f32.mrb[0].mxu0
      %v7248 = vadd.f32 %v5743, %v7247
      %v7249 = vpop.f32.mrb[0].mxu0
      %7250 = vmatprep.mubr.bf16.mxu0 0
      %7251 = vmatmul.mubr.bf16.gmra.mrb[0].mxu0 %v5698
      %v7252 = vpop.f32.mrb[0].mxu0
      %v7253 = vadd.f32 %v5743, %v7252
      %v7254 = vpop.f32.mrb[0].mxu0
      %v7255 = vpop.f32.mrb[0].mxu0
      %v7256 = vadd.f32 %v5743, %v7255
      %v7257 = vpop.f32.mrb[0].mxu0
      %7258 = vmatprep.mubr.bf16.mxu0 0
      %7259 = vmatmul.mubr.bf16.gmra.mrb[0].mxu0 %v5699
      %v7260 = vpop.f32.mrb[0].mxu0
      %v7261 = vadd.f32 %v5743, %v7260
      %v7262 = vpop.f32.mrb[0].mxu0
      %v7263 = vpop.f32.mrb[0].mxu0
      %v7264 = vadd.f32 %v5743, %v7263
      %v7265 = vpop.f32.mrb[0].mxu0
      %7266 = vmatprep.mubr.bf16.mxu0 0
      %7267 = vmatmul.mubr.bf16.gmra.mrb[0].mxu0 %v5700
      %v7268 = vpop.f32.mrb[0].mxu0
      %v7269 = vadd.f32 %v5743, %v7268
      %v7270 = vpop.f32.mrb[0].mxu0
      %v7271 = vpop.f32.mrb[0].mxu0
      %v7272 = vadd.f32 %v5743, %v7271
      %v7273 = vpop.f32.mrb[0].mxu0
      %7274 = vmatprep.mubr.bf16.mxu0 0
      %7275 = vmatmul.mubr.bf16.gmra.mrb[0].mxu0 %v5701
      %v7276 = vpop.f32.mrb[0].mxu0
      %v7277 = vadd.f32 %v5743, %v7276
      %v7278 = vpop.f32.mrb[0].mxu0
      %v7279 = vpop.f32.mrb[0].mxu0
      %v7280 = vadd.f32 %v5743, %v7279
      %v7281 = vpop.f32.mrb[0].mxu0
      %7282 = vmatprep.mubr.bf16.mxu0 0
      %7283 = vmatmul.mubr.bf16.gmra.mrb[0].mxu0 %v5702
      %v7284 = vpop.f32.mrb[0].mxu0
      %v7285 = vadd.f32 %v5743, %v7284
      %v7286 = vpop.f32.mrb[0].mxu0
      %v7287 = vpop.f32.mrb[0].mxu0
      %v7288 = vadd.f32 %v5743, %v7287
      %v7289 = vpop.f32.mrb[0].mxu0
      %7290 = vmatprep.mubr.bf16.mxu0 0
      %7291 = vmatmul.mubr.bf16.gmra.mrb[0].mxu0 %v5703
      %v7292 = vpop.f32.mrb[0].mxu0
      %v7293 = vadd.f32 %v5743, %v7292
      %v7294 = vpop.f32.mrb[0].mxu0
      %v7295 = vpop.f32.mrb[0].mxu0
      %v7296 = vadd.f32 %v5743, %v7295
      %v7297 = vpop.f32.mrb[0].mxu0
      %7298 = vmatprep.mubr.bf16.mxu0 0
      %7299 = vmatmul.mubr.bf16.gmra.mrb[0].mxu0 %v5704
      %v7300 = vpop.f32.mrb[0].mxu0
      %v7301 = vadd.f32 %v5743, %v7300
      %v7302 = vpop.f32.mrb[0].mxu0
      %v7303 = vpop.f32.mrb[0].mxu0
      %v7304 = vadd.f32 %v5743, %v7303
      %v7305 = vpop.f32.mrb[0].mxu0
      %7306 = vmatprep.mubr.bf16.mxu0 0
      %7307 = vmatmul.mubr.bf16.gmra.mrb[0].mxu0 %v5705
      %v7308 = vpop.f32.mrb[0].mxu0
      %v7309 = vadd.f32 %v5743, %v7308
      %v7310 = vpop.f32.mrb[0].mxu0
      %v7311 = vpop.f32.mrb[0].mxu0
      %v7312 = vadd.f32 %v5743, %v7311
      %v7313 = vpop.f32.mrb[0].mxu0
      %7314 = vmatprep.mubr.bf16.mxu0 0
      %7315 = vmatmul.mubr.bf16.gmra.mrb[0].mxu0 %v5706
      %v7316 = vpop.f32.mrb[0].mxu0
      %v7317 = vadd.f32 %v5743, %v7316
      %v7318 = vpop.f32.mrb[0].mxu0
      %v7319 = vpop.f32.mrb[0].mxu0
      %v7320 = vadd.f32 %v5743, %v7319
      %v7321 = vpop.f32.mrb[0].mxu0
      %7322 = vmatprep.mubr.bf16.mxu0 0
      %7323 = vmatmul.mubr.bf16.gmra.mrb[0].mxu0 %v5707
      %v7324 = vpop.f32.mrb[0].mxu0
      %v7325 = vadd.f32 %v5743, %v7324
      %v7326 = vpop.f32.mrb[0].mxu0
      %v7327 = vpop.f32.mrb[0].mxu0
      %v7328 = vadd.f32 %v5743, %v7327
      %v7329 = vpop.f32.mrb[0].mxu0
      %7330 = vmatprep.mubr.bf16.mxu0 0
      %7331 = vmatmul.mubr.bf16.gmra.mrb[0].mxu0 %v5708
      %v7332 = vpop.f32.mrb[0].mxu0
      %v7333 = vadd.f32 %v5743, %v7332
      %v7334 = vpop.f32.mrb[0].mxu0
      %v7335 = vpop.f32.mrb[0].mxu0
      %v7336 = vadd.f32 %v5743, %v7335
      %v7337 = vpop.f32.mrb[0].mxu0
      %7338 = vmatprep.mubr.bf16.mxu0 0
      %7339 = vmatmul.mubr.bf16.gmra.mrb[0].mxu0 %v5709
      %v7340 = vpop.f32.mrb[0].mxu0
      %v7341 = vadd.f32 %v5743, %v7340
      %v7342 = vpop.f32.mrb[0].mxu0
      %v7343 = vpop.f32.mrb[0].mxu0
      %v7344 = vadd.f32 %v5743, %v7343
      %v7345 = vpop.f32.mrb[0].mxu0
      %7346 = vmatprep.mubr.bf16.mxu0 0
      %7347 = vmatmul.mubr.bf16.gmra.mrb[0].mxu0 %v5710
      %v7348 = vpop.f32.mrb[0].mxu0
      %v7349 = vadd.f32 %v5743, %v7348
      %v7350 = vpop.f32.mrb[0].mxu0
      %v7351 = vpop.f32.mrb[0].mxu0
      %v7352 = vadd.f32 %v5743, %v7351
      %v7353 = vpop.f32.mrb[0].mxu0
      %7354 = vmatprep.mubr.bf16.mxu0 0
      %7355 = vmatmul.mubr.bf16.gmra.mrb[0].mxu0 %v5711
      %v7356 = vpop.f32.mrb[0].mxu0
      %v7357 = vadd.f32 %v5743, %v7356
      %v7358 = vpop.f32.mrb[0].mxu0
      %v7359 = vpop.f32.mrb[0].mxu0
      %v7360 = vadd.f32 %v5743, %v7359
      %v7361 = vpop.f32.mrb[0].mxu0
      %7362 = vmatprep.mubr.bf16.mxu0 0
      %7363 = vmatmul.mubr.bf16.gmra.mrb[0].mxu0 %v5712
      %v7364 = vpop.f32.mrb[0].mxu0
      %v7365 = vadd.f32 %v5743, %v7364
      %v7366 = vpop.f32.mrb[0].mxu0
      %v7367 = vpop.f32.mrb[0].mxu0
      %v7368 = vadd.f32 %v5743, %v7367
      %v7369 = vpop.f32.mrb[0].mxu0
      %7370 = vmatprep.mubr.bf16.mxu0 0
      %7371 = vmatmul.mubr.bf16.gmra.mrb[0].mxu0 %v5713
      %v7372 = vpop.f32.mrb[0].mxu0
      %v7373 = vadd.f32 %v5743, %v7372
      %v7374 = vpop.f32.mrb[0].mxu0
      %v7375 = vpop.f32.mrb[0].mxu0
      %v7376 = vadd.f32 %v5743, %v7375
      %v7377 = vpop.f32.mrb[0].mxu0
      %7378 = vmatprep.mubr.bf16.mxu0 0
      %7379 = vmatmul.mubr.bf16.gmra.mrb[0].mxu0 %v5714
      %v7380 = vpop.f32.mrb[0].mxu0
      %v7381 = vadd.f32 %v5743, %v7380
      %v7382 = vpop.f32.mrb[0].mxu0
      %v7383 = vpop.f32.mrb[0].mxu0
      %v7384 = vadd.f32 %v5743, %v7383
      %v7385 = vpop.f32.mrb[0].mxu0
      %7386 = vdwg.mxu0
      %v7387 = vtanh.pop %v6074
      %v7388 = vtanh.pop %v6076
      %v7389 = vtanh.pop %v6427
      %v7390 = vtanh.pop %v6429
      %v7391 = vtanh.pop %v6780
      %v7392 = vtanh.pop %v6782
      %v7393 = vtanh.pop %v7133
      %v7394 = vtanh.pop %v6078
      %v7395 = vtanh.pop %v6080
      %v7396 = vtanh.pop %v6431
      %v7397 = vtanh.pop %v6433
      %v7398 = vtanh.pop %v6784
      %v7399 = vtanh.pop %v6786
      %v7400 = vtanh.pop %v7136
      %v7401 = vtanh.pop %v6084
      %v7402 = vtanh.pop %v6086
      %v7403 = vtanh.pop %v6437
      %v7404 = vtanh.pop %v6439
      %v7405 = vtanh.pop %v6790
      %v7406 = vtanh.pop %v6792
      %v7407 = vtanh.pop %v7141
      %v7408 = vtanh.pop %v6088
      %v7409 = vtanh.pop %v6090
      %v7410 = vtanh.pop %v6441
      %v7411 = vtanh.pop %v6443
      %v7412 = vtanh.pop %v6794
      %v7413 = vtanh.pop %v6796
      %v7414 = vtanh.pop %v7144
      %v7415 = vtanh.pop %v6094
      %v7416 = vtanh.pop %v6096
      %v7417 = vtanh.pop %v6447
      %v7418 = vtanh.pop %v6449
      %v7419 = vtanh.pop %v6800
      %v7420 = vtanh.pop %v6802
      %v7421 = vtanh.pop %v7149
      %v7422 = vtanh.pop %v6098
      %v7423 = vtanh.pop %v6100
      %v7424 = vtanh.pop %v6451
      %v7425 = vtanh.pop %v6453
      %v7426 = vtanh.pop %v6804
      %v7427 = vtanh.pop %v6806
      %v7428 = vtanh.pop %v7152
      %v7429 = vtanh.pop %v6104
      %v7430 = vtanh.pop %v6106
      %v7431 = vtanh.pop %v6457
      %v7432 = vtanh.pop %v6459
      %v7433 = vtanh.pop %v6810
      %v7434 = vtanh.pop %v6812
      %v7435 = vtanh.pop %v7157
      %v7436 = vtanh.pop %v6108
      %v7437 = vtanh.pop %v6110
      %v7438 = vtanh.pop %v6461
      %v7439 = vtanh.pop %v6463
      %v7440 = vtanh.pop %v6814
      %v7441 = vtanh.pop %v6816
      %v7442 = vtanh.pop %v7160
      %v7443 = vtanh.pop %v6114
      %v7444 = vtanh.pop %v6116
      %v7445 = vtanh.pop %v6467
      %v7446 = vtanh.pop %v6469
      %v7447 = vtanh.pop %v6820
      %v7448 = vtanh.pop %v6822
      %v7449 = vtanh.pop %v7165
      %v7450 = vtanh.pop %v6118
      %v7451 = vtanh.pop %v6120
      %v7452 = vtanh.pop %v6471
      %v7453 = vtanh.pop %v6473
      %v7454 = vtanh.pop %v6824
      %v7455 = vtanh.pop %v6826
      %v7456 = vtanh.pop %v7168
      %v7457 = vtanh.pop %v6124
      %v7458 = vtanh.pop %v6126
      %v7459 = vtanh.pop %v6477
      %v7460 = vtanh.pop %v6479
      %v7461 = vtanh.pop %v6830
      %v7462 = vtanh.pop %v6832
      %v7463 = vtanh.pop %v7173
      %v7464 = vtanh.pop %v6128
      %v7465 = vtanh.pop %v6130
      %v7466 = vtanh.pop %v6481
      %v7467 = vtanh.pop %v6483
      %v7468 = vtanh.pop %v6834
      %v7469 = vtanh.pop %v6836
      %v7470 = vtanh.pop %v7176
      %v7471 = vtanh.pop %v6134
      %v7472 = vtanh.pop %v6136
      %v7473 = vtanh.pop %v6487
      %v7474 = vtanh.pop %v6489
      %v7475 = vtanh.pop %v6840
      %v7476 = vtanh.pop %v6842
      %v7477 = vtanh.pop %v7181
      %v7478 = vtanh.pop %v6138
      %v7479 = vtanh.pop %v6140
      %v7480 = vtanh.pop %v6491
      %v7481 = vtanh.pop %v6493
      %v7482 = vtanh.pop %v6844
      %v7483 = vtanh.pop %v6846
      %v7484 = vtanh.pop %v7184
      %v7485 = vtanh.pop %v6144
      %v7486 = vtanh.pop %v6146
      %v7487 = vtanh.pop %v6497
      %v7488 = vtanh.pop %v6499
      %v7489 = vtanh.pop %v6850
      %v7490 = vtanh.pop %v6852
      %v7491 = vtanh.pop %v7189
      %v7492 = vtanh.pop %v6148
      %v7493 = vtanh.pop %v6150
      %v7494 = vtanh.pop %v6501
      %v7495 = vtanh.pop %v6503
      %v7496 = vtanh.pop %v6854
      %v7497 = vtanh.pop %v6856
      %v7498 = vtanh.pop %v7192
      %v7499 = vtanh.pop %v6154
      %v7500 = vtanh.pop %v6156
      %v7501 = vtanh.pop %v6507
      %v7502 = vtanh.pop %v6509
      %v7503 = vtanh.pop %v6860
      %v7504 = vtanh.pop %v6862
      %v7505 = vtanh.pop %v7197
      %v7506 = vtanh.pop %v6158
      %v7507 = vtanh.pop %v6160
      %v7508 = vtanh.pop %v6511
      %v7509 = vtanh.pop %v6513
      %v7510 = vtanh.pop %v6864
      %v7511 = vtanh.pop %v6866
      %v7512 = vtanh.pop %v7200
      %v7513 = vtanh.pop %v6164
      %v7514 = vtanh.pop %v6166
      %v7515 = vtanh.pop %v6517
      %v7516 = vtanh.pop %v6519
      %v7517 = vtanh.pop %v6870
      %v7518 = vtanh.pop %v6872
      %v7519 = vtanh.pop %v7205
      %v7520 = vtanh.pop %v6168
      %v7521 = vtanh.pop %v6170
      %v7522 = vtanh.pop %v6521
      %v7523 = vtanh.pop %v6523
      %v7524 = vtanh.pop %v6874
      %v7525 = vtanh.pop %v6876
      %v7526 = vtanh.pop %v7208
      %v7527 = vtanh.pop %v6174
      %v7528 = vtanh.pop %v6176
      %v7529 = vtanh.pop %v6527
      %v7530 = vtanh.pop %v6529
      %v7531 = vtanh.pop %v6880
      %v7532 = vtanh.pop %v6882
      %v7533 = vtanh.pop %v7213
      %v7534 = vtanh.pop %v6178
      %v7535 = vtanh.pop %v6180
      %v7536 = vtanh.pop %v6531
      %v7537 = vtanh.pop %v6533
      %v7538 = vtanh.pop %v6884
      %v7539 = vtanh.pop %v6886
      %v7540 = vtanh.pop %v7216
      %v7541 = vtanh.pop %v6184
      %v7542 = vtanh.pop %v6186
      %v7543 = vtanh.pop %v6537
      %v7544 = vtanh.pop %v6539
      %v7545 = vtanh.pop %v6890
      %v7546 = vtanh.pop %v6892
      %v7547 = vtanh.pop %v7221
      %v7548 = vtanh.pop %v6188
      %v7549 = vtanh.pop %v6190
      %v7550 = vtanh.pop %v6541
      %v7551 = vtanh.pop %v6543
      %v7552 = vtanh.pop %v6894
      %v7553 = vtanh.pop %v6896
      %v7554 = vtanh.pop %v7224
      %v7555 = vtanh.pop %v6194
      %v7556 = vtanh.pop %v6196
      %v7557 = vtanh.pop %v6547
      %v7558 = vtanh.pop %v6549
      %v7559 = vtanh.pop %v6900
      %v7560 = vtanh.pop %v6902
      %v7561 = vtanh.pop %v7229
      %v7562 = vtanh.pop %v6198
      %v7563 = vtanh.pop %v6200
      %v7564 = vtanh.pop %v6551
      %v7565 = vtanh.pop %v6553
      %v7566 = vtanh.pop %v6904
      %v7567 = vtanh.pop %v6906
      %v7568 = vtanh.pop %v7232
      %v7569 = vtanh.pop %v6204
      %v7570 = vtanh.pop %v6206
      %v7571 = vtanh.pop %v6557
      %v7572 = vtanh.pop %v6559
      %v7573 = vtanh.pop %v6910
      %v7574 = vtanh.pop %v6912
      %v7575 = vtanh.pop %v7237
      %v7576 = vtanh.pop %v6208
      %v7577 = vtanh.pop %v6210
      %v7578 = vtanh.pop %v6561
      %v7579 = vtanh.pop %v6563
      %v7580 = vtanh.pop %v6914
      %v7581 = vtanh.pop %v6916
      %v7582 = vtanh.pop %v7240
      %v7583 = vtanh.pop %v6214
      %v7584 = vtanh.pop %v6216
      %v7585 = vtanh.pop %v6567
      %v7586 = vtanh.pop %v6569
      %v7587 = vtanh.pop %v6920
      %v7588 = vtanh.pop %v6922
      %v7589 = vtanh.pop %v7245
      %v7590 = vtanh.pop %v6218
      %v7591 = vtanh.pop %v6220
      %v7592 = vtanh.pop %v6571
      %v7593 = vtanh.pop %v6573
      %v7594 = vtanh.pop %v6924
      %v7595 = vtanh.pop %v6926
      %v7596 = vtanh.pop %v7248
      %v7597 = vtanh.pop %v6224
      %v7598 = vtanh.pop %v6226
      %v7599 = vtanh.pop %v6577
      %v7600 = vtanh.pop %v6579
      %v7601 = vtanh.pop %v6930
      %v7602 = vtanh.pop %v6932
      %v7603 = vtanh.pop %v7253
      %v7604 = vtanh.pop %v6228
      %v7605 = vtanh.pop %v6230
      %v7606 = vtanh.pop %v6581
      %v7607 = vtanh.pop %v6583
      %v7608 = vtanh.pop %v6934
      %v7609 = vtanh.pop %v6936
      %v7610 = vtanh.pop %v7256
      %v7611 = vtanh.pop %v6234
      %v7612 = vtanh.pop %v6236
      %v7613 = vtanh.pop %v6587
      %v7614 = vtanh.pop %v6589
      %v7615 = vtanh.pop %v6940
      %v7616 = vtanh.pop %v6942
      %v7617 = vtanh.pop %v7261
      %v7618 = vtanh.pop %v6238
      %v7619 = vtanh.pop %v6240
      %v7620 = vtanh.pop %v6591
      %v7621 = vtanh.pop %v6593
      %v7622 = vtanh.pop %v6944
      %v7623 = vtanh.pop %v6946
      %v7624 = vtanh.pop %v7264
      %v7625 = vtanh.pop %v6244
      %v7626 = vtanh.pop %v6246
      %v7627 = vtanh.pop %v6597
      %v7628 = vtanh.pop %v6599
      %v7629 = vtanh.pop %v6950
      %v7630 = vtanh.pop %v6952
      %v7631 = vtanh.pop %v7269
      %v7632 = vtanh.pop %v6248
      %v7633 = vtanh.pop %v6250
      %v7634 = vtanh.pop %v6601
      %v7635 = vtanh.pop %v6603
      %v7636 = vtanh.pop %v6954
      %v7637 = vtanh.pop %v6956
      %v7638 = vtanh.pop %v7272
      %v7639 = vtanh.pop %v6254
      %v7640 = vtanh.pop %v6256
      %v7641 = vtanh.pop %v6607
      %v7642 = vtanh.pop %v6609
      %v7643 = vtanh.pop %v6960
      %v7644 = vtanh.pop %v6962
      %v7645 = vtanh.pop %v7277
      %v7646 = vtanh.pop %v6258
      %v7647 = vtanh.pop %v6260
      %v7648 = vtanh.pop %v6611
      %v7649 = vtanh.pop %v6613
      %v7650 = vtanh.pop %v6964
      %v7651 = vtanh.pop %v6966
      %v7652 = vtanh.pop %v7280
      %v7653 = vtanh.pop %v6264
      %v7654 = vtanh.pop %v6266
      %v7655 = vtanh.pop %v6617
      %v7656 = vtanh.pop %v6619
      %v7657 = vtanh.pop %v6970
      %v7658 = vtanh.pop %v6972
      %v7659 = vtanh.pop %v7285
      %v7660 = vtanh.pop %v6268
      %v7661 = vtanh.pop %v6270
      %v7662 = vtanh.pop %v6621
      %v7663 = vtanh.pop %v6623
      %v7664 = vtanh.pop %v6974
      %v7665 = vtanh.pop %v6976
      %v7666 = vtanh.pop %v7288
      %v7667 = vtanh.pop %v6274
      %v7668 = vtanh.pop %v6276
      %v7669 = vtanh.pop %v6627
      %v7670 = vtanh.pop %v6629
      %v7671 = vtanh.pop %v6980
      %v7672 = vtanh.pop %v6982
      %v7673 = vtanh.pop %v7293
      %v7674 = vtanh.pop %v6278
      %v7675 = vtanh.pop %v6280
      %v7676 = vtanh.pop %v6631
      %v7677 = vtanh.pop %v6633
      %v7678 = vtanh.pop %v6984
      %v7679 = vtanh.pop %v6986
      %v7680 = vtanh.pop %v7296
      %v7681 = vtanh.pop %v6284
      %v7682 = vtanh.pop %v6286
      %v7683 = vtanh.pop %v6637
      %v7684 = vtanh.pop %v6639
      %v7685 = vtanh.pop %v6990
      %v7686 = vtanh.pop %v6992
      %v7687 = vtanh.pop %v7301
      %v7688 = vtanh.pop %v6288
      %v7689 = vtanh.pop %v6290
      %v7690 = vtanh.pop %v6641
      %v7691 = vtanh.pop %v6643
      %v7692 = vtanh.pop %v6994
      %v7693 = vtanh.pop %v6996
      %v7694 = vtanh.pop %v7304
      %v7695 = vtanh.pop %v6294
      %v7696 = vtanh.pop %v6296
      %v7697 = vtanh.pop %v6647
      %v7698 = vtanh.pop %v6649
      %v7699 = vtanh.pop %v7000
      %v7700 = vtanh.pop %v7002
      %v7701 = vtanh.pop %v7309
      %v7702 = vtanh.pop %v6298
      %v7703 = vtanh.pop %v6300
      %v7704 = vtanh.pop %v6651
      %v7705 = vtanh.pop %v6653
      %v7706 = vtanh.pop %v7004
      %v7707 = vtanh.pop %v7006
      %v7708 = vtanh.pop %v7312
      %v7709 = vtanh.pop %v6304
      %v7710 = vtanh.pop %v6306
      %v7711 = vtanh.pop %v6657
      %v7712 = vtanh.pop %v6659
      %v7713 = vtanh.pop %v7010
      %v7714 = vtanh.pop %v7012
      %v7715 = vtanh.pop %v7317
      %v7716 = vtanh.pop %v6308
      %v7717 = vtanh.pop %v6310
      %v7718 = vtanh.pop %v6661
      %v7719 = vtanh.pop %v6663
      %v7720 = vtanh.pop %v7014
      %v7721 = vtanh.pop %v7016
      %v7722 = vtanh.pop %v7320
      %v7723 = vtanh.pop %v6314
      %v7724 = vtanh.pop %v6316
      %v7725 = vtanh.pop %v6667
      %v7726 = vtanh.pop %v6669
      %v7727 = vtanh.pop %v7020
      %v7728 = vtanh.pop %v7022
      %v7729 = vtanh.pop %v7325
      %v7730 = vtanh.pop %v6318
      %v7731 = vtanh.pop %v6320
      %v7732 = vtanh.pop %v6671
      %v7733 = vtanh.pop %v6673
      %v7734 = vtanh.pop %v7024
      %v7735 = vtanh.pop %v7026
      %v7736 = vtanh.pop %v7328
      %v7737 = vtanh.pop %v6324
      %v7738 = vtanh.pop %v6326
      %v7739 = vtanh.pop %v6677
      %v7740 = vtanh.pop %v6679
      %v7741 = vtanh.pop %v7030
      %v7742 = vtanh.pop %v7032
      %v7743 = vtanh.pop %v7333
      %v7744 = vtanh.pop %v6328
      %v7745 = vtanh.pop %v6330
      %v7746 = vtanh.pop %v6681
      %v7747 = vtanh.pop %v6683
      %v7748 = vtanh.pop %v7034
      %v7749 = vtanh.pop %v7036
      %v7750 = vtanh.pop %v7336
      %v7751 = vtanh.pop %v6334
      %v7752 = vtanh.pop %v6336
      %v7753 = vtanh.pop %v6687
      %v7754 = vtanh.pop %v6689
      %v7755 = vtanh.pop %v7040
      %v7756 = vtanh.pop %v7042
      %v7757 = vtanh.pop %v7341
      %v7758 = vtanh.pop %v6338
      %v7759 = vtanh.pop %v6340
      %v7760 = vtanh.pop %v6691
      %v7761 = vtanh.pop %v6693
      %v7762 = vtanh.pop %v7044
      %v7763 = vtanh.pop %v7046
      %v7764 = vtanh.pop %v7344
      %v7765 = vtanh.pop %v6344
      %v7766 = vtanh.pop %v6346
      %v7767 = vtanh.pop %v6697
      %v7768 = vtanh.pop %v6699
      %v7769 = vtanh.pop %v7050
      %v7770 = vtanh.pop %v7052
      %v7771 = vtanh.pop %v7349
      %v7772 = vtanh.pop %v6348
      %v7773 = vtanh.pop %v6350
      %v7774 = vtanh.pop %v6701
      %v7775 = vtanh.pop %v6703
      %v7776 = vtanh.pop %v7054
      %v7777 = vtanh.pop %v7056
      %v7778 = vtanh.pop %v7352
      %v7779 = vtanh.pop %v6354
      %v7780 = vtanh.pop %v6356
      %v7781 = vtanh.pop %v6707
      %v7782 = vtanh.pop %v6709
      %v7783 = vtanh.pop %v7060
      %v7784 = vtanh.pop %v7062
      %v7785 = vtanh.pop %v7357
      %v7786 = vtanh.pop %v6358
      %v7787 = vtanh.pop %v6360
      %v7788 = vtanh.pop %v6711
      %v7789 = vtanh.pop %v6713
      %v7790 = vtanh.pop %v7064
      %v7791 = vtanh.pop %v7066
      %v7792 = vtanh.pop %v7360
      %v7793 = vtanh.pop %v6364
      %v7794 = vtanh.pop %v6366
      %v7795 = vtanh.pop %v6717
      %v7796 = vtanh.pop %v6719
      %v7797 = vtanh.pop %v7070
      %v7798 = vtanh.pop %v7072
      %v7799 = vtanh.pop %v7365
      %v7800 = vtanh.pop %v6368
      %v7801 = vtanh.pop %v6370
      %v7802 = vtanh.pop %v6721
      %v7803 = vtanh.pop %v6723
      %v7804 = vtanh.pop %v7074
      %v7805 = vtanh.pop %v7076
      %v7806 = vtanh.pop %v7368
      %v7807 = vtanh.pop %v6374
      %v7808 = vtanh.pop %v6376
      %v7809 = vtanh.pop %v6727
      %v7810 = vtanh.pop %v6729
      %v7811 = vtanh.pop %v7080
      %v7812 = vtanh.pop %v7082
      %v7813 = vtanh.pop %v7373
      %v7814 = vtanh.pop %v6378
      %v7815 = vtanh.pop %v6380
      %v7816 = vtanh.pop %v6731
      %v7817 = vtanh.pop %v6733
      %v7818 = vtanh.pop %v7084
      %v7819 = vtanh.pop %v7086
      %v7820 = vtanh.pop %v7376
      %v7821 = vtanh.pop %v6384
      %v7822 = vtanh.pop %v6386
      %v7823 = vtanh.pop %v6737
      %v7824 = vtanh.pop %v6739
      %v7825 = vtanh.pop %v7090
      %v7826 = vtanh.pop %v7092
      %v7827 = vtanh.pop %v7381
      %v7828 = vtanh.pop %v6388
      %v7829 = vtanh.pop %v6390
      %v7830 = vtanh.pop %v6741
      %v7831 = vtanh.pop %v6743
      %v7832 = vtanh.pop %v7094
      %v7833 = vtanh.pop %v7096
      %v7834 = vtanh.pop %v7384
      %7835 = vst [vmem:[%s555] sm:$0xff] %v7387
      %7836 = vst [vmem:[%s555 + $0x8] sm:$0xff] %v7388
      %7837 = vst [vmem:[%s555 + $0x10] sm:$0xff] %v7389
      %7838 = vst [vmem:[%s555 + $0x18] sm:$0xff] %v7390
      %7839 = vst [vmem:[%s555 + $0x20] sm:$0xff] %v7391
      %7840 = vst [vmem:[%s555 + $0x28] sm:$0xff] %v7392
      %7841 = vst.msk [vmem:[%s555 + $0x30] sm:$0xff] %vm1629, %v7393
      %7842 = vst [vmem:[%s555 + $0x38] sm:$0xff] %v7394
      %7843 = vst [vmem:[%s555 + $0x40] sm:$0xff] %v7395
      %7844 = vst [vmem:[%s555 + $0x48] sm:$0xff] %v7396
      %7845 = vst [vmem:[%s555 + $0x50] sm:$0xff] %v7397
      %7846 = vst [vmem:[%s555 + $0x58] sm:$0xff] %v7398
      %7847 = vst [vmem:[%s555 + $0x60] sm:$0xff] %v7399
      %7848 = vst.msk [vmem:[%s555 + $0x68] sm:$0xff] %vm1629, %v7400
      %7849 = vst [vmem:[%s555 + $0x70] sm:$0xff] %v7401
      %7850 = vst [vmem:[%s555 + $0x78] sm:$0xff] %v7402
      %7851 = vst [vmem:[%s555 + $0x80] sm:$0xff] %v7403
      %7852 = vst [vmem:[%s555 + $0x88] sm:$0xff] %v7404
      %7853 = vst [vmem:[%s555 + $0x90] sm:$0xff] %v7405
      %7854 = vst [vmem:[%s555 + $0x98] sm:$0xff] %v7406
      %7855 = vst.msk [vmem:[%s555 + $0xa0] sm:$0xff] %vm1629, %v7407
      %7856 = vst [vmem:[%s555 + $0xa8] sm:$0xff] %v7408
      %7857 = vst [vmem:[%s555 + $0xb0] sm:$0xff] %v7409
      %7858 = vst [vmem:[%s555 + $0xb8] sm:$0xff] %v7410
      %7859 = vst [vmem:[%s555 + $0xc0] sm:$0xff] %v7411
      %7860 = vst [vmem:[%s555 + $0xc8] sm:$0xff] %v7412
      %7861 = vst [vmem:[%s555 + $0xd0] sm:$0xff] %v7413
      %7862 = vst.msk [vmem:[%s555 + $0xd8] sm:$0xff] %vm1629, %v7414
      %7863 = vst [vmem:[%s555 + $0xe0] sm:$0xff] %v7415
      %7864 = vst [vmem:[%s555 + $0xe8] sm:$0xff] %v7416
      %7865 = vst [vmem:[%s555 + $0xf0] sm:$0xff] %v7417
      %7866 = vst [vmem:[%s555 + $0xf8] sm:$0xff] %v7418
      %7867 = vst [vmem:[%s555 + $0x100] sm:$0xff] %v7419
      %7868 = vst [vmem:[%s555 + $0x108] sm:$0xff] %v7420
      %7869 = vst.msk [vmem:[%s555 + $0x110] sm:$0xff] %vm1629, %v7421
      %7870 = vst [vmem:[%s555 + $0x118] sm:$0xff] %v7422
      %7871 = vst [vmem:[%s555 + $0x120] sm:$0xff] %v7423
      %7872 = vst [vmem:[%s555 + $0x128] sm:$0xff] %v7424
      %7873 = vst [vmem:[%s555 + $0x130] sm:$0xff] %v7425
      %7874 = vst [vmem:[%s555 + $0x138] sm:$0xff] %v7426
      %7875 = vst [vmem:[%s555 + $0x140] sm:$0xff] %v7427
      %7876 = vst.msk [vmem:[%s555 + $0x148] sm:$0xff] %vm1629, %v7428
      %7877 = vst [vmem:[%s555 + $0x150] sm:$0xff] %v7429
      %7878 = vst [vmem:[%s555 + $0x158] sm:$0xff] %v7430
      %7879 = vst [vmem:[%s555 + $0x160] sm:$0xff] %v7431
      %7880 = vst [vmem:[%s555 + $0x168] sm:$0xff] %v7432
      %7881 = vst [vmem:[%s555 + $0x170] sm:$0xff] %v7433
      %7882 = vst [vmem:[%s555 + $0x178] sm:$0xff] %v7434
      %7883 = vst.msk [vmem:[%s555 + $0x180] sm:$0xff] %vm1629, %v7435
      %7884 = vst [vmem:[%s555 + $0x188] sm:$0xff] %v7436
      %7885 = vst [vmem:[%s555 + $0x190] sm:$0xff] %v7437
      %7886 = vst [vmem:[%s555 + $0x198] sm:$0xff] %v7438
      %7887 = vst [vmem:[%s555 + $0x1a0] sm:$0xff] %v7439
      %7888 = vst [vmem:[%s555 + $0x1a8] sm:$0xff] %v7440
      %7889 = vst [vmem:[%s555 + $0x1b0] sm:$0xff] %v7441
      %7890 = vst.msk [vmem:[%s555 + $0x1b8] sm:$0xff] %vm1629, %v7442
      %7891 = vst [vmem:[%s555 + $0x1c0] sm:$0xff] %v7443
      %7892 = vst [vmem:[%s555 + $0x1c8] sm:$0xff] %v7444
      %7893 = vst [vmem:[%s555 + $0x1d0] sm:$0xff] %v7445
      %7894 = vst [vmem:[%s555 + $0x1d8] sm:$0xff] %v7446
      %7895 = vst [vmem:[%s555 + $0x1e0] sm:$0xff] %v7447
      %7896 = vst [vmem:[%s555 + $0x1e8] sm:$0xff] %v7448
      %7897 = vst.msk [vmem:[%s555 + $0x1f0] sm:$0xff] %vm1629, %v7449
      %7898 = vst [vmem:[%s555 + $0x1f8] sm:$0xff] %v7450
      %7899 = vst [vmem:[%s555 + $0x200] sm:$0xff] %v7451
      %7900 = vst [vmem:[%s555 + $0x208] sm:$0xff] %v7452
      %7901 = vst [vmem:[%s555 + $0x210] sm:$0xff] %v7453
      %7902 = vst [vmem:[%s555 + $0x218] sm:$0xff] %v7454
      %7903 = vst [vmem:[%s555 + $0x220] sm:$0xff] %v7455
      %7904 = vst.msk [vmem:[%s555 + $0x228] sm:$0xff] %vm1629, %v7456
      %7905 = vst [vmem:[%s555 + $0x230] sm:$0xff] %v7457
      %7906 = vst [vmem:[%s555 + $0x238] sm:$0xff] %v7458
      %7907 = vst [vmem:[%s555 + $0x240] sm:$0xff] %v7459
      %7908 = vst [vmem:[%s555 + $0x248] sm:$0xff] %v7460
      %7909 = vst [vmem:[%s555 + $0x250] sm:$0xff] %v7461
      %7910 = vst [vmem:[%s555 + $0x258] sm:$0xff] %v7462
      %7911 = vst.msk [vmem:[%s555 + $0x260] sm:$0xff] %vm1629, %v7463
      %7912 = vst [vmem:[%s555 + $0x268] sm:$0xff] %v7464
      %7913 = vst [vmem:[%s555 + $0x270] sm:$0xff] %v7465
      %7914 = vst [vmem:[%s555 + $0x278] sm:$0xff] %v7466
      %7915 = vst [vmem:[%s555 + $0x280] sm:$0xff] %v7467
      %7916 = vst [vmem:[%s555 + $0x288] sm:$0xff] %v7468
      %7917 = vst [vmem:[%s555 + $0x290] sm:$0xff] %v7469
      %7918 = vst.msk [vmem:[%s555 + $0x298] sm:$0xff] %vm1629, %v7470
      %7919 = vst [vmem:[%s555 + $0x2a0] sm:$0xff] %v7471
      %7920 = vst [vmem:[%s555 + $0x2a8] sm:$0xff] %v7472
      %7921 = vst [vmem:[%s555 + $0x2b0] sm:$0xff] %v7473
      %7922 = vst [vmem:[%s555 + $0x2b8] sm:$0xff] %v7474
      %7923 = vst [vmem:[%s555 + $0x2c0] sm:$0xff] %v7475
      %7924 = vst [vmem:[%s555 + $0x2c8] sm:$0xff] %v7476
      %7925 = vst.msk [vmem:[%s555 + $0x2d0] sm:$0xff] %vm1629, %v7477
      %7926 = vst [vmem:[%s555 + $0x2d8] sm:$0xff] %v7478
      %7927 = vst [vmem:[%s555 + $0x2e0] sm:$0xff] %v7479
      %7928 = vst [vmem:[%s555 + $0x2e8] sm:$0xff] %v7480
      %7929 = vst [vmem:[%s555 + $0x2f0] sm:$0xff] %v7481
      %7930 = vst [vmem:[%s555 + $0x2f8] sm:$0xff] %v7482
      %7931 = vst [vmem:[%s555 + $0x300] sm:$0xff] %v7483
      %7932 = vst.msk [vmem:[%s555 + $0x308] sm:$0xff] %vm1629, %v7484
      %7933 = vst [vmem:[%s555 + $0x310] sm:$0xff] %v7485
      %7934 = vst [vmem:[%s555 + $0x318] sm:$0xff] %v7486
      %7935 = vst [vmem:[%s555 + $0x320] sm:$0xff] %v7487
      %7936 = vst [vmem:[%s555 + $0x328] sm:$0xff] %v7488
      %7937 = vst [vmem:[%s555 + $0x330] sm:$0xff] %v7489
      %7938 = vst [vmem:[%s555 + $0x338] sm:$0xff] %v7490
      %7939 = vst.msk [vmem:[%s555 + $0x340] sm:$0xff] %vm1629, %v7491
      %7940 = vst [vmem:[%s555 + $0x348] sm:$0xff] %v7492
      %7941 = vst [vmem:[%s555 + $0x350] sm:$0xff] %v7493
      %7942 = vst [vmem:[%s555 + $0x358] sm:$0xff] %v7494
      %7943 = vst [vmem:[%s555 + $0x360] sm:$0xff] %v7495
      %7944 = vst [vmem:[%s555 + $0x368] sm:$0xff] %v7496
      %7945 = vst [vmem:[%s555 + $0x370] sm:$0xff] %v7497
      %7946 = vst.msk [vmem:[%s555 + $0x378] sm:$0xff] %vm1629, %v7498
      %7947 = vst [vmem:[%s555 + $0x380] sm:$0xff] %v7499
      %7948 = vst [vmem:[%s555 + $0x388] sm:$0xff] %v7500
      %7949 = vst [vmem:[%s555 + $0x390] sm:$0xff] %v7501
      %7950 = vst [vmem:[%s555 + $0x398] sm:$0xff] %v7502
      %7951 = vst [vmem:[%s555 + $0x3a0] sm:$0xff] %v7503
      %7952 = vst [vmem:[%s555 + $0x3a8] sm:$0xff] %v7504
      %7953 = vst.msk [vmem:[%s555 + $0x3b0] sm:$0xff] %vm1629, %v7505
      %7954 = vst [vmem:[%s555 + $0x3b8] sm:$0xff] %v7506
      %7955 = vst [vmem:[%s555 + $0x3c0] sm:$0xff] %v7507
      %7956 = vst [vmem:[%s555 + $0x3c8] sm:$0xff] %v7508
      %7957 = vst [vmem:[%s555 + $0x3d0] sm:$0xff] %v7509
      %7958 = vst [vmem:[%s555 + $0x3d8] sm:$0xff] %v7510
      %7959 = vst [vmem:[%s555 + $0x3e0] sm:$0xff] %v7511
      %7960 = vst.msk [vmem:[%s555 + $0x3e8] sm:$0xff] %vm1629, %v7512
      %7961 = vst [vmem:[%s555 + $0x3f0] sm:$0xff] %v7513
      %7962 = vst [vmem:[%s555 + $0x3f8] sm:$0xff] %v7514
      %7963 = vst [vmem:[%s555 + $0x400] sm:$0xff] %v7515
      %7964 = vst [vmem:[%s555 + $0x408] sm:$0xff] %v7516
      %7965 = vst [vmem:[%s555 + $0x410] sm:$0xff] %v7517
      %7966 = vst [vmem:[%s555 + $0x418] sm:$0xff] %v7518
      %7967 = vst.msk [vmem:[%s555 + $0x420] sm:$0xff] %vm1629, %v7519
      %7968 = vst [vmem:[%s555 + $0x428] sm:$0xff] %v7520
      %7969 = vst [vmem:[%s555 + $0x430] sm:$0xff] %v7521
      %7970 = vst [vmem:[%s555 + $0x438] sm:$0xff] %v7522
      %7971 = vst [vmem:[%s555 + $0x440] sm:$0xff] %v7523
      %7972 = vst [vmem:[%s555 + $0x448] sm:$0xff] %v7524
      %7973 = vst [vmem:[%s555 + $0x450] sm:$0xff] %v7525
      %7974 = vst.msk [vmem:[%s555 + $0x458] sm:$0xff] %vm1629, %v7526
      %7975 = vst [vmem:[%s555 + $0x460] sm:$0xff] %v7527
      %7976 = vst [vmem:[%s555 + $0x468] sm:$0xff] %v7528
      %7977 = vst [vmem:[%s555 + $0x470] sm:$0xff] %v7529
      %7978 = vst [vmem:[%s555 + $0x478] sm:$0xff] %v7530
      %7979 = vst [vmem:[%s555 + $0x480] sm:$0xff] %v7531
      %7980 = vst [vmem:[%s555 + $0x488] sm:$0xff] %v7532
      %7981 = vst.msk [vmem:[%s555 + $0x490] sm:$0xff] %vm1629, %v7533
      %7982 = vst [vmem:[%s555 + $0x498] sm:$0xff] %v7534
      %7983 = vst [vmem:[%s555 + $0x4a0] sm:$0xff] %v7535
      %7984 = vst [vmem:[%s555 + $0x4a8] sm:$0xff] %v7536
      %7985 = vst [vmem:[%s555 + $0x4b0] sm:$0xff] %v7537
      %7986 = vst [vmem:[%s555 + $0x4b8] sm:$0xff] %v7538
      %7987 = vst [vmem:[%s555 + $0x4c0] sm:$0xff] %v7539
      %7988 = vst.msk [vmem:[%s555 + $0x4c8] sm:$0xff] %vm1629, %v7540
      %7989 = vst [vmem:[%s555 + $0x4d0] sm:$0xff] %v7541
      %7990 = vst [vmem:[%s555 + $0x4d8] sm:$0xff] %v7542
      %7991 = vst [vmem:[%s555 + $0x4e0] sm:$0xff] %v7543
      %7992 = vst [vmem:[%s555 + $0x4e8] sm:$0xff] %v7544
      %7993 = vst [vmem:[%s555 + $0x4f0] sm:$0xff] %v7545
      %7994 = vst [vmem:[%s555 + $0x4f8] sm:$0xff] %v7546
      %7995 = vst.msk [vmem:[%s555 + $0x500] sm:$0xff] %vm1629, %v7547
      %7996 = vst [vmem:[%s555 + $0x508] sm:$0xff] %v7548
      %7997 = vst [vmem:[%s555 + $0x510] sm:$0xff] %v7549
      %7998 = vst [vmem:[%s555 + $0x518] sm:$0xff] %v7550
      %7999 = vst [vmem:[%s555 + $0x520] sm:$0xff] %v7551
      %8000 = vst [vmem:[%s555 + $0x528] sm:$0xff] %v7552
      %8001 = vst [vmem:[%s555 + $0x530] sm:$0xff] %v7553
      %8002 = vst.msk [vmem:[%s555 + $0x538] sm:$0xff] %vm1629, %v7554
      %8003 = vst [vmem:[%s555 + $0x540] sm:$0xff] %v7555
      %8004 = vst [vmem:[%s555 + $0x548] sm:$0xff] %v7556
      %8005 = vst [vmem:[%s555 + $0x550] sm:$0xff] %v7557
      %8006 = vst [vmem:[%s555 + $0x558] sm:$0xff] %v7558
      %8007 = vst [vmem:[%s555 + $0x560] sm:$0xff] %v7559
      %8008 = vst [vmem:[%s555 + $0x568] sm:$0xff] %v7560
      %8009 = vst.msk [vmem:[%s555 + $0x570] sm:$0xff] %vm1629, %v7561
      %8010 = vst [vmem:[%s555 + $0x578] sm:$0xff] %v7562
      %8011 = vst [vmem:[%s555 + $0x580] sm:$0xff] %v7563
      %8012 = vst [vmem:[%s555 + $0x588] sm:$0xff] %v7564
      %8013 = vst [vmem:[%s555 + $0x590] sm:$0xff] %v7565
      %8014 = vst [vmem:[%s555 + $0x598] sm:$0xff] %v7566
      %8015 = vst [vmem:[%s555 + $0x5a0] sm:$0xff] %v7567
      %8016 = vst.msk [vmem:[%s555 + $0x5a8] sm:$0xff] %vm1629, %v7568
      %8017 = vst [vmem:[%s555 + $0x5b0] sm:$0xff] %v7569
      %8018 = vst [vmem:[%s555 + $0x5b8] sm:$0xff] %v7570
      %8019 = vst [vmem:[%s555 + $0x5c0] sm:$0xff] %v7571
      %8020 = vst [vmem:[%s555 + $0x5c8] sm:$0xff] %v7572
      %8021 = vst [vmem:[%s555 + $0x5d0] sm:$0xff] %v7573
      %8022 = vst [vmem:[%s555 + $0x5d8] sm:$0xff] %v7574
      %8023 = vst.msk [vmem:[%s555 + $0x5e0] sm:$0xff] %vm1629, %v7575
      %8024 = vst [vmem:[%s555 + $0x5e8] sm:$0xff] %v7576
      %8025 = vst [vmem:[%s555 + $0x5f0] sm:$0xff] %v7577
      %8026 = vst [vmem:[%s555 + $0x5f8] sm:$0xff] %v7578
      %8027 = vst [vmem:[%s555 + $0x600] sm:$0xff] %v7579
      %8028 = vst [vmem:[%s555 + $0x608] sm:$0xff] %v7580
      %8029 = vst [vmem:[%s555 + $0x610] sm:$0xff] %v7581
      %8030 = vst.msk [vmem:[%s555 + $0x618] sm:$0xff] %vm1629, %v7582
      %8031 = vst [vmem:[%s555 + $0x620] sm:$0xff] %v7583
      %8032 = vst [vmem:[%s555 + $0x628] sm:$0xff] %v7584
      %8033 = vst [vmem:[%s555 + $0x630] sm:$0xff] %v7585
      %8034 = vst [vmem:[%s555 + $0x638] sm:$0xff] %v7586
      %8035 = vst [vmem:[%s555 + $0x640] sm:$0xff] %v7587
      %8036 = vst [vmem:[%s555 + $0x648] sm:$0xff] %v7588
      %8037 = vst.msk [vmem:[%s555 + $0x650] sm:$0xff] %vm1629, %v7589
      %8038 = vst [vmem:[%s555 + $0x658] sm:$0xff] %v7590
      %8039 = vst [vmem:[%s555 + $0x660] sm:$0xff] %v7591
      %8040 = vst [vmem:[%s555 + $0x668] sm:$0xff] %v7592
      %8041 = vst [vmem:[%s555 + $0x670] sm:$0xff] %v7593
      %8042 = vst [vmem:[%s555 + $0x678] sm:$0xff] %v7594
      %8043 = vst [vmem:[%s555 + $0x680] sm:$0xff] %v7595
      %8044 = vst.msk [vmem:[%s555 + $0x688] sm:$0xff] %vm1629, %v7596
      %8045 = vst [vmem:[%s555 + $0x690] sm:$0xff] %v7597
      %8046 = vst [vmem:[%s555 + $0x698] sm:$0xff] %v7598
      %8047 = vst [vmem:[%s555 + $0x6a0] sm:$0xff] %v7599
      %8048 = vst [vmem:[%s555 + $0x6a8] sm:$0xff] %v7600
      %8049 = vst [vmem:[%s555 + $0x6b0] sm:$0xff] %v7601
      %8050 = vst [vmem:[%s555 + $0x6b8] sm:$0xff] %v7602
      %8051 = vst.msk [vmem:[%s555 + $0x6c0] sm:$0xff] %vm1629, %v7603
      %8052 = vst [vmem:[%s555 + $0x6c8] sm:$0xff] %v7604
      %8053 = vst [vmem:[%s555 + $0x6d0] sm:$0xff] %v7605
      %8054 = vst [vmem:[%s555 + $0x6d8] sm:$0xff] %v7606
      %8055 = vst [vmem:[%s555 + $0x6e0] sm:$0xff] %v7607
      %8056 = vst [vmem:[%s555 + $0x6e8] sm:$0xff] %v7608
      %8057 = vst [vmem:[%s555 + $0x6f0] sm:$0xff] %v7609
      %8058 = vst.msk [vmem:[%s555 + $0x6f8] sm:$0xff] %vm1629, %v7610
      %8059 = vst [vmem:[%s555 + $0x700] sm:$0xff] %v7611
      %8060 = vst [vmem:[%s555 + $0x708] sm:$0xff] %v7612
      %8061 = vst [vmem:[%s555 + $0x710] sm:$0xff] %v7613
      %8062 = vst [vmem:[%s555 + $0x718] sm:$0xff] %v7614
      %8063 = vst [vmem:[%s555 + $0x720] sm:$0xff] %v7615
      %8064 = vst [vmem:[%s555 + $0x728] sm:$0xff] %v7616
      %8065 = vst.msk [vmem:[%s555 + $0x730] sm:$0xff] %vm1629, %v7617
      %8066 = vst [vmem:[%s555 + $0x738] sm:$0xff] %v7618
      %8067 = vst [vmem:[%s555 + $0x740] sm:$0xff] %v7619
      %8068 = vst [vmem:[%s555 + $0x748] sm:$0xff] %v7620
      %8069 = vst [vmem:[%s555 + $0x750] sm:$0xff] %v7621
      %8070 = vst [vmem:[%s555 + $0x758] sm:$0xff] %v7622
      %8071 = vst [vmem:[%s555 + $0x760] sm:$0xff] %v7623
      %8072 = vst.msk [vmem:[%s555 + $0x768] sm:$0xff] %vm1629, %v7624
      %8073 = vst [vmem:[%s555 + $0x770] sm:$0xff] %v7625
      %8074 = vst [vmem:[%s555 + $0x778] sm:$0xff] %v7626
      %8075 = vst [vmem:[%s555 + $0x780] sm:$0xff] %v7627
      %8076 = vst [vmem:[%s555 + $0x788] sm:$0xff] %v7628
      %8077 = vst [vmem:[%s555 + $0x790] sm:$0xff] %v7629
      %8078 = vst [vmem:[%s555 + $0x798] sm:$0xff] %v7630
      %8079 = vst.msk [vmem:[%s555 + $0x7a0] sm:$0xff] %vm1629, %v7631
      %8080 = vst [vmem:[%s555 + $0x7a8] sm:$0xff] %v7632
      %8081 = vst [vmem:[%s555 + $0x7b0] sm:$0xff] %v7633
      %8082 = vst [vmem:[%s555 + $0x7b8] sm:$0xff] %v7634
      %8083 = vst [vmem:[%s555 + $0x7c0] sm:$0xff] %v7635
      %8084 = vst [vmem:[%s555 + $0x7c8] sm:$0xff] %v7636
      %8085 = vst [vmem:[%s555 + $0x7d0] sm:$0xff] %v7637
      %8086 = vst.msk [vmem:[%s555 + $0x7d8] sm:$0xff] %vm1629, %v7638
      %8087 = vst [vmem:[%s555 + $0x7e0] sm:$0xff] %v7639
      %8088 = vst [vmem:[%s555 + $0x7e8] sm:$0xff] %v7640
      %8089 = vst [vmem:[%s555 + $0x7f0] sm:$0xff] %v7641
      %8090 = vst [vmem:[%s555 + $0x7f8] sm:$0xff] %v7642
      %8091 = vst [vmem:[%s555 + $0x800] sm:$0xff] %v7643
      %8092 = vst [vmem:[%s555 + $0x808] sm:$0xff] %v7644
      %8093 = vst.msk [vmem:[%s555 + $0x810] sm:$0xff] %vm1629, %v7645
      %8094 = vst [vmem:[%s555 + $0x818] sm:$0xff] %v7646
      %8095 = vst [vmem:[%s555 + $0x820] sm:$0xff] %v7647
      %8096 = vst [vmem:[%s555 + $0x828] sm:$0xff] %v7648
      %8097 = vst [vmem:[%s555 + $0x830] sm:$0xff] %v7649
      %8098 = vst [vmem:[%s555 + $0x838] sm:$0xff] %v7650
      %8099 = vst [vmem:[%s555 + $0x840] sm:$0xff] %v7651
      %8100 = vst.msk [vmem:[%s555 + $0x848] sm:$0xff] %vm1629, %v7652
      %8101 = vst [vmem:[%s555 + $0x850] sm:$0xff] %v7653
      %8102 = vst [vmem:[%s555 + $0x858] sm:$0xff] %v7654
      %8103 = vst [vmem:[%s555 + $0x860] sm:$0xff] %v7655
      %8104 = vst [vmem:[%s555 + $0x868] sm:$0xff] %v7656
      %8105 = vst [vmem:[%s555 + $0x870] sm:$0xff] %v7657
      %8106 = vst [vmem:[%s555 + $0x878] sm:$0xff] %v7658
      %8107 = vst.msk [vmem:[%s555 + $0x880] sm:$0xff] %vm1629, %v7659
      %8108 = vst [vmem:[%s555 + $0x888] sm:$0xff] %v7660
      %8109 = vst [vmem:[%s555 + $0x890] sm:$0xff] %v7661
      %8110 = vst [vmem:[%s555 + $0x898] sm:$0xff] %v7662
      %8111 = vst [vmem:[%s555 + $0x8a0] sm:$0xff] %v7663
      %8112 = vst [vmem:[%s555 + $0x8a8] sm:$0xff] %v7664
      %8113 = vst [vmem:[%s555 + $0x8b0] sm:$0xff] %v7665
      %8114 = vst.msk [vmem:[%s555 + $0x8b8] sm:$0xff] %vm1629, %v7666
      %8115 = vst [vmem:[%s555 + $0x8c0] sm:$0xff] %v7667
      %8116 = vst [vmem:[%s555 + $0x8c8] sm:$0xff] %v7668
      %8117 = vst [vmem:[%s555 + $0x8d0] sm:$0xff] %v7669
      %8118 = vst [vmem:[%s555 + $0x8d8] sm:$0xff] %v7670
      %8119 = vst [vmem:[%s555 + $0x8e0] sm:$0xff] %v7671
      %8120 = vst [vmem:[%s555 + $0x8e8] sm:$0xff] %v7672
      %8121 = vst.msk [vmem:[%s555 + $0x8f0] sm:$0xff] %vm1629, %v7673
      %8122 = vst [vmem:[%s555 + $0x8f8] sm:$0xff] %v7674
      %8123 = vst [vmem:[%s555 + $0x900] sm:$0xff] %v7675
      %8124 = vst [vmem:[%s555 + $0x908] sm:$0xff] %v7676
      %8125 = vst [vmem:[%s555 + $0x910] sm:$0xff] %v7677
      %8126 = vst [vmem:[%s555 + $0x918] sm:$0xff] %v7678
      %8127 = vst [vmem:[%s555 + $0x920] sm:$0xff] %v7679
      %8128 = vst.msk [vmem:[%s555 + $0x928] sm:$0xff] %vm1629, %v7680
      %8129 = vst [vmem:[%s555 + $0x930] sm:$0xff] %v7681
      %8130 = vst [vmem:[%s555 + $0x938] sm:$0xff] %v7682
      %8131 = vst [vmem:[%s555 + $0x940] sm:$0xff] %v7683
      %8132 = vst [vmem:[%s555 + $0x948] sm:$0xff] %v7684
      %8133 = vst [vmem:[%s555 + $0x950] sm:$0xff] %v7685
      %8134 = vst [vmem:[%s555 + $0x958] sm:$0xff] %v7686
      %8135 = vst.msk [vmem:[%s555 + $0x960] sm:$0xff] %vm1629, %v7687
      %8136 = vst [vmem:[%s555 + $0x968] sm:$0xff] %v7688
      %8137 = vst [vmem:[%s555 + $0x970] sm:$0xff] %v7689
      %8138 = vst [vmem:[%s555 + $0x978] sm:$0xff] %v7690
      %8139 = vst [vmem:[%s555 + $0x980] sm:$0xff] %v7691
      %8140 = vst [vmem:[%s555 + $0x988] sm:$0xff] %v7692
      %8141 = vst [vmem:[%s555 + $0x990] sm:$0xff] %v7693
      %8142 = vst.msk [vmem:[%s555 + $0x998] sm:$0xff] %vm1629, %v7694
      %8143 = vst [vmem:[%s555 + $0x9a0] sm:$0xff] %v7695
      %8144 = vst [vmem:[%s555 + $0x9a8] sm:$0xff] %v7696
      %8145 = vst [vmem:[%s555 + $0x9b0] sm:$0xff] %v7697
      %8146 = vst [vmem:[%s555 + $0x9b8] sm:$0xff] %v7698
      %8147 = vst [vmem:[%s555 + $0x9c0] sm:$0xff] %v7699
      %8148 = vst [vmem:[%s555 + $0x9c8] sm:$0xff] %v7700
      %8149 = vst.msk [vmem:[%s555 + $0x9d0] sm:$0xff] %vm1629, %v7701
      %8150 = vst [vmem:[%s555 + $0x9d8] sm:$0xff] %v7702
      %8151 = vst [vmem:[%s555 + $0x9e0] sm:$0xff] %v7703
      %8152 = vst [vmem:[%s555 + $0x9e8] sm:$0xff] %v7704
      %8153 = vst [vmem:[%s555 + $0x9f0] sm:$0xff] %v7705
      %8154 = vst [vmem:[%s555 + $0x9f8] sm:$0xff] %v7706
      %8155 = vst [vmem:[%s555 + $0xa00] sm:$0xff] %v7707
      %8156 = vst.msk [vmem:[%s555 + $0xa08] sm:$0xff] %vm1629, %v7708
      %8157 = vst [vmem:[%s555 + $0xa10] sm:$0xff] %v7709
      %8158 = vst [vmem:[%s555 + $0xa18] sm:$0xff] %v7710
      %8159 = vst [vmem:[%s555 + $0xa20] sm:$0xff] %v7711
      %8160 = vst [vmem:[%s555 + $0xa28] sm:$0xff] %v7712
      %8161 = vst [vmem:[%s555 + $0xa30] sm:$0xff] %v7713
      %8162 = vst [vmem:[%s555 + $0xa38] sm:$0xff] %v7714
      %8163 = vst.msk [vmem:[%s555 + $0xa40] sm:$0xff] %vm1629, %v7715
      %8164 = vst [vmem:[%s555 + $0xa48] sm:$0xff] %v7716
      %8165 = vst [vmem:[%s555 + $0xa50] sm:$0xff] %v7717
      %8166 = vst [vmem:[%s555 + $0xa58] sm:$0xff] %v7718
      %8167 = vst [vmem:[%s555 + $0xa60] sm:$0xff] %v7719
      %8168 = vst [vmem:[%s555 + $0xa68] sm:$0xff] %v7720
      %8169 = vst [vmem:[%s555 + $0xa70] sm:$0xff] %v7721
      %8170 = vst.msk [vmem:[%s555 + $0xa78] sm:$0xff] %vm1629, %v7722
      %8171 = vst [vmem:[%s555 + $0xa80] sm:$0xff] %v7723
      %8172 = vst [vmem:[%s555 + $0xa88] sm:$0xff] %v7724
      %8173 = vst [vmem:[%s555 + $0xa90] sm:$0xff] %v7725
      %8174 = vst [vmem:[%s555 + $0xa98] sm:$0xff] %v7726
      %8175 = vst [vmem:[%s555 + $0xaa0] sm:$0xff] %v7727
      %8176 = vst [vmem:[%s555 + $0xaa8] sm:$0xff] %v7728
      %8177 = vst.msk [vmem:[%s555 + $0xab0] sm:$0xff] %vm1629, %v7729
      %8178 = vst [vmem:[%s555 + $0xab8] sm:$0xff] %v7730
      %8179 = vst [vmem:[%s555 + $0xac0] sm:$0xff] %v7731
      %8180 = vst [vmem:[%s555 + $0xac8] sm:$0xff] %v7732
      %8181 = vst [vmem:[%s555 + $0xad0] sm:$0xff] %v7733
      %8182 = vst [vmem:[%s555 + $0xad8] sm:$0xff] %v7734
      %8183 = vst [vmem:[%s555 + $0xae0] sm:$0xff] %v7735
      %8184 = vst.msk [vmem:[%s555 + $0xae8] sm:$0xff] %vm1629, %v7736
      %8185 = vst [vmem:[%s555 + $0xaf0] sm:$0xff] %v7737
      %8186 = vst [vmem:[%s555 + $0xaf8] sm:$0xff] %v7738
      %8187 = vst [vmem:[%s555 + $0xb00] sm:$0xff] %v7739
      %8188 = vst [vmem:[%s555 + $0xb08] sm:$0xff] %v7740
      %8189 = vst [vmem:[%s555 + $0xb10] sm:$0xff] %v7741
      %8190 = vst [vmem:[%s555 + $0xb18] sm:$0xff] %v7742
      %8191 = vst.msk [vmem:[%s555 + $0xb20] sm:$0xff] %vm1629, %v7743
      %8192 = vst [vmem:[%s555 + $0xb28] sm:$0xff] %v7744
      %8193 = vst [vmem:[%s555 + $0xb30] sm:$0xff] %v7745
      %8194 = vst [vmem:[%s555 + $0xb38] sm:$0xff] %v7746
      %8195 = vst [vmem:[%s555 + $0xb40] sm:$0xff] %v7747
      %8196 = vst [vmem:[%s555 + $0xb48] sm:$0xff] %v7748
      %8197 = vst [vmem:[%s555 + $0xb50] sm:$0xff] %v7749
      %8198 = vst.msk [vmem:[%s555 + $0xb58] sm:$0xff] %vm1629, %v7750
      %8199 = vst [vmem:[%s555 + $0xb60] sm:$0xff] %v7751
      %8200 = vst [vmem:[%s555 + $0xb68] sm:$0xff] %v7752
      %8201 = vst [vmem:[%s555 + $0xb70] sm:$0xff] %v7753
      %8202 = vst [vmem:[%s555 + $0xb78] sm:$0xff] %v7754
      %8203 = vst [vmem:[%s555 + $0xb80] sm:$0xff] %v7755
      %8204 = vst [vmem:[%s555 + $0xb88] sm:$0xff] %v7756
      %8205 = vst.msk [vmem:[%s555 + $0xb90] sm:$0xff] %vm1629, %v7757
      %8206 = vst [vmem:[%s555 + $0xb98] sm:$0xff] %v7758
      %8207 = vst [vmem:[%s555 + $0xba0] sm:$0xff] %v7759
      %8208 = vst [vmem:[%s555 + $0xba8] sm:$0xff] %v7760
      %8209 = vst [vmem:[%s555 + $0xbb0] sm:$0xff] %v7761
      %8210 = vst [vmem:[%s555 + $0xbb8] sm:$0xff] %v7762
      %8211 = vst [vmem:[%s555 + $0xbc0] sm:$0xff] %v7763
      %8212 = vst.msk [vmem:[%s555 + $0xbc8] sm:$0xff] %vm1629, %v7764
      %8213 = vst [vmem:[%s555 + $0xbd0] sm:$0xff] %v7765
      %8214 = vst [vmem:[%s555 + $0xbd8] sm:$0xff] %v7766
      %8215 = vst [vmem:[%s555 + $0xbe0] sm:$0xff] %v7767
      %8216 = vst [vmem:[%s555 + $0xbe8] sm:$0xff] %v7768
      %8217 = vst [vmem:[%s555 + $0xbf0] sm:$0xff] %v7769
      %8218 = vst [vmem:[%s555 + $0xbf8] sm:$0xff] %v7770
      %8219 = vst.msk [vmem:[%s555 + $0xc00] sm:$0xff] %vm1629, %v7771
      %8220 = vst [vmem:[%s555 + $0xc08] sm:$0xff] %v7772
      %8221 = vst [vmem:[%s555 + $0xc10] sm:$0xff] %v7773
      %8222 = vst [vmem:[%s555 + $0xc18] sm:$0xff] %v7774
      %8223 = vst [vmem:[%s555 + $0xc20] sm:$0xff] %v7775
      %8224 = vst [vmem:[%s555 + $0xc28] sm:$0xff] %v7776
      %8225 = vst [vmem:[%s555 + $0xc30] sm:$0xff] %v7777
      %8226 = vst.msk [vmem:[%s555 + $0xc38] sm:$0xff] %vm1629, %v7778
      %8227 = vst [vmem:[%s555 + $0xc40] sm:$0xff] %v7779
      %8228 = vst [vmem:[%s555 + $0xc48] sm:$0xff] %v7780
      %8229 = vst [vmem:[%s555 + $0xc50] sm:$0xff] %v7781
      %8230 = vst [vmem:[%s555 + $0xc58] sm:$0xff] %v7782
      %8231 = vst [vmem:[%s555 + $0xc60] sm:$0xff] %v7783
      %8232 = vst [vmem:[%s555 + $0xc68] sm:$0xff] %v7784
      %8233 = vst.msk [vmem:[%s555 + $0xc70] sm:$0xff] %vm1629, %v7785
      %8234 = vst [vmem:[%s555 + $0xc78] sm:$0xff] %v7786
      %8235 = vst [vmem:[%s555 + $0xc80] sm:$0xff] %v7787
      %8236 = vst [vmem:[%s555 + $0xc88] sm:$0xff] %v7788
      %8237 = vst [vmem:[%s555 + $0xc90] sm:$0xff] %v7789
      %8238 = vst [vmem:[%s555 + $0xc98] sm:$0xff] %v7790
      %8239 = vst [vmem:[%s555 + $0xca0] sm:$0xff] %v7791
      %8240 = vst.msk [vmem:[%s555 + $0xca8] sm:$0xff] %vm1629, %v7792
      %8241 = vst [vmem:[%s555 + $0xcb0] sm:$0xff] %v7793
      %8242 = vst [vmem:[%s555 + $0xcb8] sm:$0xff] %v7794
      %8243 = vst [vmem:[%s555 + $0xcc0] sm:$0xff] %v7795
      %8244 = vst [vmem:[%s555 + $0xcc8] sm:$0xff] %v7796
      %8245 = vst [vmem:[%s555 + $0xcd0] sm:$0xff] %v7797
      %8246 = vst [vmem:[%s555 + $0xcd8] sm:$0xff] %v7798
      %8247 = vst.msk [vmem:[%s555 + $0xce0] sm:$0xff] %vm1629, %v7799
      %8248 = vst [vmem:[%s555 + $0xce8] sm:$0xff] %v7800
      %8249 = vst [vmem:[%s555 + $0xcf0] sm:$0xff] %v7801
      %8250 = vst [vmem:[%s555 + $0xcf8] sm:$0xff] %v7802
      %8251 = vst [vmem:[%s555 + $0xd00] sm:$0xff] %v7803
      %8252 = vst [vmem:[%s555 + $0xd08] sm:$0xff] %v7804
      %8253 = vst [vmem:[%s555 + $0xd10] sm:$0xff] %v7805
      %8254 = vst.msk [vmem:[%s555 + $0xd18] sm:$0xff] %vm1629, %v7806
      %8255 = vst [vmem:[%s555 + $0xd20] sm:$0xff] %v7807
      %8256 = vst [vmem:[%s555 + $0xd28] sm:$0xff] %v7808
      %8257 = vst [vmem:[%s555 + $0xd30] sm:$0xff] %v7809
      %8258 = vst [vmem:[%s555 + $0xd38] sm:$0xff] %v7810
      %8259 = vst [vmem:[%s555 + $0xd40] sm:$0xff] %v7811
      %8260 = vst [vmem:[%s555 + $0xd48] sm:$0xff] %v7812
      %8261 = vst.msk [vmem:[%s555 + $0xd50] sm:$0xff] %vm1629, %v7813
      %8262 = vst [vmem:[%s555 + $0xd58] sm:$0xff] %v7814
      %8263 = vst [vmem:[%s555 + $0xd60] sm:$0xff] %v7815
      %8264 = vst [vmem:[%s555 + $0xd68] sm:$0xff] %v7816
      %8265 = vst [vmem:[%s555 + $0xd70] sm:$0xff] %v7817
      %8266 = vst [vmem:[%s555 + $0xd78] sm:$0xff] %v7818
      %8267 = vst [vmem:[%s555 + $0xd80] sm:$0xff] %v7819
      %8268 = vst.msk [vmem:[%s555 + $0xd88] sm:$0xff] %vm1629, %v7820
      %8269 = vst [vmem:[%s555 + $0xd90] sm:$0xff] %v7821
      %8270 = vst [vmem:[%s555 + $0xd98] sm:$0xff] %v7822
      %8271 = vst [vmem:[%s555 + $0xda0] sm:$0xff] %v7823
      %8272 = vst [vmem:[%s555 + $0xda8] sm:$0xff] %v7824
      %8273 = vst [vmem:[%s555 + $0xdb0] sm:$0xff] %v7825
      %8274 = vst [vmem:[%s555 + $0xdb8] sm:$0xff] %v7826
      %8275 = vst.msk [vmem:[%s555 + $0xdc0] sm:$0xff] %vm1629, %v7827
      %8276 = vst [vmem:[%s555 + $0xdc8] sm:$0xff] %v7828
      %8277 = vst [vmem:[%s555 + $0xdd0] sm:$0xff] %v7829
      %8278 = vst [vmem:[%s555 + $0xdd8] sm:$0xff] %v7830
      %8279 = vst [vmem:[%s555 + $0xde0] sm:$0xff] %v7831
      %8280 = vst [vmem:[%s555 + $0xde8] sm:$0xff] %v7832
      %8281 = vst [vmem:[%s555 + $0xdf0] sm:$0xff] %v7833
      %8282 = vst.msk [vmem:[%s555 + $0xdf8] sm:$0xff] %vm1629, %v7834
      %s8283 = smul.u32 64, %s28
      %p8284 = scmp.lt.s32.totalorder %s8283, 127
      %s8285 = scalar_select %p8284, %s8283, 127
      %s8286 = smul.addr %s8285, 7
      %s8287 = smul.addr %s8286, 8
      %s8288 = scalar_lea.vmem %s17, %s8287
      // Predicated region
      $region89: #{autoencoder_forward.1} parent=87 // pred_check
        %p8289 = pneg %p408
      $region90: #{autoencoder_forward.1} parent=87 // pred_check_branch
        %8291 = sbr.rel (%p8289) target = $region92
      $region91: #{autoencoder_forward.1} parent=87 // pred_region
        %s8292 = smul.u32 64, %s28
      $region92: #{autoencoder_forward.1} parent=87 // pred_fallthru
        _
    $region88: #{autoencoder_forward.1} parent=5 // pred_fallthru
      _
    %p8293 = scmp.le.s32.totalorder 2, %s23
    // Predicated region
    $region93: #{autoencoder_forward.1} parent=5 // pred_check
      %p8294 = pneg %p8293
    $region94: #{autoencoder_forward.1} parent=5 // pred_check_branch
      %8296 = sbr.rel (%p8294) target = $region96
    $region95: #{autoencoder_forward.1} parent=5 // pred_region
      %s8297 = ssub.s32 %s23, 2
      // Predicated region
      $region97: #{autoencoder_forward.1} parent=95 // pred_check
        %p8298 = pneg %p414
      $region98: #{autoencoder_forward.1} parent=95 // pred_check_branch
        %8300 = sbr.rel (%p8298) target = $region100
      $region99: #{autoencoder_forward.1} parent=95 // pred_region
        %s8301 = smul.u32 64, %s29
        %p8302 = scmp.lt.s32.totalorder %s8301, 127
        %s8303 = scalar_select %p8302, %s8301, 127
        %s8304 = smul.addr %s8303, 7
        %s8305 = smul.addr %s8304, 8
        %s8306 = scalar_lea.vmem %s17, %s8305
      $region100: #{autoencoder_forward.1} parent=95 // pred_fallthru
        _
    $region96: #{autoencoder_forward.1} parent=5 // pred_fallthru
      _
  $region6: #{autoencoder_forward.1} parent=0 // loop_footer
    %s27 = sadd.s32 1, %s23
  $region7: #{autoencoder_forward.1} parent=0 // loop_footer_branch
    %22 = sbr.rel target = $region3
  $region8: #{autoencoder_forward.1} parent=0 // loop_exit
    _

</llo_original>
